<compile_context>
chip_gen: v5e
topology: v5e:2x2
jax: 0.10.0
libtpu: 0.0.40
codegen_flags: <defaults>
</compile_context>

<pallas_src>
import jax
import jax.numpy as jnp
from jax import lax
from jax.experimental import pallas as pl
from jax.experimental.pallas import tpu as pltpu


# ----------------------------- fused kernel ----------------------------------

def _bottleneck_kernel(x_ref, w1_ref, w2_ref, w3_ref,
                       s1_ref, b1_ref, s2_ref, b2_ref, s3_ref, b3_ref,
                       o_ref, t1s_ref):
    db = pl.program_id(1)
    _, D, H, W, Co = x_ref.shape
    Dp2, Hp2, Wq, C3 = t1s_ref.shape      # (D+2, H+2, round_up(W,8), 3*Cp)
    Cp = C3 // 3
    DBLK = o_ref.shape[1]
    d0 = db * DBLK

    # ---- stage 1 (cold path, once per batch element): conv1(1x1x1)+bn1+relu for the whole
    #      depth column, written as THREE kw-shifted lane groups into the padded scratch.
    @pl.when(db == 0)
    def _():
        # Zero only the halo faces; the interior is fully overwritten below.
        zdf = jnp.zeros((1, Hp2, Wq, C3), t1s_ref.dtype)
        t1s_ref[0:1, :, :, :] = zdf
        t1s_ref[Dp2 - 1:Dp2, :, :, :] = zdf
        zhf = jnp.zeros((D, 1, Wq, C3), t1s_ref.dtype)
        t1s_ref[1:D + 1, 0:1, :, :] = zhf
        t1s_ref[1:D + 1, Hp2 - 1:Hp2, :, :] = zhf
        if Wq > W:                                        # static
            t1s_ref[1:D + 1, 1:H + 1, W:Wq, :] = jnp.zeros(
                (D, H, Wq - W, C3), t1s_ref.dtype)

        M1 = D * H * W
        xm = x_ref[0].reshape(M1, Co)                     # layout-preserving (W % 8 == 0)
        t1 = jnp.dot(xm, w1_ref[...], preferred_element_type=jnp.float32)
        t1 = jnp.maximum(t1 * s1_ref[...] + b1_ref[...], 0.0)
        t1_4 = t1.reshape(D, H, W, Cp)

        # kw-shifted copies (shift along W baked into lane groups): group kw holds
        # t1_padded[..., w + kw, :] for w in [0, W).  Cold path, once per n.
        zcol = jnp.zeros((D, H, 1, Cp), jnp.float32)
        g0 = jnp.concatenate([zcol, t1_4[:, :, :W - 1, :]], axis=2)   # t1[w-1], 0 at w=0
        g2 = jnp.concatenate([t1_4[:, :, 1:, :], zcol], axis=2)       # t1[w+1], 0 at w=W-1
        t1sh = jnp.concatenate([g0, t1_4, g2], axis=-1).astype(t1s_ref.dtype)
        t1s_ref[1:D + 1, 1:H + 1, 0:W, :] = t1sh          # tile-aligned interior store

    # ---- stage 2: conv2(3x3x3, pad=1, stride=1) + bn2 + relu for DBLK output depths.
    # 3 accumulating matmuls (one per kd); K stacks (kw, ci), N stacks (kh, co).
    M2 = DBLK * Hp2 * Wq
    acc = jnp.dot(t1s_ref[pl.ds(d0 + 0, DBLK)].reshape(M2, C3), w2_ref[0],
                  preferred_element_type=jnp.float32)
    acc = acc + jnp.dot(t1s_ref[pl.ds(d0 + 1, DBLK)].reshape(M2, C3), w2_ref[1],
                        preferred_element_type=jnp.float32)
    acc = acc + jnp.dot(t1s_ref[pl.ds(d0 + 2, DBLK)].reshape(M2, C3), w2_ref[2],
                        preferred_element_type=jnp.float32)
    acc4 = acc.reshape(DBLK, Hp2, Wq, C3)
    # kh combination: leading-dim slices + 128-aligned lane-group slices only.
    y = (acc4[:, 0:H, :, 0:Cp]
         + acc4[:, 1:H + 1, :, Cp:2 * Cp]
         + acc4[:, 2:H + 2, :, 2 * Cp:3 * Cp])
    y = y * s2_ref[...] + b2_ref[...]
    t2 = jnp.maximum(y, 0.0).astype(jnp.bfloat16)         # (DBLK, H, Wq, Cp)

    # ---- stage 3: conv3(1x1x1) + bn3 + identity residual + relu.
    z = jnp.dot(t2.reshape(DBLK * H * Wq, Cp), w3_ref[...],
                preferred_element_type=jnp.float32)
    z = z * s3_ref[...] + b3_ref[...]
    z4 = z.reshape(DBLK, H, Wq, Co)[:, :, :W, :]
    res = x_ref[0, pl.ds(d0, DBLK)].astype(jnp.float32)   # (DBLK, H, W, Co)
    out = jnp.maximum(z4 + res, 0.0)
    o_ref[0] = out.astype(o_ref.dtype)


# ----------------------------- wrapper ----------------------------------------

def _round_up(v, m):
    return ((v + m - 1) // m) * m


def _pad_to(a, shape):
    return jnp.pad(a, [(0, t - s) for s, t in zip(a.shape, shape)])


def _bn_fold(gamma, beta, mean, var, eps=1e-5):
    scale = gamma / jnp.sqrt(var + eps)
    shift = beta - mean * scale
    return scale.astype(jnp.float32), shift.astype(jnp.float32)


@jax.jit
def bottleneck_forward(x_ncdhw, params):
    """Bottleneck.forward. x_ncdhw: (N, C_in, D, H, W) with C_in == planes*4."""
    x = jnp.transpose(x_ncdhw.astype(jnp.bfloat16), (0, 2, 3, 4, 1))   # NDHWC, bf16 first
    N, D, H, W, Cin = x.shape
    planes = params["w1"].shape[1]
    assert Cin == params["w3"].shape[1]          # identity shortcut (downsample=None)

    Cp = _round_up(planes, 128)                  # conv1/conv2 channel width (lane padded)
    Co = _round_up(Cin, 128)                     # conv3 output / residual width
    Wq = _round_up(W, 8)                         # scratch W extent (sublane aligned, no halo)
    DBLK = 4 if D % 4 == 0 else (2 if D % 2 == 0 else 1)

    s1, b1 = _bn_fold(*params["bn1"])
    s2, b2 = _bn_fold(*params["bn2"])
    s3, b3 = _bn_fold(*params["bn3"])

    xb = _pad_to(x, (N, D, H, W, Co))                                   # bf16 channel pad

    w1 = _pad_to(params["w1"], (Co, Cp)).astype(jnp.bfloat16)
    w3 = _pad_to(params["w3"], (Cp, Co)).astype(jnp.bfloat16)
    w2p = _pad_to(params["w2"], (3, 3, 3, Cp, Cp)).astype(jnp.bfloat16)  # (kd,kh,kw,ci,co)
    # one matrix per kd: K axis stacks (kw, ci), N axis stacks (kh, co)
    w2m = jnp.transpose(w2p, (0, 2, 3, 1, 4)).reshape(3, 3 * Cp, 3 * Cp)

    s1p = _pad_to(s1, (Cp,)).reshape(1, Cp); b1p = _pad_to(b1, (Cp,)).reshape(1, Cp)
    s2p = _pad_to(s2, (Cp,)).reshape(1, Cp); b2p = _pad_to(b2, (Cp,)).reshape(1, Cp)
    s3p = _pad_to(s3, (Co,)).reshape(1, Co); b3p = _pad_to(b3, (Co,)).reshape(1, Co)

    const2 = lambda n, d: (0, 0)
    const3 = lambda n, d: (0, 0, 0)

    out = pl.pallas_call(
        _bottleneck_kernel,
        out_shape=jax.ShapeDtypeStruct((N, D, H, W, Co), jnp.bfloat16),
        grid=(N, D // DBLK),
        in_specs=[
            pl.BlockSpec((1, D, H, W, Co), lambda n, d: (n, 0, 0, 0, 0)),  # x resident per n
            pl.BlockSpec((Co, Cp), const2),                # w1
            pl.BlockSpec((3, 3 * Cp, 3 * Cp), const3),     # w2 (per-kd, kw on K, kh on N)
            pl.BlockSpec((Cp, Co), const2),                # w3
            pl.BlockSpec((1, Cp), const2),                 # bn1 scale
            pl.BlockSpec((1, Cp), const2),                 # bn1 shift
            pl.BlockSpec((1, Cp), const2),                 # bn2 scale
            pl.BlockSpec((1, Cp), const2),                 # bn2 shift
            pl.BlockSpec((1, Co), const2),                 # bn3 scale
            pl.BlockSpec((1, Co), const2),                 # bn3 shift
        ],
        out_specs=pl.BlockSpec((1, DBLK, H, W, Co), lambda n, d: (n, d, 0, 0, 0)),
        scratch_shapes=[pltpu.VMEM((D + 2, H + 2, Wq, 3 * Cp), jnp.bfloat16)],
        compiler_params=pltpu.CompilerParams(
            dimension_semantics=("parallel", "arbitrary"),
            vmem_limit_bytes=32 * 1024 * 1024),
    )(xb, w1, w2m, w3, s1p, b1p, s2p, b2p, s3p, b3p)

    out = out[..., :Cin]                                   # bf16 slice
    return jnp.transpose(out, (0, 4, 1, 2, 3)).astype(jnp.float32)   # back to NCDHW


# ----------------------------- reference (plain JAX, bf16-mirrored) -----------

def bottleneck_reference(x_ncdhw, params):
    bf = lambda a: a.astype(jnp.bfloat16).astype(jnp.float32)
    x = bf(jnp.transpose(x_ncdhw, (0, 2, 3, 4, 1)))
    s1, b1 = _bn_fold(*params["bn1"])
    s2, b2 = _bn_fold(*params["bn2"])
    s3, b3 = _bn_fold(*params["bn3"])

    t1 = jnp.maximum(jnp.einsum("ndhwc,ck->ndhwk", x, bf(params["w1"])) * s1 + b1, 0.0)
    t1 = bf(t1)
    t2 = lax.conv_general_dilated(
        t1, bf(params["w2"]), window_strides=(1, 1, 1), padding="SAME",
        dimension_numbers=("NDHWC", "DHWIO", "NDHWC"))
    t2 = bf(jnp.maximum(t2 * s2 + b2, 0.0))
    t3 = jnp.einsum("ndhwc,ck->ndhwk", t2, bf(params["w3"])) * s3 + b3
    out = bf(jnp.maximum(t3 + x, 0.0))
    return jnp.transpose(out, (0, 4, 1, 2, 3))


# ----------------------------- main --------------------------------------------

if __name__ == "__main__":
    key = jax.random.PRNGKey(0)
    planes = 4
    expansion = 4
    in_planes = planes * expansion        # identity shortcut (downsample=None)
    N, D, H, W = 2, 8, 8, 8

    keys = jax.random.split(key, 16)
    x = jax.random.normal(keys[0], (N, in_planes, D, H, W), jnp.float32)

    # Conv weights in kernel layout (PyTorch would be (Cout, Cin, kD, kH, kW)):
    w1 = 0.1 * jax.random.normal(keys[1], (in_planes, planes), jnp.float32)        # 1x1x1
    w2 = 0.1 * jax.random.normal(keys[2], (3, 3, 3, planes, planes), jnp.float32)  # DHWIO
    w3 = 0.1 * jax.random.normal(keys[3], (planes, planes * expansion), jnp.float32)

    def bn_init(kg, kb, km, kv, c):
        gamma = 1.0 + 0.1 * jax.random.normal(kg, (c,), jnp.float32)
        beta = 0.1 * jax.random.normal(kb, (c,), jnp.float32)
        mean = 0.1 * jax.random.normal(km, (c,), jnp.float32)
        var = 0.5 + 0.5 * jnp.abs(jax.random.normal(kv, (c,), jnp.float32))
        return (gamma, beta, mean, var)

    params = {
        "w1": w1, "w2": w2, "w3": w3,
        "bn1": bn_init(keys[4], keys[5], keys[6], keys[7], planes),
        "bn2": bn_init(keys[8], keys[9], keys[10], keys[11], planes),
        "bn3": bn_init(keys[12], keys[13], keys[14], keys[15], planes * expansion),
    }

    out = jax.block_until_ready(bottleneck_forward(x, params))
    ref = jax.block_until_ready(bottleneck_reference(x, params))

    assert out.shape == (N, in_planes, D, H, W), out.shape
    max_err = float(jnp.max(jnp.abs(out - ref)))
    assert jnp.allclose(out, ref, atol=1e-2, rtol=1e-2), max_err

    print("KERNEL_OK")
</pallas_src>

<mosaic_0001>
module attributes {stable_mosaic.version = 11 : i64} {
  func.func @_bottleneck_kernel(%arg0: i32, %arg1: i32, %arg2: memref<1x8x8x8x128xbf16, #tpu.memory_space<vmem>>, %arg3: memref<128x128xbf16, #tpu.memory_space<vmem>>, %arg4: memref<3x384x384xbf16, #tpu.memory_space<vmem>>, %arg5: memref<128x128xbf16, #tpu.memory_space<vmem>>, %arg6: memref<1x128xf32, #tpu.memory_space<vmem>>, %arg7: memref<1x128xf32, #tpu.memory_space<vmem>>, %arg8: memref<1x128xf32, #tpu.memory_space<vmem>>, %arg9: memref<1x128xf32, #tpu.memory_space<vmem>>, %arg10: memref<1x128xf32, #tpu.memory_space<vmem>>, %arg11: memref<1x128xf32, #tpu.memory_space<vmem>>, %arg12: memref<1x4x8x8x128xbf16, #tpu.memory_space<vmem>>, %arg13: memref<10x10x8x384xbf16, #tpu.memory_space<vmem>>) attributes {dimension_semantics = [#tpu.dimension_semantics<parallel>, #tpu.dimension_semantics<arbitrary>], iteration_bounds = array<i64: 2, 2>, scalar_prefetch = 0 : i64, scratch_operands = 1 : i64, tpu.core_type = #tpu.core_type<tc>, window_params = [{transform_indices = @transform_0, window_bounds = array<i64: 1, 8, 8, 8, 128>}, {pipeline_mode = #tpu.pipeline_mode<synchronous>, transform_indices = @transform_1, window_bounds = array<i64: 128, 128>}, {pipeline_mode = #tpu.pipeline_mode<synchronous>, transform_indices = @transform_2, window_bounds = array<i64: 3, 384, 384>}, {pipeline_mode = #tpu.pipeline_mode<synchronous>, transform_indices = @transform_3, window_bounds = array<i64: 128, 128>}, {pipeline_mode = #tpu.pipeline_mode<synchronous>, transform_indices = @transform_4, window_bounds = array<i64: 1, 128>}, {pipeline_mode = #tpu.pipeline_mode<synchronous>, transform_indices = @transform_5, window_bounds = array<i64: 1, 128>}, {pipeline_mode = #tpu.pipeline_mode<synchronous>, transform_indices = @transform_6, window_bounds = array<i64: 1, 128>}, {pipeline_mode = #tpu.pipeline_mode<synchronous>, transform_indices = @transform_7, window_bounds = array<i64: 1, 128>}, {pipeline_mode = #tpu.pipeline_mode<synchronous>, transform_indices = @transform_8, window_bounds = array<i64: 1, 128>}, {pipeline_mode = #tpu.pipeline_mode<synchronous>, transform_indices = @transform_9, window_bounds = array<i64: 1, 128>}, {transform_indices = @transform_10, window_bounds = array<i64: 1, 4, 8, 8, 128>}]} {
    %c4_i32 = arith.constant 4 : i32
    %0 = arith.muli %arg1, %c4_i32 : i32
    %c0_i32 = arith.constant 0 : i32
    %1 = arith.cmpi eq, %arg1, %c0_i32 : i32
    %2 = arith.extui %1 : i1 to i32
    %c0_i32_0 = arith.constant 0 : i32
    %3 = arith.cmpi ne, %2, %c0_i32_0 : i32
    scf.if %3 {
      %cst_41 = arith.constant 0.000000e+00 : bf16
      %65 = vector.broadcast %cst_41 : bf16 to vector<1x10x8x384xbf16>
      %c0_42 = arith.constant 0 : index
      %c0_43 = arith.constant 0 : index
      %c0_44 = arith.constant 0 : index
      %c0_45 = arith.constant 0 : index
      %66 = vector.load %arg13[%c0_42, %c0_43, %c0_44, %c0_45] : memref<10x10x8x384xbf16, #tpu.memory_space<vmem>>, vector<1x10x8x384xbf16>
      tpu.vector_store %arg13[%c0_42, %c0_43, %c0_44, %c0_45], %65 {strides = array<i32>} : memref<10x10x8x384xbf16, #tpu.memory_space<vmem>>, vector<1x10x8x384xbf16>,
      %c9 = arith.constant 9 : index
      %c0_46 = arith.constant 0 : index
      %c0_47 = arith.constant 0 : index
      %c0_48 = arith.constant 0 : index
      %67 = vector.load %arg13[%c9, %c0_46, %c0_47, %c0_48] : memref<10x10x8x384xbf16, #tpu.memory_space<vmem>>, vector<1x10x8x384xbf16>
      tpu.vector_store %arg13[%c9, %c0_46, %c0_47, %c0_48], %65 {strides = array<i32>} : memref<10x10x8x384xbf16, #tpu.memory_space<vmem>>, vector<1x10x8x384xbf16>,
      %cst_49 = arith.constant 0.000000e+00 : bf16
      %68 = vector.broadcast %cst_49 : bf16 to vector<8x1x8x384xbf16>
      %c1_50 = arith.constant 1 : index
      %c0_51 = arith.constant 0 : index
      %c0_52 = arith.constant 0 : index
      %c0_53 = arith.constant 0 : index
      %69 = vector.load %arg13[%c1_50, %c0_51, %c0_52, %c0_53] : memref<10x10x8x384xbf16, #tpu.memory_space<vmem>>, vector<8x1x8x384xbf16>
      tpu.vector_store %arg13[%c1_50, %c0_51, %c0_52, %c0_53], %68 {strides = array<i32>} : memref<10x10x8x384xbf16, #tpu.memory_space<vmem>>, vector<8x1x8x384xbf16>,
      %c1_54 = arith.constant 1 : index
      %c9_55 = arith.constant 9 : index
      %c0_56 = arith.constant 0 : index
      %c0_57 = arith.constant 0 : index
      %70 = vector.load %arg13[%c1_54, %c9_55, %c0_56, %c0_57] : memref<10x10x8x384xbf16, #tpu.memory_space<vmem>>, vector<8x1x8x384xbf16>
      tpu.vector_store %arg13[%c1_54, %c9_55, %c0_56, %c0_57], %68 {strides = array<i32>} : memref<10x10x8x384xbf16, #tpu.memory_space<vmem>>, vector<8x1x8x384xbf16>,
      %c0_58 = arith.constant 0 : index
      %c0_59 = arith.constant 0 : index
      %c0_60 = arith.constant 0 : index
      %c0_61 = arith.constant 0 : index
      %c0_62 = arith.constant 0 : index
      %71 = vector.load %arg2[%c0_58, %c0_59, %c0_60, %c0_61, %c0_62] : memref<1x8x8x8x128xbf16, #tpu.memory_space<vmem>>, vector<1x8x8x8x128xbf16>
      %72 = vector.shape_cast %71 : vector<1x8x8x8x128xbf16> to vector<8x8x8x128xbf16>
      %73 = vector.shape_cast %72 : vector<8x8x8x128xbf16> to vector<512x128xbf16>
      %c0_63 = arith.constant 0 : index
      %c0_64 = arith.constant 0 : index
      %74 = vector.load %arg3[%c0_63, %c0_64] : memref<128x128xbf16, #tpu.memory_space<vmem>>, vector<128x128xbf16>
      %cst_65 = arith.constant dense<0.000000e+00> : vector<512x128xf32>
      %75 = tpu.matmul %73, %74, %cst_65 {dimension_numbers = #tpu.dot_dimension_numbers<[1], [0], [0], [1], [0, 0, 1, 1], [], []>} : vector<512x128xbf16>, vector<128x128xbf16>, vector<512x128xf32> -> vector<512x128xf32>
      %c0_66 = arith.constant 0 : index
      %c0_67 = arith.constant 0 : index
      %76 = vector.load %arg6[%c0_66, %c0_67] : memref<1x128xf32, #tpu.memory_space<vmem>>, vector<1x128xf32>
      %77 = vector.broadcast %76 : vector<1x128xf32> to vector<512x128xf32>
      %78 = arith.mulf %75, %77 : vector<512x128xf32>
      %c0_68 = arith.constant 0 : index
      %c0_69 = arith.constant 0 : index
      %79 = vector.load %arg7[%c0_68, %c0_69] : memref<1x128xf32, #tpu.memory_space<vmem>>, vector<1x128xf32>
      %80 = vector.broadcast %79 : vector<1x128xf32> to vector<512x128xf32>
      %81 = arith.addf %78, %80 : vector<512x128xf32>
      %cst_70 = arith.constant 0.000000e+00 : f32
      %82 = vector.broadcast %cst_70 : f32 to vector<512x128xf32>
      %83 = arith.maximumf %81, %82 : vector<512x128xf32>
      %84 = vector.shape_cast %83 : vector<512x128xf32> to vector<8x8x8x128xf32>
      %cst_71 = arith.constant 0.000000e+00 : f32
      %85 = vector.broadcast %cst_71 : f32 to vector<8x8x1x128xf32>
      %86 = vector.extract_strided_slice %84 {offsets = [0, 0, 0, 0], sizes = [8, 8, 7, 128], strides = [1, 1, 1, 1]} : vector<8x8x8x128xf32> to vector<8x8x7x128xf32>
      %87 = tpu.concatenate %85, %86 in 2 : vector<8x8x1x128xf32>, vector<8x8x7x128xf32> -> vector<8x8x8x128xf32>
      %88 = vector.extract_strided_slice %84 {offsets = [0, 0, 1, 0], sizes = [8, 8, 7, 128], strides = [1, 1, 1, 1]} : vector<8x8x8x128xf32> to vector<8x8x7x128xf32>
      %89 = tpu.concatenate %88, %85 in 2 : vector<8x8x7x128xf32>, vector<8x8x1x128xf32> -> vector<8x8x8x128xf32>
      %90 = tpu.concatenate %87, %84, %89 in 3 : vector<8x8x8x128xf32>, vector<8x8x8x128xf32>, vector<8x8x8x128xf32> -> vector<8x8x8x384xf32>
      %91 = arith.truncf %90 : vector<8x8x8x384xf32> to vector<8x8x8x384xbf16>
      %c1_72 = arith.constant 1 : index
      %c1_73 = arith.constant 1 : index
      %c0_74 = arith.constant 0 : index
      %c0_75 = arith.constant 0 : index
      %92 = vector.load %arg13[%c1_72, %c1_73, %c0_74, %c0_75] : memref<10x10x8x384xbf16, #tpu.memory_space<vmem>>, vector<8x8x8x384xbf16>
      tpu.vector_store %arg13[%c1_72, %c1_73, %c0_74, %c0_75], %91 {strides = array<i32>} : memref<10x10x8x384xbf16, #tpu.memory_space<vmem>>, vector<8x8x8x384xbf16>,
    } else {
    }
    %c0_i32_1 = arith.constant 0 : i32
    %4 = arith.addi %0, %c0_i32_1 : i32
    %5 = arith.index_cast %4 : i32 to index
    %c0 = arith.constant 0 : index
    %c0_2 = arith.constant 0 : index
    %c0_3 = arith.constant 0 : index
    %6 = vector.load %arg13[%5, %c0, %c0_2, %c0_3] : memref<10x10x8x384xbf16, #tpu.memory_space<vmem>>, vector<4x10x8x384xbf16>
    %7 = vector.shape_cast %6 : vector<4x10x8x384xbf16> to vector<320x384xbf16>
    %c0_4 = arith.constant 0 : index
    %c0_5 = arith.constant 0 : index
    %c0_6 = arith.constant 0 : index
    %8 = vector.load %arg4[%c0_4, %c0_5, %c0_6] : memref<3x384x384xbf16, #tpu.memory_space<vmem>>, vector<1x384x384xbf16>
    %9 = vector.shape_cast %8 : vector<1x384x384xbf16> to vector<384x384xbf16>
    %cst = arith.constant dense<0.000000e+00> : vector<320x384xf32>
    %10 = tpu.matmul %7, %9, %cst {dimension_numbers = #tpu.dot_dimension_numbers<[1], [0], [0], [1], [0, 0, 1, 1], [], []>} : vector<320x384xbf16>, vector<384x384xbf16>, vector<320x384xf32> -> vector<320x384xf32>
    %c1_i32 = arith.constant 1 : i32
    %11 = arith.addi %0, %c1_i32 : i32
    %12 = arith.index_cast %11 : i32 to index
    %c0_7 = arith.constant 0 : index
    %c0_8 = arith.constant 0 : index
    %c0_9 = arith.constant 0 : index
    %13 = vector.load %arg13[%12, %c0_7, %c0_8, %c0_9] : memref<10x10x8x384xbf16, #tpu.memory_space<vmem>>, vector<4x10x8x384xbf16>
    %14 = vector.shape_cast %13 : vector<4x10x8x384xbf16> to vector<320x384xbf16>
    %c1 = arith.constant 1 : index
    %c0_10 = arith.constant 0 : index
    %c0_11 = arith.constant 0 : index
    %15 = vector.load %arg4[%c1, %c0_10, %c0_11] : memref<3x384x384xbf16, #tpu.memory_space<vmem>>, vector<1x384x384xbf16>
    %16 = vector.shape_cast %15 : vector<1x384x384xbf16> to vector<384x384xbf16>
    %cst_12 = arith.constant dense<0.000000e+00> : vector<320x384xf32>
    %17 = tpu.matmul %14, %16, %cst_12 {dimension_numbers = #tpu.dot_dimension_numbers<[1], [0], [0], [1], [0, 0, 1, 1], [], []>} : vector<320x384xbf16>, vector<384x384xbf16>, vector<320x384xf32> -> vector<320x384xf32>
    %18 = arith.addf %10, %17 : vector<320x384xf32>
    %c2_i32 = arith.constant 2 : i32
    %19 = arith.addi %0, %c2_i32 : i32
    %20 = arith.index_cast %19 : i32 to index
    %c0_13 = arith.constant 0 : index
    %c0_14 = arith.constant 0 : index
    %c0_15 = arith.constant 0 : index
    %21 = vector.load %arg13[%20, %c0_13, %c0_14, %c0_15] : memref<10x10x8x384xbf16, #tpu.memory_space<vmem>>, vector<4x10x8x384xbf16>
    %22 = vector.shape_cast %21 : vector<4x10x8x384xbf16> to vector<320x384xbf16>
    %c2 = arith.constant 2 : index
    %c0_16 = arith.constant 0 : index
    %c0_17 = arith.constant 0 : index
    %23 = vector.load %arg4[%c2, %c0_16, %c0_17] : memref<3x384x384xbf16, #tpu.memory_space<vmem>>, vector<1x384x384xbf16>
    %24 = vector.shape_cast %23 : vector<1x384x384xbf16> to vector<384x384xbf16>
    %cst_18 = arith.constant dense<0.000000e+00> : vector<320x384xf32>
    %25 = tpu.matmul %22, %24, %cst_18 {dimension_numbers = #tpu.dot_dimension_numbers<[1], [0], [0], [1], [0, 0, 1, 1], [], []>} : vector<320x384xbf16>, vector<384x384xbf16>, vector<320x384xf32> -> vector<320x384xf32>
    %26 = arith.addf %18, %25 : vector<320x384xf32>
    %27 = vector.shape_cast %26 : vector<320x384xf32> to vector<4x10x8x384xf32>
    %28 = vector.extract_strided_slice %27 {offsets = [0, 0, 0, 0], sizes = [4, 8, 8, 128], strides = [1, 1, 1, 1]} : vector<4x10x8x384xf32> to vector<4x8x8x128xf32>
    %29 = vector.extract_strided_slice %27 {offsets = [0, 1, 0, 128], sizes = [4, 8, 8, 128], strides = [1, 1, 1, 1]} : vector<4x10x8x384xf32> to vector<4x8x8x128xf32>
    %30 = arith.addf %28, %29 : vector<4x8x8x128xf32>
    %31 = vector.extract_strided_slice %27 {offsets = [0, 2, 0, 256], sizes = [4, 8, 8, 128], strides = [1, 1, 1, 1]} : vector<4x10x8x384xf32> to vector<4x8x8x128xf32>
    %32 = arith.addf %30, %31 : vector<4x8x8x128xf32>
    %c0_19 = arith.constant 0 : index
    %c0_20 = arith.constant 0 : index
    %33 = vector.load %arg8[%c0_19, %c0_20] : memref<1x128xf32, #tpu.memory_space<vmem>>, vector<1x128xf32>
    %34 = vector.shape_cast %33 : vector<1x128xf32> to vector<1x1x1x128xf32>
    %35 = vector.broadcast %34 : vector<1x1x1x128xf32> to vector<4x8x8x128xf32>
    %36 = arith.mulf %32, %35 : vector<4x8x8x128xf32>
    %c0_21 = arith.constant 0 : index
    %c0_22 = arith.constant 0 : index
    %37 = vector.load %arg9[%c0_21, %c0_22] : memref<1x128xf32, #tpu.memory_space<vmem>>, vector<1x128xf32>
    %38 = vector.shape_cast %37 : vector<1x128xf32> to vector<1x1x1x128xf32>
    %39 = vector.broadcast %38 : vector<1x1x1x128xf32> to vector<4x8x8x128xf32>
    %40 = arith.addf %36, %39 : vector<4x8x8x128xf32>
    %cst_23 = arith.constant 0.000000e+00 : f32
    %41 = vector.broadcast %cst_23 : f32 to vector<4x8x8x128xf32>
    %42 = arith.maximumf %40, %41 : vector<4x8x8x128xf32>
    %43 = arith.truncf %42 : vector<4x8x8x128xf32> to vector<4x8x8x128xbf16>
    %44 = vector.shape_cast %43 : vector<4x8x8x128xbf16> to vector<256x128xbf16>
    %c0_24 = arith.constant 0 : index
    %c0_25 = arith.constant 0 : index
    %45 = vector.load %arg5[%c0_24, %c0_25] : memref<128x128xbf16, #tpu.memory_space<vmem>>, vector<128x128xbf16>
    %cst_26 = arith.constant dense<0.000000e+00> : vector<256x128xf32>
    %46 = tpu.matmul %44, %45, %cst_26 {dimension_numbers = #tpu.dot_dimension_numbers<[1], [0], [0], [1], [0, 0, 1, 1], [], []>} : vector<256x128xbf16>, vector<128x128xbf16>, vector<256x128xf32> -> vector<256x128xf32>
    %c0_27 = arith.constant 0 : index
    %c0_28 = arith.constant 0 : index
    %47 = vector.load %arg10[%c0_27, %c0_28] : memref<1x128xf32, #tpu.memory_space<vmem>>, vector<1x128xf32>
    %48 = vector.broadcast %47 : vector<1x128xf32> to vector<256x128xf32>
    %49 = arith.mulf %46, %48 : vector<256x128xf32>
    %c0_29 = arith.constant 0 : index
    %c0_30 = arith.constant 0 : index
    %50 = vector.load %arg11[%c0_29, %c0_30] : memref<1x128xf32, #tpu.memory_space<vmem>>, vector<1x128xf32>
    %51 = vector.broadcast %50 : vector<1x128xf32> to vector<256x128xf32>
    %52 = arith.addf %49, %51 : vector<256x128xf32>
    %53 = vector.shape_cast %52 : vector<256x128xf32> to vector<4x8x8x128xf32>
    %c0_31 = arith.constant 0 : index
    %54 = arith.index_cast %0 : i32 to index
    %c0_32 = arith.constant 0 : index
    %c0_33 = arith.constant 0 : index
    %c0_34 = arith.constant 0 : index
    %55 = vector.load %arg2[%c0_31, %54, %c0_32, %c0_33, %c0_34] : memref<1x8x8x8x128xbf16, #tpu.memory_space<vmem>>, vector<1x4x8x8x128xbf16>
    %56 = vector.shape_cast %55 : vector<1x4x8x8x128xbf16> to vector<4x8x8x128xbf16>
    %57 = arith.extf %56 : vector<4x8x8x128xbf16> to vector<4x8x8x128xf32>
    %58 = arith.addf %53, %57 : vector<4x8x8x128xf32>
    %cst_35 = arith.constant 0.000000e+00 : f32
    %59 = vector.broadcast %cst_35 : f32 to vector<4x8x8x128xf32>
    %60 = arith.maximumf %58, %59 : vector<4x8x8x128xf32>
    %61 = arith.truncf %60 : vector<4x8x8x128xf32> to vector<4x8x8x128xbf16>
    %c0_36 = arith.constant 0 : index
    %c0_37 = arith.constant 0 : index
    %c0_38 = arith.constant 0 : index
    %c0_39 = arith.constant 0 : index
    %c0_40 = arith.constant 0 : index
    %62 = vector.load %arg12[%c0_36, %c0_37, %c0_38, %c0_39, %c0_40] : memref<1x4x8x8x128xbf16, #tpu.memory_space<vmem>>, vector<1x4x8x8x128xbf16>
    %63 = vector.shape_cast %62 : vector<1x4x8x8x128xbf16> to vector<4x8x8x128xbf16>
    %64 = vector.shape_cast %61 : vector<4x8x8x128xbf16> to vector<1x4x8x8x128xbf16>
    tpu.vector_store %arg12[%c0_36, %c0_37, %c0_38, %c0_39, %c0_40], %64 {strides = array<i32>} : memref<1x4x8x8x128xbf16, #tpu.memory_space<vmem>>, vector<1x4x8x8x128xbf16>,
    return
  }
  func.func @transform_0(%arg0: i32, %arg1: i32) -> (i32, i32, i32, i32, i32) {
    %c0_i32 = arith.constant 0 : i32
    %c0_i32_0 = arith.constant 0 : i32
    %c0_i32_1 = arith.constant 0 : i32
    %c0_i32_2 = arith.constant 0 : i32
    %c0_i32_3 = arith.constant 0 : i32
    return %arg0, %c0_i32, %c0_i32_0, %c0_i32_1, %c0_i32_2 : i32, i32, i32, i32, i32
  }
  func.func @transform_1(%arg0: i32, %arg1: i32) -> (i32, i32) {
    %c0_i32 = arith.constant 0 : i32
    %c0_i32_0 = arith.constant 0 : i32
    %c0_i32_1 = arith.constant 0 : i32
    return %c0_i32, %c0_i32_0 : i32, i32
  }
  func.func @transform_2(%arg0: i32, %arg1: i32) -> (i32, i32, i32) {
    %c0_i32 = arith.constant 0 : i32
    %c0_i32_0 = arith.constant 0 : i32
    %c0_i32_1 = arith.constant 0 : i32
    %c0_i32_2 = arith.constant 0 : i32
    return %c0_i32, %c0_i32_0, %c0_i32_1 : i32, i32, i32
  }
  func.func @transform_3(%arg0: i32, %arg1: i32) -> (i32, i32) {
    %c0_i32 = arith.constant 0 : i32
    %c0_i32_0 = arith.constant 0 : i32
    %c0_i32_1 = arith.constant 0 : i32
    return %c0_i32, %c0_i32_0 : i32, i32
  }
  func.func @transform_4(%arg0: i32, %arg1: i32) -> (i32, i32) {
    %c0_i32 = arith.constant 0 : i32
    %c0_i32_0 = arith.constant 0 : i32
    %c0_i32_1 = arith.constant 0 : i32
    return %c0_i32, %c0_i32_0 : i32, i32
  }
  func.func @transform_5(%arg0: i32, %arg1: i32) -> (i32, i32) {
    %c0_i32 = arith.constant 0 : i32
    %c0_i32_0 = arith.constant 0 : i32
    %c0_i32_1 = arith.constant 0 : i32
    return %c0_i32, %c0_i32_0 : i32, i32
  }
  func.func @transform_6(%arg0: i32, %arg1: i32) -> (i32, i32) {
    %c0_i32 = arith.constant 0 : i32
    %c0_i32_0 = arith.constant 0 : i32
    %c0_i32_1 = arith.constant 0 : i32
    return %c0_i32, %c0_i32_0 : i32, i32
  }
  func.func @transform_7(%arg0: i32, %arg1: i32) -> (i32, i32) {
    %c0_i32 = arith.constant 0 : i32
    %c0_i32_0 = arith.constant 0 : i32
    %c0_i32_1 = arith.constant 0 : i32
    return %c0_i32, %c0_i32_0 : i32, i32
  }
  func.func @transform_8(%arg0: i32, %arg1: i32) -> (i32, i32) {
    %c0_i32 = arith.constant 0 : i32
    %c0_i32_0 = arith.constant 0 : i32
    %c0_i32_1 = arith.constant 0 : i32
    return %c0_i32, %c0_i32_0 : i32, i32
  }
  func.func @transform_9(%arg0: i32, %arg1: i32) -> (i32, i32) {
    %c0_i32 = arith.constant 0 : i32
    %c0_i32_0 = arith.constant 0 : i32
    %c0_i32_1 = arith.constant 0 : i32
    return %c0_i32, %c0_i32_0 : i32, i32
  }
  func.func @transform_10(%arg0: i32, %arg1: i32) -> (i32, i32, i32, i32, i32) {
    %c0_i32 = arith.constant 0 : i32
    %c0_i32_0 = arith.constant 0 : i32
    %c0_i32_1 = arith.constant 0 : i32
    %c0_i32_2 = arith.constant 0 : i32
    return %arg0, %arg1, %c0_i32, %c0_i32_0, %c0_i32_1 : i32, i32, i32, i32, i32
  }
}

</mosaic_0001>

<llo_original>
// kernel: bottleneck_forward.1
$region0: #{bottleneck_forward.1}
  #allocation0 [shape = 'u32[]', space=smem, size = 0x4, offset = 0x4, fixed_abs, tag = 'smem constant byte address 0x4 - core index']
  #allocation1 [shape = 'u32[72,128]{1,0:T(1,128)}', space=vmem, size = 0x9000, scoped, tag = 'internal scratch']
  #allocation2 [shape = 'bf16[10,10,8,384]{3,2,1,0:T(8,128)(2,1)}', space=vmem, size = 0x96000, scoped, tag = 'scratch operand']
  %s0 = inlined_call_operand.vmem [shape: bf16[2,8,8,8,128], index: 0, kind: input, shape index: {}]
  %s1 = inlined_call_operand.vmem [shape: bf16[128,128], index: 1, kind: input, shape index: {}]
  %s2 = inlined_call_operand.vmem [shape: bf16[3,384,384], index: 2, kind: input, shape index: {}]
  %s3 = inlined_call_operand.vmem [shape: bf16[128,128], index: 3, kind: input, shape index: {}]
  %s4 = inlined_call_operand.vmem [shape: f32[1,128], index: 4, kind: input, shape index: {}]
  %s5 = inlined_call_operand.vmem [shape: f32[1,128], index: 5, kind: input, shape index: {}]
  %s6 = inlined_call_operand.vmem [shape: f32[1,128], index: 6, kind: input, shape index: {}]
  %s7 = inlined_call_operand.vmem [shape: f32[1,128], index: 7, kind: input, shape index: {}]
  %s8 = inlined_call_operand.vmem [shape: f32[1,128], index: 8, kind: input, shape index: {}]
  %s9 = inlined_call_operand.vmem [shape: f32[1,128], index: 9, kind: input, shape index: {}]
  %s10 = inlined_call_operand.vmem [shape: bf16[2,8,8,8,128], index: 10, kind: output, shape index: {}]
  %s11 = sld [smem:[#allocation0]]
  $region77: #{bottleneck_forward.1} parent=0
    _
  %s13 = ssub.s32 1, %s11
  %s14 = scalar_select 0, %s13, %s11
  loop: start=0, step=1, limit=6
  $region2: #{bottleneck_forward.1} parent=0 // loop_pre_header
    _
  $region3: #{bottleneck_forward.1} parent=0 // loop_header
    %s16 = sphi 0, %s20
    %p17 = scmp.ge.s32.totalorder %s16, 6
    %s23 = sphi 0, %s35
    %s24 = sphi 0, %s31
    %s25 = sphi 0, %s23
    %s26 = sphi 0, %s24
    %s27 = sphi 0, %s25
    %s28 = sphi 0, %s26
    %s38 = sphi 0, %s40
    %s41 = sphi 0, %s38
    %s42 = sphi 0, %s41
    %s58 = sphi 0, %s42
    %s62 = sphi 0, %s62
    %s64 = sphi 0, %s62
    %s65 = sphi 0, %s64
    %s79 = sphi 0, %s65
    %s83 = sphi 0, %s83
    %s85 = sphi 0, %s83
    %s86 = sphi 0, %s85
    %s100 = sphi 0, %s86
    %s104 = sphi 0, %s104
    %s106 = sphi 0, %s104
    %s107 = sphi 0, %s106
    %s121 = sphi 0, %s107
    %s125 = sphi 0, %s125
    %s127 = sphi 0, %s125
    %s128 = sphi 0, %s127
    %s142 = sphi 0, %s128
    %s146 = sphi 0, %s146
    %s148 = sphi 0, %s146
    %s149 = sphi 0, %s148
    %s163 = sphi 0, %s149
    %s167 = sphi 0, %s167
    %s169 = sphi 0, %s167
    %s170 = sphi 0, %s169
    %s184 = sphi 0, %s170
    %s188 = sphi 0, %s188
    %s190 = sphi 0, %s188
    %s191 = sphi 0, %s190
    %s205 = sphi 0, %s191
    %s209 = sphi 0, %s209
    %s211 = sphi 0, %s209
    %s212 = sphi 0, %s211
    %s226 = sphi 0, %s212
    %s230 = sphi 0, %s230
    %s232 = sphi 0, %s230
    %s233 = sphi 0, %s232
    %s247 = sphi 0, %s233
    %s255 = sphi 0, %s257
    %s258 = sphi 0, %s255
    %s259 = sphi 0, %s258
    %s275 = sphi 0, %s259
  $region4: #{bottleneck_forward.1} parent=0 // loop_header_branch
    %19 = sbr.rel (%p17) target = $region8
  $region5: #{bottleneck_forward.1} parent=0 // loop_body
    %s21 = ssub.s32 %s16, 1
    %s22 = ssub.s32 %s16, 2
    %s29 = sadd.s32 1, %s24
    %p30 = scmp.ge.s32.totalorder %s29, 2
    %s31 = scalar_select %p30, 0, %s29
    %s32 = sadd.s32 1, %s23
    %s33 = scalar_select %p30, %s32, %s23
    %p34 = scmp.ge.s32.totalorder %s33, 2
    %s35 = scalar_select %p34, 0, %s33
    %s36 = ssub.s32 %s23, %s35
    %p37 = scmp.eq.s32.totalorder %s36, 0
    %s39 = sadd.s32 %s38, 1
    %s40 = scalar_select %p37, %s38, %s39
    %p43 = pneg %p37
    %p44 = scmp.eq.s32.totalorder %s16, 3
    %p45 = por %p43, %p44
    %p46 = scmp.ne.s32.totalorder %s38, %s41
    %p47 = scmp.eq.s32.totalorder %s16, 0
    %p48 = por %p46, %p47
    %p49 = scmp.ne.s32.totalorder %s38, %s41
    %p50 = scmp.eq.s32.totalorder %s21, 3
    %p51 = por %p49, %p50
    %p52 = scmp.ne.s32.totalorder %s41, %s42
    %p53 = scmp.eq.s32.totalorder %s21, 0
    %p54 = por %p52, %p53
    %p55 = scmp.ne.s32.totalorder %s41, %s42
    %p56 = scmp.eq.s32.totalorder %s22, 3
    %p57 = por %p55, %p56
    %p59 = scmp.ne.s32.totalorder %s42, %s58
    %p60 = scmp.eq.s32.totalorder %s22, 0
    %p61 = por %p59, %p60
    %s63 = sadd.s32 %s62, 1
    %p66 = scmp.eq.s32.totalorder %s16, 3
    %p67 = scmp.ne.s32.totalorder %s62, %s64
    %p68 = scmp.eq.s32.totalorder %s16, 0
    %p69 = por %p67, %p68
    %p70 = scmp.ne.s32.totalorder %s62, %s64
    %p71 = scmp.eq.s32.totalorder %s21, 3
    %p72 = por %p70, %p71
    %p73 = scmp.ne.s32.totalorder %s64, %s65
    %p74 = scmp.eq.s32.totalorder %s21, 0
    %p75 = por %p73, %p74
    %p76 = scmp.ne.s32.totalorder %s64, %s65
    %p77 = scmp.eq.s32.totalorder %s22, 3
    %p78 = por %p76, %p77
    %p80 = scmp.ne.s32.totalorder %s65, %s79
    %p81 = scmp.eq.s32.totalorder %s22, 0
    %p82 = por %p80, %p81
    %s84 = sadd.s32 %s83, 1
    %p87 = scmp.eq.s32.totalorder %s16, 3
    %p88 = scmp.ne.s32.totalorder %s83, %s85
    %p89 = scmp.eq.s32.totalorder %s16, 0
    %p90 = por %p88, %p89
    %p91 = scmp.ne.s32.totalorder %s83, %s85
    %p92 = scmp.eq.s32.totalorder %s21, 3
    %p93 = por %p91, %p92
    %p94 = scmp.ne.s32.totalorder %s85, %s86
    %p95 = scmp.eq.s32.totalorder %s21, 0
    %p96 = por %p94, %p95
    %p97 = scmp.ne.s32.totalorder %s85, %s86
    %p98 = scmp.eq.s32.totalorder %s22, 3
    %p99 = por %p97, %p98
    %p101 = scmp.ne.s32.totalorder %s86, %s100
    %p102 = scmp.eq.s32.totalorder %s22, 0
    %p103 = por %p101, %p102
    %s105 = sadd.s32 %s104, 1
    %p108 = scmp.eq.s32.totalorder %s16, 3
    %p109 = scmp.ne.s32.totalorder %s104, %s106
    %p110 = scmp.eq.s32.totalorder %s16, 0
    %p111 = por %p109, %p110
    %p112 = scmp.ne.s32.totalorder %s104, %s106
    %p113 = scmp.eq.s32.totalorder %s21, 3
    %p114 = por %p112, %p113
    %p115 = scmp.ne.s32.totalorder %s106, %s107
    %p116 = scmp.eq.s32.totalorder %s21, 0
    %p117 = por %p115, %p116
    %p118 = scmp.ne.s32.totalorder %s106, %s107
    %p119 = scmp.eq.s32.totalorder %s22, 3
    %p120 = por %p118, %p119
    %p122 = scmp.ne.s32.totalorder %s107, %s121
    %p123 = scmp.eq.s32.totalorder %s22, 0
    %p124 = por %p122, %p123
    %s126 = sadd.s32 %s125, 1
    %p129 = scmp.eq.s32.totalorder %s16, 3
    %p130 = scmp.ne.s32.totalorder %s125, %s127
    %p131 = scmp.eq.s32.totalorder %s16, 0
    %p132 = por %p130, %p131
    %p133 = scmp.ne.s32.totalorder %s125, %s127
    %p134 = scmp.eq.s32.totalorder %s21, 3
    %p135 = por %p133, %p134
    %p136 = scmp.ne.s32.totalorder %s127, %s128
    %p137 = scmp.eq.s32.totalorder %s21, 0
    %p138 = por %p136, %p137
    %p139 = scmp.ne.s32.totalorder %s127, %s128
    %p140 = scmp.eq.s32.totalorder %s22, 3
    %p141 = por %p139, %p140
    %p143 = scmp.ne.s32.totalorder %s128, %s142
    %p144 = scmp.eq.s32.totalorder %s22, 0
    %p145 = por %p143, %p144
    %s147 = sadd.s32 %s146, 1
    %p150 = scmp.eq.s32.totalorder %s16, 3
    %p151 = scmp.ne.s32.totalorder %s146, %s148
    %p152 = scmp.eq.s32.totalorder %s16, 0
    %p153 = por %p151, %p152
    %p154 = scmp.ne.s32.totalorder %s146, %s148
    %p155 = scmp.eq.s32.totalorder %s21, 3
    %p156 = por %p154, %p155
    %p157 = scmp.ne.s32.totalorder %s148, %s149
    %p158 = scmp.eq.s32.totalorder %s21, 0
    %p159 = por %p157, %p158
    %p160 = scmp.ne.s32.totalorder %s148, %s149
    %p161 = scmp.eq.s32.totalorder %s22, 3
    %p162 = por %p160, %p161
    %p164 = scmp.ne.s32.totalorder %s149, %s163
    %p165 = scmp.eq.s32.totalorder %s22, 0
    %p166 = por %p164, %p165
    %s168 = sadd.s32 %s167, 1
    %p171 = scmp.eq.s32.totalorder %s16, 3
    %p172 = scmp.ne.s32.totalorder %s167, %s169
    %p173 = scmp.eq.s32.totalorder %s16, 0
    %p174 = por %p172, %p173
    %p175 = scmp.ne.s32.totalorder %s167, %s169
    %p176 = scmp.eq.s32.totalorder %s21, 3
    %p177 = por %p175, %p176
    %p178 = scmp.ne.s32.totalorder %s169, %s170
    %p179 = scmp.eq.s32.totalorder %s21, 0
    %p180 = por %p178, %p179
    %p181 = scmp.ne.s32.totalorder %s169, %s170
    %p182 = scmp.eq.s32.totalorder %s22, 3
    %p183 = por %p181, %p182
    %p185 = scmp.ne.s32.totalorder %s170, %s184
    %p186 = scmp.eq.s32.totalorder %s22, 0
    %p187 = por %p185, %p186
    %s189 = sadd.s32 %s188, 1
    %p192 = scmp.eq.s32.totalorder %s16, 3
    %p193 = scmp.ne.s32.totalorder %s188, %s190
    %p194 = scmp.eq.s32.totalorder %s16, 0
    %p195 = por %p193, %p194
    %p196 = scmp.ne.s32.totalorder %s188, %s190
    %p197 = scmp.eq.s32.totalorder %s21, 3
    %p198 = por %p196, %p197
    %p199 = scmp.ne.s32.totalorder %s190, %s191
    %p200 = scmp.eq.s32.totalorder %s21, 0
    %p201 = por %p199, %p200
    %p202 = scmp.ne.s32.totalorder %s190, %s191
    %p203 = scmp.eq.s32.totalorder %s22, 3
    %p204 = por %p202, %p203
    %p206 = scmp.ne.s32.totalorder %s191, %s205
    %p207 = scmp.eq.s32.totalorder %s22, 0
    %p208 = por %p206, %p207
    %s210 = sadd.s32 %s209, 1
    %p213 = scmp.eq.s32.totalorder %s16, 3
    %p214 = scmp.ne.s32.totalorder %s209, %s211
    %p215 = scmp.eq.s32.totalorder %s16, 0
    %p216 = por %p214, %p215
    %p217 = scmp.ne.s32.totalorder %s209, %s211
    %p218 = scmp.eq.s32.totalorder %s21, 3
    %p219 = por %p217, %p218
    %p220 = scmp.ne.s32.totalorder %s211, %s212
    %p221 = scmp.eq.s32.totalorder %s21, 0
    %p222 = por %p220, %p221
    %p223 = scmp.ne.s32.totalorder %s211, %s212
    %p224 = scmp.eq.s32.totalorder %s22, 3
    %p225 = por %p223, %p224
    %p227 = scmp.ne.s32.totalorder %s212, %s226
    %p228 = scmp.eq.s32.totalorder %s22, 0
    %p229 = por %p227, %p228
    %s231 = sadd.s32 %s230, 1
    %p234 = scmp.eq.s32.totalorder %s16, 3
    %p235 = scmp.ne.s32.totalorder %s230, %s232
    %p236 = scmp.eq.s32.totalorder %s16, 0
    %p237 = por %p235, %p236
    %p238 = scmp.ne.s32.totalorder %s230, %s232
    %p239 = scmp.eq.s32.totalorder %s21, 3
    %p240 = por %p238, %p239
    %p241 = scmp.ne.s32.totalorder %s232, %s233
    %p242 = scmp.eq.s32.totalorder %s21, 0
    %p243 = por %p241, %p242
    %p244 = scmp.ne.s32.totalorder %s232, %s233
    %p245 = scmp.eq.s32.totalorder %s22, 3
    %p246 = por %p244, %p245
    %p248 = scmp.ne.s32.totalorder %s233, %s247
    %p249 = scmp.eq.s32.totalorder %s22, 0
    %p250 = por %p248, %p249
    %s251 = ssub.s32 %s23, %s35
    %s252 = ssub.s32 %s24, %s31
    %s253 = sor.u32 %s251, %s252
    %p254 = scmp.eq.s32.totalorder %s253, 0
    %s256 = sadd.s32 %s255, 1
    %s257 = scalar_select %p254, %s255, %s256
    %p260 = pneg %p254
    %p261 = scmp.eq.s32.totalorder %s16, 3
    %p262 = por %p260, %p261
    %p263 = scmp.ne.s32.totalorder %s255, %s258
    %p264 = scmp.eq.s32.totalorder %s16, 0
    %p265 = por %p263, %p264
    %p266 = scmp.ne.s32.totalorder %s255, %s258
    %p267 = scmp.eq.s32.totalorder %s21, 3
    %p268 = por %p266, %p267
    %p269 = scmp.ne.s32.totalorder %s258, %s259
    %p270 = scmp.eq.s32.totalorder %s21, 0
    %p271 = por %p269, %p270
    %p272 = scmp.ne.s32.totalorder %s258, %s259
    %p273 = scmp.eq.s32.totalorder %s22, 3
    %p274 = por %p272, %p273
    %p276 = scmp.ne.s32.totalorder %s259, %s275
    %p277 = scmp.eq.s32.totalorder %s22, 0
    %p278 = por %p276, %p277
    %p279 = scmp.le.s32.totalorder 1, %s16
    %p280 = scmp.lt.s32.totalorder %s16, 5
    %p281 = pnand %p279, %p280
    %p282 = pneg %p281
    // Predicated region
    $region9: #{bottleneck_forward.1} parent=5 // pred_check
      _
    $region10: #{bottleneck_forward.1} parent=5 // pred_check_branch
      %284 = sbr.rel (%p281) target = $region12
    $region11: #{bottleneck_forward.1} parent=5 // pred_region
      %s285 = ssub.s32 %s16, 1
      // Predicated region
      $region13: #{bottleneck_forward.1} parent=11 // pred_check
        %p286 = pneg %p75
      $region14: #{bottleneck_forward.1} parent=11 // pred_check_branch
        %288 = sbr.rel (%p286) target = $region16
      $region15: #{bottleneck_forward.1} parent=11 // pred_region
        _
      $region16: #{bottleneck_forward.1} parent=11 // pred_fallthru
        _
      // Predicated region
      $region17: #{bottleneck_forward.1} parent=11 // pred_check
        %p289 = pneg %p96
      $region18: #{bottleneck_forward.1} parent=11 // pred_check_branch
        %291 = sbr.rel (%p289) target = $region20
      $region19: #{bottleneck_forward.1} parent=11 // pred_region
        _
      $region20: #{bottleneck_forward.1} parent=11 // pred_fallthru
        _
      // Predicated region
      $region21: #{bottleneck_forward.1} parent=11 // pred_check
        %p292 = pneg %p117
      $region22: #{bottleneck_forward.1} parent=11 // pred_check_branch
        %294 = sbr.rel (%p292) target = $region24
      $region23: #{bottleneck_forward.1} parent=11 // pred_region
        _
      $region24: #{bottleneck_forward.1} parent=11 // pred_fallthru
        _
      // Predicated region
      $region25: #{bottleneck_forward.1} parent=11 // pred_check
        %p295 = pneg %p138
      $region26: #{bottleneck_forward.1} parent=11 // pred_check_branch
        %297 = sbr.rel (%p295) target = $region28
      $region27: #{bottleneck_forward.1} parent=11 // pred_region
        _
      $region28: #{bottleneck_forward.1} parent=11 // pred_fallthru
        _
      // Predicated region
      $region29: #{bottleneck_forward.1} parent=11 // pred_check
        %p298 = pneg %p159
      $region30: #{bottleneck_forward.1} parent=11 // pred_check_branch
        %300 = sbr.rel (%p298) target = $region32
      $region31: #{bottleneck_forward.1} parent=11 // pred_region
        _
      $region32: #{bottleneck_forward.1} parent=11 // pred_fallthru
        _
      // Predicated region
      $region33: #{bottleneck_forward.1} parent=11 // pred_check
        %p301 = pneg %p180
      $region34: #{bottleneck_forward.1} parent=11 // pred_check_branch
        %303 = sbr.rel (%p301) target = $region36
      $region35: #{bottleneck_forward.1} parent=11 // pred_region
        _
      $region36: #{bottleneck_forward.1} parent=11 // pred_fallthru
        _
      // Predicated region
      $region37: #{bottleneck_forward.1} parent=11 // pred_check
        %p304 = pneg %p201
      $region38: #{bottleneck_forward.1} parent=11 // pred_check_branch
        %306 = sbr.rel (%p304) target = $region40
      $region39: #{bottleneck_forward.1} parent=11 // pred_region
        _
      $region40: #{bottleneck_forward.1} parent=11 // pred_fallthru
        _
      // Predicated region
      $region41: #{bottleneck_forward.1} parent=11 // pred_check
        %p307 = pneg %p222
      $region42: #{bottleneck_forward.1} parent=11 // pred_check_branch
        %309 = sbr.rel (%p307) target = $region44
      $region43: #{bottleneck_forward.1} parent=11 // pred_region
        _
      $region44: #{bottleneck_forward.1} parent=11 // pred_fallthru
        _
      // Predicated region
      $region45: #{bottleneck_forward.1} parent=11 // pred_check
        %p310 = pneg %p243
      $region46: #{bottleneck_forward.1} parent=11 // pred_check_branch
        %312 = sbr.rel (%p310) target = $region48
      $region47: #{bottleneck_forward.1} parent=11 // pred_region
        _
      $region48: #{bottleneck_forward.1} parent=11 // pred_fallthru
        _
    $region12: #{bottleneck_forward.1} parent=5 // pred_fallthru
      _
    %p313 = scmp.lt.s32.totalorder %s16, 4
    // Predicated region
    $region49: #{bottleneck_forward.1} parent=5 // pred_check
      %p314 = pneg %p313
    $region50: #{bottleneck_forward.1} parent=5 // pred_check_branch
      %316 = sbr.rel (%p314) target = $region52
    $region51: #{bottleneck_forward.1} parent=5 // pred_region
      // Predicated region
      $region53: #{bottleneck_forward.1} parent=51 // pred_check
        %p317 = pneg %p48
      $region54: #{bottleneck_forward.1} parent=51 // pred_check_branch
        %319 = sbr.rel (%p317) target = $region56
      $region55: #{bottleneck_forward.1} parent=51 // pred_region
        %p320 = scmp.lt.s32.totalorder %s23, 1
        %s321 = scalar_select %p320, %s23, 1
        %s322 = smul.addr %s321, 64
        %s323 = smul.addr %s322, 4
        %s324 = scalar_lea.vmem %s0, %s323
      $region56: #{bottleneck_forward.1} parent=51 // pred_fallthru
        _
    $region52: #{bottleneck_forward.1} parent=5 // pred_fallthru
      _
    %p325 = scmp.le.s32.totalorder 1, %s16
    %p326 = scmp.lt.s32.totalorder %s16, 5
    %p327 = pnand %p325, %p326
    %p328 = pneg %p327
    // Predicated region
    $region57: #{bottleneck_forward.1} parent=5 // pred_check
      _
    $region58: #{bottleneck_forward.1} parent=5 // pred_check_branch
      %330 = sbr.rel (%p327) target = $region60
    $region59: #{bottleneck_forward.1} parent=5 // pred_region
      %s331 = ssub.s32 %s16, 1
      %p332 = scmp.lt.s32.totalorder %s25, 1
      %s333 = scalar_select %p332, %s25, 1
      %s334 = smul.addr %s333, 64
      %s335 = smul.addr %s334, 4
      %s336 = scalar_lea.vmem %s0, %s335
      %p337 = pneg %p54
      %p338 = pneg %p51
      %p339 = pneg %p75
      %p340 = pneg %p72
      %p341 = pneg %p96
      %p342 = pneg %p93
      %p343 = pneg %p117
      %p344 = pneg %p114
      %p345 = pneg %p138
      %p346 = pneg %p135
      %p347 = pneg %p159
      %p348 = pneg %p156
      %p349 = pneg %p180
      %p350 = pneg %p177
      %p351 = pneg %p201
      %p352 = pneg %p198
      %p353 = pneg %p222
      %p354 = pneg %p219
      %p355 = pneg %p243
      %p356 = pneg %p240
      %p357 = pneg %p271
      %p358 = pneg %p268
      %s359 = smul.u32 4, %s26
      %p360 = scmp.lt.s32.totalorder %s25, 1
      %s361 = scalar_select %p360, %s25, 1
      %p362 = scmp.lt.s32.totalorder %s359, 7
      %s363 = scalar_select %p362, %s359, 7
      %s364 = smul.addr %s363, 8
      %s365 = smul.addr %s361, 64
      %s366 = sadd.s32 %s364, %s365
      %s367 = smul.addr %s366, 4
      %s368 = scalar_lea.vmem %s10, %s367
      %p369 = scmp.lt.s32.totalorder %s25, 1
      %s370 = scalar_select %p369, %s25, 1
      %s371 = smul.addr %s370, 64
      %s372 = smul.addr %s371, 4
      %s373 = scalar_lea.vmem %s0, %s372
      %s374 = smul.u32 4, %s26
      %p375 = scmp.lt.s32.totalorder %s25, 1
      %s376 = scalar_select %p375, %s25, 1
      %p377 = scmp.lt.s32.totalorder %s374, 7
      %s378 = scalar_select %p377, %s374, 7
      %s379 = smul.addr %s378, 8
      %s380 = smul.addr %s376, 64
      %s381 = sadd.s32 %s379, %s380
      %s382 = smul.addr %s381, 4
      %s383 = scalar_lea.vmem %s10, %s382
      %s384 = smul.u32 4, %s26
      %s386 = smul.u32 %s26, 4
      %p387 = scmp.eq.s32.totalorder %s26, 0
      // Predicated region
      $region61: #{bottleneck_forward.1} parent=59 // pred_check
        %p388 = pneg %p387
      $region62: #{bottleneck_forward.1} parent=59 // pred_check_branch
        %390 = sbr.rel (%p388) target = $region64
      $region63: #{bottleneck_forward.1} parent=59 // pred_region
        %391 = vst [vmem:[#allocation2] sm:$0xff] 0
        %392 = vst [vmem:[#allocation2 + $0x8] sm:$0xf] 0
        %393 = vst [vmem:[#allocation2 + $0xc] sm:$0xff] 0
        %394 = vst [vmem:[#allocation2 + $0x14] sm:$0xf] 0
        %395 = vst [vmem:[#allocation2 + $0x18] sm:$0xff] 0
        %396 = vst [vmem:[#allocation2 + $0x20] sm:$0xf] 0
        %397 = vst [vmem:[#allocation2 + $0x24] sm:$0xff] 0
        %398 = vst [vmem:[#allocation2 + $0x2c] sm:$0xf] 0
        %399 = vst [vmem:[#allocation2 + $0x30] sm:$0xff] 0
        %400 = vst [vmem:[#allocation2 + $0x38] sm:$0xf] 0
        %401 = vst [vmem:[#allocation2 + $0x3c] sm:$0xff] 0
        %402 = vst [vmem:[#allocation2 + $0x44] sm:$0xf] 0
        %403 = vst [vmem:[#allocation2 + $0x48] sm:$0xff] 0
        %404 = vst [vmem:[#allocation2 + $0x50] sm:$0xf] 0
        %405 = vst [vmem:[#allocation2 + $0x54] sm:$0xff] 0
        %406 = vst [vmem:[#allocation2 + $0x5c] sm:$0xf] 0
        %407 = vst [vmem:[#allocation2 + $0x60] sm:$0xff] 0
        %408 = vst [vmem:[#allocation2 + $0x68] sm:$0xf] 0
        %409 = vst [vmem:[#allocation2 + $0x6c] sm:$0xff] 0
        %410 = vst [vmem:[#allocation2 + $0x74] sm:$0xf] 0
        %s411 = scalar_lea.vmem [#allocation2], 1080
        %412 = vst [vmem:[%s411] sm:$0xff] 0
        %413 = vst [vmem:[%s411 + $0x8] sm:$0xf] 0
        %414 = vst [vmem:[%s411 + $0xc] sm:$0xff] 0
        %415 = vst [vmem:[%s411 + $0x14] sm:$0xf] 0
        %416 = vst [vmem:[%s411 + $0x18] sm:$0xff] 0
        %417 = vst [vmem:[%s411 + $0x20] sm:$0xf] 0
        %418 = vst [vmem:[%s411 + $0x24] sm:$0xff] 0
        %419 = vst [vmem:[%s411 + $0x2c] sm:$0xf] 0
        %420 = vst [vmem:[%s411 + $0x30] sm:$0xff] 0
        %421 = vst [vmem:[%s411 + $0x38] sm:$0xf] 0
        %422 = vst [vmem:[%s411 + $0x3c] sm:$0xff] 0
        %423 = vst [vmem:[%s411 + $0x44] sm:$0xf] 0
        %424 = vst [vmem:[%s411 + $0x48] sm:$0xff] 0
        %425 = vst [vmem:[%s411 + $0x50] sm:$0xf] 0
        %426 = vst [vmem:[%s411 + $0x54] sm:$0xff] 0
        %427 = vst [vmem:[%s411 + $0x5c] sm:$0xf] 0
        %428 = vst [vmem:[%s411 + $0x60] sm:$0xff] 0
        %429 = vst [vmem:[%s411 + $0x68] sm:$0xf] 0
        %430 = vst [vmem:[%s411 + $0x6c] sm:$0xff] 0
        %431 = vst [vmem:[%s411 + $0x74] sm:$0xf] 0
        %s432 = scalar_lea.vmem [#allocation2], 120
        %433 = vst [vmem:[%s432] sm:$0xff] 0
        %434 = vst [vmem:[%s432 + $0x8] sm:$0xf] 0
        %435 = vst [vmem:[%s432 + $0x78] sm:$0xff] 0
        %436 = vst [vmem:[%s432 + $0x80] sm:$0xf] 0
        %437 = vst [vmem:[%s432 + $0xf0] sm:$0xff] 0
        %438 = vst [vmem:[%s432 + $0xf8] sm:$0xf] 0
        %439 = vst [vmem:[%s432 + $0x168] sm:$0xff] 0
        %440 = vst [vmem:[%s432 + $0x170] sm:$0xf] 0
        %441 = vst [vmem:[%s432 + $0x1e0] sm:$0xff] 0
        %442 = vst [vmem:[%s432 + $0x1e8] sm:$0xf] 0
        %443 = vst [vmem:[%s432 + $0x258] sm:$0xff] 0
        %444 = vst [vmem:[%s432 + $0x260] sm:$0xf] 0
        %445 = vst [vmem:[%s432 + $0x2d0] sm:$0xff] 0
        %446 = vst [vmem:[%s432 + $0x2d8] sm:$0xf] 0
        %447 = vst [vmem:[%s432 + $0x348] sm:$0xff] 0
        %448 = vst [vmem:[%s432 + $0x350] sm:$0xf] 0
        %s449 = scalar_lea.vmem [#allocation2], 228
        %450 = vst [vmem:[%s449] sm:$0xff] 0
        %451 = vst [vmem:[%s449 + $0x8] sm:$0xf] 0
        %452 = vst [vmem:[%s449 + $0x78] sm:$0xff] 0
        %453 = vst [vmem:[%s449 + $0x80] sm:$0xf] 0
        %454 = vst [vmem:[%s449 + $0xf0] sm:$0xff] 0
        %455 = vst [vmem:[%s449 + $0xf8] sm:$0xf] 0
        %456 = vst [vmem:[%s449 + $0x168] sm:$0xff] 0
        %457 = vst [vmem:[%s449 + $0x170] sm:$0xf] 0
        %458 = vst [vmem:[%s449 + $0x1e0] sm:$0xff] 0
        %459 = vst [vmem:[%s449 + $0x1e8] sm:$0xf] 0
        %460 = vst [vmem:[%s449 + $0x258] sm:$0xff] 0
        %461 = vst [vmem:[%s449 + $0x260] sm:$0xf] 0
        %462 = vst [vmem:[%s449 + $0x2d0] sm:$0xff] 0
        %463 = vst [vmem:[%s449 + $0x2d8] sm:$0xf] 0
        %464 = vst [vmem:[%s449 + $0x348] sm:$0xff] 0
        %465 = vst [vmem:[%s449 + $0x350] sm:$0xf] 0
        %v466 = vld [vmem:[%s373] sm:$0xf]
        %v467 = vld [vmem:[%s373 + $0x4] sm:$0xf]
        %v468 = vld [vmem:[%s373 + $0x8] sm:$0xf]
        %v469 = vld [vmem:[%s373 + $0xc] sm:$0xf]
        %v470 = vld [vmem:[%s373 + $0x10] sm:$0xf]
        %v471 = vld [vmem:[%s373 + $0x14] sm:$0xf]
        %v472 = vld [vmem:[%s373 + $0x18] sm:$0xf]
        %v473 = vld [vmem:[%s373 + $0x1c] sm:$0xf]
        %v474 = vld [vmem:[%s373 + $0x20] sm:$0xf]
        %v475 = vld [vmem:[%s373 + $0x24] sm:$0xf]
        %v476 = vld [vmem:[%s373 + $0x28] sm:$0xf]
        %v477 = vld [vmem:[%s373 + $0x2c] sm:$0xf]
        %v478 = vld [vmem:[%s373 + $0x30] sm:$0xf]
        %v479 = vld [vmem:[%s373 + $0x34] sm:$0xf]
        %v480 = vld [vmem:[%s373 + $0x38] sm:$0xf]
        %v481 = vld [vmem:[%s373 + $0x3c] sm:$0xf]
        %v482 = vld [vmem:[%s373 + $0x40] sm:$0xf]
        %v483 = vld [vmem:[%s373 + $0x44] sm:$0xf]
        %v484 = vld [vmem:[%s373 + $0x48] sm:$0xf]
        %v485 = vld [vmem:[%s373 + $0x4c] sm:$0xf]
        %v486 = vld [vmem:[%s373 + $0x50] sm:$0xf]
        %v487 = vld [vmem:[%s373 + $0x54] sm:$0xf]
        %v488 = vld [vmem:[%s373 + $0x58] sm:$0xf]
        %v489 = vld [vmem:[%s373 + $0x5c] sm:$0xf]
        %v490 = vld [vmem:[%s373 + $0x60] sm:$0xf]
        %v491 = vld [vmem:[%s373 + $0x64] sm:$0xf]
        %v492 = vld [vmem:[%s373 + $0x68] sm:$0xf]
        %v493 = vld [vmem:[%s373 + $0x6c] sm:$0xf]
        %v494 = vld [vmem:[%s373 + $0x70] sm:$0xf]
        %v495 = vld [vmem:[%s373 + $0x74] sm:$0xf]
        %v496 = vld [vmem:[%s373 + $0x78] sm:$0xf]
        %v497 = vld [vmem:[%s373 + $0x7c] sm:$0xf]
        %v498 = vld [vmem:[%s373 + $0x80] sm:$0xf]
        %v499 = vld [vmem:[%s373 + $0x84] sm:$0xf]
        %v500 = vld [vmem:[%s373 + $0x88] sm:$0xf]
        %v501 = vld [vmem:[%s373 + $0x8c] sm:$0xf]
        %v502 = vld [vmem:[%s373 + $0x90] sm:$0xf]
        %v503 = vld [vmem:[%s373 + $0x94] sm:$0xf]
        %v504 = vld [vmem:[%s373 + $0x98] sm:$0xf]
        %v505 = vld [vmem:[%s373 + $0x9c] sm:$0xf]
        %v506 = vld [vmem:[%s373 + $0xa0] sm:$0xf]
        %v507 = vld [vmem:[%s373 + $0xa4] sm:$0xf]
        %v508 = vld [vmem:[%s373 + $0xa8] sm:$0xf]
        %v509 = vld [vmem:[%s373 + $0xac] sm:$0xf]
        %v510 = vld [vmem:[%s373 + $0xb0] sm:$0xf]
        %v511 = vld [vmem:[%s373 + $0xb4] sm:$0xf]
        %v512 = vld [vmem:[%s373 + $0xb8] sm:$0xf]
        %v513 = vld [vmem:[%s373 + $0xbc] sm:$0xf]
        %v514 = vld [vmem:[%s373 + $0xc0] sm:$0xf]
        %v515 = vld [vmem:[%s373 + $0xc4] sm:$0xf]
        %v516 = vld [vmem:[%s373 + $0xc8] sm:$0xf]
        %v517 = vld [vmem:[%s373 + $0xcc] sm:$0xf]
        %v518 = vld [vmem:[%s373 + $0xd0] sm:$0xf]
        %v519 = vld [vmem:[%s373 + $0xd4] sm:$0xf]
        %v520 = vld [vmem:[%s373 + $0xd8] sm:$0xf]
        %v521 = vld [vmem:[%s373 + $0xdc] sm:$0xf]
        %v522 = vld [vmem:[%s373 + $0xe0] sm:$0xf]
        %v523 = vld [vmem:[%s373 + $0xe4] sm:$0xf]
        %v524 = vld [vmem:[%s373 + $0xe8] sm:$0xf]
        %v525 = vld [vmem:[%s373 + $0xec] sm:$0xf]
        %v526 = vld [vmem:[%s373 + $0xf0] sm:$0xf]
        %v527 = vld [vmem:[%s373 + $0xf4] sm:$0xf]
        %v528 = vld [vmem:[%s373 + $0xf8] sm:$0xf]
        %v529 = vld [vmem:[%s373 + $0xfc] sm:$0xf]
        %v530 = vld [vmem:[%s1] sm:$0xf]
        %v531 = vld [vmem:[%s1 + $0x4] sm:$0xf]
        %v532 = vld [vmem:[%s1 + $0x8] sm:$0xf]
        %v533 = vld [vmem:[%s1 + $0xc] sm:$0xf]
        %v534 = vld [vmem:[%s1 + $0x10] sm:$0xf]
        %v535 = vld [vmem:[%s1 + $0x14] sm:$0xf]
        %v536 = vld [vmem:[%s1 + $0x18] sm:$0xf]
        %v537 = vld [vmem:[%s1 + $0x1c] sm:$0xf]
        %v538 = vld [vmem:[%s1 + $0x20] sm:$0xf]
        %v539 = vld [vmem:[%s1 + $0x24] sm:$0xf]
        %v540 = vld [vmem:[%s1 + $0x28] sm:$0xf]
        %v541 = vld [vmem:[%s1 + $0x2c] sm:$0xf]
        %v542 = vld [vmem:[%s1 + $0x30] sm:$0xf]
        %v543 = vld [vmem:[%s1 + $0x34] sm:$0xf]
        %v544 = vld [vmem:[%s1 + $0x38] sm:$0xf]
        %v545 = vld [vmem:[%s1 + $0x3c] sm:$0xf]
        %v610 = vunpack.c.l.b16 %v466
        %v611 = vunpack.c.l.b16 %v467
        %v612 = vunpack.c.l.b16 %v468
        %v613 = vunpack.c.l.b16 %v469
        %v614 = vunpack.c.l.b16 %v470
        %v615 = vunpack.c.l.b16 %v471
        %v616 = vunpack.c.l.b16 %v472
        %v617 = vunpack.c.l.b16 %v473
        %v618 = vunpack.c.l.b16 %v474
        %v619 = vunpack.c.l.b16 %v475
        %v620 = vunpack.c.l.b16 %v476
        %v621 = vunpack.c.l.b16 %v477
        %v622 = vunpack.c.l.b16 %v478
        %v623 = vunpack.c.l.b16 %v479
        %v624 = vunpack.c.l.b16 %v480
        %v625 = vunpack.c.l.b16 %v481
        %v626 = vunpack.c.l.b16 %v482
        %v627 = vunpack.c.l.b16 %v483
        %v628 = vunpack.c.l.b16 %v484
        %v629 = vunpack.c.l.b16 %v485
        %v630 = vunpack.c.l.b16 %v486
        %v631 = vunpack.c.l.b16 %v487
        %v632 = vunpack.c.l.b16 %v488
        %v633 = vunpack.c.l.b16 %v489
        %v634 = vunpack.c.l.b16 %v490
        %v635 = vunpack.c.l.b16 %v491
        %v636 = vunpack.c.l.b16 %v492
        %v637 = vunpack.c.l.b16 %v493
        %v638 = vunpack.c.l.b16 %v494
        %v639 = vunpack.c.l.b16 %v495
        %v640 = vunpack.c.l.b16 %v496
        %v641 = vunpack.c.l.b16 %v497
        %v642 = vunpack.c.l.b16 %v498
        %v643 = vunpack.c.l.b16 %v499
        %v644 = vunpack.c.l.b16 %v500
        %v645 = vunpack.c.l.b16 %v501
        %v646 = vunpack.c.l.b16 %v502
        %v647 = vunpack.c.l.b16 %v503
        %v648 = vunpack.c.l.b16 %v504
        %v649 = vunpack.c.l.b16 %v505
        %v650 = vunpack.c.l.b16 %v506
        %v651 = vunpack.c.l.b16 %v507
        %v652 = vunpack.c.l.b16 %v508
        %v653 = vunpack.c.l.b16 %v509
        %v654 = vunpack.c.l.b16 %v510
        %v655 = vunpack.c.l.b16 %v511
        %v656 = vunpack.c.l.b16 %v512
        %v657 = vunpack.c.l.b16 %v513
        %v658 = vunpack.c.l.b16 %v514
        %v659 = vunpack.c.l.b16 %v515
        %v660 = vunpack.c.l.b16 %v516
        %v661 = vunpack.c.l.b16 %v517
        %v662 = vunpack.c.l.b16 %v518
        %v663 = vunpack.c.l.b16 %v519
        %v664 = vunpack.c.l.b16 %v520
        %v665 = vunpack.c.l.b16 %v521
        %v666 = vunpack.c.l.b16 %v522
        %v667 = vunpack.c.l.b16 %v523
        %v668 = vunpack.c.l.b16 %v524
        %v669 = vunpack.c.l.b16 %v525
        %v670 = vunpack.c.l.b16 %v526
        %v671 = vunpack.c.l.b16 %v527
        %v672 = vunpack.c.l.b16 %v528
        %v673 = vunpack.c.l.b16 %v529
        %v674 = vpack.c.b16 %v611, %v610
        %v675 = vpack.c.b16 %v613, %v612
        %v676 = vpack.c.b16 %v615, %v614
        %v677 = vpack.c.b16 %v617, %v616
        %v678 = vpack.c.b16 %v619, %v618
        %v679 = vpack.c.b16 %v621, %v620
        %v680 = vpack.c.b16 %v623, %v622
        %v681 = vpack.c.b16 %v625, %v624
        %v682 = vpack.c.b16 %v627, %v626
        %v683 = vpack.c.b16 %v629, %v628
        %v684 = vpack.c.b16 %v631, %v630
        %v685 = vpack.c.b16 %v633, %v632
        %v686 = vpack.c.b16 %v635, %v634
        %v687 = vpack.c.b16 %v637, %v636
        %v688 = vpack.c.b16 %v639, %v638
        %v689 = vpack.c.b16 %v641, %v640
        %v690 = vpack.c.b16 %v643, %v642
        %v691 = vpack.c.b16 %v645, %v644
        %v692 = vpack.c.b16 %v647, %v646
        %v693 = vpack.c.b16 %v649, %v648
        %v694 = vpack.c.b16 %v651, %v650
        %v695 = vpack.c.b16 %v653, %v652
        %v696 = vpack.c.b16 %v655, %v654
        %v697 = vpack.c.b16 %v657, %v656
        %v698 = vpack.c.b16 %v659, %v658
        %v699 = vpack.c.b16 %v661, %v660
        %v700 = vpack.c.b16 %v663, %v662
        %v701 = vpack.c.b16 %v665, %v664
        %v702 = vpack.c.b16 %v667, %v666
        %v703 = vpack.c.b16 %v669, %v668
        %v704 = vpack.c.b16 %v671, %v670
        %v705 = vpack.c.b16 %v673, %v672
        %v754 = vunpack.c.l.b16 %v530
        %v755 = vunpack.c.l.b16 %v531
        %v756 = vunpack.c.l.b16 %v532
        %v757 = vunpack.c.l.b16 %v533
        %v758 = vunpack.c.l.b16 %v534
        %v759 = vunpack.c.l.b16 %v535
        %v760 = vunpack.c.l.b16 %v536
        %v761 = vunpack.c.l.b16 %v537
        %v762 = vunpack.c.l.b16 %v538
        %v763 = vunpack.c.l.b16 %v539
        %v764 = vunpack.c.l.b16 %v540
        %v765 = vunpack.c.l.b16 %v541
        %v766 = vunpack.c.l.b16 %v542
        %v767 = vunpack.c.l.b16 %v543
        %v768 = vunpack.c.l.b16 %v544
        %v769 = vunpack.c.l.b16 %v545
        %v770 = vpack.c.b16 %v755, %v754
        %v771 = vpack.c.b16 %v757, %v756
        %v772 = vpack.c.b16 %v759, %v758
        %v773 = vpack.c.b16 %v761, %v760
        %v774 = vpack.c.b16 %v763, %v762
        %v775 = vpack.c.b16 %v765, %v764
        %v776 = vpack.c.b16 %v767, %v766
        %v777 = vpack.c.b16 %v769, %v768
        %786 = vmatpush.bf16.msra.mxu0 %v777
        %787 = vmatpush.bf16.msra.mxu0 %v776
        %788 = vmatpush.bf16.msra.mxu0 %v775
        %789 = vmatpush.bf16.msra.mxu0 %v774
        %790 = vmatpush.bf16.msra.mxu0 %v773
        %791 = vmatpush.bf16.msra.mxu0 %v772
        %792 = vmatpush.bf16.msra.mxu0 %v771
        %793 = vmatpush.bf16.msra.mxu0 %v770
        %794 = vmatmul.bf16.gmra.mxu0 %v674
        %v795 = vpop.f32.mrf.mxu0
        %v796 = vadd.f32 0.0, %v795
        %v797 = vpop.f32.mrf.mxu0
        %v798 = vadd.f32 0.0, %v797
        %799 = vmatmul.bf16.gmra.mxu0 %v675
        %v800 = vpop.f32.mrf.mxu0
        %v801 = vadd.f32 0.0, %v800
        %v802 = vpop.f32.mrf.mxu0
        %v803 = vadd.f32 0.0, %v802
        %804 = vmatmul.bf16.gmra.mxu0 %v676
        %v805 = vpop.f32.mrf.mxu0
        %v806 = vadd.f32 0.0, %v805
        %v807 = vpop.f32.mrf.mxu0
        %v808 = vadd.f32 0.0, %v807
        %809 = vmatmul.bf16.gmra.mxu0 %v677
        %v810 = vpop.f32.mrf.mxu0
        %v811 = vadd.f32 0.0, %v810
        %v812 = vpop.f32.mrf.mxu0
        %v813 = vadd.f32 0.0, %v812
        %814 = vmatmul.bf16.gmra.mxu0 %v678
        %v815 = vpop.f32.mrf.mxu0
        %v816 = vadd.f32 0.0, %v815
        %v817 = vpop.f32.mrf.mxu0
        %v818 = vadd.f32 0.0, %v817
        %819 = vmatmul.bf16.gmra.mxu0 %v679
        %v820 = vpop.f32.mrf.mxu0
        %v821 = vadd.f32 0.0, %v820
        %v822 = vpop.f32.mrf.mxu0
        %v823 = vadd.f32 0.0, %v822
        %824 = vmatmul.bf16.gmra.mxu0 %v680
        %v825 = vpop.f32.mrf.mxu0
        %v826 = vadd.f32 0.0, %v825
        %v827 = vpop.f32.mrf.mxu0
        %v828 = vadd.f32 0.0, %v827
        %829 = vmatmul.bf16.gmra.mxu0 %v681
        %v830 = vpop.f32.mrf.mxu0
        %v831 = vadd.f32 0.0, %v830
        %v832 = vpop.f32.mrf.mxu0
        %v833 = vadd.f32 0.0, %v832
        %834 = vmatmul.bf16.gmra.mxu0 %v682
        %v835 = vpop.f32.mrf.mxu0
        %v836 = vadd.f32 0.0, %v835
        %v837 = vpop.f32.mrf.mxu0
        %v838 = vadd.f32 0.0, %v837
        %839 = vmatmul.bf16.gmra.mxu0 %v683
        %v840 = vpop.f32.mrf.mxu0
        %v841 = vadd.f32 0.0, %v840
        %v842 = vpop.f32.mrf.mxu0
        %v843 = vadd.f32 0.0, %v842
        %844 = vmatmul.bf16.gmra.mxu0 %v684
        %v845 = vpop.f32.mrf.mxu0
        %v846 = vadd.f32 0.0, %v845
        %v847 = vpop.f32.mrf.mxu0
        %v848 = vadd.f32 0.0, %v847
        %849 = vmatmul.bf16.gmra.mxu0 %v685
        %v850 = vpop.f32.mrf.mxu0
        %v851 = vadd.f32 0.0, %v850
        %v852 = vpop.f32.mrf.mxu0
        %v853 = vadd.f32 0.0, %v852
        %854 = vmatmul.bf16.gmra.mxu0 %v686
        %v855 = vpop.f32.mrf.mxu0
        %v856 = vadd.f32 0.0, %v855
        %v857 = vpop.f32.mrf.mxu0
        %v858 = vadd.f32 0.0, %v857
        %859 = vmatmul.bf16.gmra.mxu0 %v687
        %v860 = vpop.f32.mrf.mxu0
        %v861 = vadd.f32 0.0, %v860
        %v862 = vpop.f32.mrf.mxu0
        %v863 = vadd.f32 0.0, %v862
        %864 = vmatmul.bf16.gmra.mxu0 %v688
        %v865 = vpop.f32.mrf.mxu0
        %v866 = vadd.f32 0.0, %v865
        %v867 = vpop.f32.mrf.mxu0
        %v868 = vadd.f32 0.0, %v867
        %869 = vmatmul.bf16.gmra.mxu0 %v689
        %v870 = vpop.f32.mrf.mxu0
        %v871 = vadd.f32 0.0, %v870
        %v872 = vpop.f32.mrf.mxu0
        %v873 = vadd.f32 0.0, %v872
        %874 = vmatmul.bf16.gmra.mxu0 %v690
        %v875 = vpop.f32.mrf.mxu0
        %v876 = vadd.f32 0.0, %v875
        %v877 = vpop.f32.mrf.mxu0
        %v878 = vadd.f32 0.0, %v877
        %879 = vmatmul.bf16.gmra.mxu0 %v691
        %v880 = vpop.f32.mrf.mxu0
        %v881 = vadd.f32 0.0, %v880
        %v882 = vpop.f32.mrf.mxu0
        %v883 = vadd.f32 0.0, %v882
        %884 = vmatmul.bf16.gmra.mxu0 %v692
        %v885 = vpop.f32.mrf.mxu0
        %v886 = vadd.f32 0.0, %v885
        %v887 = vpop.f32.mrf.mxu0
        %v888 = vadd.f32 0.0, %v887
        %889 = vmatmul.bf16.gmra.mxu0 %v693
        %v890 = vpop.f32.mrf.mxu0
        %v891 = vadd.f32 0.0, %v890
        %v892 = vpop.f32.mrf.mxu0
        %v893 = vadd.f32 0.0, %v892
        %894 = vmatmul.bf16.gmra.mxu0 %v694
        %v895 = vpop.f32.mrf.mxu0
        %v896 = vadd.f32 0.0, %v895
        %v897 = vpop.f32.mrf.mxu0
        %v898 = vadd.f32 0.0, %v897
        %899 = vmatmul.bf16.gmra.mxu0 %v695
        %v900 = vpop.f32.mrf.mxu0
        %v901 = vadd.f32 0.0, %v900
        %v902 = vpop.f32.mrf.mxu0
        %v903 = vadd.f32 0.0, %v902
        %904 = vmatmul.bf16.gmra.mxu0 %v696
        %v905 = vpop.f32.mrf.mxu0
        %v906 = vadd.f32 0.0, %v905
        %v907 = vpop.f32.mrf.mxu0
        %v908 = vadd.f32 0.0, %v907
        %909 = vmatmul.bf16.gmra.mxu0 %v697
        %v910 = vpop.f32.mrf.mxu0
        %v911 = vadd.f32 0.0, %v910
        %v912 = vpop.f32.mrf.mxu0
        %v913 = vadd.f32 0.0, %v912
        %914 = vmatmul.bf16.gmra.mxu0 %v698
        %v915 = vpop.f32.mrf.mxu0
        %v916 = vadd.f32 0.0, %v915
        %v917 = vpop.f32.mrf.mxu0
        %v918 = vadd.f32 0.0, %v917
        %919 = vmatmul.bf16.gmra.mxu0 %v699
        %v920 = vpop.f32.mrf.mxu0
        %v921 = vadd.f32 0.0, %v920
        %v922 = vpop.f32.mrf.mxu0
        %v923 = vadd.f32 0.0, %v922
        %924 = vmatmul.bf16.gmra.mxu0 %v700
        %v925 = vpop.f32.mrf.mxu0
        %v926 = vadd.f32 0.0, %v925
        %v927 = vpop.f32.mrf.mxu0
        %v928 = vadd.f32 0.0, %v927
        %929 = vmatmul.bf16.gmra.mxu0 %v701
        %v930 = vpop.f32.mrf.mxu0
        %v931 = vadd.f32 0.0, %v930
        %v932 = vpop.f32.mrf.mxu0
        %v933 = vadd.f32 0.0, %v932
        %934 = vmatmul.bf16.gmra.mxu0 %v702
        %v935 = vpop.f32.mrf.mxu0
        %v936 = vadd.f32 0.0, %v935
        %v937 = vpop.f32.mrf.mxu0
        %v938 = vadd.f32 0.0, %v937
        %939 = vmatmul.bf16.gmra.mxu0 %v703
        %v940 = vpop.f32.mrf.mxu0
        %v941 = vadd.f32 0.0, %v940
        %v942 = vpop.f32.mrf.mxu0
        %v943 = vadd.f32 0.0, %v942
        %944 = vmatmul.bf16.gmra.mxu0 %v704
        %v945 = vpop.f32.mrf.mxu0
        %v946 = vadd.f32 0.0, %v945
        %v947 = vpop.f32.mrf.mxu0
        %v948 = vadd.f32 0.0, %v947
        %949 = vmatmul.bf16.gmra.mxu0 %v705
        %v950 = vpop.f32.mrf.mxu0
        %v951 = vadd.f32 0.0, %v950
        %v952 = vpop.f32.mrf.mxu0
        %v953 = vadd.f32 0.0, %v952
        %954 = vdwg.mxu0
        %v955 = vld [vmem:[%s4] sm:$0x1]
        %v957 = vperm.slane %v955, 0
        %v959 = vmul.f32 %v796, %v957
        %v960 = vmul.f32 %v798, %v957
        %v961 = vmul.f32 %v801, %v957
        %v962 = vmul.f32 %v803, %v957
        %v963 = vmul.f32 %v806, %v957
        %v964 = vmul.f32 %v808, %v957
        %v965 = vmul.f32 %v811, %v957
        %v966 = vmul.f32 %v813, %v957
        %v967 = vmul.f32 %v816, %v957
        %v968 = vmul.f32 %v818, %v957
        %v969 = vmul.f32 %v821, %v957
        %v970 = vmul.f32 %v823, %v957
        %v971 = vmul.f32 %v826, %v957
        %v972 = vmul.f32 %v828, %v957
        %v973 = vmul.f32 %v831, %v957
        %v974 = vmul.f32 %v833, %v957
        %v975 = vmul.f32 %v836, %v957
        %v976 = vmul.f32 %v838, %v957
        %v977 = vmul.f32 %v841, %v957
        %v978 = vmul.f32 %v843, %v957
        %v979 = vmul.f32 %v846, %v957
        %v980 = vmul.f32 %v848, %v957
        %v981 = vmul.f32 %v851, %v957
        %v982 = vmul.f32 %v853, %v957
        %v983 = vmul.f32 %v856, %v957
        %v984 = vmul.f32 %v858, %v957
        %v985 = vmul.f32 %v861, %v957
        %v986 = vmul.f32 %v863, %v957
        %v987 = vmul.f32 %v866, %v957
        %v988 = vmul.f32 %v868, %v957
        %v989 = vmul.f32 %v871, %v957
        %v990 = vmul.f32 %v873, %v957
        %v991 = vmul.f32 %v876, %v957
        %v992 = vmul.f32 %v878, %v957
        %v993 = vmul.f32 %v881, %v957
        %v994 = vmul.f32 %v883, %v957
        %v995 = vmul.f32 %v886, %v957
        %v996 = vmul.f32 %v888, %v957
        %v997 = vmul.f32 %v891, %v957
        %v998 = vmul.f32 %v893, %v957
        %v999 = vmul.f32 %v896, %v957
        %v1000 = vmul.f32 %v898, %v957
        %v1001 = vmul.f32 %v901, %v957
        %v1002 = vmul.f32 %v903, %v957
        %v1003 = vmul.f32 %v906, %v957
        %v1004 = vmul.f32 %v908, %v957
        %v1005 = vmul.f32 %v911, %v957
        %v1006 = vmul.f32 %v913, %v957
        %v1007 = vmul.f32 %v916, %v957
        %v1008 = vmul.f32 %v918, %v957
        %v1009 = vmul.f32 %v921, %v957
        %v1010 = vmul.f32 %v923, %v957
        %v1011 = vmul.f32 %v926, %v957
        %v1012 = vmul.f32 %v928, %v957
        %v1013 = vmul.f32 %v931, %v957
        %v1014 = vmul.f32 %v933, %v957
        %v1015 = vmul.f32 %v936, %v957
        %v1016 = vmul.f32 %v938, %v957
        %v1017 = vmul.f32 %v941, %v957
        %v1018 = vmul.f32 %v943, %v957
        %v1019 = vmul.f32 %v946, %v957
        %v1020 = vmul.f32 %v948, %v957
        %v1021 = vmul.f32 %v951, %v957
        %v1022 = vmul.f32 %v953, %v957
        %v1023 = vld [vmem:[%s5] sm:$0x1]
        %v1025 = vperm.slane %v1023, 0
        %v1027 = vadd.f32 %v959, %v1025
        %v1028 = vadd.f32 %v960, %v1025
        %v1029 = vadd.f32 %v961, %v1025
        %v1030 = vadd.f32 %v962, %v1025
        %v1031 = vadd.f32 %v963, %v1025
        %v1032 = vadd.f32 %v964, %v1025
        %v1033 = vadd.f32 %v965, %v1025
        %v1034 = vadd.f32 %v966, %v1025
        %v1035 = vadd.f32 %v967, %v1025
        %v1036 = vadd.f32 %v968, %v1025
        %v1037 = vadd.f32 %v969, %v1025
        %v1038 = vadd.f32 %v970, %v1025
        %v1039 = vadd.f32 %v971, %v1025
        %v1040 = vadd.f32 %v972, %v1025
        %v1041 = vadd.f32 %v973, %v1025
        %v1042 = vadd.f32 %v974, %v1025
        %v1043 = vadd.f32 %v975, %v1025
        %v1044 = vadd.f32 %v976, %v1025
        %v1045 = vadd.f32 %v977, %v1025
        %v1046 = vadd.f32 %v978, %v1025
        %v1047 = vadd.f32 %v979, %v1025
        %v1048 = vadd.f32 %v980, %v1025
        %v1049 = vadd.f32 %v981, %v1025
        %v1050 = vadd.f32 %v982, %v1025
        %v1051 = vadd.f32 %v983, %v1025
        %v1052 = vadd.f32 %v984, %v1025
        %v1053 = vadd.f32 %v985, %v1025
        %v1054 = vadd.f32 %v986, %v1025
        %v1055 = vadd.f32 %v987, %v1025
        %v1056 = vadd.f32 %v988, %v1025
        %v1057 = vadd.f32 %v989, %v1025
        %v1058 = vadd.f32 %v990, %v1025
        %v1059 = vadd.f32 %v991, %v1025
        %v1060 = vadd.f32 %v992, %v1025
        %v1061 = vadd.f32 %v993, %v1025
        %v1062 = vadd.f32 %v994, %v1025
        %v1063 = vadd.f32 %v995, %v1025
        %v1064 = vadd.f32 %v996, %v1025
        %v1065 = vadd.f32 %v997, %v1025
        %v1066 = vadd.f32 %v998, %v1025
        %v1067 = vadd.f32 %v999, %v1025
        %v1068 = vadd.f32 %v1000, %v1025
        %v1069 = vadd.f32 %v1001, %v1025
        %v1070 = vadd.f32 %v1002, %v1025
        %v1071 = vadd.f32 %v1003, %v1025
        %v1072 = vadd.f32 %v1004, %v1025
        %v1073 = vadd.f32 %v1005, %v1025
        %v1074 = vadd.f32 %v1006, %v1025
        %v1075 = vadd.f32 %v1007, %v1025
        %v1076 = vadd.f32 %v1008, %v1025
        %v1077 = vadd.f32 %v1009, %v1025
        %v1078 = vadd.f32 %v1010, %v1025
        %v1079 = vadd.f32 %v1011, %v1025
        %v1080 = vadd.f32 %v1012, %v1025
        %v1081 = vadd.f32 %v1013, %v1025
        %v1082 = vadd.f32 %v1014, %v1025
        %v1083 = vadd.f32 %v1015, %v1025
        %v1084 = vadd.f32 %v1016, %v1025
        %v1085 = vadd.f32 %v1017, %v1025
        %v1086 = vadd.f32 %v1018, %v1025
        %v1087 = vadd.f32 %v1019, %v1025
        %v1088 = vadd.f32 %v1020, %v1025
        %v1089 = vadd.f32 %v1021, %v1025
        %v1090 = vadd.f32 %v1022, %v1025
        %v1091 = vmax.f32 %v1027, 0.0
        %v1092 = vmax.f32 %v1028, 0.0
        %v1093 = vmax.f32 %v1029, 0.0
        %v1094 = vmax.f32 %v1030, 0.0
        %v1095 = vmax.f32 %v1031, 0.0
        %v1096 = vmax.f32 %v1032, 0.0
        %v1097 = vmax.f32 %v1033, 0.0
        %v1098 = vmax.f32 %v1034, 0.0
        %v1099 = vmax.f32 %v1035, 0.0
        %v1100 = vmax.f32 %v1036, 0.0
        %v1101 = vmax.f32 %v1037, 0.0
        %v1102 = vmax.f32 %v1038, 0.0
        %v1103 = vmax.f32 %v1039, 0.0
        %v1104 = vmax.f32 %v1040, 0.0
        %v1105 = vmax.f32 %v1041, 0.0
        %v1106 = vmax.f32 %v1042, 0.0
        %v1107 = vmax.f32 %v1043, 0.0
        %v1108 = vmax.f32 %v1044, 0.0
        %v1109 = vmax.f32 %v1045, 0.0
        %v1110 = vmax.f32 %v1046, 0.0
        %v1111 = vmax.f32 %v1047, 0.0
        %v1112 = vmax.f32 %v1048, 0.0
        %v1113 = vmax.f32 %v1049, 0.0
        %v1114 = vmax.f32 %v1050, 0.0
        %v1115 = vmax.f32 %v1051, 0.0
        %v1116 = vmax.f32 %v1052, 0.0
        %v1117 = vmax.f32 %v1053, 0.0
        %v1118 = vmax.f32 %v1054, 0.0
        %v1119 = vmax.f32 %v1055, 0.0
        %v1120 = vmax.f32 %v1056, 0.0
        %v1121 = vmax.f32 %v1057, 0.0
        %v1122 = vmax.f32 %v1058, 0.0
        %v1123 = vmax.f32 %v1059, 0.0
        %v1124 = vmax.f32 %v1060, 0.0
        %v1125 = vmax.f32 %v1061, 0.0
        %v1126 = vmax.f32 %v1062, 0.0
        %v1127 = vmax.f32 %v1063, 0.0
        %v1128 = vmax.f32 %v1064, 0.0
        %v1129 = vmax.f32 %v1065, 0.0
        %v1130 = vmax.f32 %v1066, 0.0
        %v1131 = vmax.f32 %v1067, 0.0
        %v1132 = vmax.f32 %v1068, 0.0
        %v1133 = vmax.f32 %v1069, 0.0
        %v1134 = vmax.f32 %v1070, 0.0
        %v1135 = vmax.f32 %v1071, 0.0
        %v1136 = vmax.f32 %v1072, 0.0
        %v1137 = vmax.f32 %v1073, 0.0
        %v1138 = vmax.f32 %v1074, 0.0
        %v1139 = vmax.f32 %v1075, 0.0
        %v1140 = vmax.f32 %v1076, 0.0
        %v1141 = vmax.f32 %v1077, 0.0
        %v1142 = vmax.f32 %v1078, 0.0
        %v1143 = vmax.f32 %v1079, 0.0
        %v1144 = vmax.f32 %v1080, 0.0
        %v1145 = vmax.f32 %v1081, 0.0
        %v1146 = vmax.f32 %v1082, 0.0
        %v1147 = vmax.f32 %v1083, 0.0
        %v1148 = vmax.f32 %v1084, 0.0
        %v1149 = vmax.f32 %v1085, 0.0
        %v1150 = vmax.f32 %v1086, 0.0
        %v1151 = vmax.f32 %v1087, 0.0
        %v1152 = vmax.f32 %v1088, 0.0
        %v1153 = vmax.f32 %v1089, 0.0
        %v1154 = vmax.f32 %v1090, 0.0
        %v1219 = vrot.slane %v1091, 7
        %v1220 = vrot.slane %v1092, 7
        %v1221 = vrot.slane %v1093, 7
        %v1222 = vrot.slane %v1094, 7
        %v1223 = vrot.slane %v1095, 7
        %v1224 = vrot.slane %v1096, 7
        %v1225 = vrot.slane %v1097, 7
        %v1226 = vrot.slane %v1098, 7
        %v1227 = vrot.slane %v1099, 7
        %v1228 = vrot.slane %v1100, 7
        %v1229 = vrot.slane %v1101, 7
        %v1230 = vrot.slane %v1102, 7
        %v1231 = vrot.slane %v1103, 7
        %v1232 = vrot.slane %v1104, 7
        %v1233 = vrot.slane %v1105, 7
        %v1234 = vrot.slane %v1106, 7
        %v1235 = vrot.slane %v1107, 7
        %v1236 = vrot.slane %v1108, 7
        %v1237 = vrot.slane %v1109, 7
        %v1238 = vrot.slane %v1110, 7
        %v1239 = vrot.slane %v1111, 7
        %v1240 = vrot.slane %v1112, 7
        %v1241 = vrot.slane %v1113, 7
        %v1242 = vrot.slane %v1114, 7
        %v1243 = vrot.slane %v1115, 7
        %v1244 = vrot.slane %v1116, 7
        %v1245 = vrot.slane %v1117, 7
        %v1246 = vrot.slane %v1118, 7
        %v1247 = vrot.slane %v1119, 7
        %v1248 = vrot.slane %v1120, 7
        %v1249 = vrot.slane %v1121, 7
        %v1250 = vrot.slane %v1122, 7
        %v1251 = vrot.slane %v1123, 7
        %v1252 = vrot.slane %v1124, 7
        %v1253 = vrot.slane %v1125, 7
        %v1254 = vrot.slane %v1126, 7
        %v1255 = vrot.slane %v1127, 7
        %v1256 = vrot.slane %v1128, 7
        %v1257 = vrot.slane %v1129, 7
        %v1258 = vrot.slane %v1130, 7
        %v1259 = vrot.slane %v1131, 7
        %v1260 = vrot.slane %v1132, 7
        %v1261 = vrot.slane %v1133, 7
        %v1262 = vrot.slane %v1134, 7
        %v1263 = vrot.slane %v1135, 7
        %v1264 = vrot.slane %v1136, 7
        %v1265 = vrot.slane %v1137, 7
        %v1266 = vrot.slane %v1138, 7
        %v1267 = vrot.slane %v1139, 7
        %v1268 = vrot.slane %v1140, 7
        %v1269 = vrot.slane %v1141, 7
        %v1270 = vrot.slane %v1142, 7
        %v1271 = vrot.slane %v1143, 7
        %v1272 = vrot.slane %v1144, 7
        %v1273 = vrot.slane %v1145, 7
        %v1274 = vrot.slane %v1146, 7
        %v1275 = vrot.slane %v1147, 7
        %v1276 = vrot.slane %v1148, 7
        %v1277 = vrot.slane %v1149, 7
        %v1278 = vrot.slane %v1150, 7
        %v1279 = vrot.slane %v1151, 7
        %v1280 = vrot.slane %v1152, 7
        %v1281 = vrot.slane %v1153, 7
        %v1282 = vrot.slane %v1154, 7
        %vm1347 = vcmask 1040384
        %v1348 = vsel %vm1347, 0.0, %v1219
        %v1349 = vsel %vm1347, 0.0, %v1220
        %v1350 = vsel %vm1347, 0.0, %v1221
        %v1351 = vsel %vm1347, 0.0, %v1222
        %v1352 = vsel %vm1347, 0.0, %v1223
        %v1353 = vsel %vm1347, 0.0, %v1224
        %v1354 = vsel %vm1347, 0.0, %v1225
        %v1355 = vsel %vm1347, 0.0, %v1226
        %v1356 = vsel %vm1347, 0.0, %v1227
        %v1357 = vsel %vm1347, 0.0, %v1228
        %v1358 = vsel %vm1347, 0.0, %v1229
        %v1359 = vsel %vm1347, 0.0, %v1230
        %v1360 = vsel %vm1347, 0.0, %v1231
        %v1361 = vsel %vm1347, 0.0, %v1232
        %v1362 = vsel %vm1347, 0.0, %v1233
        %v1363 = vsel %vm1347, 0.0, %v1234
        %v1364 = vsel %vm1347, 0.0, %v1235
        %v1365 = vsel %vm1347, 0.0, %v1236
        %v1366 = vsel %vm1347, 0.0, %v1237
        %v1367 = vsel %vm1347, 0.0, %v1238
        %v1368 = vsel %vm1347, 0.0, %v1239
        %v1369 = vsel %vm1347, 0.0, %v1240
        %v1370 = vsel %vm1347, 0.0, %v1241
        %v1371 = vsel %vm1347, 0.0, %v1242
        %v1372 = vsel %vm1347, 0.0, %v1243
        %v1373 = vsel %vm1347, 0.0, %v1244
        %v1374 = vsel %vm1347, 0.0, %v1245
        %v1375 = vsel %vm1347, 0.0, %v1246
        %v1376 = vsel %vm1347, 0.0, %v1247
        %v1377 = vsel %vm1347, 0.0, %v1248
        %v1378 = vsel %vm1347, 0.0, %v1249
        %v1379 = vsel %vm1347, 0.0, %v1250
        %v1380 = vsel %vm1347, 0.0, %v1251
        %v1381 = vsel %vm1347, 0.0, %v1252
        %v1382 = vsel %vm1347, 0.0, %v1253
        %v1383 = vsel %vm1347, 0.0, %v1254
        %v1384 = vsel %vm1347, 0.0, %v1255
        %v1385 = vsel %vm1347, 0.0, %v1256
        %v1386 = vsel %vm1347, 0.0, %v1257
        %v1387 = vsel %vm1347, 0.0, %v1258
        %v1388 = vsel %vm1347, 0.0, %v1259
        %v1389 = vsel %vm1347, 0.0, %v1260
        %v1390 = vsel %vm1347, 0.0, %v1261
        %v1391 = vsel %vm1347, 0.0, %v1262
        %v1392 = vsel %vm1347, 0.0, %v1263
        %v1393 = vsel %vm1347, 0.0, %v1264
        %v1394 = vsel %vm1347, 0.0, %v1265
        %v1395 = vsel %vm1347, 0.0, %v1266
        %v1396 = vsel %vm1347, 0.0, %v1267
        %v1397 = vsel %vm1347, 0.0, %v1268
        %v1398 = vsel %vm1347, 0.0, %v1269
        %v1399 = vsel %vm1347, 0.0, %v1270
        %v1400 = vsel %vm1347, 0.0, %v1271
        %v1401 = vsel %vm1347, 0.0, %v1272
        %v1402 = vsel %vm1347, 0.0, %v1273
        %v1403 = vsel %vm1347, 0.0, %v1274
        %v1404 = vsel %vm1347, 0.0, %v1275
        %v1405 = vsel %vm1347, 0.0, %v1276
        %v1406 = vsel %vm1347, 0.0, %v1277
        %v1407 = vsel %vm1347, 0.0, %v1278
        %v1408 = vsel %vm1347, 0.0, %v1279
        %v1409 = vsel %vm1347, 0.0, %v1280
        %v1410 = vsel %vm1347, 0.0, %v1281
        %v1411 = vsel %vm1347, 0.0, %v1282
        %v1412 = vrot.slane %v1091, 1
        %v1413 = vrot.slane %v1092, 1
        %v1414 = vrot.slane %v1093, 1
        %v1415 = vrot.slane %v1094, 1
        %v1416 = vrot.slane %v1095, 1
        %v1417 = vrot.slane %v1096, 1
        %v1418 = vrot.slane %v1097, 1
        %v1419 = vrot.slane %v1098, 1
        %v1420 = vrot.slane %v1099, 1
        %v1421 = vrot.slane %v1100, 1
        %v1422 = vrot.slane %v1101, 1
        %v1423 = vrot.slane %v1102, 1
        %v1424 = vrot.slane %v1103, 1
        %v1425 = vrot.slane %v1104, 1
        %v1426 = vrot.slane %v1105, 1
        %v1427 = vrot.slane %v1106, 1
        %v1428 = vrot.slane %v1107, 1
        %v1429 = vrot.slane %v1108, 1
        %v1430 = vrot.slane %v1109, 1
        %v1431 = vrot.slane %v1110, 1
        %v1432 = vrot.slane %v1111, 1
        %v1433 = vrot.slane %v1112, 1
        %v1434 = vrot.slane %v1113, 1
        %v1435 = vrot.slane %v1114, 1
        %v1436 = vrot.slane %v1115, 1
        %v1437 = vrot.slane %v1116, 1
        %v1438 = vrot.slane %v1117, 1
        %v1439 = vrot.slane %v1118, 1
        %v1440 = vrot.slane %v1119, 1
        %v1441 = vrot.slane %v1120, 1
        %v1442 = vrot.slane %v1121, 1
        %v1443 = vrot.slane %v1122, 1
        %v1444 = vrot.slane %v1123, 1
        %v1445 = vrot.slane %v1124, 1
        %v1446 = vrot.slane %v1125, 1
        %v1447 = vrot.slane %v1126, 1
        %v1448 = vrot.slane %v1127, 1
        %v1449 = vrot.slane %v1128, 1
        %v1450 = vrot.slane %v1129, 1
        %v1451 = vrot.slane %v1130, 1
        %v1452 = vrot.slane %v1131, 1
        %v1453 = vrot.slane %v1132, 1
        %v1454 = vrot.slane %v1133, 1
        %v1455 = vrot.slane %v1134, 1
        %v1456 = vrot.slane %v1135, 1
        %v1457 = vrot.slane %v1136, 1
        %v1458 = vrot.slane %v1137, 1
        %v1459 = vrot.slane %v1138, 1
        %v1460 = vrot.slane %v1139, 1
        %v1461 = vrot.slane %v1140, 1
        %v1462 = vrot.slane %v1141, 1
        %v1463 = vrot.slane %v1142, 1
        %v1464 = vrot.slane %v1143, 1
        %v1465 = vrot.slane %v1144, 1
        %v1466 = vrot.slane %v1145, 1
        %v1467 = vrot.slane %v1146, 1
        %v1468 = vrot.slane %v1147, 1
        %v1469 = vrot.slane %v1148, 1
        %v1470 = vrot.slane %v1149, 1
        %v1471 = vrot.slane %v1150, 1
        %v1472 = vrot.slane %v1151, 1
        %v1473 = vrot.slane %v1152, 1
        %v1474 = vrot.slane %v1153, 1
        %v1475 = vrot.slane %v1154, 1
        %vm1540 = vcmask 1046528
        %v1541 = vsel %vm1540, %v1412, 0.0
        %v1542 = vsel %vm1540, %v1413, 0.0
        %v1543 = vsel %vm1540, %v1414, 0.0
        %v1544 = vsel %vm1540, %v1415, 0.0
        %v1545 = vsel %vm1540, %v1416, 0.0
        %v1546 = vsel %vm1540, %v1417, 0.0
        %v1547 = vsel %vm1540, %v1418, 0.0
        %v1548 = vsel %vm1540, %v1419, 0.0
        %v1549 = vsel %vm1540, %v1420, 0.0
        %v1550 = vsel %vm1540, %v1421, 0.0
        %v1551 = vsel %vm1540, %v1422, 0.0
        %v1552 = vsel %vm1540, %v1423, 0.0
        %v1553 = vsel %vm1540, %v1424, 0.0
        %v1554 = vsel %vm1540, %v1425, 0.0
        %v1555 = vsel %vm1540, %v1426, 0.0
        %v1556 = vsel %vm1540, %v1427, 0.0
        %v1557 = vsel %vm1540, %v1428, 0.0
        %v1558 = vsel %vm1540, %v1429, 0.0
        %v1559 = vsel %vm1540, %v1430, 0.0
        %v1560 = vsel %vm1540, %v1431, 0.0
        %v1561 = vsel %vm1540, %v1432, 0.0
        %v1562 = vsel %vm1540, %v1433, 0.0
        %v1563 = vsel %vm1540, %v1434, 0.0
        %v1564 = vsel %vm1540, %v1435, 0.0
        %v1565 = vsel %vm1540, %v1436, 0.0
        %v1566 = vsel %vm1540, %v1437, 0.0
        %v1567 = vsel %vm1540, %v1438, 0.0
        %v1568 = vsel %vm1540, %v1439, 0.0
        %v1569 = vsel %vm1540, %v1440, 0.0
        %v1570 = vsel %vm1540, %v1441, 0.0
        %v1571 = vsel %vm1540, %v1442, 0.0
        %v1572 = vsel %vm1540, %v1443, 0.0
        %v1573 = vsel %vm1540, %v1444, 0.0
        %v1574 = vsel %vm1540, %v1445, 0.0
        %v1575 = vsel %vm1540, %v1446, 0.0
        %v1576 = vsel %vm1540, %v1447, 0.0
        %v1577 = vsel %vm1540, %v1448, 0.0
        %v1578 = vsel %vm1540, %v1449, 0.0
        %v1579 = vsel %vm1540, %v1450, 0.0
        %v1580 = vsel %vm1540, %v1451, 0.0
        %v1581 = vsel %vm1540, %v1452, 0.0
        %v1582 = vsel %vm1540, %v1453, 0.0
        %v1583 = vsel %vm1540, %v1454, 0.0
        %v1584 = vsel %vm1540, %v1455, 0.0
        %v1585 = vsel %vm1540, %v1456, 0.0
        %v1586 = vsel %vm1540, %v1457, 0.0
        %v1587 = vsel %vm1540, %v1458, 0.0
        %v1588 = vsel %vm1540, %v1459, 0.0
        %v1589 = vsel %vm1540, %v1460, 0.0
        %v1590 = vsel %vm1540, %v1461, 0.0
        %v1591 = vsel %vm1540, %v1462, 0.0
        %v1592 = vsel %vm1540, %v1463, 0.0
        %v1593 = vsel %vm1540, %v1464, 0.0
        %v1594 = vsel %vm1540, %v1465, 0.0
        %v1595 = vsel %vm1540, %v1466, 0.0
        %v1596 = vsel %vm1540, %v1467, 0.0
        %v1597 = vsel %vm1540, %v1468, 0.0
        %v1598 = vsel %vm1540, %v1469, 0.0
        %v1599 = vsel %vm1540, %v1470, 0.0
        %v1600 = vsel %vm1540, %v1471, 0.0
        %v1601 = vsel %vm1540, %v1472, 0.0
        %v1602 = vsel %vm1540, %v1473, 0.0
        %v1603 = vsel %vm1540, %v1474, 0.0
        %v1604 = vsel %vm1540, %v1475, 0.0
        %v1605 = vpack.c.bf16 %v1091, %v1348
        %v1606 = vpack.c.bf16 %v1541, %v1541
        %v1607 = vpack.c.bf16 %v1092, %v1349
        %v1608 = vpack.c.bf16 %v1542, %v1542
        %v1609 = vpack.c.bf16 %v1093, %v1350
        %v1610 = vpack.c.bf16 %v1543, %v1543
        %v1611 = vpack.c.bf16 %v1094, %v1351
        %v1612 = vpack.c.bf16 %v1544, %v1544
        %v1613 = vpack.c.bf16 %v1095, %v1352
        %v1614 = vpack.c.bf16 %v1545, %v1545
        %v1615 = vpack.c.bf16 %v1096, %v1353
        %v1616 = vpack.c.bf16 %v1546, %v1546
        %v1617 = vpack.c.bf16 %v1097, %v1354
        %v1618 = vpack.c.bf16 %v1547, %v1547
        %v1619 = vpack.c.bf16 %v1098, %v1355
        %v1620 = vpack.c.bf16 %v1548, %v1548
        %v1621 = vpack.c.bf16 %v1099, %v1356
        %v1622 = vpack.c.bf16 %v1549, %v1549
        %v1623 = vpack.c.bf16 %v1100, %v1357
        %v1624 = vpack.c.bf16 %v1550, %v1550
        %v1625 = vpack.c.bf16 %v1101, %v1358
        %v1626 = vpack.c.bf16 %v1551, %v1551
        %v1627 = vpack.c.bf16 %v1102, %v1359
        %v1628 = vpack.c.bf16 %v1552, %v1552
        %v1629 = vpack.c.bf16 %v1103, %v1360
        %v1630 = vpack.c.bf16 %v1553, %v1553
        %v1631 = vpack.c.bf16 %v1104, %v1361
        %v1632 = vpack.c.bf16 %v1554, %v1554
        %v1633 = vpack.c.bf16 %v1105, %v1362
        %v1634 = vpack.c.bf16 %v1555, %v1555
        %v1635 = vpack.c.bf16 %v1106, %v1363
        %v1636 = vpack.c.bf16 %v1556, %v1556
        %v1637 = vpack.c.bf16 %v1107, %v1364
        %v1638 = vpack.c.bf16 %v1557, %v1557
        %v1639 = vpack.c.bf16 %v1108, %v1365
        %v1640 = vpack.c.bf16 %v1558, %v1558
        %v1641 = vpack.c.bf16 %v1109, %v1366
        %v1642 = vpack.c.bf16 %v1559, %v1559
        %v1643 = vpack.c.bf16 %v1110, %v1367
        %v1644 = vpack.c.bf16 %v1560, %v1560
        %v1645 = vpack.c.bf16 %v1111, %v1368
        %v1646 = vpack.c.bf16 %v1561, %v1561
        %v1647 = vpack.c.bf16 %v1112, %v1369
        %v1648 = vpack.c.bf16 %v1562, %v1562
        %v1649 = vpack.c.bf16 %v1113, %v1370
        %v1650 = vpack.c.bf16 %v1563, %v1563
        %v1651 = vpack.c.bf16 %v1114, %v1371
        %v1652 = vpack.c.bf16 %v1564, %v1564
        %v1653 = vpack.c.bf16 %v1115, %v1372
        %v1654 = vpack.c.bf16 %v1565, %v1565
        %v1655 = vpack.c.bf16 %v1116, %v1373
        %v1656 = vpack.c.bf16 %v1566, %v1566
        %v1657 = vpack.c.bf16 %v1117, %v1374
        %v1658 = vpack.c.bf16 %v1567, %v1567
        %v1659 = vpack.c.bf16 %v1118, %v1375
        %v1660 = vpack.c.bf16 %v1568, %v1568
        %v1661 = vpack.c.bf16 %v1119, %v1376
        %v1662 = vpack.c.bf16 %v1569, %v1569
        %v1663 = vpack.c.bf16 %v1120, %v1377
        %v1664 = vpack.c.bf16 %v1570, %v1570
        %v1665 = vpack.c.bf16 %v1121, %v1378
        %v1666 = vpack.c.bf16 %v1571, %v1571
        %v1667 = vpack.c.bf16 %v1122, %v1379
        %v1668 = vpack.c.bf16 %v1572, %v1572
        %v1669 = vpack.c.bf16 %v1123, %v1380
        %v1670 = vpack.c.bf16 %v1573, %v1573
        %v1671 = vpack.c.bf16 %v1124, %v1381
        %v1672 = vpack.c.bf16 %v1574, %v1574
        %v1673 = vpack.c.bf16 %v1125, %v1382
        %v1674 = vpack.c.bf16 %v1575, %v1575
        %v1675 = vpack.c.bf16 %v1126, %v1383
        %v1676 = vpack.c.bf16 %v1576, %v1576
        %v1677 = vpack.c.bf16 %v1127, %v1384
        %v1678 = vpack.c.bf16 %v1577, %v1577
        %v1679 = vpack.c.bf16 %v1128, %v1385
        %v1680 = vpack.c.bf16 %v1578, %v1578
        %v1681 = vpack.c.bf16 %v1129, %v1386
        %v1682 = vpack.c.bf16 %v1579, %v1579
        %v1683 = vpack.c.bf16 %v1130, %v1387
        %v1684 = vpack.c.bf16 %v1580, %v1580
        %v1685 = vpack.c.bf16 %v1131, %v1388
        %v1686 = vpack.c.bf16 %v1581, %v1581
        %v1687 = vpack.c.bf16 %v1132, %v1389
        %v1688 = vpack.c.bf16 %v1582, %v1582
        %v1689 = vpack.c.bf16 %v1133, %v1390
        %v1690 = vpack.c.bf16 %v1583, %v1583
        %v1691 = vpack.c.bf16 %v1134, %v1391
        %v1692 = vpack.c.bf16 %v1584, %v1584
        %v1693 = vpack.c.bf16 %v1135, %v1392
        %v1694 = vpack.c.bf16 %v1585, %v1585
        %v1695 = vpack.c.bf16 %v1136, %v1393
        %v1696 = vpack.c.bf16 %v1586, %v1586
        %v1697 = vpack.c.bf16 %v1137, %v1394
        %v1698 = vpack.c.bf16 %v1587, %v1587
        %v1699 = vpack.c.bf16 %v1138, %v1395
        %v1700 = vpack.c.bf16 %v1588, %v1588
        %v1701 = vpack.c.bf16 %v1139, %v1396
        %v1702 = vpack.c.bf16 %v1589, %v1589
        %v1703 = vpack.c.bf16 %v1140, %v1397
        %v1704 = vpack.c.bf16 %v1590, %v1590
        %v1705 = vpack.c.bf16 %v1141, %v1398
        %v1706 = vpack.c.bf16 %v1591, %v1591
        %v1707 = vpack.c.bf16 %v1142, %v1399
        %v1708 = vpack.c.bf16 %v1592, %v1592
        %v1709 = vpack.c.bf16 %v1143, %v1400
        %v1710 = vpack.c.bf16 %v1593, %v1593
        %v1711 = vpack.c.bf16 %v1144, %v1401
        %v1712 = vpack.c.bf16 %v1594, %v1594
        %v1713 = vpack.c.bf16 %v1145, %v1402
        %v1714 = vpack.c.bf16 %v1595, %v1595
        %v1715 = vpack.c.bf16 %v1146, %v1403
        %v1716 = vpack.c.bf16 %v1596, %v1596
        %v1717 = vpack.c.bf16 %v1147, %v1404
        %v1718 = vpack.c.bf16 %v1597, %v1597
        %v1719 = vpack.c.bf16 %v1148, %v1405
        %v1720 = vpack.c.bf16 %v1598, %v1598
        %v1721 = vpack.c.bf16 %v1149, %v1406
        %v1722 = vpack.c.bf16 %v1599, %v1599
        %v1723 = vpack.c.bf16 %v1150, %v1407
        %v1724 = vpack.c.bf16 %v1600, %v1600
        %v1725 = vpack.c.bf16 %v1151, %v1408
        %v1726 = vpack.c.bf16 %v1601, %v1601
        %v1727 = vpack.c.bf16 %v1152, %v1409
        %v1728 = vpack.c.bf16 %v1602, %v1602
        %v1729 = vpack.c.bf16 %v1153, %v1410
        %v1730 = vpack.c.bf16 %v1603, %v1603
        %v1731 = vpack.c.bf16 %v1154, %v1411
        %v1732 = vpack.c.bf16 %v1604, %v1604
        %s1733 = scalar_lea.vmem [#allocation2], 132
        %1734 = vst [vmem:[%s1733] sm:$0xff] %v1605
        %1735 = vst [vmem:[%s1733 + $0x8] sm:$0xf] %v1606
        %1736 = vst [vmem:[%s1733 + $0xc] sm:$0xff] %v1607
        %1737 = vst [vmem:[%s1733 + $0x14] sm:$0xf] %v1608
        %1738 = vst [vmem:[%s1733 + $0x18] sm:$0xff] %v1609
        %1739 = vst [vmem:[%s1733 + $0x20] sm:$0xf] %v1610
        %1740 = vst [vmem:[%s1733 + $0x24] sm:$0xff] %v1611
        %1741 = vst [vmem:[%s1733 + $0x2c] sm:$0xf] %v1612
        %1742 = vst [vmem:[%s1733 + $0x30] sm:$0xff] %v1613
        %1743 = vst [vmem:[%s1733 + $0x38] sm:$0xf] %v1614
        %1744 = vst [vmem:[%s1733 + $0x3c] sm:$0xff] %v1615
        %1745 = vst [vmem:[%s1733 + $0x44] sm:$0xf] %v1616
        %1746 = vst [vmem:[%s1733 + $0x48] sm:$0xff] %v1617
        %1747 = vst [vmem:[%s1733 + $0x50] sm:$0xf] %v1618
        %1748 = vst [vmem:[%s1733 + $0x54] sm:$0xff] %v1619
        %1749 = vst [vmem:[%s1733 + $0x5c] sm:$0xf] %v1620
        %1750 = vst [vmem:[%s1733 + $0x78] sm:$0xff] %v1621
        %1751 = vst [vmem:[%s1733 + $0x80] sm:$0xf] %v1622
        %1752 = vst [vmem:[%s1733 + $0x84] sm:$0xff] %v1623
        %1753 = vst [vmem:[%s1733 + $0x8c] sm:$0xf] %v1624
        %1754 = vst [vmem:[%s1733 + $0x90] sm:$0xff] %v1625
        %1755 = vst [vmem:[%s1733 + $0x98] sm:$0xf] %v1626
        %1756 = vst [vmem:[%s1733 + $0x9c] sm:$0xff] %v1627
        %1757 = vst [vmem:[%s1733 + $0xa4] sm:$0xf] %v1628
        %1758 = vst [vmem:[%s1733 + $0xa8] sm:$0xff] %v1629
        %1759 = vst [vmem:[%s1733 + $0xb0] sm:$0xf] %v1630
        %1760 = vst [vmem:[%s1733 + $0xb4] sm:$0xff] %v1631
        %1761 = vst [vmem:[%s1733 + $0xbc] sm:$0xf] %v1632
        %1762 = vst [vmem:[%s1733 + $0xc0] sm:$0xff] %v1633
        %1763 = vst [vmem:[%s1733 + $0xc8] sm:$0xf] %v1634
        %1764 = vst [vmem:[%s1733 + $0xcc] sm:$0xff] %v1635
        %1765 = vst [vmem:[%s1733 + $0xd4] sm:$0xf] %v1636
        %1766 = vst [vmem:[%s1733 + $0xf0] sm:$0xff] %v1637
        %1767 = vst [vmem:[%s1733 + $0xf8] sm:$0xf] %v1638
        %1768 = vst [vmem:[%s1733 + $0xfc] sm:$0xff] %v1639
        %1769 = vst [vmem:[%s1733 + $0x104] sm:$0xf] %v1640
        %1770 = vst [vmem:[%s1733 + $0x108] sm:$0xff] %v1641
        %1771 = vst [vmem:[%s1733 + $0x110] sm:$0xf] %v1642
        %1772 = vst [vmem:[%s1733 + $0x114] sm:$0xff] %v1643
        %1773 = vst [vmem:[%s1733 + $0x11c] sm:$0xf] %v1644
        %1774 = vst [vmem:[%s1733 + $0x120] sm:$0xff] %v1645
        %1775 = vst [vmem:[%s1733 + $0x128] sm:$0xf] %v1646
        %1776 = vst [vmem:[%s1733 + $0x12c] sm:$0xff] %v1647
        %1777 = vst [vmem:[%s1733 + $0x134] sm:$0xf] %v1648
        %1778 = vst [vmem:[%s1733 + $0x138] sm:$0xff] %v1649
        %1779 = vst [vmem:[%s1733 + $0x140] sm:$0xf] %v1650
        %1780 = vst [vmem:[%s1733 + $0x144] sm:$0xff] %v1651
        %1781 = vst [vmem:[%s1733 + $0x14c] sm:$0xf] %v1652
        %1782 = vst [vmem:[%s1733 + $0x168] sm:$0xff] %v1653
        %1783 = vst [vmem:[%s1733 + $0x170] sm:$0xf] %v1654
        %1784 = vst [vmem:[%s1733 + $0x174] sm:$0xff] %v1655
        %1785 = vst [vmem:[%s1733 + $0x17c] sm:$0xf] %v1656
        %1786 = vst [vmem:[%s1733 + $0x180] sm:$0xff] %v1657
        %1787 = vst [vmem:[%s1733 + $0x188] sm:$0xf] %v1658
        %1788 = vst [vmem:[%s1733 + $0x18c] sm:$0xff] %v1659
        %1789 = vst [vmem:[%s1733 + $0x194] sm:$0xf] %v1660
        %1790 = vst [vmem:[%s1733 + $0x198] sm:$0xff] %v1661
        %1791 = vst [vmem:[%s1733 + $0x1a0] sm:$0xf] %v1662
        %1792 = vst [vmem:[%s1733 + $0x1a4] sm:$0xff] %v1663
        %1793 = vst [vmem:[%s1733 + $0x1ac] sm:$0xf] %v1664
        %1794 = vst [vmem:[%s1733 + $0x1b0] sm:$0xff] %v1665
        %1795 = vst [vmem:[%s1733 + $0x1b8] sm:$0xf] %v1666
        %1796 = vst [vmem:[%s1733 + $0x1bc] sm:$0xff] %v1667
        %1797 = vst [vmem:[%s1733 + $0x1c4] sm:$0xf] %v1668
        %1798 = vst [vmem:[%s1733 + $0x1e0] sm:$0xff] %v1669
        %1799 = vst [vmem:[%s1733 + $0x1e8] sm:$0xf] %v1670
        %1800 = vst [vmem:[%s1733 + $0x1ec] sm:$0xff] %v1671
        %1801 = vst [vmem:[%s1733 + $0x1f4] sm:$0xf] %v1672
        %1802 = vst [vmem:[%s1733 + $0x1f8] sm:$0xff] %v1673
        %1803 = vst [vmem:[%s1733 + $0x200] sm:$0xf] %v1674
        %1804 = vst [vmem:[%s1733 + $0x204] sm:$0xff] %v1675
        %1805 = vst [vmem:[%s1733 + $0x20c] sm:$0xf] %v1676
        %1806 = vst [vmem:[%s1733 + $0x210] sm:$0xff] %v1677
        %1807 = vst [vmem:[%s1733 + $0x218] sm:$0xf] %v1678
        %1808 = vst [vmem:[%s1733 + $0x21c] sm:$0xff] %v1679
        %1809 = vst [vmem:[%s1733 + $0x224] sm:$0xf] %v1680
        %1810 = vst [vmem:[%s1733 + $0x228] sm:$0xff] %v1681
        %1811 = vst [vmem:[%s1733 + $0x230] sm:$0xf] %v1682
        %1812 = vst [vmem:[%s1733 + $0x234] sm:$0xff] %v1683
        %1813 = vst [vmem:[%s1733 + $0x23c] sm:$0xf] %v1684
        %1814 = vst [vmem:[%s1733 + $0x258] sm:$0xff] %v1685
        %1815 = vst [vmem:[%s1733 + $0x260] sm:$0xf] %v1686
        %1816 = vst [vmem:[%s1733 + $0x264] sm:$0xff] %v1687
        %1817 = vst [vmem:[%s1733 + $0x26c] sm:$0xf] %v1688
        %1818 = vst [vmem:[%s1733 + $0x270] sm:$0xff] %v1689
        %1819 = vst [vmem:[%s1733 + $0x278] sm:$0xf] %v1690
        %1820 = vst [vmem:[%s1733 + $0x27c] sm:$0xff] %v1691
        %1821 = vst [vmem:[%s1733 + $0x284] sm:$0xf] %v1692
        %1822 = vst [vmem:[%s1733 + $0x288] sm:$0xff] %v1693
        %1823 = vst [vmem:[%s1733 + $0x290] sm:$0xf] %v1694
        %1824 = vst [vmem:[%s1733 + $0x294] sm:$0xff] %v1695
        %1825 = vst [vmem:[%s1733 + $0x29c] sm:$0xf] %v1696
        %1826 = vst [vmem:[%s1733 + $0x2a0] sm:$0xff] %v1697
        %1827 = vst [vmem:[%s1733 + $0x2a8] sm:$0xf] %v1698
        %1828 = vst [vmem:[%s1733 + $0x2ac] sm:$0xff] %v1699
        %1829 = vst [vmem:[%s1733 + $0x2b4] sm:$0xf] %v1700
        %1830 = vst [vmem:[%s1733 + $0x2d0] sm:$0xff] %v1701
        %1831 = vst [vmem:[%s1733 + $0x2d8] sm:$0xf] %v1702
        %1832 = vst [vmem:[%s1733 + $0x2dc] sm:$0xff] %v1703
        %1833 = vst [vmem:[%s1733 + $0x2e4] sm:$0xf] %v1704
        %1834 = vst [vmem:[%s1733 + $0x2e8] sm:$0xff] %v1705
        %1835 = vst [vmem:[%s1733 + $0x2f0] sm:$0xf] %v1706
        %1836 = vst [vmem:[%s1733 + $0x2f4] sm:$0xff] %v1707
        %1837 = vst [vmem:[%s1733 + $0x2fc] sm:$0xf] %v1708
        %1838 = vst [vmem:[%s1733 + $0x300] sm:$0xff] %v1709
        %1839 = vst [vmem:[%s1733 + $0x308] sm:$0xf] %v1710
        %1840 = vst [vmem:[%s1733 + $0x30c] sm:$0xff] %v1711
        %1841 = vst [vmem:[%s1733 + $0x314] sm:$0xf] %v1712
        %1842 = vst [vmem:[%s1733 + $0x318] sm:$0xff] %v1713
        %1843 = vst [vmem:[%s1733 + $0x320] sm:$0xf] %v1714
        %1844 = vst [vmem:[%s1733 + $0x324] sm:$0xff] %v1715
        %1845 = vst [vmem:[%s1733 + $0x32c] sm:$0xf] %v1716
        %1846 = vst [vmem:[%s1733 + $0x348] sm:$0xff] %v1717
        %1847 = vst [vmem:[%s1733 + $0x350] sm:$0xf] %v1718
        %1848 = vst [vmem:[%s1733 + $0x354] sm:$0xff] %v1719
        %1849 = vst [vmem:[%s1733 + $0x35c] sm:$0xf] %v1720
        %1850 = vst [vmem:[%s1733 + $0x360] sm:$0xff] %v1721
        %1851 = vst [vmem:[%s1733 + $0x368] sm:$0xf] %v1722
        %1852 = vst [vmem:[%s1733 + $0x36c] sm:$0xff] %v1723
        %1853 = vst [vmem:[%s1733 + $0x374] sm:$0xf] %v1724
        %1854 = vst [vmem:[%s1733 + $0x378] sm:$0xff] %v1725
        %1855 = vst [vmem:[%s1733 + $0x380] sm:$0xf] %v1726
        %1856 = vst [vmem:[%s1733 + $0x384] sm:$0xff] %v1727
        %1857 = vst [vmem:[%s1733 + $0x38c] sm:$0xf] %v1728
        %1858 = vst [vmem:[%s1733 + $0x390] sm:$0xff] %v1729
        %1859 = vst [vmem:[%s1733 + $0x398] sm:$0xf] %v1730
        %1860 = vst [vmem:[%s1733 + $0x39c] sm:$0xff] %v1731
        %1861 = vst [vmem:[%s1733 + $0x3a4] sm:$0xf] %v1732
      $region64: #{bottleneck_forward.1} parent=59 // pred_fallthru
        _
      %s1862 = smul.u32 %s386, 30
      %s1863 = smul.addr %s1862, 4
      %s1864 = scalar_lea.vmem [#allocation2], %s1863
      %v1865 = vld [vmem:[%s1864] sm:$0xff]
      %v1866 = vld [vmem:[%s1864 + $0x8] sm:$0xf]
      %v1867 = vld [vmem:[%s1864 + $0xc] sm:$0xff]
      %v1868 = vld [vmem:[%s1864 + $0x14] sm:$0xf]
      %v1869 = vld [vmem:[%s1864 + $0x18] sm:$0xff]
      %v1870 = vld [vmem:[%s1864 + $0x20] sm:$0xf]
      %v1871 = vld [vmem:[%s1864 + $0x24] sm:$0xff]
      %v1872 = vld [vmem:[%s1864 + $0x2c] sm:$0xf]
      %v1873 = vld [vmem:[%s1864 + $0x30] sm:$0xff]
      %v1874 = vld [vmem:[%s1864 + $0x38] sm:$0xf]
      %v1875 = vld [vmem:[%s1864 + $0x3c] sm:$0xff]
      %v1876 = vld [vmem:[%s1864 + $0x44] sm:$0xf]
      %v1877 = vld [vmem:[%s1864 + $0x48] sm:$0xff]
      %v1878 = vld [vmem:[%s1864 + $0x50] sm:$0xf]
      %v1879 = vld [vmem:[%s1864 + $0x54] sm:$0xff]
      %v1880 = vld [vmem:[%s1864 + $0x5c] sm:$0xf]
      %v1881 = vld [vmem:[%s1864 + $0x60] sm:$0xff]
      %v1882 = vld [vmem:[%s1864 + $0x68] sm:$0xf]
      %v1883 = vld [vmem:[%s1864 + $0x6c] sm:$0xff]
      %v1884 = vld [vmem:[%s1864 + $0x74] sm:$0xf]
      %v1885 = vld [vmem:[%s1864 + $0x78] sm:$0xff]
      %v1886 = vld [vmem:[%s1864 + $0x80] sm:$0xf]
      %v1887 = vld [vmem:[%s1864 + $0x84] sm:$0xff]
      %v1888 = vld [vmem:[%s1864 + $0x8c] sm:$0xf]
      %v1889 = vld [vmem:[%s1864 + $0x90] sm:$0xff]
      %v1890 = vld [vmem:[%s1864 + $0x98] sm:$0xf]
      %v1891 = vld [vmem:[%s1864 + $0x9c] sm:$0xff]
      %v1892 = vld [vmem:[%s1864 + $0xa4] sm:$0xf]
      %v1893 = vld [vmem:[%s1864 + $0xa8] sm:$0xff]
      %v1894 = vld [vmem:[%s1864 + $0xb0] sm:$0xf]
      %v1895 = vld [vmem:[%s1864 + $0xb4] sm:$0xff]
      %v1896 = vld [vmem:[%s1864 + $0xbc] sm:$0xf]
      %v1897 = vld [vmem:[%s1864 + $0xc0] sm:$0xff]
      %v1898 = vld [vmem:[%s1864 + $0xc8] sm:$0xf]
      %v1899 = vld [vmem:[%s1864 + $0xcc] sm:$0xff]
      %v1900 = vld [vmem:[%s1864 + $0xd4] sm:$0xf]
      %v1901 = vld [vmem:[%s1864 + $0xd8] sm:$0xff]
      %v1902 = vld [vmem:[%s1864 + $0xe0] sm:$0xf]
      %v1903 = vld [vmem:[%s1864 + $0xe4] sm:$0xff]
      %v1904 = vld [vmem:[%s1864 + $0xec] sm:$0xf]
      %v1905 = vld [vmem:[%s1864 + $0xf0] sm:$0xff]
      %v1906 = vld [vmem:[%s1864 + $0xf8] sm:$0xf]
      %v1907 = vld [vmem:[%s1864 + $0xfc] sm:$0xff]
      %v1908 = vld [vmem:[%s1864 + $0x104] sm:$0xf]
      %v1909 = vld [vmem:[%s1864 + $0x108] sm:$0xff]
      %v1910 = vld [vmem:[%s1864 + $0x110] sm:$0xf]
      %v1911 = vld [vmem:[%s1864 + $0x114] sm:$0xff]
      %v1912 = vld [vmem:[%s1864 + $0x11c] sm:$0xf]
      %v1913 = vld [vmem:[%s1864 + $0x120] sm:$0xff]
      %v1914 = vld [vmem:[%s1864 + $0x128] sm:$0xf]
      %v1915 = vld [vmem:[%s1864 + $0x12c] sm:$0xff]
      %v1916 = vld [vmem:[%s1864 + $0x134] sm:$0xf]
      %v1917 = vld [vmem:[%s1864 + $0x138] sm:$0xff]
      %v1918 = vld [vmem:[%s1864 + $0x140] sm:$0xf]
      %v1919 = vld [vmem:[%s1864 + $0x144] sm:$0xff]
      %v1920 = vld [vmem:[%s1864 + $0x14c] sm:$0xf]
      %v1921 = vld [vmem:[%s1864 + $0x150] sm:$0xff]
      %v1922 = vld [vmem:[%s1864 + $0x158] sm:$0xf]
      %v1923 = vld [vmem:[%s1864 + $0x15c] sm:$0xff]
      %v1924 = vld [vmem:[%s1864 + $0x164] sm:$0xf]
      %v1925 = vld [vmem:[%s1864 + $0x168] sm:$0xff]
      %v1926 = vld [vmem:[%s1864 + $0x170] sm:$0xf]
      %v1927 = vld [vmem:[%s1864 + $0x174] sm:$0xff]
      %v1928 = vld [vmem:[%s1864 + $0x17c] sm:$0xf]
      %v1929 = vld [vmem:[%s1864 + $0x180] sm:$0xff]
      %v1930 = vld [vmem:[%s1864 + $0x188] sm:$0xf]
      %v1931 = vld [vmem:[%s1864 + $0x18c] sm:$0xff]
      %v1932 = vld [vmem:[%s1864 + $0x194] sm:$0xf]
      %v1933 = vld [vmem:[%s1864 + $0x198] sm:$0xff]
      %v1934 = vld [vmem:[%s1864 + $0x1a0] sm:$0xf]
      %v1935 = vld [vmem:[%s1864 + $0x1a4] sm:$0xff]
      %v1936 = vld [vmem:[%s1864 + $0x1ac] sm:$0xf]
      %v1937 = vld [vmem:[%s1864 + $0x1b0] sm:$0xff]
      %v1938 = vld [vmem:[%s1864 + $0x1b8] sm:$0xf]
      %v1939 = vld [vmem:[%s1864 + $0x1bc] sm:$0xff]
      %v1940 = vld [vmem:[%s1864 + $0x1c4] sm:$0xf]
      %v1941 = vld [vmem:[%s1864 + $0x1c8] sm:$0xff]
      %v1942 = vld [vmem:[%s1864 + $0x1d0] sm:$0xf]
      %v1943 = vld [vmem:[%s1864 + $0x1d4] sm:$0xff]
      %v1944 = vld [vmem:[%s1864 + $0x1dc] sm:$0xf]
      %v1945 = vld [vmem:[%s2] sm:$0xff]
      %v1946 = vld [vmem:[%s2 + $0x8] sm:$0xf]
      %v1947 = vld [vmem:[%s2 + $0xc] sm:$0xff]
      %v1948 = vld [vmem:[%s2 + $0x14] sm:$0xf]
      %v1949 = vld [vmem:[%s2 + $0x18] sm:$0xff]
      %v1950 = vld [vmem:[%s2 + $0x20] sm:$0xf]
      %v1951 = vld [vmem:[%s2 + $0x24] sm:$0xff]
      %v1952 = vld [vmem:[%s2 + $0x2c] sm:$0xf]
      %v1953 = vld [vmem:[%s2 + $0x30] sm:$0xff]
      %v1954 = vld [vmem:[%s2 + $0x38] sm:$0xf]
      %v1955 = vld [vmem:[%s2 + $0x3c] sm:$0xff]
      %v1956 = vld [vmem:[%s2 + $0x44] sm:$0xf]
      %v1957 = vld [vmem:[%s2 + $0x48] sm:$0xff]
      %v1958 = vld [vmem:[%s2 + $0x50] sm:$0xf]
      %v1959 = vld [vmem:[%s2 + $0x54] sm:$0xff]
      %v1960 = vld [vmem:[%s2 + $0x5c] sm:$0xf]
      %v1961 = vld [vmem:[%s2 + $0x60] sm:$0xff]
      %v1962 = vld [vmem:[%s2 + $0x68] sm:$0xf]
      %v1963 = vld [vmem:[%s2 + $0x6c] sm:$0xff]
      %v1964 = vld [vmem:[%s2 + $0x74] sm:$0xf]
      %v1965 = vld [vmem:[%s2 + $0x78] sm:$0xff]
      %v1966 = vld [vmem:[%s2 + $0x80] sm:$0xf]
      %v1967 = vld [vmem:[%s2 + $0x84] sm:$0xff]
      %v1968 = vld [vmem:[%s2 + $0x8c] sm:$0xf]
      %v1969 = vld [vmem:[%s2 + $0x90] sm:$0xff]
      %v1970 = vld [vmem:[%s2 + $0x98] sm:$0xf]
      %v1971 = vld [vmem:[%s2 + $0x9c] sm:$0xff]
      %v1972 = vld [vmem:[%s2 + $0xa4] sm:$0xf]
      %v1973 = vld [vmem:[%s2 + $0xa8] sm:$0xff]
      %v1974 = vld [vmem:[%s2 + $0xb0] sm:$0xf]
      %v1975 = vld [vmem:[%s2 + $0xb4] sm:$0xff]
      %v1976 = vld [vmem:[%s2 + $0xbc] sm:$0xf]
      %v1977 = vld [vmem:[%s2 + $0xc0] sm:$0xff]
      %v1978 = vld [vmem:[%s2 + $0xc8] sm:$0xf]
      %v1979 = vld [vmem:[%s2 + $0xcc] sm:$0xff]
      %v1980 = vld [vmem:[%s2 + $0xd4] sm:$0xf]
      %v1981 = vld [vmem:[%s2 + $0xd8] sm:$0xff]
      %v1982 = vld [vmem:[%s2 + $0xe0] sm:$0xf]
      %v1983 = vld [vmem:[%s2 + $0xe4] sm:$0xff]
      %v1984 = vld [vmem:[%s2 + $0xec] sm:$0xf]
      %v1985 = vld [vmem:[%s2 + $0xf0] sm:$0xff]
      %v1986 = vld [vmem:[%s2 + $0xf8] sm:$0xf]
      %v1987 = vld [vmem:[%s2 + $0xfc] sm:$0xff]
      %v1988 = vld [vmem:[%s2 + $0x104] sm:$0xf]
      %v1989 = vld [vmem:[%s2 + $0x108] sm:$0xff]
      %v1990 = vld [vmem:[%s2 + $0x110] sm:$0xf]
      %v1991 = vld [vmem:[%s2 + $0x114] sm:$0xff]
      %v1992 = vld [vmem:[%s2 + $0x11c] sm:$0xf]
      %v1993 = vld [vmem:[%s2 + $0x120] sm:$0xff]
      %v1994 = vld [vmem:[%s2 + $0x128] sm:$0xf]
      %v1995 = vld [vmem:[%s2 + $0x12c] sm:$0xff]
      %v1996 = vld [vmem:[%s2 + $0x134] sm:$0xf]
      %v1997 = vld [vmem:[%s2 + $0x138] sm:$0xff]
      %v1998 = vld [vmem:[%s2 + $0x140] sm:$0xf]
      %v1999 = vld [vmem:[%s2 + $0x144] sm:$0xff]
      %v2000 = vld [vmem:[%s2 + $0x14c] sm:$0xf]
      %v2001 = vld [vmem:[%s2 + $0x150] sm:$0xff]
      %v2002 = vld [vmem:[%s2 + $0x158] sm:$0xf]
      %v2003 = vld [vmem:[%s2 + $0x15c] sm:$0xff]
      %v2004 = vld [vmem:[%s2 + $0x164] sm:$0xf]
      %v2005 = vld [vmem:[%s2 + $0x168] sm:$0xff]
      %v2006 = vld [vmem:[%s2 + $0x170] sm:$0xf]
      %v2007 = vld [vmem:[%s2 + $0x174] sm:$0xff]
      %v2008 = vld [vmem:[%s2 + $0x17c] sm:$0xf]
      %v2009 = vld [vmem:[%s2 + $0x180] sm:$0xff]
      %v2010 = vld [vmem:[%s2 + $0x188] sm:$0xf]
      %v2011 = vld [vmem:[%s2 + $0x18c] sm:$0xff]
      %v2012 = vld [vmem:[%s2 + $0x194] sm:$0xf]
      %v2013 = vld [vmem:[%s2 + $0x198] sm:$0xff]
      %v2014 = vld [vmem:[%s2 + $0x1a0] sm:$0xf]
      %v2015 = vld [vmem:[%s2 + $0x1a4] sm:$0xff]
      %v2016 = vld [vmem:[%s2 + $0x1ac] sm:$0xf]
      %v2017 = vld [vmem:[%s2 + $0x1b0] sm:$0xff]
      %v2018 = vld [vmem:[%s2 + $0x1b8] sm:$0xf]
      %v2019 = vld [vmem:[%s2 + $0x1bc] sm:$0xff]
      %v2020 = vld [vmem:[%s2 + $0x1c4] sm:$0xf]
      %v2021 = vld [vmem:[%s2 + $0x1c8] sm:$0xff]
      %v2022 = vld [vmem:[%s2 + $0x1d0] sm:$0xf]
      %v2023 = vld [vmem:[%s2 + $0x1d4] sm:$0xff]
      %v2024 = vld [vmem:[%s2 + $0x1dc] sm:$0xf]
      %v2025 = vld [vmem:[%s2 + $0x1e0] sm:$0xff]
      %v2026 = vld [vmem:[%s2 + $0x1e8] sm:$0xf]
      %v2027 = vld [vmem:[%s2 + $0x1ec] sm:$0xff]
      %v2028 = vld [vmem:[%s2 + $0x1f4] sm:$0xf]
      %v2029 = vld [vmem:[%s2 + $0x1f8] sm:$0xff]
      %v2030 = vld [vmem:[%s2 + $0x200] sm:$0xf]
      %v2031 = vld [vmem:[%s2 + $0x204] sm:$0xff]
      %v2032 = vld [vmem:[%s2 + $0x20c] sm:$0xf]
      %v2033 = vld [vmem:[%s2 + $0x210] sm:$0xff]
      %v2034 = vld [vmem:[%s2 + $0x218] sm:$0xf]
      %v2035 = vld [vmem:[%s2 + $0x21c] sm:$0xff]
      %v2036 = vld [vmem:[%s2 + $0x224] sm:$0xf]
      %v2037 = vld [vmem:[%s2 + $0x228] sm:$0xff]
      %v2038 = vld [vmem:[%s2 + $0x230] sm:$0xf]
      %v2039 = vld [vmem:[%s2 + $0x234] sm:$0xff]
      %v2040 = vld [vmem:[%s2 + $0x23c] sm:$0xf]
      %s2041 = sadd.s32 %s386, 1
      %s2042 = smul.u32 %s2041, 30
      %s2043 = smul.addr %s2042, 4
      %s2044 = scalar_lea.vmem [#allocation2], %s2043
      %v2045 = vld [vmem:[%s2044] sm:$0xff]
      %v2046 = vld [vmem:[%s2044 + $0x8] sm:$0xf]
      %v2047 = vld [vmem:[%s2044 + $0xc] sm:$0xff]
      %v2048 = vld [vmem:[%s2044 + $0x14] sm:$0xf]
      %v2049 = vld [vmem:[%s2044 + $0x18] sm:$0xff]
      %v2050 = vld [vmem:[%s2044 + $0x20] sm:$0xf]
      %v2051 = vld [vmem:[%s2044 + $0x24] sm:$0xff]
      %v2052 = vld [vmem:[%s2044 + $0x2c] sm:$0xf]
      %v2053 = vld [vmem:[%s2044 + $0x30] sm:$0xff]
      %v2054 = vld [vmem:[%s2044 + $0x38] sm:$0xf]
      %v2055 = vld [vmem:[%s2044 + $0x3c] sm:$0xff]
      %v2056 = vld [vmem:[%s2044 + $0x44] sm:$0xf]
      %v2057 = vld [vmem:[%s2044 + $0x48] sm:$0xff]
      %v2058 = vld [vmem:[%s2044 + $0x50] sm:$0xf]
      %v2059 = vld [vmem:[%s2044 + $0x54] sm:$0xff]
      %v2060 = vld [vmem:[%s2044 + $0x5c] sm:$0xf]
      %v2061 = vld [vmem:[%s2044 + $0x60] sm:$0xff]
      %v2062 = vld [vmem:[%s2044 + $0x68] sm:$0xf]
      %v2063 = vld [vmem:[%s2044 + $0x6c] sm:$0xff]
      %v2064 = vld [vmem:[%s2044 + $0x74] sm:$0xf]
      %v2065 = vld [vmem:[%s2044 + $0x78] sm:$0xff]
      %v2066 = vld [vmem:[%s2044 + $0x80] sm:$0xf]
      %v2067 = vld [vmem:[%s2044 + $0x84] sm:$0xff]
      %v2068 = vld [vmem:[%s2044 + $0x8c] sm:$0xf]
      %v2069 = vld [vmem:[%s2044 + $0x90] sm:$0xff]
      %v2070 = vld [vmem:[%s2044 + $0x98] sm:$0xf]
      %v2071 = vld [vmem:[%s2044 + $0x9c] sm:$0xff]
      %v2072 = vld [vmem:[%s2044 + $0xa4] sm:$0xf]
      %v2073 = vld [vmem:[%s2044 + $0xa8] sm:$0xff]
      %v2074 = vld [vmem:[%s2044 + $0xb0] sm:$0xf]
      %v2075 = vld [vmem:[%s2044 + $0xb4] sm:$0xff]
      %v2076 = vld [vmem:[%s2044 + $0xbc] sm:$0xf]
      %v2077 = vld [vmem:[%s2044 + $0xc0] sm:$0xff]
      %v2078 = vld [vmem:[%s2044 + $0xc8] sm:$0xf]
      %v2079 = vld [vmem:[%s2044 + $0xcc] sm:$0xff]
      %v2080 = vld [vmem:[%s2044 + $0xd4] sm:$0xf]
      %v2081 = vld [vmem:[%s2044 + $0xd8] sm:$0xff]
      %v2082 = vld [vmem:[%s2044 + $0xe0] sm:$0xf]
      %v2083 = vld [vmem:[%s2044 + $0xe4] sm:$0xff]
      %v2084 = vld [vmem:[%s2044 + $0xec] sm:$0xf]
      %v2085 = vld [vmem:[%s2044 + $0xf0] sm:$0xff]
      %v2086 = vld [vmem:[%s2044 + $0xf8] sm:$0xf]
      %v2087 = vld [vmem:[%s2044 + $0xfc] sm:$0xff]
      %v2088 = vld [vmem:[%s2044 + $0x104] sm:$0xf]
      %v2089 = vld [vmem:[%s2044 + $0x108] sm:$0xff]
      %v2090 = vld [vmem:[%s2044 + $0x110] sm:$0xf]
      %v2091 = vld [vmem:[%s2044 + $0x114] sm:$0xff]
      %v2092 = vld [vmem:[%s2044 + $0x11c] sm:$0xf]
      %v2093 = vld [vmem:[%s2044 + $0x120] sm:$0xff]
      %v2094 = vld [vmem:[%s2044 + $0x128] sm:$0xf]
      %v2095 = vld [vmem:[%s2044 + $0x12c] sm:$0xff]
      %v2096 = vld [vmem:[%s2044 + $0x134] sm:$0xf]
      %v2097 = vld [vmem:[%s2044 + $0x138] sm:$0xff]
      %v2098 = vld [vmem:[%s2044 + $0x140] sm:$0xf]
      %v2099 = vld [vmem:[%s2044 + $0x144] sm:$0xff]
      %v2100 = vld [vmem:[%s2044 + $0x14c] sm:$0xf]
      %v2101 = vld [vmem:[%s2044 + $0x150] sm:$0xff]
      %v2102 = vld [vmem:[%s2044 + $0x158] sm:$0xf]
      %v2103 = vld [vmem:[%s2044 + $0x15c] sm:$0xff]
      %v2104 = vld [vmem:[%s2044 + $0x164] sm:$0xf]
      %v2105 = vld [vmem:[%s2044 + $0x168] sm:$0xff]
      %v2106 = vld [vmem:[%s2044 + $0x170] sm:$0xf]
      %v2107 = vld [vmem:[%s2044 + $0x174] sm:$0xff]
      %v2108 = vld [vmem:[%s2044 + $0x17c] sm:$0xf]
      %v2109 = vld [vmem:[%s2044 + $0x180] sm:$0xff]
      %v2110 = vld [vmem:[%s2044 + $0x188] sm:$0xf]
      %v2111 = vld [vmem:[%s2044 + $0x18c] sm:$0xff]
      %v2112 = vld [vmem:[%s2044 + $0x194] sm:$0xf]
      %v2113 = vld [vmem:[%s2044 + $0x198] sm:$0xff]
      %v2114 = vld [vmem:[%s2044 + $0x1a0] sm:$0xf]
      %v2115 = vld [vmem:[%s2044 + $0x1a4] sm:$0xff]
      %v2116 = vld [vmem:[%s2044 + $0x1ac] sm:$0xf]
      %v2117 = vld [vmem:[%s2044 + $0x1b0] sm:$0xff]
      %v2118 = vld [vmem:[%s2044 + $0x1b8] sm:$0xf]
      %v2119 = vld [vmem:[%s2044 + $0x1bc] sm:$0xff]
      %v2120 = vld [vmem:[%s2044 + $0x1c4] sm:$0xf]
      %v2121 = vld [vmem:[%s2044 + $0x1c8] sm:$0xff]
      %v2122 = vld [vmem:[%s2044 + $0x1d0] sm:$0xf]
      %v2123 = vld [vmem:[%s2044 + $0x1d4] sm:$0xff]
      %v2124 = vld [vmem:[%s2044 + $0x1dc] sm:$0xf]
      %s2125 = scalar_lea.vmem %s2, 576
      %v2126 = vld [vmem:[%s2125] sm:$0xff]
      %v2127 = vld [vmem:[%s2125 + $0x8] sm:$0xf]
      %v2128 = vld [vmem:[%s2125 + $0xc] sm:$0xff]
      %v2129 = vld [vmem:[%s2125 + $0x14] sm:$0xf]
      %v2130 = vld [vmem:[%s2125 + $0x18] sm:$0xff]
      %v2131 = vld [vmem:[%s2125 + $0x20] sm:$0xf]
      %v2132 = vld [vmem:[%s2125 + $0x24] sm:$0xff]
      %v2133 = vld [vmem:[%s2125 + $0x2c] sm:$0xf]
      %v2134 = vld [vmem:[%s2125 + $0x30] sm:$0xff]
      %v2135 = vld [vmem:[%s2125 + $0x38] sm:$0xf]
      %v2136 = vld [vmem:[%s2125 + $0x3c] sm:$0xff]
      %v2137 = vld [vmem:[%s2125 + $0x44] sm:$0xf]
      %v2138 = vld [vmem:[%s2125 + $0x48] sm:$0xff]
      %v2139 = vld [vmem:[%s2125 + $0x50] sm:$0xf]
      %v2140 = vld [vmem:[%s2125 + $0x54] sm:$0xff]
      %v2141 = vld [vmem:[%s2125 + $0x5c] sm:$0xf]
      %v2142 = vld [vmem:[%s2125 + $0x60] sm:$0xff]
      %v2143 = vld [vmem:[%s2125 + $0x68] sm:$0xf]
      %v2144 = vld [vmem:[%s2125 + $0x6c] sm:$0xff]
      %v2145 = vld [vmem:[%s2125 + $0x74] sm:$0xf]
      %v2146 = vld [vmem:[%s2125 + $0x78] sm:$0xff]
      %v2147 = vld [vmem:[%s2125 + $0x80] sm:$0xf]
      %v2148 = vld [vmem:[%s2125 + $0x84] sm:$0xff]
      %v2149 = vld [vmem:[%s2125 + $0x8c] sm:$0xf]
      %v2150 = vld [vmem:[%s2125 + $0x90] sm:$0xff]
      %v2151 = vld [vmem:[%s2125 + $0x98] sm:$0xf]
      %v2152 = vld [vmem:[%s2125 + $0x9c] sm:$0xff]
      %v2153 = vld [vmem:[%s2125 + $0xa4] sm:$0xf]
      %v2154 = vld [vmem:[%s2125 + $0xa8] sm:$0xff]
      %v2155 = vld [vmem:[%s2125 + $0xb0] sm:$0xf]
      %v2156 = vld [vmem:[%s2125 + $0xb4] sm:$0xff]
      %v2157 = vld [vmem:[%s2125 + $0xbc] sm:$0xf]
      %v2158 = vld [vmem:[%s2125 + $0xc0] sm:$0xff]
      %v2159 = vld [vmem:[%s2125 + $0xc8] sm:$0xf]
      %v2160 = vld [vmem:[%s2125 + $0xcc] sm:$0xff]
      %v2161 = vld [vmem:[%s2125 + $0xd4] sm:$0xf]
      %v2162 = vld [vmem:[%s2125 + $0xd8] sm:$0xff]
      %v2163 = vld [vmem:[%s2125 + $0xe0] sm:$0xf]
      %v2164 = vld [vmem:[%s2125 + $0xe4] sm:$0xff]
      %v2165 = vld [vmem:[%s2125 + $0xec] sm:$0xf]
      %v2166 = vld [vmem:[%s2125 + $0xf0] sm:$0xff]
      %v2167 = vld [vmem:[%s2125 + $0xf8] sm:$0xf]
      %v2168 = vld [vmem:[%s2125 + $0xfc] sm:$0xff]
      %v2169 = vld [vmem:[%s2125 + $0x104] sm:$0xf]
      %v2170 = vld [vmem:[%s2125 + $0x108] sm:$0xff]
      %v2171 = vld [vmem:[%s2125 + $0x110] sm:$0xf]
      %v2172 = vld [vmem:[%s2125 + $0x114] sm:$0xff]
      %v2173 = vld [vmem:[%s2125 + $0x11c] sm:$0xf]
      %v2174 = vld [vmem:[%s2125 + $0x120] sm:$0xff]
      %v2175 = vld [vmem:[%s2125 + $0x128] sm:$0xf]
      %v2176 = vld [vmem:[%s2125 + $0x12c] sm:$0xff]
      %v2177 = vld [vmem:[%s2125 + $0x134] sm:$0xf]
      %v2178 = vld [vmem:[%s2125 + $0x138] sm:$0xff]
      %v2179 = vld [vmem:[%s2125 + $0x140] sm:$0xf]
      %v2180 = vld [vmem:[%s2125 + $0x144] sm:$0xff]
      %v2181 = vld [vmem:[%s2125 + $0x14c] sm:$0xf]
      %v2182 = vld [vmem:[%s2125 + $0x150] sm:$0xff]
      %v2183 = vld [vmem:[%s2125 + $0x158] sm:$0xf]
      %v2184 = vld [vmem:[%s2125 + $0x15c] sm:$0xff]
      %v2185 = vld [vmem:[%s2125 + $0x164] sm:$0xf]
      %v2186 = vld [vmem:[%s2125 + $0x168] sm:$0xff]
      %v2187 = vld [vmem:[%s2125 + $0x170] sm:$0xf]
      %v2188 = vld [vmem:[%s2125 + $0x174] sm:$0xff]
      %v2189 = vld [vmem:[%s2125 + $0x17c] sm:$0xf]
      %v2190 = vld [vmem:[%s2125 + $0x180] sm:$0xff]
      %v2191 = vld [vmem:[%s2125 + $0x188] sm:$0xf]
      %v2192 = vld [vmem:[%s2125 + $0x18c] sm:$0xff]
      %v2193 = vld [vmem:[%s2125 + $0x194] sm:$0xf]
      %v2194 = vld [vmem:[%s2125 + $0x198] sm:$0xff]
      %v2195 = vld [vmem:[%s2125 + $0x1a0] sm:$0xf]
      %v2196 = vld [vmem:[%s2125 + $0x1a4] sm:$0xff]
      %v2197 = vld [vmem:[%s2125 + $0x1ac] sm:$0xf]
      %v2198 = vld [vmem:[%s2125 + $0x1b0] sm:$0xff]
      %v2199 = vld [vmem:[%s2125 + $0x1b8] sm:$0xf]
      %v2200 = vld [vmem:[%s2125 + $0x1bc] sm:$0xff]
      %v2201 = vld [vmem:[%s2125 + $0x1c4] sm:$0xf]
      %v2202 = vld [vmem:[%s2125 + $0x1c8] sm:$0xff]
      %v2203 = vld [vmem:[%s2125 + $0x1d0] sm:$0xf]
      %v2204 = vld [vmem:[%s2125 + $0x1d4] sm:$0xff]
      %v2205 = vld [vmem:[%s2125 + $0x1dc] sm:$0xf]
      %v2206 = vld [vmem:[%s2125 + $0x1e0] sm:$0xff]
      %v2207 = vld [vmem:[%s2125 + $0x1e8] sm:$0xf]
      %v2208 = vld [vmem:[%s2125 + $0x1ec] sm:$0xff]
      %v2209 = vld [vmem:[%s2125 + $0x1f4] sm:$0xf]
      %v2210 = vld [vmem:[%s2125 + $0x1f8] sm:$0xff]
      %v2211 = vld [vmem:[%s2125 + $0x200] sm:$0xf]
      %v2212 = vld [vmem:[%s2125 + $0x204] sm:$0xff]
      %v2213 = vld [vmem:[%s2125 + $0x20c] sm:$0xf]
      %v2214 = vld [vmem:[%s2125 + $0x210] sm:$0xff]
      %v2215 = vld [vmem:[%s2125 + $0x218] sm:$0xf]
      %v2216 = vld [vmem:[%s2125 + $0x21c] sm:$0xff]
      %v2217 = vld [vmem:[%s2125 + $0x224] sm:$0xf]
      %v2218 = vld [vmem:[%s2125 + $0x228] sm:$0xff]
      %v2219 = vld [vmem:[%s2125 + $0x230] sm:$0xf]
      %v2220 = vld [vmem:[%s2125 + $0x234] sm:$0xff]
      %v2221 = vld [vmem:[%s2125 + $0x23c] sm:$0xf]
      %v2302 = vunpack.c.l.b16 %v2045
      %v2303 = vunpack.c.h.b16 %v2045
      %v2304 = vunpack.c.l.b16 %v2046
      %v2305 = vunpack.c.l.b16 %v2047
      %v2306 = vunpack.c.h.b16 %v2047
      %v2307 = vunpack.c.l.b16 %v2048
      %v2308 = vunpack.c.l.b16 %v2049
      %v2309 = vunpack.c.h.b16 %v2049
      %v2310 = vunpack.c.l.b16 %v2050
      %v2311 = vunpack.c.l.b16 %v2051
      %v2312 = vunpack.c.h.b16 %v2051
      %v2313 = vunpack.c.l.b16 %v2052
      %v2314 = vunpack.c.l.b16 %v2053
      %v2315 = vunpack.c.h.b16 %v2053
      %v2316 = vunpack.c.l.b16 %v2054
      %v2317 = vunpack.c.l.b16 %v2055
      %v2318 = vunpack.c.h.b16 %v2055
      %v2319 = vunpack.c.l.b16 %v2056
      %v2320 = vunpack.c.l.b16 %v2057
      %v2321 = vunpack.c.h.b16 %v2057
      %v2322 = vunpack.c.l.b16 %v2058
      %v2323 = vunpack.c.l.b16 %v2059
      %v2324 = vunpack.c.h.b16 %v2059
      %v2325 = vunpack.c.l.b16 %v2060
      %v2326 = vunpack.c.l.b16 %v2061
      %v2327 = vunpack.c.h.b16 %v2061
      %v2328 = vunpack.c.l.b16 %v2062
      %v2329 = vunpack.c.l.b16 %v2063
      %v2330 = vunpack.c.h.b16 %v2063
      %v2331 = vunpack.c.l.b16 %v2064
      %v2332 = vunpack.c.l.b16 %v2065
      %v2333 = vunpack.c.h.b16 %v2065
      %v2334 = vunpack.c.l.b16 %v2066
      %v2335 = vunpack.c.l.b16 %v2067
      %v2336 = vunpack.c.h.b16 %v2067
      %v2337 = vunpack.c.l.b16 %v2068
      %v2338 = vunpack.c.l.b16 %v2069
      %v2339 = vunpack.c.h.b16 %v2069
      %v2340 = vunpack.c.l.b16 %v2070
      %v2341 = vunpack.c.l.b16 %v2071
      %v2342 = vunpack.c.h.b16 %v2071
      %v2343 = vunpack.c.l.b16 %v2072
      %v2344 = vunpack.c.l.b16 %v2073
      %v2345 = vunpack.c.h.b16 %v2073
      %v2346 = vunpack.c.l.b16 %v2074
      %v2347 = vunpack.c.l.b16 %v2075
      %v2348 = vunpack.c.h.b16 %v2075
      %v2349 = vunpack.c.l.b16 %v2076
      %v2350 = vunpack.c.l.b16 %v2077
      %v2351 = vunpack.c.h.b16 %v2077
      %v2352 = vunpack.c.l.b16 %v2078
      %v2353 = vunpack.c.l.b16 %v2079
      %v2354 = vunpack.c.h.b16 %v2079
      %v2355 = vunpack.c.l.b16 %v2080
      %v2356 = vunpack.c.l.b16 %v2081
      %v2357 = vunpack.c.h.b16 %v2081
      %v2358 = vunpack.c.l.b16 %v2082
      %v2359 = vunpack.c.l.b16 %v2083
      %v2360 = vunpack.c.h.b16 %v2083
      %v2361 = vunpack.c.l.b16 %v2084
      %v2362 = vunpack.c.l.b16 %v2085
      %v2363 = vunpack.c.h.b16 %v2085
      %v2364 = vunpack.c.l.b16 %v2086
      %v2365 = vunpack.c.l.b16 %v2087
      %v2366 = vunpack.c.h.b16 %v2087
      %v2367 = vunpack.c.l.b16 %v2088
      %v2368 = vunpack.c.l.b16 %v2089
      %v2369 = vunpack.c.h.b16 %v2089
      %v2370 = vunpack.c.l.b16 %v2090
      %v2371 = vunpack.c.l.b16 %v2091
      %v2372 = vunpack.c.h.b16 %v2091
      %v2373 = vunpack.c.l.b16 %v2092
      %v2374 = vunpack.c.l.b16 %v2093
      %v2375 = vunpack.c.h.b16 %v2093
      %v2376 = vunpack.c.l.b16 %v2094
      %v2377 = vunpack.c.l.b16 %v2095
      %v2378 = vunpack.c.h.b16 %v2095
      %v2379 = vunpack.c.l.b16 %v2096
      %v2380 = vunpack.c.l.b16 %v2097
      %v2381 = vunpack.c.h.b16 %v2097
      %v2382 = vunpack.c.l.b16 %v2098
      %v2383 = vunpack.c.l.b16 %v2099
      %v2384 = vunpack.c.h.b16 %v2099
      %v2385 = vunpack.c.l.b16 %v2100
      %v2386 = vunpack.c.l.b16 %v2101
      %v2387 = vunpack.c.h.b16 %v2101
      %v2388 = vunpack.c.l.b16 %v2102
      %v2389 = vunpack.c.l.b16 %v2103
      %v2390 = vunpack.c.h.b16 %v2103
      %v2391 = vunpack.c.l.b16 %v2104
      %v2392 = vunpack.c.l.b16 %v2105
      %v2393 = vunpack.c.h.b16 %v2105
      %v2394 = vunpack.c.l.b16 %v2106
      %v2395 = vunpack.c.l.b16 %v2107
      %v2396 = vunpack.c.h.b16 %v2107
      %v2397 = vunpack.c.l.b16 %v2108
      %v2398 = vunpack.c.l.b16 %v2109
      %v2399 = vunpack.c.h.b16 %v2109
      %v2400 = vunpack.c.l.b16 %v2110
      %v2401 = vunpack.c.l.b16 %v2111
      %v2402 = vunpack.c.h.b16 %v2111
      %v2403 = vunpack.c.l.b16 %v2112
      %v2404 = vunpack.c.l.b16 %v2113
      %v2405 = vunpack.c.h.b16 %v2113
      %v2406 = vunpack.c.l.b16 %v2114
      %v2407 = vunpack.c.l.b16 %v2115
      %v2408 = vunpack.c.h.b16 %v2115
      %v2409 = vunpack.c.l.b16 %v2116
      %v2410 = vunpack.c.l.b16 %v2117
      %v2411 = vunpack.c.h.b16 %v2117
      %v2412 = vunpack.c.l.b16 %v2118
      %v2413 = vunpack.c.l.b16 %v2119
      %v2414 = vunpack.c.h.b16 %v2119
      %v2415 = vunpack.c.l.b16 %v2120
      %v2416 = vunpack.c.l.b16 %v2121
      %v2417 = vunpack.c.h.b16 %v2121
      %v2418 = vunpack.c.l.b16 %v2122
      %v2419 = vunpack.c.l.b16 %v2123
      %v2420 = vunpack.c.h.b16 %v2123
      %v2421 = vunpack.c.l.b16 %v2124
      %v2422 = vpack.c.b16 %v2305, %v2302
      %v2423 = vpack.c.b16 %v2306, %v2303
      %v2424 = vpack.c.b16 %v2307, %v2304
      %v2425 = vpack.c.b16 %v2311, %v2308
      %v2426 = vpack.c.b16 %v2312, %v2309
      %v2427 = vpack.c.b16 %v2313, %v2310
      %v2428 = vpack.c.b16 %v2317, %v2314
      %v2429 = vpack.c.b16 %v2318, %v2315
      %v2430 = vpack.c.b16 %v2319, %v2316
      %v2431 = vpack.c.b16 %v2323, %v2320
      %v2432 = vpack.c.b16 %v2324, %v2321
      %v2433 = vpack.c.b16 %v2325, %v2322
      %v2434 = vpack.c.b16 %v2329, %v2326
      %v2435 = vpack.c.b16 %v2330, %v2327
      %v2436 = vpack.c.b16 %v2331, %v2328
      %v2437 = vpack.c.b16 %v2335, %v2332
      %v2438 = vpack.c.b16 %v2336, %v2333
      %v2439 = vpack.c.b16 %v2337, %v2334
      %v2440 = vpack.c.b16 %v2341, %v2338
      %v2441 = vpack.c.b16 %v2342, %v2339
      %v2442 = vpack.c.b16 %v2343, %v2340
      %v2443 = vpack.c.b16 %v2347, %v2344
      %v2444 = vpack.c.b16 %v2348, %v2345
      %v2445 = vpack.c.b16 %v2349, %v2346
      %v2446 = vpack.c.b16 %v2353, %v2350
      %v2447 = vpack.c.b16 %v2354, %v2351
      %v2448 = vpack.c.b16 %v2355, %v2352
      %v2449 = vpack.c.b16 %v2359, %v2356
      %v2450 = vpack.c.b16 %v2360, %v2357
      %v2451 = vpack.c.b16 %v2361, %v2358
      %v2452 = vpack.c.b16 %v2365, %v2362
      %v2453 = vpack.c.b16 %v2366, %v2363
      %v2454 = vpack.c.b16 %v2367, %v2364
      %v2455 = vpack.c.b16 %v2371, %v2368
      %v2456 = vpack.c.b16 %v2372, %v2369
      %v2457 = vpack.c.b16 %v2373, %v2370
      %v2458 = vpack.c.b16 %v2377, %v2374
      %v2459 = vpack.c.b16 %v2378, %v2375
      %v2460 = vpack.c.b16 %v2379, %v2376
      %v2461 = vpack.c.b16 %v2383, %v2380
      %v2462 = vpack.c.b16 %v2384, %v2381
      %v2463 = vpack.c.b16 %v2385, %v2382
      %v2464 = vpack.c.b16 %v2389, %v2386
      %v2465 = vpack.c.b16 %v2390, %v2387
      %v2466 = vpack.c.b16 %v2391, %v2388
      %v2467 = vpack.c.b16 %v2395, %v2392
      %v2468 = vpack.c.b16 %v2396, %v2393
      %v2469 = vpack.c.b16 %v2397, %v2394
      %v2470 = vpack.c.b16 %v2401, %v2398
      %v2471 = vpack.c.b16 %v2402, %v2399
      %v2472 = vpack.c.b16 %v2403, %v2400
      %v2473 = vpack.c.b16 %v2407, %v2404
      %v2474 = vpack.c.b16 %v2408, %v2405
      %v2475 = vpack.c.b16 %v2409, %v2406
      %v2476 = vpack.c.b16 %v2413, %v2410
      %v2477 = vpack.c.b16 %v2414, %v2411
      %v2478 = vpack.c.b16 %v2415, %v2412
      %v2479 = vpack.c.b16 %v2419, %v2416
      %v2480 = vpack.c.b16 %v2420, %v2417
      %v2481 = vpack.c.b16 %v2421, %v2418
      %v2638 = vunpack.c.l.b16 %v2126
      %v2639 = vunpack.c.h.b16 %v2126
      %v2640 = vunpack.c.l.b16 %v2127
      %v2641 = vunpack.c.l.b16 %v2128
      %v2642 = vunpack.c.h.b16 %v2128
      %v2643 = vunpack.c.l.b16 %v2129
      %v2644 = vunpack.c.l.b16 %v2130
      %v2645 = vunpack.c.h.b16 %v2130
      %v2646 = vunpack.c.l.b16 %v2131
      %v2647 = vunpack.c.l.b16 %v2132
      %v2648 = vunpack.c.h.b16 %v2132
      %v2649 = vunpack.c.l.b16 %v2133
      %v2650 = vunpack.c.l.b16 %v2134
      %v2651 = vunpack.c.h.b16 %v2134
      %v2652 = vunpack.c.l.b16 %v2135
      %v2653 = vunpack.c.l.b16 %v2136
      %v2654 = vunpack.c.h.b16 %v2136
      %v2655 = vunpack.c.l.b16 %v2137
      %v2656 = vunpack.c.l.b16 %v2138
      %v2657 = vunpack.c.h.b16 %v2138
      %v2658 = vunpack.c.l.b16 %v2139
      %v2659 = vunpack.c.l.b16 %v2140
      %v2660 = vunpack.c.h.b16 %v2140
      %v2661 = vunpack.c.l.b16 %v2141
      %v2662 = vunpack.c.l.b16 %v2142
      %v2663 = vunpack.c.h.b16 %v2142
      %v2664 = vunpack.c.l.b16 %v2143
      %v2665 = vunpack.c.l.b16 %v2144
      %v2666 = vunpack.c.h.b16 %v2144
      %v2667 = vunpack.c.l.b16 %v2145
      %v2668 = vunpack.c.l.b16 %v2146
      %v2669 = vunpack.c.h.b16 %v2146
      %v2670 = vunpack.c.l.b16 %v2147
      %v2671 = vunpack.c.l.b16 %v2148
      %v2672 = vunpack.c.h.b16 %v2148
      %v2673 = vunpack.c.l.b16 %v2149
      %v2674 = vunpack.c.l.b16 %v2150
      %v2675 = vunpack.c.h.b16 %v2150
      %v2676 = vunpack.c.l.b16 %v2151
      %v2677 = vunpack.c.l.b16 %v2152
      %v2678 = vunpack.c.h.b16 %v2152
      %v2679 = vunpack.c.l.b16 %v2153
      %v2680 = vunpack.c.l.b16 %v2154
      %v2681 = vunpack.c.h.b16 %v2154
      %v2682 = vunpack.c.l.b16 %v2155
      %v2683 = vunpack.c.l.b16 %v2156
      %v2684 = vunpack.c.h.b16 %v2156
      %v2685 = vunpack.c.l.b16 %v2157
      %v2686 = vunpack.c.l.b16 %v2158
      %v2687 = vunpack.c.h.b16 %v2158
      %v2688 = vunpack.c.l.b16 %v2159
      %v2689 = vunpack.c.l.b16 %v2160
      %v2690 = vunpack.c.h.b16 %v2160
      %v2691 = vunpack.c.l.b16 %v2161
      %v2692 = vunpack.c.l.b16 %v2162
      %v2693 = vunpack.c.h.b16 %v2162
      %v2694 = vunpack.c.l.b16 %v2163
      %v2695 = vunpack.c.l.b16 %v2164
      %v2696 = vunpack.c.h.b16 %v2164
      %v2697 = vunpack.c.l.b16 %v2165
      %v2698 = vunpack.c.l.b16 %v2166
      %v2699 = vunpack.c.h.b16 %v2166
      %v2700 = vunpack.c.l.b16 %v2167
      %v2701 = vunpack.c.l.b16 %v2168
      %v2702 = vunpack.c.h.b16 %v2168
      %v2703 = vunpack.c.l.b16 %v2169
      %v2704 = vunpack.c.l.b16 %v2170
      %v2705 = vunpack.c.h.b16 %v2170
      %v2706 = vunpack.c.l.b16 %v2171
      %v2707 = vunpack.c.l.b16 %v2172
      %v2708 = vunpack.c.h.b16 %v2172
      %v2709 = vunpack.c.l.b16 %v2173
      %v2710 = vunpack.c.l.b16 %v2174
      %v2711 = vunpack.c.h.b16 %v2174
      %v2712 = vunpack.c.l.b16 %v2175
      %v2713 = vunpack.c.l.b16 %v2176
      %v2714 = vunpack.c.h.b16 %v2176
      %v2715 = vunpack.c.l.b16 %v2177
      %v2716 = vunpack.c.l.b16 %v2178
      %v2717 = vunpack.c.h.b16 %v2178
      %v2718 = vunpack.c.l.b16 %v2179
      %v2719 = vunpack.c.l.b16 %v2180
      %v2720 = vunpack.c.h.b16 %v2180
      %v2721 = vunpack.c.l.b16 %v2181
      %v2722 = vunpack.c.l.b16 %v2182
      %v2723 = vunpack.c.h.b16 %v2182
      %v2724 = vunpack.c.l.b16 %v2183
      %v2725 = vunpack.c.l.b16 %v2184
      %v2726 = vunpack.c.h.b16 %v2184
      %v2727 = vunpack.c.l.b16 %v2185
      %v2728 = vunpack.c.l.b16 %v2186
      %v2729 = vunpack.c.h.b16 %v2186
      %v2730 = vunpack.c.l.b16 %v2187
      %v2731 = vunpack.c.l.b16 %v2188
      %v2732 = vunpack.c.h.b16 %v2188
      %v2733 = vunpack.c.l.b16 %v2189
      %v2734 = vunpack.c.l.b16 %v2190
      %v2735 = vunpack.c.h.b16 %v2190
      %v2736 = vunpack.c.l.b16 %v2191
      %v2737 = vunpack.c.l.b16 %v2192
      %v2738 = vunpack.c.h.b16 %v2192
      %v2739 = vunpack.c.l.b16 %v2193
      %v2740 = vunpack.c.l.b16 %v2194
      %v2741 = vunpack.c.h.b16 %v2194
      %v2742 = vunpack.c.l.b16 %v2195
      %v2743 = vunpack.c.l.b16 %v2196
      %v2744 = vunpack.c.h.b16 %v2196
      %v2745 = vunpack.c.l.b16 %v2197
      %v2746 = vunpack.c.l.b16 %v2198
      %v2747 = vunpack.c.h.b16 %v2198
      %v2748 = vunpack.c.l.b16 %v2199
      %v2749 = vunpack.c.l.b16 %v2200
      %v2750 = vunpack.c.h.b16 %v2200
      %v2751 = vunpack.c.l.b16 %v2201
      %v2752 = vunpack.c.l.b16 %v2202
      %v2753 = vunpack.c.h.b16 %v2202
      %v2754 = vunpack.c.l.b16 %v2203
      %v2755 = vunpack.c.l.b16 %v2204
      %v2756 = vunpack.c.h.b16 %v2204
      %v2757 = vunpack.c.l.b16 %v2205
      %v2758 = vunpack.c.l.b16 %v2206
      %v2759 = vunpack.c.h.b16 %v2206
      %v2760 = vunpack.c.l.b16 %v2207
      %v2761 = vunpack.c.l.b16 %v2208
      %v2762 = vunpack.c.h.b16 %v2208
      %v2763 = vunpack.c.l.b16 %v2209
      %v2764 = vunpack.c.l.b16 %v2210
      %v2765 = vunpack.c.h.b16 %v2210
      %v2766 = vunpack.c.l.b16 %v2211
      %v2767 = vunpack.c.l.b16 %v2212
      %v2768 = vunpack.c.h.b16 %v2212
      %v2769 = vunpack.c.l.b16 %v2213
      %v2770 = vunpack.c.l.b16 %v2214
      %v2771 = vunpack.c.h.b16 %v2214
      %v2772 = vunpack.c.l.b16 %v2215
      %v2773 = vunpack.c.l.b16 %v2216
      %v2774 = vunpack.c.h.b16 %v2216
      %v2775 = vunpack.c.l.b16 %v2217
      %v2776 = vunpack.c.l.b16 %v2218
      %v2777 = vunpack.c.h.b16 %v2218
      %v2778 = vunpack.c.l.b16 %v2219
      %v2779 = vunpack.c.l.b16 %v2220
      %v2780 = vunpack.c.h.b16 %v2220
      %v2781 = vunpack.c.l.b16 %v2221
      %v2782 = vpack.c.b16 %v2641, %v2638
      %v2783 = vpack.c.b16 %v2642, %v2639
      %v2784 = vpack.c.b16 %v2643, %v2640
      %v2785 = vpack.c.b16 %v2647, %v2644
      %v2786 = vpack.c.b16 %v2648, %v2645
      %v2787 = vpack.c.b16 %v2649, %v2646
      %v2788 = vpack.c.b16 %v2653, %v2650
      %v2789 = vpack.c.b16 %v2654, %v2651
      %v2790 = vpack.c.b16 %v2655, %v2652
      %v2791 = vpack.c.b16 %v2659, %v2656
      %v2792 = vpack.c.b16 %v2660, %v2657
      %v2793 = vpack.c.b16 %v2661, %v2658
      %v2794 = vpack.c.b16 %v2665, %v2662
      %v2795 = vpack.c.b16 %v2666, %v2663
      %v2796 = vpack.c.b16 %v2667, %v2664
      %v2797 = vpack.c.b16 %v2671, %v2668
      %v2798 = vpack.c.b16 %v2672, %v2669
      %v2799 = vpack.c.b16 %v2673, %v2670
      %v2800 = vpack.c.b16 %v2677, %v2674
      %v2801 = vpack.c.b16 %v2678, %v2675
      %v2802 = vpack.c.b16 %v2679, %v2676
      %v2803 = vpack.c.b16 %v2683, %v2680
      %v2804 = vpack.c.b16 %v2684, %v2681
      %v2805 = vpack.c.b16 %v2685, %v2682
      %v2806 = vpack.c.b16 %v2689, %v2686
      %v2807 = vpack.c.b16 %v2690, %v2687
      %v2808 = vpack.c.b16 %v2691, %v2688
      %v2809 = vpack.c.b16 %v2695, %v2692
      %v2810 = vpack.c.b16 %v2696, %v2693
      %v2811 = vpack.c.b16 %v2697, %v2694
      %v2812 = vpack.c.b16 %v2701, %v2698
      %v2813 = vpack.c.b16 %v2702, %v2699
      %v2814 = vpack.c.b16 %v2703, %v2700
      %v2815 = vpack.c.b16 %v2707, %v2704
      %v2816 = vpack.c.b16 %v2708, %v2705
      %v2817 = vpack.c.b16 %v2709, %v2706
      %v2818 = vpack.c.b16 %v2713, %v2710
      %v2819 = vpack.c.b16 %v2714, %v2711
      %v2820 = vpack.c.b16 %v2715, %v2712
      %v2821 = vpack.c.b16 %v2719, %v2716
      %v2822 = vpack.c.b16 %v2720, %v2717
      %v2823 = vpack.c.b16 %v2721, %v2718
      %v2824 = vpack.c.b16 %v2725, %v2722
      %v2825 = vpack.c.b16 %v2726, %v2723
      %v2826 = vpack.c.b16 %v2727, %v2724
      %v2827 = vpack.c.b16 %v2731, %v2728
      %v2828 = vpack.c.b16 %v2732, %v2729
      %v2829 = vpack.c.b16 %v2733, %v2730
      %v2830 = vpack.c.b16 %v2737, %v2734
      %v2831 = vpack.c.b16 %v2738, %v2735
      %v2832 = vpack.c.b16 %v2739, %v2736
      %v2833 = vpack.c.b16 %v2743, %v2740
      %v2834 = vpack.c.b16 %v2744, %v2741
      %v2835 = vpack.c.b16 %v2745, %v2742
      %v2836 = vpack.c.b16 %v2749, %v2746
      %v2837 = vpack.c.b16 %v2750, %v2747
      %v2838 = vpack.c.b16 %v2751, %v2748
      %v2839 = vpack.c.b16 %v2755, %v2752
      %v2840 = vpack.c.b16 %v2756, %v2753
      %v2841 = vpack.c.b16 %v2757, %v2754
      %v2842 = vpack.c.b16 %v2761, %v2758
      %v2843 = vpack.c.b16 %v2762, %v2759
      %v2844 = vpack.c.b16 %v2763, %v2760
      %v2845 = vpack.c.b16 %v2767, %v2764
      %v2846 = vpack.c.b16 %v2768, %v2765
      %v2847 = vpack.c.b16 %v2769, %v2766
      %v2848 = vpack.c.b16 %v2773, %v2770
      %v2849 = vpack.c.b16 %v2774, %v2771
      %v2850 = vpack.c.b16 %v2775, %v2772
      %v2851 = vpack.c.b16 %v2779, %v2776
      %v2852 = vpack.c.b16 %v2780, %v2777
      %v2853 = vpack.c.b16 %v2781, %v2778
      %2926 = vmatpush.bf16.msra.mxu0 %v2803
      %2927 = vmatpush.bf16.msra.mxu0 %v2800
      %2928 = vmatpush.bf16.msra.mxu0 %v2797
      %2929 = vmatpush.bf16.msra.mxu0 %v2794
      %2930 = vmatpush.bf16.msra.mxu0 %v2791
      %2931 = vmatpush.bf16.msra.mxu0 %v2788
      %2932 = vmatpush.bf16.msra.mxu0 %v2785
      %2933 = vmatpush.bf16.msra.mxu0 %v2782
      %2934 = vmatmul.bf16.gmra.mxu0 %v2422
      %v2935 = vpop.f32.mrf.mxu0
      %v2936 = vadd.f32 0.0, %v2935
      %v2937 = vpop.f32.mrf.mxu0
      %v2938 = vadd.f32 0.0, %v2937
      %2939 = vmatmul.bf16.gmra.mxu0 %v2425
      %v2940 = vpop.f32.mrf.mxu0
      %v2941 = vadd.f32 0.0, %v2940
      %v2942 = vpop.f32.mrf.mxu0
      %v2943 = vadd.f32 0.0, %v2942
      %2944 = vmatmul.bf16.gmra.mxu0 %v2428
      %v2945 = vpop.f32.mrf.mxu0
      %v2946 = vadd.f32 0.0, %v2945
      %v2947 = vpop.f32.mrf.mxu0
      %v2948 = vadd.f32 0.0, %v2947
      %2949 = vmatmul.bf16.gmra.mxu0 %v2431
      %v2950 = vpop.f32.mrf.mxu0
      %v2951 = vadd.f32 0.0, %v2950
      %v2952 = vpop.f32.mrf.mxu0
      %v2953 = vadd.f32 0.0, %v2952
      %2954 = vmatmul.bf16.gmra.mxu0 %v2434
      %v2955 = vpop.f32.mrf.mxu0
      %v2956 = vpop.f32.mrf.mxu0
      %2957 = vmatmul.bf16.gmra.mxu0 %v2437
      %v2958 = vpop.f32.mrf.mxu0
      %v2959 = vadd.f32 0.0, %v2958
      %v2960 = vpop.f32.mrf.mxu0
      %v2961 = vadd.f32 0.0, %v2960
      %2962 = vmatmul.bf16.gmra.mxu0 %v2440
      %v2963 = vpop.f32.mrf.mxu0
      %v2964 = vadd.f32 0.0, %v2963
      %v2965 = vpop.f32.mrf.mxu0
      %v2966 = vadd.f32 0.0, %v2965
      %2967 = vmatmul.bf16.gmra.mxu0 %v2443
      %v2968 = vpop.f32.mrf.mxu0
      %v2969 = vadd.f32 0.0, %v2968
      %v2970 = vpop.f32.mrf.mxu0
      %v2971 = vadd.f32 0.0, %v2970
      %2972 = vmatmul.bf16.gmra.mxu0 %v2446
      %v2973 = vpop.f32.mrf.mxu0
      %v2974 = vadd.f32 0.0, %v2973
      %v2975 = vpop.f32.mrf.mxu0
      %v2976 = vadd.f32 0.0, %v2975
      %2977 = vmatmul.bf16.gmra.mxu0 %v2449
      %v2978 = vpop.f32.mrf.mxu0
      %v2979 = vpop.f32.mrf.mxu0
      %2980 = vmatmul.bf16.gmra.mxu0 %v2452
      %v2981 = vpop.f32.mrf.mxu0
      %v2982 = vadd.f32 0.0, %v2981
      %v2983 = vpop.f32.mrf.mxu0
      %v2984 = vadd.f32 0.0, %v2983
      %2985 = vmatmul.bf16.gmra.mxu0 %v2455
      %v2986 = vpop.f32.mrf.mxu0
      %v2987 = vadd.f32 0.0, %v2986
      %v2988 = vpop.f32.mrf.mxu0
      %v2989 = vadd.f32 0.0, %v2988
      %2990 = vmatmul.bf16.gmra.mxu0 %v2458
      %v2991 = vpop.f32.mrf.mxu0
      %v2992 = vadd.f32 0.0, %v2991
      %v2993 = vpop.f32.mrf.mxu0
      %v2994 = vadd.f32 0.0, %v2993
      %2995 = vmatmul.bf16.gmra.mxu0 %v2461
      %v2996 = vpop.f32.mrf.mxu0
      %v2997 = vadd.f32 0.0, %v2996
      %v2998 = vpop.f32.mrf.mxu0
      %v2999 = vadd.f32 0.0, %v2998
      %3000 = vmatmul.bf16.gmra.mxu0 %v2464
      %v3001 = vpop.f32.mrf.mxu0
      %v3002 = vpop.f32.mrf.mxu0
      %3003 = vmatmul.bf16.gmra.mxu0 %v2467
      %v3004 = vpop.f32.mrf.mxu0
      %v3005 = vadd.f32 0.0, %v3004
      %v3006 = vpop.f32.mrf.mxu0
      %v3007 = vadd.f32 0.0, %v3006
      %3008 = vmatmul.bf16.gmra.mxu0 %v2470
      %v3009 = vpop.f32.mrf.mxu0
      %v3010 = vadd.f32 0.0, %v3009
      %v3011 = vpop.f32.mrf.mxu0
      %v3012 = vadd.f32 0.0, %v3011
      %3013 = vmatmul.bf16.gmra.mxu0 %v2473
      %v3014 = vpop.f32.mrf.mxu0
      %v3015 = vadd.f32 0.0, %v3014
      %v3016 = vpop.f32.mrf.mxu0
      %v3017 = vadd.f32 0.0, %v3016
      %3018 = vmatmul.bf16.gmra.mxu0 %v2476
      %v3019 = vpop.f32.mrf.mxu0
      %v3020 = vadd.f32 0.0, %v3019
      %v3021 = vpop.f32.mrf.mxu0
      %v3022 = vadd.f32 0.0, %v3021
      %3023 = vmatmul.bf16.gmra.mxu0 %v2479
      %v3024 = vpop.f32.mrf.mxu0
      %v3025 = vpop.f32.mrf.mxu0
      %3026 = vdwg.mxu0
      %3027 = vmatpush.bf16.msra.mxu0 %v2827
      %3028 = vmatpush.bf16.msra.mxu0 %v2824
      %3029 = vmatpush.bf16.msra.mxu0 %v2821
      %3030 = vmatpush.bf16.msra.mxu0 %v2818
      %3031 = vmatpush.bf16.msra.mxu0 %v2815
      %3032 = vmatpush.bf16.msra.mxu0 %v2812
      %3033 = vmatpush.bf16.msra.mxu0 %v2809
      %3034 = vmatpush.bf16.msra.mxu0 %v2806
      %3035 = vmatmul.bf16.gmra.mxu0 %v2423
      %v3036 = vpop.f32.mrf.mxu0
      %v3037 = vadd.f32 %v2936, %v3036
      %v3038 = vpop.f32.mrf.mxu0
      %v3039 = vadd.f32 %v2938, %v3038
      %3040 = vmatmul.bf16.gmra.mxu0 %v2426
      %v3041 = vpop.f32.mrf.mxu0
      %v3042 = vadd.f32 %v2941, %v3041
      %v3043 = vpop.f32.mrf.mxu0
      %v3044 = vadd.f32 %v2943, %v3043
      %3045 = vmatmul.bf16.gmra.mxu0 %v2429
      %v3046 = vpop.f32.mrf.mxu0
      %v3047 = vadd.f32 %v2946, %v3046
      %v3048 = vpop.f32.mrf.mxu0
      %v3049 = vadd.f32 %v2948, %v3048
      %3050 = vmatmul.bf16.gmra.mxu0 %v2432
      %v3051 = vpop.f32.mrf.mxu0
      %v3052 = vadd.f32 %v2951, %v3051
      %v3053 = vpop.f32.mrf.mxu0
      %v3054 = vadd.f32 %v2953, %v3053
      %3055 = vmatmul.bf16.gmra.mxu0 %v2435
      %v3056 = vpop.f32.mrf.mxu0
      %v3057 = vpop.f32.mrf.mxu0
      %3058 = vmatmul.bf16.gmra.mxu0 %v2438
      %v3059 = vpop.f32.mrf.mxu0
      %v3060 = vadd.f32 %v2959, %v3059
      %v3061 = vpop.f32.mrf.mxu0
      %v3062 = vadd.f32 %v2961, %v3061
      %3063 = vmatmul.bf16.gmra.mxu0 %v2441
      %v3064 = vpop.f32.mrf.mxu0
      %v3065 = vadd.f32 %v2964, %v3064
      %v3066 = vpop.f32.mrf.mxu0
      %v3067 = vadd.f32 %v2966, %v3066
      %3068 = vmatmul.bf16.gmra.mxu0 %v2444
      %v3069 = vpop.f32.mrf.mxu0
      %v3070 = vadd.f32 %v2969, %v3069
      %v3071 = vpop.f32.mrf.mxu0
      %v3072 = vadd.f32 %v2971, %v3071
      %3073 = vmatmul.bf16.gmra.mxu0 %v2447
      %v3074 = vpop.f32.mrf.mxu0
      %v3075 = vadd.f32 %v2974, %v3074
      %v3076 = vpop.f32.mrf.mxu0
      %v3077 = vadd.f32 %v2976, %v3076
      %3078 = vmatmul.bf16.gmra.mxu0 %v2450
      %v3079 = vpop.f32.mrf.mxu0
      %v3080 = vpop.f32.mrf.mxu0
      %3081 = vmatmul.bf16.gmra.mxu0 %v2453
      %v3082 = vpop.f32.mrf.mxu0
      %v3083 = vadd.f32 %v2982, %v3082
      %v3084 = vpop.f32.mrf.mxu0
      %v3085 = vadd.f32 %v2984, %v3084
      %3086 = vmatmul.bf16.gmra.mxu0 %v2456
      %v3087 = vpop.f32.mrf.mxu0
      %v3088 = vadd.f32 %v2987, %v3087
      %v3089 = vpop.f32.mrf.mxu0
      %v3090 = vadd.f32 %v2989, %v3089
      %3091 = vmatmul.bf16.gmra.mxu0 %v2459
      %v3092 = vpop.f32.mrf.mxu0
      %v3093 = vadd.f32 %v2992, %v3092
      %v3094 = vpop.f32.mrf.mxu0
      %v3095 = vadd.f32 %v2994, %v3094
      %3096 = vmatmul.bf16.gmra.mxu0 %v2462
      %v3097 = vpop.f32.mrf.mxu0
      %v3098 = vadd.f32 %v2997, %v3097
      %v3099 = vpop.f32.mrf.mxu0
      %v3100 = vadd.f32 %v2999, %v3099
      %3101 = vmatmul.bf16.gmra.mxu0 %v2465
      %v3102 = vpop.f32.mrf.mxu0
      %v3103 = vpop.f32.mrf.mxu0
      %3104 = vmatmul.bf16.gmra.mxu0 %v2468
      %v3105 = vpop.f32.mrf.mxu0
      %v3106 = vadd.f32 %v3005, %v3105
      %v3107 = vpop.f32.mrf.mxu0
      %v3108 = vadd.f32 %v3007, %v3107
      %3109 = vmatmul.bf16.gmra.mxu0 %v2471
      %v3110 = vpop.f32.mrf.mxu0
      %v3111 = vadd.f32 %v3010, %v3110
      %v3112 = vpop.f32.mrf.mxu0
      %v3113 = vadd.f32 %v3012, %v3112
      %3114 = vmatmul.bf16.gmra.mxu0 %v2474
      %v3115 = vpop.f32.mrf.mxu0
      %v3116 = vadd.f32 %v3015, %v3115
      %v3117 = vpop.f32.mrf.mxu0
      %v3118 = vadd.f32 %v3017, %v3117
      %3119 = vmatmul.bf16.gmra.mxu0 %v2477
      %v3120 = vpop.f32.mrf.mxu0
      %v3121 = vadd.f32 %v3020, %v3120
      %v3122 = vpop.f32.mrf.mxu0
      %v3123 = vadd.f32 %v3022, %v3122
      %3124 = vmatmul.bf16.gmra.mxu0 %v2480
      %v3125 = vpop.f32.mrf.mxu0
      %v3126 = vpop.f32.mrf.mxu0
      %3127 = vdwg.mxu0
      %3128 = vmatpush.bf16.msra.mxu0 %v2851
      %3129 = vmatpush.bf16.msra.mxu0 %v2848
      %3130 = vmatpush.bf16.msra.mxu0 %v2845
      %3131 = vmatpush.bf16.msra.mxu0 %v2842
      %3132 = vmatpush.bf16.msra.mxu0 %v2839
      %3133 = vmatpush.bf16.msra.mxu0 %v2836
      %3134 = vmatpush.bf16.msra.mxu0 %v2833
      %3135 = vmatpush.bf16.msra.mxu0 %v2830
      %3136 = vmatmul.bf16.gmra.mxu0 %v2424
      %v3137 = vpop.f32.mrf.mxu0
      %v3138 = vadd.f32 %v3037, %v3137
      %v3139 = vpop.f32.mrf.mxu0
      %v3140 = vadd.f32 %v3039, %v3139
      %3141 = vmatmul.bf16.gmra.mxu0 %v2427
      %v3142 = vpop.f32.mrf.mxu0
      %v3143 = vadd.f32 %v3042, %v3142
      %v3144 = vpop.f32.mrf.mxu0
      %v3145 = vadd.f32 %v3044, %v3144
      %3146 = vmatmul.bf16.gmra.mxu0 %v2430
      %v3147 = vpop.f32.mrf.mxu0
      %v3148 = vadd.f32 %v3047, %v3147
      %v3149 = vpop.f32.mrf.mxu0
      %v3150 = vadd.f32 %v3049, %v3149
      %3151 = vmatmul.bf16.gmra.mxu0 %v2433
      %v3152 = vpop.f32.mrf.mxu0
      %v3153 = vadd.f32 %v3052, %v3152
      %v3154 = vpop.f32.mrf.mxu0
      %v3155 = vadd.f32 %v3054, %v3154
      %3156 = vmatmul.bf16.gmra.mxu0 %v2436
      %v3157 = vpop.f32.mrf.mxu0
      %v3158 = vpop.f32.mrf.mxu0
      %3159 = vmatmul.bf16.gmra.mxu0 %v2439
      %v3160 = vpop.f32.mrf.mxu0
      %v3161 = vadd.f32 %v3060, %v3160
      %v3162 = vpop.f32.mrf.mxu0
      %v3163 = vadd.f32 %v3062, %v3162
      %3164 = vmatmul.bf16.gmra.mxu0 %v2442
      %v3165 = vpop.f32.mrf.mxu0
      %v3166 = vadd.f32 %v3065, %v3165
      %v3167 = vpop.f32.mrf.mxu0
      %v3168 = vadd.f32 %v3067, %v3167
      %3169 = vmatmul.bf16.gmra.mxu0 %v2445
      %v3170 = vpop.f32.mrf.mxu0
      %v3171 = vadd.f32 %v3070, %v3170
      %v3172 = vpop.f32.mrf.mxu0
      %v3173 = vadd.f32 %v3072, %v3172
      %3174 = vmatmul.bf16.gmra.mxu0 %v2448
      %v3175 = vpop.f32.mrf.mxu0
      %v3176 = vadd.f32 %v3075, %v3175
      %v3177 = vpop.f32.mrf.mxu0
      %v3178 = vadd.f32 %v3077, %v3177
      %3179 = vmatmul.bf16.gmra.mxu0 %v2451
      %v3180 = vpop.f32.mrf.mxu0
      %v3181 = vpop.f32.mrf.mxu0
      %3182 = vmatmul.bf16.gmra.mxu0 %v2454
      %v3183 = vpop.f32.mrf.mxu0
      %v3184 = vadd.f32 %v3083, %v3183
      %v3185 = vpop.f32.mrf.mxu0
      %v3186 = vadd.f32 %v3085, %v3185
      %3187 = vmatmul.bf16.gmra.mxu0 %v2457
      %v3188 = vpop.f32.mrf.mxu0
      %v3189 = vadd.f32 %v3088, %v3188
      %v3190 = vpop.f32.mrf.mxu0
      %v3191 = vadd.f32 %v3090, %v3190
      %3192 = vmatmul.bf16.gmra.mxu0 %v2460
      %v3193 = vpop.f32.mrf.mxu0
      %v3194 = vadd.f32 %v3093, %v3193
      %v3195 = vpop.f32.mrf.mxu0
      %v3196 = vadd.f32 %v3095, %v3195
      %3197 = vmatmul.bf16.gmra.mxu0 %v2463
      %v3198 = vpop.f32.mrf.mxu0
      %v3199 = vadd.f32 %v3098, %v3198
      %v3200 = vpop.f32.mrf.mxu0
      %v3201 = vadd.f32 %v3100, %v3200
      %3202 = vmatmul.bf16.gmra.mxu0 %v2466
      %v3203 = vpop.f32.mrf.mxu0
      %v3204 = vpop.f32.mrf.mxu0
      %3205 = vmatmul.bf16.gmra.mxu0 %v2469
      %v3206 = vpop.f32.mrf.mxu0
      %v3207 = vadd.f32 %v3106, %v3206
      %v3208 = vpop.f32.mrf.mxu0
      %v3209 = vadd.f32 %v3108, %v3208
      %3210 = vmatmul.bf16.gmra.mxu0 %v2472
      %v3211 = vpop.f32.mrf.mxu0
      %v3212 = vadd.f32 %v3111, %v3211
      %v3213 = vpop.f32.mrf.mxu0
      %v3214 = vadd.f32 %v3113, %v3213
      %3215 = vmatmul.bf16.gmra.mxu0 %v2475
      %v3216 = vpop.f32.mrf.mxu0
      %v3217 = vadd.f32 %v3116, %v3216
      %v3218 = vpop.f32.mrf.mxu0
      %v3219 = vadd.f32 %v3118, %v3218
      %3220 = vmatmul.bf16.gmra.mxu0 %v2478
      %v3221 = vpop.f32.mrf.mxu0
      %v3222 = vadd.f32 %v3121, %v3221
      %v3223 = vpop.f32.mrf.mxu0
      %v3224 = vadd.f32 %v3123, %v3223
      %3225 = vmatmul.bf16.gmra.mxu0 %v2481
      %v3226 = vpop.f32.mrf.mxu0
      %v3227 = vpop.f32.mrf.mxu0
      %3228 = vdwg.mxu0
      %3229 = vmatpush.bf16.msra.mxu0 %v2804
      %3230 = vmatpush.bf16.msra.mxu0 %v2801
      %3231 = vmatpush.bf16.msra.mxu0 %v2798
      %3232 = vmatpush.bf16.msra.mxu0 %v2795
      %3233 = vmatpush.bf16.msra.mxu0 %v2792
      %3234 = vmatpush.bf16.msra.mxu0 %v2789
      %3235 = vmatpush.bf16.msra.mxu0 %v2786
      %3236 = vmatpush.bf16.msra.mxu0 %v2783
      %3237 = vmatmul.bf16.gmra.mxu0 %v2422
      %v3238 = vpop.f32.mrf.mxu0
      %v3239 = vpop.f32.mrf.mxu0
      %v3240 = vadd.f32 0.0, %v3239
      %3241 = vmatmul.bf16.gmra.mxu0 %v2425
      %v3242 = vpop.f32.mrf.mxu0
      %v3243 = vadd.f32 0.0, %v3242
      %v3244 = vpop.f32.mrf.mxu0
      %v3245 = vadd.f32 0.0, %v3244
      %3246 = vmatmul.bf16.gmra.mxu0 %v2428
      %v3247 = vpop.f32.mrf.mxu0
      %v3248 = vadd.f32 0.0, %v3247
      %v3249 = vpop.f32.mrf.mxu0
      %v3250 = vadd.f32 0.0, %v3249
      %3251 = vmatmul.bf16.gmra.mxu0 %v2431
      %v3252 = vpop.f32.mrf.mxu0
      %v3253 = vadd.f32 0.0, %v3252
      %v3254 = vpop.f32.mrf.mxu0
      %v3255 = vadd.f32 0.0, %v3254
      %3256 = vmatmul.bf16.gmra.mxu0 %v2434
      %v3257 = vpop.f32.mrf.mxu0
      %v3258 = vadd.f32 0.0, %v3257
      %v3259 = vpop.f32.mrf.mxu0
      %3260 = vmatmul.bf16.gmra.mxu0 %v2437
      %v3261 = vpop.f32.mrf.mxu0
      %v3262 = vpop.f32.mrf.mxu0
      %v3263 = vadd.f32 0.0, %v3262
      %3264 = vmatmul.bf16.gmra.mxu0 %v2440
      %v3265 = vpop.f32.mrf.mxu0
      %v3266 = vadd.f32 0.0, %v3265
      %v3267 = vpop.f32.mrf.mxu0
      %v3268 = vadd.f32 0.0, %v3267
      %3269 = vmatmul.bf16.gmra.mxu0 %v2443
      %v3270 = vpop.f32.mrf.mxu0
      %v3271 = vadd.f32 0.0, %v3270
      %v3272 = vpop.f32.mrf.mxu0
      %v3273 = vadd.f32 0.0, %v3272
      %3274 = vmatmul.bf16.gmra.mxu0 %v2446
      %v3275 = vpop.f32.mrf.mxu0
      %v3276 = vadd.f32 0.0, %v3275
      %v3277 = vpop.f32.mrf.mxu0
      %v3278 = vadd.f32 0.0, %v3277
      %3279 = vmatmul.bf16.gmra.mxu0 %v2449
      %v3280 = vpop.f32.mrf.mxu0
      %v3281 = vadd.f32 0.0, %v3280
      %v3282 = vpop.f32.mrf.mxu0
      %3283 = vmatmul.bf16.gmra.mxu0 %v2452
      %v3284 = vpop.f32.mrf.mxu0
      %v3285 = vpop.f32.mrf.mxu0
      %v3286 = vadd.f32 0.0, %v3285
      %3287 = vmatmul.bf16.gmra.mxu0 %v2455
      %v3288 = vpop.f32.mrf.mxu0
      %v3289 = vadd.f32 0.0, %v3288
      %v3290 = vpop.f32.mrf.mxu0
      %v3291 = vadd.f32 0.0, %v3290
      %3292 = vmatmul.bf16.gmra.mxu0 %v2458
      %v3293 = vpop.f32.mrf.mxu0
      %v3294 = vadd.f32 0.0, %v3293
      %v3295 = vpop.f32.mrf.mxu0
      %v3296 = vadd.f32 0.0, %v3295
      %3297 = vmatmul.bf16.gmra.mxu0 %v2461
      %v3298 = vpop.f32.mrf.mxu0
      %v3299 = vadd.f32 0.0, %v3298
      %v3300 = vpop.f32.mrf.mxu0
      %v3301 = vadd.f32 0.0, %v3300
      %3302 = vmatmul.bf16.gmra.mxu0 %v2464
      %v3303 = vpop.f32.mrf.mxu0
      %v3304 = vadd.f32 0.0, %v3303
      %v3305 = vpop.f32.mrf.mxu0
      %3306 = vmatmul.bf16.gmra.mxu0 %v2467
      %v3307 = vpop.f32.mrf.mxu0
      %v3308 = vpop.f32.mrf.mxu0
      %v3309 = vadd.f32 0.0, %v3308
      %3310 = vmatmul.bf16.gmra.mxu0 %v2470
      %v3311 = vpop.f32.mrf.mxu0
      %v3312 = vadd.f32 0.0, %v3311
      %v3313 = vpop.f32.mrf.mxu0
      %v3314 = vadd.f32 0.0, %v3313
      %3315 = vmatmul.bf16.gmra.mxu0 %v2473
      %v3316 = vpop.f32.mrf.mxu0
      %v3317 = vadd.f32 0.0, %v3316
      %v3318 = vpop.f32.mrf.mxu0
      %v3319 = vadd.f32 0.0, %v3318
      %3320 = vmatmul.bf16.gmra.mxu0 %v2476
      %v3321 = vpop.f32.mrf.mxu0
      %v3322 = vadd.f32 0.0, %v3321
      %v3323 = vpop.f32.mrf.mxu0
      %v3324 = vadd.f32 0.0, %v3323
      %3325 = vmatmul.bf16.gmra.mxu0 %v2479
      %v3326 = vpop.f32.mrf.mxu0
      %v3327 = vadd.f32 0.0, %v3326
      %v3328 = vpop.f32.mrf.mxu0
      %3329 = vdwg.mxu0
      %3330 = vmatpush.bf16.msra.mxu0 %v2828
      %3331 = vmatpush.bf16.msra.mxu0 %v2825
      %3332 = vmatpush.bf16.msra.mxu0 %v2822
      %3333 = vmatpush.bf16.msra.mxu0 %v2819
      %3334 = vmatpush.bf16.msra.mxu0 %v2816
      %3335 = vmatpush.bf16.msra.mxu0 %v2813
      %3336 = vmatpush.bf16.msra.mxu0 %v2810
      %3337 = vmatpush.bf16.msra.mxu0 %v2807
      %3338 = vmatmul.bf16.gmra.mxu0 %v2423
      %v3339 = vpop.f32.mrf.mxu0
      %v3340 = vpop.f32.mrf.mxu0
      %v3341 = vadd.f32 %v3240, %v3340
      %3342 = vmatmul.bf16.gmra.mxu0 %v2426
      %v3343 = vpop.f32.mrf.mxu0
      %v3344 = vadd.f32 %v3243, %v3343
      %v3345 = vpop.f32.mrf.mxu0
      %v3346 = vadd.f32 %v3245, %v3345
      %3347 = vmatmul.bf16.gmra.mxu0 %v2429
      %v3348 = vpop.f32.mrf.mxu0
      %v3349 = vadd.f32 %v3248, %v3348
      %v3350 = vpop.f32.mrf.mxu0
      %v3351 = vadd.f32 %v3250, %v3350
      %3352 = vmatmul.bf16.gmra.mxu0 %v2432
      %v3353 = vpop.f32.mrf.mxu0
      %v3354 = vadd.f32 %v3253, %v3353
      %v3355 = vpop.f32.mrf.mxu0
      %v3356 = vadd.f32 %v3255, %v3355
      %3357 = vmatmul.bf16.gmra.mxu0 %v2435
      %v3358 = vpop.f32.mrf.mxu0
      %v3359 = vadd.f32 %v3258, %v3358
      %v3360 = vpop.f32.mrf.mxu0
      %3361 = vmatmul.bf16.gmra.mxu0 %v2438
      %v3362 = vpop.f32.mrf.mxu0
      %v3363 = vpop.f32.mrf.mxu0
      %v3364 = vadd.f32 %v3263, %v3363
      %3365 = vmatmul.bf16.gmra.mxu0 %v2441
      %v3366 = vpop.f32.mrf.mxu0
      %v3367 = vadd.f32 %v3266, %v3366
      %v3368 = vpop.f32.mrf.mxu0
      %v3369 = vadd.f32 %v3268, %v3368
      %3370 = vmatmul.bf16.gmra.mxu0 %v2444
      %v3371 = vpop.f32.mrf.mxu0
      %v3372 = vadd.f32 %v3271, %v3371
      %v3373 = vpop.f32.mrf.mxu0
      %v3374 = vadd.f32 %v3273, %v3373
      %3375 = vmatmul.bf16.gmra.mxu0 %v2447
      %v3376 = vpop.f32.mrf.mxu0
      %v3377 = vadd.f32 %v3276, %v3376
      %v3378 = vpop.f32.mrf.mxu0
      %v3379 = vadd.f32 %v3278, %v3378
      %3380 = vmatmul.bf16.gmra.mxu0 %v2450
      %v3381 = vpop.f32.mrf.mxu0
      %v3382 = vadd.f32 %v3281, %v3381
      %v3383 = vpop.f32.mrf.mxu0
      %3384 = vmatmul.bf16.gmra.mxu0 %v2453
      %v3385 = vpop.f32.mrf.mxu0
      %v3386 = vpop.f32.mrf.mxu0
      %v3387 = vadd.f32 %v3286, %v3386
      %3388 = vmatmul.bf16.gmra.mxu0 %v2456
      %v3389 = vpop.f32.mrf.mxu0
      %v3390 = vadd.f32 %v3289, %v3389
      %v3391 = vpop.f32.mrf.mxu0
      %v3392 = vadd.f32 %v3291, %v3391
      %3393 = vmatmul.bf16.gmra.mxu0 %v2459
      %v3394 = vpop.f32.mrf.mxu0
      %v3395 = vadd.f32 %v3294, %v3394
      %v3396 = vpop.f32.mrf.mxu0
      %v3397 = vadd.f32 %v3296, %v3396
      %3398 = vmatmul.bf16.gmra.mxu0 %v2462
      %v3399 = vpop.f32.mrf.mxu0
      %v3400 = vadd.f32 %v3299, %v3399
      %v3401 = vpop.f32.mrf.mxu0
      %v3402 = vadd.f32 %v3301, %v3401
      %3403 = vmatmul.bf16.gmra.mxu0 %v2465
      %v3404 = vpop.f32.mrf.mxu0
      %v3405 = vadd.f32 %v3304, %v3404
      %v3406 = vpop.f32.mrf.mxu0
      %3407 = vmatmul.bf16.gmra.mxu0 %v2468
      %v3408 = vpop.f32.mrf.mxu0
      %v3409 = vpop.f32.mrf.mxu0
      %v3410 = vadd.f32 %v3309, %v3409
      %3411 = vmatmul.bf16.gmra.mxu0 %v2471
      %v3412 = vpop.f32.mrf.mxu0
      %v3413 = vadd.f32 %v3312, %v3412
      %v3414 = vpop.f32.mrf.mxu0
      %v3415 = vadd.f32 %v3314, %v3414
      %3416 = vmatmul.bf16.gmra.mxu0 %v2474
      %v3417 = vpop.f32.mrf.mxu0
      %v3418 = vadd.f32 %v3317, %v3417
      %v3419 = vpop.f32.mrf.mxu0
      %v3420 = vadd.f32 %v3319, %v3419
      %3421 = vmatmul.bf16.gmra.mxu0 %v2477
      %v3422 = vpop.f32.mrf.mxu0
      %v3423 = vadd.f32 %v3322, %v3422
      %v3424 = vpop.f32.mrf.mxu0
      %v3425 = vadd.f32 %v3324, %v3424
      %3426 = vmatmul.bf16.gmra.mxu0 %v2480
      %v3427 = vpop.f32.mrf.mxu0
      %v3428 = vadd.f32 %v3327, %v3427
      %v3429 = vpop.f32.mrf.mxu0
      %3430 = vdwg.mxu0
      %3431 = vmatpush.bf16.msra.mxu0 %v2852
      %3432 = vmatpush.bf16.msra.mxu0 %v2849
      %3433 = vmatpush.bf16.msra.mxu0 %v2846
      %3434 = vmatpush.bf16.msra.mxu0 %v2843
      %3435 = vmatpush.bf16.msra.mxu0 %v2840
      %3436 = vmatpush.bf16.msra.mxu0 %v2837
      %3437 = vmatpush.bf16.msra.mxu0 %v2834
      %3438 = vmatpush.bf16.msra.mxu0 %v2831
      %3439 = vmatmul.bf16.gmra.mxu0 %v2424
      %v3440 = vpop.f32.mrf.mxu0
      %v3441 = vpop.f32.mrf.mxu0
      %v3442 = vadd.f32 %v3341, %v3441
      %3443 = vmatmul.bf16.gmra.mxu0 %v2427
      %v3444 = vpop.f32.mrf.mxu0
      %v3445 = vadd.f32 %v3344, %v3444
      %v3446 = vpop.f32.mrf.mxu0
      %v3447 = vadd.f32 %v3346, %v3446
      %3448 = vmatmul.bf16.gmra.mxu0 %v2430
      %v3449 = vpop.f32.mrf.mxu0
      %v3450 = vadd.f32 %v3349, %v3449
      %v3451 = vpop.f32.mrf.mxu0
      %v3452 = vadd.f32 %v3351, %v3451
      %3453 = vmatmul.bf16.gmra.mxu0 %v2433
      %v3454 = vpop.f32.mrf.mxu0
      %v3455 = vadd.f32 %v3354, %v3454
      %v3456 = vpop.f32.mrf.mxu0
      %v3457 = vadd.f32 %v3356, %v3456
      %3458 = vmatmul.bf16.gmra.mxu0 %v2436
      %v3459 = vpop.f32.mrf.mxu0
      %v3460 = vadd.f32 %v3359, %v3459
      %v3461 = vpop.f32.mrf.mxu0
      %3462 = vmatmul.bf16.gmra.mxu0 %v2439
      %v3463 = vpop.f32.mrf.mxu0
      %v3464 = vpop.f32.mrf.mxu0
      %v3465 = vadd.f32 %v3364, %v3464
      %3466 = vmatmul.bf16.gmra.mxu0 %v2442
      %v3467 = vpop.f32.mrf.mxu0
      %v3468 = vadd.f32 %v3367, %v3467
      %v3469 = vpop.f32.mrf.mxu0
      %v3470 = vadd.f32 %v3369, %v3469
      %3471 = vmatmul.bf16.gmra.mxu0 %v2445
      %v3472 = vpop.f32.mrf.mxu0
      %v3473 = vadd.f32 %v3372, %v3472
      %v3474 = vpop.f32.mrf.mxu0
      %v3475 = vadd.f32 %v3374, %v3474
      %3476 = vmatmul.bf16.gmra.mxu0 %v2448
      %v3477 = vpop.f32.mrf.mxu0
      %v3478 = vadd.f32 %v3377, %v3477
      %v3479 = vpop.f32.mrf.mxu0
      %v3480 = vadd.f32 %v3379, %v3479
      %3481 = vmatmul.bf16.gmra.mxu0 %v2451
      %v3482 = vpop.f32.mrf.mxu0
      %v3483 = vadd.f32 %v3382, %v3482
      %v3484 = vpop.f32.mrf.mxu0
      %3485 = vmatmul.bf16.gmra.mxu0 %v2454
      %v3486 = vpop.f32.mrf.mxu0
      %v3487 = vpop.f32.mrf.mxu0
      %v3488 = vadd.f32 %v3387, %v3487
      %3489 = vmatmul.bf16.gmra.mxu0 %v2457
      %v3490 = vpop.f32.mrf.mxu0
      %v3491 = vadd.f32 %v3390, %v3490
      %v3492 = vpop.f32.mrf.mxu0
      %v3493 = vadd.f32 %v3392, %v3492
      %3494 = vmatmul.bf16.gmra.mxu0 %v2460
      %v3495 = vpop.f32.mrf.mxu0
      %v3496 = vadd.f32 %v3395, %v3495
      %v3497 = vpop.f32.mrf.mxu0
      %v3498 = vadd.f32 %v3397, %v3497
      %3499 = vmatmul.bf16.gmra.mxu0 %v2463
      %v3500 = vpop.f32.mrf.mxu0
      %v3501 = vadd.f32 %v3400, %v3500
      %v3502 = vpop.f32.mrf.mxu0
      %v3503 = vadd.f32 %v3402, %v3502
      %3504 = vmatmul.bf16.gmra.mxu0 %v2466
      %v3505 = vpop.f32.mrf.mxu0
      %v3506 = vadd.f32 %v3405, %v3505
      %v3507 = vpop.f32.mrf.mxu0
      %3508 = vmatmul.bf16.gmra.mxu0 %v2469
      %v3509 = vpop.f32.mrf.mxu0
      %v3510 = vpop.f32.mrf.mxu0
      %v3511 = vadd.f32 %v3410, %v3510
      %3512 = vmatmul.bf16.gmra.mxu0 %v2472
      %v3513 = vpop.f32.mrf.mxu0
      %v3514 = vadd.f32 %v3413, %v3513
      %v3515 = vpop.f32.mrf.mxu0
      %v3516 = vadd.f32 %v3415, %v3515
      %3517 = vmatmul.bf16.gmra.mxu0 %v2475
      %v3518 = vpop.f32.mrf.mxu0
      %v3519 = vadd.f32 %v3418, %v3518
      %v3520 = vpop.f32.mrf.mxu0
      %v3521 = vadd.f32 %v3420, %v3520
      %3522 = vmatmul.bf16.gmra.mxu0 %v2478
      %v3523 = vpop.f32.mrf.mxu0
      %v3524 = vadd.f32 %v3423, %v3523
      %v3525 = vpop.f32.mrf.mxu0
      %v3526 = vadd.f32 %v3425, %v3525
      %3527 = vmatmul.bf16.gmra.mxu0 %v2481
      %v3528 = vpop.f32.mrf.mxu0
      %v3529 = vadd.f32 %v3428, %v3528
      %v3530 = vpop.f32.mrf.mxu0
      %3531 = vdwg.mxu0
      %3532 = vmatpush.bf16.msra.mxu0 %v2805
      %3533 = vmatpush.bf16.msra.mxu0 %v2802
      %3534 = vmatpush.bf16.msra.mxu0 %v2799
      %3535 = vmatpush.bf16.msra.mxu0 %v2796
      %3536 = vmatpush.bf16.msra.mxu0 %v2793
      %3537 = vmatpush.bf16.msra.mxu0 %v2790
      %3538 = vmatpush.bf16.msra.mxu0 %v2787
      %3539 = vmatpush.bf16.msra.mxu0 %v2784
      %3540 = vmatmul.bf16.gmra.mxu0 %v2422
      %v3541 = vpop.f32.mrf.mxu0
      %v3542 = vpop.f32.mrf.mxu0
      %3543 = vmatmul.bf16.gmra.mxu0 %v2425
      %v3544 = vpop.f32.mrf.mxu0
      %v3545 = vadd.f32 0.0, %v3544
      %v3546 = vpop.f32.mrf.mxu0
      %v3547 = vadd.f32 0.0, %v3546
      %3548 = vmatmul.bf16.gmra.mxu0 %v2428
      %v3549 = vpop.f32.mrf.mxu0
      %v3550 = vadd.f32 0.0, %v3549
      %v3551 = vpop.f32.mrf.mxu0
      %v3552 = vadd.f32 0.0, %v3551
      %3553 = vmatmul.bf16.gmra.mxu0 %v2431
      %v3554 = vpop.f32.mrf.mxu0
      %v3555 = vadd.f32 0.0, %v3554
      %v3556 = vpop.f32.mrf.mxu0
      %v3557 = vadd.f32 0.0, %v3556
      %3558 = vmatmul.bf16.gmra.mxu0 %v2434
      %v3559 = vpop.f32.mrf.mxu0
      %v3560 = vadd.f32 0.0, %v3559
      %v3561 = vpop.f32.mrf.mxu0
      %v3562 = vadd.f32 0.0, %v3561
      %3563 = vmatmul.bf16.gmra.mxu0 %v2437
      %v3564 = vpop.f32.mrf.mxu0
      %v3565 = vpop.f32.mrf.mxu0
      %3566 = vmatmul.bf16.gmra.mxu0 %v2440
      %v3567 = vpop.f32.mrf.mxu0
      %v3568 = vadd.f32 0.0, %v3567
      %v3569 = vpop.f32.mrf.mxu0
      %v3570 = vadd.f32 0.0, %v3569
      %3571 = vmatmul.bf16.gmra.mxu0 %v2443
      %v3572 = vpop.f32.mrf.mxu0
      %v3573 = vadd.f32 0.0, %v3572
      %v3574 = vpop.f32.mrf.mxu0
      %v3575 = vadd.f32 0.0, %v3574
      %3576 = vmatmul.bf16.gmra.mxu0 %v2446
      %v3577 = vpop.f32.mrf.mxu0
      %v3578 = vadd.f32 0.0, %v3577
      %v3579 = vpop.f32.mrf.mxu0
      %v3580 = vadd.f32 0.0, %v3579
      %3581 = vmatmul.bf16.gmra.mxu0 %v2449
      %v3582 = vpop.f32.mrf.mxu0
      %v3583 = vadd.f32 0.0, %v3582
      %v3584 = vpop.f32.mrf.mxu0
      %v3585 = vadd.f32 0.0, %v3584
      %3586 = vmatmul.bf16.gmra.mxu0 %v2452
      %v3587 = vpop.f32.mrf.mxu0
      %v3588 = vpop.f32.mrf.mxu0
      %3589 = vmatmul.bf16.gmra.mxu0 %v2455
      %v3590 = vpop.f32.mrf.mxu0
      %v3591 = vadd.f32 0.0, %v3590
      %v3592 = vpop.f32.mrf.mxu0
      %v3593 = vadd.f32 0.0, %v3592
      %3594 = vmatmul.bf16.gmra.mxu0 %v2458
      %v3595 = vpop.f32.mrf.mxu0
      %v3596 = vadd.f32 0.0, %v3595
      %v3597 = vpop.f32.mrf.mxu0
      %v3598 = vadd.f32 0.0, %v3597
      %3599 = vmatmul.bf16.gmra.mxu0 %v2461
      %v3600 = vpop.f32.mrf.mxu0
      %v3601 = vadd.f32 0.0, %v3600
      %v3602 = vpop.f32.mrf.mxu0
      %v3603 = vadd.f32 0.0, %v3602
      %3604 = vmatmul.bf16.gmra.mxu0 %v2464
      %v3605 = vpop.f32.mrf.mxu0
      %v3606 = vadd.f32 0.0, %v3605
      %v3607 = vpop.f32.mrf.mxu0
      %v3608 = vadd.f32 0.0, %v3607
      %3609 = vmatmul.bf16.gmra.mxu0 %v2467
      %v3610 = vpop.f32.mrf.mxu0
      %v3611 = vpop.f32.mrf.mxu0
      %3612 = vmatmul.bf16.gmra.mxu0 %v2470
      %v3613 = vpop.f32.mrf.mxu0
      %v3614 = vadd.f32 0.0, %v3613
      %v3615 = vpop.f32.mrf.mxu0
      %v3616 = vadd.f32 0.0, %v3615
      %3617 = vmatmul.bf16.gmra.mxu0 %v2473
      %v3618 = vpop.f32.mrf.mxu0
      %v3619 = vadd.f32 0.0, %v3618
      %v3620 = vpop.f32.mrf.mxu0
      %v3621 = vadd.f32 0.0, %v3620
      %3622 = vmatmul.bf16.gmra.mxu0 %v2476
      %v3623 = vpop.f32.mrf.mxu0
      %v3624 = vadd.f32 0.0, %v3623
      %v3625 = vpop.f32.mrf.mxu0
      %v3626 = vadd.f32 0.0, %v3625
      %3627 = vmatmul.bf16.gmra.mxu0 %v2479
      %v3628 = vpop.f32.mrf.mxu0
      %v3629 = vadd.f32 0.0, %v3628
      %v3630 = vpop.f32.mrf.mxu0
      %v3631 = vadd.f32 0.0, %v3630
      %3632 = vdwg.mxu0
      %3633 = vmatpush.bf16.msra.mxu0 %v2829
      %3634 = vmatpush.bf16.msra.mxu0 %v2826
      %3635 = vmatpush.bf16.msra.mxu0 %v2823
      %3636 = vmatpush.bf16.msra.mxu0 %v2820
      %3637 = vmatpush.bf16.msra.mxu0 %v2817
      %3638 = vmatpush.bf16.msra.mxu0 %v2814
      %3639 = vmatpush.bf16.msra.mxu0 %v2811
      %3640 = vmatpush.bf16.msra.mxu0 %v2808
      %3641 = vmatmul.bf16.gmra.mxu0 %v2423
      %v3642 = vpop.f32.mrf.mxu0
      %v3643 = vpop.f32.mrf.mxu0
      %3644 = vmatmul.bf16.gmra.mxu0 %v2426
      %v3645 = vpop.f32.mrf.mxu0
      %v3646 = vadd.f32 %v3545, %v3645
      %v3647 = vpop.f32.mrf.mxu0
      %v3648 = vadd.f32 %v3547, %v3647
      %3649 = vmatmul.bf16.gmra.mxu0 %v2429
      %v3650 = vpop.f32.mrf.mxu0
      %v3651 = vadd.f32 %v3550, %v3650
      %v3652 = vpop.f32.mrf.mxu0
      %v3653 = vadd.f32 %v3552, %v3652
      %3654 = vmatmul.bf16.gmra.mxu0 %v2432
      %v3655 = vpop.f32.mrf.mxu0
      %v3656 = vadd.f32 %v3555, %v3655
      %v3657 = vpop.f32.mrf.mxu0
      %v3658 = vadd.f32 %v3557, %v3657
      %3659 = vmatmul.bf16.gmra.mxu0 %v2435
      %v3660 = vpop.f32.mrf.mxu0
      %v3661 = vadd.f32 %v3560, %v3660
      %v3662 = vpop.f32.mrf.mxu0
      %v3663 = vadd.f32 %v3562, %v3662
      %3664 = vmatmul.bf16.gmra.mxu0 %v2438
      %v3665 = vpop.f32.mrf.mxu0
      %v3666 = vpop.f32.mrf.mxu0
      %3667 = vmatmul.bf16.gmra.mxu0 %v2441
      %v3668 = vpop.f32.mrf.mxu0
      %v3669 = vadd.f32 %v3568, %v3668
      %v3670 = vpop.f32.mrf.mxu0
      %v3671 = vadd.f32 %v3570, %v3670
      %3672 = vmatmul.bf16.gmra.mxu0 %v2444
      %v3673 = vpop.f32.mrf.mxu0
      %v3674 = vadd.f32 %v3573, %v3673
      %v3675 = vpop.f32.mrf.mxu0
      %v3676 = vadd.f32 %v3575, %v3675
      %3677 = vmatmul.bf16.gmra.mxu0 %v2447
      %v3678 = vpop.f32.mrf.mxu0
      %v3679 = vadd.f32 %v3578, %v3678
      %v3680 = vpop.f32.mrf.mxu0
      %v3681 = vadd.f32 %v3580, %v3680
      %3682 = vmatmul.bf16.gmra.mxu0 %v2450
      %v3683 = vpop.f32.mrf.mxu0
      %v3684 = vadd.f32 %v3583, %v3683
      %v3685 = vpop.f32.mrf.mxu0
      %v3686 = vadd.f32 %v3585, %v3685
      %3687 = vmatmul.bf16.gmra.mxu0 %v2453
      %v3688 = vpop.f32.mrf.mxu0
      %v3689 = vpop.f32.mrf.mxu0
      %3690 = vmatmul.bf16.gmra.mxu0 %v2456
      %v3691 = vpop.f32.mrf.mxu0
      %v3692 = vadd.f32 %v3591, %v3691
      %v3693 = vpop.f32.mrf.mxu0
      %v3694 = vadd.f32 %v3593, %v3693
      %3695 = vmatmul.bf16.gmra.mxu0 %v2459
      %v3696 = vpop.f32.mrf.mxu0
      %v3697 = vadd.f32 %v3596, %v3696
      %v3698 = vpop.f32.mrf.mxu0
      %v3699 = vadd.f32 %v3598, %v3698
      %3700 = vmatmul.bf16.gmra.mxu0 %v2462
      %v3701 = vpop.f32.mrf.mxu0
      %v3702 = vadd.f32 %v3601, %v3701
      %v3703 = vpop.f32.mrf.mxu0
      %v3704 = vadd.f32 %v3603, %v3703
      %3705 = vmatmul.bf16.gmra.mxu0 %v2465
      %v3706 = vpop.f32.mrf.mxu0
      %v3707 = vadd.f32 %v3606, %v3706
      %v3708 = vpop.f32.mrf.mxu0
      %v3709 = vadd.f32 %v3608, %v3708
      %3710 = vmatmul.bf16.gmra.mxu0 %v2468
      %v3711 = vpop.f32.mrf.mxu0
      %v3712 = vpop.f32.mrf.mxu0
      %3713 = vmatmul.bf16.gmra.mxu0 %v2471
      %v3714 = vpop.f32.mrf.mxu0
      %v3715 = vadd.f32 %v3614, %v3714
      %v3716 = vpop.f32.mrf.mxu0
      %v3717 = vadd.f32 %v3616, %v3716
      %3718 = vmatmul.bf16.gmra.mxu0 %v2474
      %v3719 = vpop.f32.mrf.mxu0
      %v3720 = vadd.f32 %v3619, %v3719
      %v3721 = vpop.f32.mrf.mxu0
      %v3722 = vadd.f32 %v3621, %v3721
      %3723 = vmatmul.bf16.gmra.mxu0 %v2477
      %v3724 = vpop.f32.mrf.mxu0
      %v3725 = vadd.f32 %v3624, %v3724
      %v3726 = vpop.f32.mrf.mxu0
      %v3727 = vadd.f32 %v3626, %v3726
      %3728 = vmatmul.bf16.gmra.mxu0 %v2480
      %v3729 = vpop.f32.mrf.mxu0
      %v3730 = vadd.f32 %v3629, %v3729
      %v3731 = vpop.f32.mrf.mxu0
      %v3732 = vadd.f32 %v3631, %v3731
      %3733 = vdwg.mxu0
      %3734 = vmatpush.bf16.msra.mxu0 %v2853
      %3735 = vmatpush.bf16.msra.mxu0 %v2850
      %3736 = vmatpush.bf16.msra.mxu0 %v2847
      %3737 = vmatpush.bf16.msra.mxu0 %v2844
      %3738 = vmatpush.bf16.msra.mxu0 %v2841
      %3739 = vmatpush.bf16.msra.mxu0 %v2838
      %3740 = vmatpush.bf16.msra.mxu0 %v2835
      %3741 = vmatpush.bf16.msra.mxu0 %v2832
      %3742 = vmatmul.bf16.gmra.mxu0 %v2424
      %v3743 = vpop.f32.mrf.mxu0
      %v3744 = vpop.f32.mrf.mxu0
      %3745 = vmatmul.bf16.gmra.mxu0 %v2427
      %v3746 = vpop.f32.mrf.mxu0
      %v3747 = vadd.f32 %v3646, %v3746
      %v3748 = vpop.f32.mrf.mxu0
      %v3749 = vadd.f32 %v3648, %v3748
      %3750 = vmatmul.bf16.gmra.mxu0 %v2430
      %v3751 = vpop.f32.mrf.mxu0
      %v3752 = vadd.f32 %v3651, %v3751
      %v3753 = vpop.f32.mrf.mxu0
      %v3754 = vadd.f32 %v3653, %v3753
      %3755 = vmatmul.bf16.gmra.mxu0 %v2433
      %v3756 = vpop.f32.mrf.mxu0
      %v3757 = vadd.f32 %v3656, %v3756
      %v3758 = vpop.f32.mrf.mxu0
      %v3759 = vadd.f32 %v3658, %v3758
      %3760 = vmatmul.bf16.gmra.mxu0 %v2436
      %v3761 = vpop.f32.mrf.mxu0
      %v3762 = vadd.f32 %v3661, %v3761
      %v3763 = vpop.f32.mrf.mxu0
      %v3764 = vadd.f32 %v3663, %v3763
      %3765 = vmatmul.bf16.gmra.mxu0 %v2439
      %v3766 = vpop.f32.mrf.mxu0
      %v3767 = vpop.f32.mrf.mxu0
      %3768 = vmatmul.bf16.gmra.mxu0 %v2442
      %v3769 = vpop.f32.mrf.mxu0
      %v3770 = vadd.f32 %v3669, %v3769
      %v3771 = vpop.f32.mrf.mxu0
      %v3772 = vadd.f32 %v3671, %v3771
      %3773 = vmatmul.bf16.gmra.mxu0 %v2445
      %v3774 = vpop.f32.mrf.mxu0
      %v3775 = vadd.f32 %v3674, %v3774
      %v3776 = vpop.f32.mrf.mxu0
      %v3777 = vadd.f32 %v3676, %v3776
      %3778 = vmatmul.bf16.gmra.mxu0 %v2448
      %v3779 = vpop.f32.mrf.mxu0
      %v3780 = vadd.f32 %v3679, %v3779
      %v3781 = vpop.f32.mrf.mxu0
      %v3782 = vadd.f32 %v3681, %v3781
      %3783 = vmatmul.bf16.gmra.mxu0 %v2451
      %v3784 = vpop.f32.mrf.mxu0
      %v3785 = vadd.f32 %v3684, %v3784
      %v3786 = vpop.f32.mrf.mxu0
      %v3787 = vadd.f32 %v3686, %v3786
      %3788 = vmatmul.bf16.gmra.mxu0 %v2454
      %v3789 = vpop.f32.mrf.mxu0
      %v3790 = vpop.f32.mrf.mxu0
      %3791 = vmatmul.bf16.gmra.mxu0 %v2457
      %v3792 = vpop.f32.mrf.mxu0
      %v3793 = vadd.f32 %v3692, %v3792
      %v3794 = vpop.f32.mrf.mxu0
      %v3795 = vadd.f32 %v3694, %v3794
      %3796 = vmatmul.bf16.gmra.mxu0 %v2460
      %v3797 = vpop.f32.mrf.mxu0
      %v3798 = vadd.f32 %v3697, %v3797
      %v3799 = vpop.f32.mrf.mxu0
      %v3800 = vadd.f32 %v3699, %v3799
      %3801 = vmatmul.bf16.gmra.mxu0 %v2463
      %v3802 = vpop.f32.mrf.mxu0
      %v3803 = vadd.f32 %v3702, %v3802
      %v3804 = vpop.f32.mrf.mxu0
      %v3805 = vadd.f32 %v3704, %v3804
      %3806 = vmatmul.bf16.gmra.mxu0 %v2466
      %v3807 = vpop.f32.mrf.mxu0
      %v3808 = vadd.f32 %v3707, %v3807
      %v3809 = vpop.f32.mrf.mxu0
      %v3810 = vadd.f32 %v3709, %v3809
      %3811 = vmatmul.bf16.gmra.mxu0 %v2469
      %v3812 = vpop.f32.mrf.mxu0
      %v3813 = vpop.f32.mrf.mxu0
      %3814 = vmatmul.bf16.gmra.mxu0 %v2472
      %v3815 = vpop.f32.mrf.mxu0
      %v3816 = vadd.f32 %v3715, %v3815
      %v3817 = vpop.f32.mrf.mxu0
      %v3818 = vadd.f32 %v3717, %v3817
      %3819 = vmatmul.bf16.gmra.mxu0 %v2475
      %v3820 = vpop.f32.mrf.mxu0
      %v3821 = vadd.f32 %v3720, %v3820
      %v3822 = vpop.f32.mrf.mxu0
      %v3823 = vadd.f32 %v3722, %v3822
      %3824 = vmatmul.bf16.gmra.mxu0 %v2478
      %v3825 = vpop.f32.mrf.mxu0
      %v3826 = vadd.f32 %v3725, %v3825
      %v3827 = vpop.f32.mrf.mxu0
      %v3828 = vadd.f32 %v3727, %v3827
      %3829 = vmatmul.bf16.gmra.mxu0 %v2481
      %v3830 = vpop.f32.mrf.mxu0
      %v3831 = vadd.f32 %v3730, %v3830
      %v3832 = vpop.f32.mrf.mxu0
      %v3833 = vadd.f32 %v3732, %v3832
      %3834 = vdwg.mxu0
      %v3915 = vunpack.c.l.b16 %v1865
      %v3916 = vunpack.c.h.b16 %v1865
      %v3917 = vunpack.c.l.b16 %v1866
      %v3918 = vunpack.c.l.b16 %v1867
      %v3919 = vunpack.c.h.b16 %v1867
      %v3920 = vunpack.c.l.b16 %v1868
      %v3921 = vunpack.c.l.b16 %v1869
      %v3922 = vunpack.c.h.b16 %v1869
      %v3923 = vunpack.c.l.b16 %v1870
      %v3924 = vunpack.c.l.b16 %v1871
      %v3925 = vunpack.c.h.b16 %v1871
      %v3926 = vunpack.c.l.b16 %v1872
      %v3927 = vunpack.c.l.b16 %v1873
      %v3928 = vunpack.c.h.b16 %v1873
      %v3929 = vunpack.c.l.b16 %v1874
      %v3930 = vunpack.c.l.b16 %v1875
      %v3931 = vunpack.c.h.b16 %v1875
      %v3932 = vunpack.c.l.b16 %v1876
      %v3933 = vunpack.c.l.b16 %v1877
      %v3934 = vunpack.c.h.b16 %v1877
      %v3935 = vunpack.c.l.b16 %v1878
      %v3936 = vunpack.c.l.b16 %v1879
      %v3937 = vunpack.c.h.b16 %v1879
      %v3938 = vunpack.c.l.b16 %v1880
      %v3939 = vunpack.c.l.b16 %v1881
      %v3940 = vunpack.c.h.b16 %v1881
      %v3941 = vunpack.c.l.b16 %v1882
      %v3942 = vunpack.c.l.b16 %v1883
      %v3943 = vunpack.c.h.b16 %v1883
      %v3944 = vunpack.c.l.b16 %v1884
      %v3945 = vunpack.c.l.b16 %v1885
      %v3946 = vunpack.c.h.b16 %v1885
      %v3947 = vunpack.c.l.b16 %v1886
      %v3948 = vunpack.c.l.b16 %v1887
      %v3949 = vunpack.c.h.b16 %v1887
      %v3950 = vunpack.c.l.b16 %v1888
      %v3951 = vunpack.c.l.b16 %v1889
      %v3952 = vunpack.c.h.b16 %v1889
      %v3953 = vunpack.c.l.b16 %v1890
      %v3954 = vunpack.c.l.b16 %v1891
      %v3955 = vunpack.c.h.b16 %v1891
      %v3956 = vunpack.c.l.b16 %v1892
      %v3957 = vunpack.c.l.b16 %v1893
      %v3958 = vunpack.c.h.b16 %v1893
      %v3959 = vunpack.c.l.b16 %v1894
      %v3960 = vunpack.c.l.b16 %v1895
      %v3961 = vunpack.c.h.b16 %v1895
      %v3962 = vunpack.c.l.b16 %v1896
      %v3963 = vunpack.c.l.b16 %v1897
      %v3964 = vunpack.c.h.b16 %v1897
      %v3965 = vunpack.c.l.b16 %v1898
      %v3966 = vunpack.c.l.b16 %v1899
      %v3967 = vunpack.c.h.b16 %v1899
      %v3968 = vunpack.c.l.b16 %v1900
      %v3969 = vunpack.c.l.b16 %v1901
      %v3970 = vunpack.c.h.b16 %v1901
      %v3971 = vunpack.c.l.b16 %v1902
      %v3972 = vunpack.c.l.b16 %v1903
      %v3973 = vunpack.c.h.b16 %v1903
      %v3974 = vunpack.c.l.b16 %v1904
      %v3975 = vunpack.c.l.b16 %v1905
      %v3976 = vunpack.c.h.b16 %v1905
      %v3977 = vunpack.c.l.b16 %v1906
      %v3978 = vunpack.c.l.b16 %v1907
      %v3979 = vunpack.c.h.b16 %v1907
      %v3980 = vunpack.c.l.b16 %v1908
      %v3981 = vunpack.c.l.b16 %v1909
      %v3982 = vunpack.c.h.b16 %v1909
      %v3983 = vunpack.c.l.b16 %v1910
      %v3984 = vunpack.c.l.b16 %v1911
      %v3985 = vunpack.c.h.b16 %v1911
      %v3986 = vunpack.c.l.b16 %v1912
      %v3987 = vunpack.c.l.b16 %v1913
      %v3988 = vunpack.c.h.b16 %v1913
      %v3989 = vunpack.c.l.b16 %v1914
      %v3990 = vunpack.c.l.b16 %v1915
      %v3991 = vunpack.c.h.b16 %v1915
      %v3992 = vunpack.c.l.b16 %v1916
      %v3993 = vunpack.c.l.b16 %v1917
      %v3994 = vunpack.c.h.b16 %v1917
      %v3995 = vunpack.c.l.b16 %v1918
      %v3996 = vunpack.c.l.b16 %v1919
      %v3997 = vunpack.c.h.b16 %v1919
      %v3998 = vunpack.c.l.b16 %v1920
      %v3999 = vunpack.c.l.b16 %v1921
      %v4000 = vunpack.c.h.b16 %v1921
      %v4001 = vunpack.c.l.b16 %v1922
      %v4002 = vunpack.c.l.b16 %v1923
      %v4003 = vunpack.c.h.b16 %v1923
      %v4004 = vunpack.c.l.b16 %v1924
      %v4005 = vunpack.c.l.b16 %v1925
      %v4006 = vunpack.c.h.b16 %v1925
      %v4007 = vunpack.c.l.b16 %v1926
      %v4008 = vunpack.c.l.b16 %v1927
      %v4009 = vunpack.c.h.b16 %v1927
      %v4010 = vunpack.c.l.b16 %v1928
      %v4011 = vunpack.c.l.b16 %v1929
      %v4012 = vunpack.c.h.b16 %v1929
      %v4013 = vunpack.c.l.b16 %v1930
      %v4014 = vunpack.c.l.b16 %v1931
      %v4015 = vunpack.c.h.b16 %v1931
      %v4016 = vunpack.c.l.b16 %v1932
      %v4017 = vunpack.c.l.b16 %v1933
      %v4018 = vunpack.c.h.b16 %v1933
      %v4019 = vunpack.c.l.b16 %v1934
      %v4020 = vunpack.c.l.b16 %v1935
      %v4021 = vunpack.c.h.b16 %v1935
      %v4022 = vunpack.c.l.b16 %v1936
      %v4023 = vunpack.c.l.b16 %v1937
      %v4024 = vunpack.c.h.b16 %v1937
      %v4025 = vunpack.c.l.b16 %v1938
      %v4026 = vunpack.c.l.b16 %v1939
      %v4027 = vunpack.c.h.b16 %v1939
      %v4028 = vunpack.c.l.b16 %v1940
      %v4029 = vunpack.c.l.b16 %v1941
      %v4030 = vunpack.c.h.b16 %v1941
      %v4031 = vunpack.c.l.b16 %v1942
      %v4032 = vunpack.c.l.b16 %v1943
      %v4033 = vunpack.c.h.b16 %v1943
      %v4034 = vunpack.c.l.b16 %v1944
      %v4035 = vpack.c.b16 %v3918, %v3915
      %v4036 = vpack.c.b16 %v3919, %v3916
      %v4037 = vpack.c.b16 %v3920, %v3917
      %v4038 = vpack.c.b16 %v3924, %v3921
      %v4039 = vpack.c.b16 %v3925, %v3922
      %v4040 = vpack.c.b16 %v3926, %v3923
      %v4041 = vpack.c.b16 %v3930, %v3927
      %v4042 = vpack.c.b16 %v3931, %v3928
      %v4043 = vpack.c.b16 %v3932, %v3929
      %v4044 = vpack.c.b16 %v3936, %v3933
      %v4045 = vpack.c.b16 %v3937, %v3934
      %v4046 = vpack.c.b16 %v3938, %v3935
      %v4047 = vpack.c.b16 %v3942, %v3939
      %v4048 = vpack.c.b16 %v3943, %v3940
      %v4049 = vpack.c.b16 %v3944, %v3941
      %v4050 = vpack.c.b16 %v3948, %v3945
      %v4051 = vpack.c.b16 %v3949, %v3946
      %v4052 = vpack.c.b16 %v3950, %v3947
      %v4053 = vpack.c.b16 %v3954, %v3951
      %v4054 = vpack.c.b16 %v3955, %v3952
      %v4055 = vpack.c.b16 %v3956, %v3953
      %v4056 = vpack.c.b16 %v3960, %v3957
      %v4057 = vpack.c.b16 %v3961, %v3958
      %v4058 = vpack.c.b16 %v3962, %v3959
      %v4059 = vpack.c.b16 %v3966, %v3963
      %v4060 = vpack.c.b16 %v3967, %v3964
      %v4061 = vpack.c.b16 %v3968, %v3965
      %v4062 = vpack.c.b16 %v3972, %v3969
      %v4063 = vpack.c.b16 %v3973, %v3970
      %v4064 = vpack.c.b16 %v3974, %v3971
      %v4065 = vpack.c.b16 %v3978, %v3975
      %v4066 = vpack.c.b16 %v3979, %v3976
      %v4067 = vpack.c.b16 %v3980, %v3977
      %v4068 = vpack.c.b16 %v3984, %v3981
      %v4069 = vpack.c.b16 %v3985, %v3982
      %v4070 = vpack.c.b16 %v3986, %v3983
      %v4071 = vpack.c.b16 %v3990, %v3987
      %v4072 = vpack.c.b16 %v3991, %v3988
      %v4073 = vpack.c.b16 %v3992, %v3989
      %v4074 = vpack.c.b16 %v3996, %v3993
      %v4075 = vpack.c.b16 %v3997, %v3994
      %v4076 = vpack.c.b16 %v3998, %v3995
      %v4077 = vpack.c.b16 %v4002, %v3999
      %v4078 = vpack.c.b16 %v4003, %v4000
      %v4079 = vpack.c.b16 %v4004, %v4001
      %v4080 = vpack.c.b16 %v4008, %v4005
      %v4081 = vpack.c.b16 %v4009, %v4006
      %v4082 = vpack.c.b16 %v4010, %v4007
      %v4083 = vpack.c.b16 %v4014, %v4011
      %v4084 = vpack.c.b16 %v4015, %v4012
      %v4085 = vpack.c.b16 %v4016, %v4013
      %v4086 = vpack.c.b16 %v4020, %v4017
      %v4087 = vpack.c.b16 %v4021, %v4018
      %v4088 = vpack.c.b16 %v4022, %v4019
      %v4089 = vpack.c.b16 %v4026, %v4023
      %v4090 = vpack.c.b16 %v4027, %v4024
      %v4091 = vpack.c.b16 %v4028, %v4025
      %v4092 = vpack.c.b16 %v4032, %v4029
      %v4093 = vpack.c.b16 %v4033, %v4030
      %v4094 = vpack.c.b16 %v4034, %v4031
      %v4251 = vunpack.c.l.b16 %v1945
      %v4252 = vunpack.c.h.b16 %v1945
      %v4253 = vunpack.c.l.b16 %v1946
      %v4254 = vunpack.c.l.b16 %v1947
      %v4255 = vunpack.c.h.b16 %v1947
      %v4256 = vunpack.c.l.b16 %v1948
      %v4257 = vunpack.c.l.b16 %v1949
      %v4258 = vunpack.c.h.b16 %v1949
      %v4259 = vunpack.c.l.b16 %v1950
      %v4260 = vunpack.c.l.b16 %v1951
      %v4261 = vunpack.c.h.b16 %v1951
      %v4262 = vunpack.c.l.b16 %v1952
      %v4263 = vunpack.c.l.b16 %v1953
      %v4264 = vunpack.c.h.b16 %v1953
      %v4265 = vunpack.c.l.b16 %v1954
      %v4266 = vunpack.c.l.b16 %v1955
      %v4267 = vunpack.c.h.b16 %v1955
      %v4268 = vunpack.c.l.b16 %v1956
      %v4269 = vunpack.c.l.b16 %v1957
      %v4270 = vunpack.c.h.b16 %v1957
      %v4271 = vunpack.c.l.b16 %v1958
      %v4272 = vunpack.c.l.b16 %v1959
      %v4273 = vunpack.c.h.b16 %v1959
      %v4274 = vunpack.c.l.b16 %v1960
      %v4275 = vunpack.c.l.b16 %v1961
      %v4276 = vunpack.c.h.b16 %v1961
      %v4277 = vunpack.c.l.b16 %v1962
      %v4278 = vunpack.c.l.b16 %v1963
      %v4279 = vunpack.c.h.b16 %v1963
      %v4280 = vunpack.c.l.b16 %v1964
      %v4281 = vunpack.c.l.b16 %v1965
      %v4282 = vunpack.c.h.b16 %v1965
      %v4283 = vunpack.c.l.b16 %v1966
      %v4284 = vunpack.c.l.b16 %v1967
      %v4285 = vunpack.c.h.b16 %v1967
      %v4286 = vunpack.c.l.b16 %v1968
      %v4287 = vunpack.c.l.b16 %v1969
      %v4288 = vunpack.c.h.b16 %v1969
      %v4289 = vunpack.c.l.b16 %v1970
      %v4290 = vunpack.c.l.b16 %v1971
      %v4291 = vunpack.c.h.b16 %v1971
      %v4292 = vunpack.c.l.b16 %v1972
      %v4293 = vunpack.c.l.b16 %v1973
      %v4294 = vunpack.c.h.b16 %v1973
      %v4295 = vunpack.c.l.b16 %v1974
      %v4296 = vunpack.c.l.b16 %v1975
      %v4297 = vunpack.c.h.b16 %v1975
      %v4298 = vunpack.c.l.b16 %v1976
      %v4299 = vunpack.c.l.b16 %v1977
      %v4300 = vunpack.c.h.b16 %v1977
      %v4301 = vunpack.c.l.b16 %v1978
      %v4302 = vunpack.c.l.b16 %v1979
      %v4303 = vunpack.c.h.b16 %v1979
      %v4304 = vunpack.c.l.b16 %v1980
      %v4305 = vunpack.c.l.b16 %v1981
      %v4306 = vunpack.c.h.b16 %v1981
      %v4307 = vunpack.c.l.b16 %v1982
      %v4308 = vunpack.c.l.b16 %v1983
      %v4309 = vunpack.c.h.b16 %v1983
      %v4310 = vunpack.c.l.b16 %v1984
      %v4311 = vunpack.c.l.b16 %v1985
      %v4312 = vunpack.c.h.b16 %v1985
      %v4313 = vunpack.c.l.b16 %v1986
      %v4314 = vunpack.c.l.b16 %v1987
      %v4315 = vunpack.c.h.b16 %v1987
      %v4316 = vunpack.c.l.b16 %v1988
      %v4317 = vunpack.c.l.b16 %v1989
      %v4318 = vunpack.c.h.b16 %v1989
      %v4319 = vunpack.c.l.b16 %v1990
      %v4320 = vunpack.c.l.b16 %v1991
      %v4321 = vunpack.c.h.b16 %v1991
      %v4322 = vunpack.c.l.b16 %v1992
      %v4323 = vunpack.c.l.b16 %v1993
      %v4324 = vunpack.c.h.b16 %v1993
      %v4325 = vunpack.c.l.b16 %v1994
      %v4326 = vunpack.c.l.b16 %v1995
      %v4327 = vunpack.c.h.b16 %v1995
      %v4328 = vunpack.c.l.b16 %v1996
      %v4329 = vunpack.c.l.b16 %v1997
      %v4330 = vunpack.c.h.b16 %v1997
      %v4331 = vunpack.c.l.b16 %v1998
      %v4332 = vunpack.c.l.b16 %v1999
      %v4333 = vunpack.c.h.b16 %v1999
      %v4334 = vunpack.c.l.b16 %v2000
      %v4335 = vunpack.c.l.b16 %v2001
      %v4336 = vunpack.c.h.b16 %v2001
      %v4337 = vunpack.c.l.b16 %v2002
      %v4338 = vunpack.c.l.b16 %v2003
      %v4339 = vunpack.c.h.b16 %v2003
      %v4340 = vunpack.c.l.b16 %v2004
      %v4341 = vunpack.c.l.b16 %v2005
      %v4342 = vunpack.c.h.b16 %v2005
      %v4343 = vunpack.c.l.b16 %v2006
      %v4344 = vunpack.c.l.b16 %v2007
      %v4345 = vunpack.c.h.b16 %v2007
      %v4346 = vunpack.c.l.b16 %v2008
      %v4347 = vunpack.c.l.b16 %v2009
      %v4348 = vunpack.c.h.b16 %v2009
      %v4349 = vunpack.c.l.b16 %v2010
      %v4350 = vunpack.c.l.b16 %v2011
      %v4351 = vunpack.c.h.b16 %v2011
      %v4352 = vunpack.c.l.b16 %v2012
      %v4353 = vunpack.c.l.b16 %v2013
      %v4354 = vunpack.c.h.b16 %v2013
      %v4355 = vunpack.c.l.b16 %v2014
      %v4356 = vunpack.c.l.b16 %v2015
      %v4357 = vunpack.c.h.b16 %v2015
      %v4358 = vunpack.c.l.b16 %v2016
      %v4359 = vunpack.c.l.b16 %v2017
      %v4360 = vunpack.c.h.b16 %v2017
      %v4361 = vunpack.c.l.b16 %v2018
      %v4362 = vunpack.c.l.b16 %v2019
      %v4363 = vunpack.c.h.b16 %v2019
      %v4364 = vunpack.c.l.b16 %v2020
      %v4365 = vunpack.c.l.b16 %v2021
      %v4366 = vunpack.c.h.b16 %v2021
      %v4367 = vunpack.c.l.b16 %v2022
      %v4368 = vunpack.c.l.b16 %v2023
      %v4369 = vunpack.c.h.b16 %v2023
      %v4370 = vunpack.c.l.b16 %v2024
      %v4371 = vunpack.c.l.b16 %v2025
      %v4372 = vunpack.c.h.b16 %v2025
      %v4373 = vunpack.c.l.b16 %v2026
      %v4374 = vunpack.c.l.b16 %v2027
      %v4375 = vunpack.c.h.b16 %v2027
      %v4376 = vunpack.c.l.b16 %v2028
      %v4377 = vunpack.c.l.b16 %v2029
      %v4378 = vunpack.c.h.b16 %v2029
      %v4379 = vunpack.c.l.b16 %v2030
      %v4380 = vunpack.c.l.b16 %v2031
      %v4381 = vunpack.c.h.b16 %v2031
      %v4382 = vunpack.c.l.b16 %v2032
      %v4383 = vunpack.c.l.b16 %v2033
      %v4384 = vunpack.c.h.b16 %v2033
      %v4385 = vunpack.c.l.b16 %v2034
      %v4386 = vunpack.c.l.b16 %v2035
      %v4387 = vunpack.c.h.b16 %v2035
      %v4388 = vunpack.c.l.b16 %v2036
      %v4389 = vunpack.c.l.b16 %v2037
      %v4390 = vunpack.c.h.b16 %v2037
      %v4391 = vunpack.c.l.b16 %v2038
      %v4392 = vunpack.c.l.b16 %v2039
      %v4393 = vunpack.c.h.b16 %v2039
      %v4394 = vunpack.c.l.b16 %v2040
      %v4395 = vpack.c.b16 %v4254, %v4251
      %v4396 = vpack.c.b16 %v4255, %v4252
      %v4397 = vpack.c.b16 %v4256, %v4253
      %v4398 = vpack.c.b16 %v4260, %v4257
      %v4399 = vpack.c.b16 %v4261, %v4258
      %v4400 = vpack.c.b16 %v4262, %v4259
      %v4401 = vpack.c.b16 %v4266, %v4263
      %v4402 = vpack.c.b16 %v4267, %v4264
      %v4403 = vpack.c.b16 %v4268, %v4265
      %v4404 = vpack.c.b16 %v4272, %v4269
      %v4405 = vpack.c.b16 %v4273, %v4270
      %v4406 = vpack.c.b16 %v4274, %v4271
      %v4407 = vpack.c.b16 %v4278, %v4275
      %v4408 = vpack.c.b16 %v4279, %v4276
      %v4409 = vpack.c.b16 %v4280, %v4277
      %v4410 = vpack.c.b16 %v4284, %v4281
      %v4411 = vpack.c.b16 %v4285, %v4282
      %v4412 = vpack.c.b16 %v4286, %v4283
      %v4413 = vpack.c.b16 %v4290, %v4287
      %v4414 = vpack.c.b16 %v4291, %v4288
      %v4415 = vpack.c.b16 %v4292, %v4289
      %v4416 = vpack.c.b16 %v4296, %v4293
      %v4417 = vpack.c.b16 %v4297, %v4294
      %v4418 = vpack.c.b16 %v4298, %v4295
      %v4419 = vpack.c.b16 %v4302, %v4299
      %v4420 = vpack.c.b16 %v4303, %v4300
      %v4421 = vpack.c.b16 %v4304, %v4301
      %v4422 = vpack.c.b16 %v4308, %v4305
      %v4423 = vpack.c.b16 %v4309, %v4306
      %v4424 = vpack.c.b16 %v4310, %v4307
      %v4425 = vpack.c.b16 %v4314, %v4311
      %v4426 = vpack.c.b16 %v4315, %v4312
      %v4427 = vpack.c.b16 %v4316, %v4313
      %v4428 = vpack.c.b16 %v4320, %v4317
      %v4429 = vpack.c.b16 %v4321, %v4318
      %v4430 = vpack.c.b16 %v4322, %v4319
      %v4431 = vpack.c.b16 %v4326, %v4323
      %v4432 = vpack.c.b16 %v4327, %v4324
      %v4433 = vpack.c.b16 %v4328, %v4325
      %v4434 = vpack.c.b16 %v4332, %v4329
      %v4435 = vpack.c.b16 %v4333, %v4330
      %v4436 = vpack.c.b16 %v4334, %v4331
      %v4437 = vpack.c.b16 %v4338, %v4335
      %v4438 = vpack.c.b16 %v4339, %v4336
      %v4439 = vpack.c.b16 %v4340, %v4337
      %v4440 = vpack.c.b16 %v4344, %v4341
      %v4441 = vpack.c.b16 %v4345, %v4342
      %v4442 = vpack.c.b16 %v4346, %v4343
      %v4443 = vpack.c.b16 %v4350, %v4347
      %v4444 = vpack.c.b16 %v4351, %v4348
      %v4445 = vpack.c.b16 %v4352, %v4349
      %v4446 = vpack.c.b16 %v4356, %v4353
      %v4447 = vpack.c.b16 %v4357, %v4354
      %v4448 = vpack.c.b16 %v4358, %v4355
      %v4449 = vpack.c.b16 %v4362, %v4359
      %v4450 = vpack.c.b16 %v4363, %v4360
      %v4451 = vpack.c.b16 %v4364, %v4361
      %v4452 = vpack.c.b16 %v4368, %v4365
      %v4453 = vpack.c.b16 %v4369, %v4366
      %v4454 = vpack.c.b16 %v4370, %v4367
      %v4455 = vpack.c.b16 %v4374, %v4371
      %v4456 = vpack.c.b16 %v4375, %v4372
      %v4457 = vpack.c.b16 %v4376, %v4373
      %v4458 = vpack.c.b16 %v4380, %v4377
      %v4459 = vpack.c.b16 %v4381, %v4378
      %v4460 = vpack.c.b16 %v4382, %v4379
      %v4461 = vpack.c.b16 %v4386, %v4383
      %v4462 = vpack.c.b16 %v4387, %v4384
      %v4463 = vpack.c.b16 %v4388, %v4385
      %v4464 = vpack.c.b16 %v4392, %v4389
      %v4465 = vpack.c.b16 %v4393, %v4390
      %v4466 = vpack.c.b16 %v4394, %v4391
      %4539 = vmatpush.bf16.msra.mxu0 %v4416
      %4540 = vmatpush.bf16.msra.mxu0 %v4413
      %4541 = vmatpush.bf16.msra.mxu0 %v4410
      %4542 = vmatpush.bf16.msra.mxu0 %v4407
      %4543 = vmatpush.bf16.msra.mxu0 %v4404
      %4544 = vmatpush.bf16.msra.mxu0 %v4401
      %4545 = vmatpush.bf16.msra.mxu0 %v4398
      %4546 = vmatpush.bf16.msra.mxu0 %v4395
      %4547 = vmatmul.bf16.gmra.mxu0 %v4035
      %v4548 = vpop.f32.mrf.mxu0
      %v4549 = vadd.f32 %v3138, %v4548
      %v4550 = vpop.f32.mrf.mxu0
      %v4551 = vadd.f32 %v3140, %v4550
      %4552 = vmatmul.bf16.gmra.mxu0 %v4038
      %v4553 = vpop.f32.mrf.mxu0
      %v4554 = vadd.f32 %v3143, %v4553
      %v4555 = vpop.f32.mrf.mxu0
      %v4556 = vadd.f32 %v3145, %v4555
      %4557 = vmatmul.bf16.gmra.mxu0 %v4041
      %v4558 = vpop.f32.mrf.mxu0
      %v4559 = vadd.f32 %v3148, %v4558
      %v4560 = vpop.f32.mrf.mxu0
      %v4561 = vadd.f32 %v3150, %v4560
      %4562 = vmatmul.bf16.gmra.mxu0 %v4044
      %v4563 = vpop.f32.mrf.mxu0
      %v4564 = vadd.f32 %v3153, %v4563
      %v4565 = vpop.f32.mrf.mxu0
      %v4566 = vadd.f32 %v3155, %v4565
      %4567 = vmatmul.bf16.gmra.mxu0 %v4047
      %v4568 = vpop.f32.mrf.mxu0
      %v4569 = vpop.f32.mrf.mxu0
      %4570 = vmatmul.bf16.gmra.mxu0 %v4050
      %v4571 = vpop.f32.mrf.mxu0
      %v4572 = vadd.f32 %v3161, %v4571
      %v4573 = vpop.f32.mrf.mxu0
      %v4574 = vadd.f32 %v3163, %v4573
      %4575 = vmatmul.bf16.gmra.mxu0 %v4053
      %v4576 = vpop.f32.mrf.mxu0
      %v4577 = vadd.f32 %v3166, %v4576
      %v4578 = vpop.f32.mrf.mxu0
      %v4579 = vadd.f32 %v3168, %v4578
      %4580 = vmatmul.bf16.gmra.mxu0 %v4056
      %v4581 = vpop.f32.mrf.mxu0
      %v4582 = vadd.f32 %v3171, %v4581
      %v4583 = vpop.f32.mrf.mxu0
      %v4584 = vadd.f32 %v3173, %v4583
      %4585 = vmatmul.bf16.gmra.mxu0 %v4059
      %v4586 = vpop.f32.mrf.mxu0
      %v4587 = vadd.f32 %v3176, %v4586
      %v4588 = vpop.f32.mrf.mxu0
      %v4589 = vadd.f32 %v3178, %v4588
      %4590 = vmatmul.bf16.gmra.mxu0 %v4062
      %v4591 = vpop.f32.mrf.mxu0
      %v4592 = vpop.f32.mrf.mxu0
      %4593 = vmatmul.bf16.gmra.mxu0 %v4065
      %v4594 = vpop.f32.mrf.mxu0
      %v4595 = vadd.f32 %v3184, %v4594
      %v4596 = vpop.f32.mrf.mxu0
      %v4597 = vadd.f32 %v3186, %v4596
      %4598 = vmatmul.bf16.gmra.mxu0 %v4068
      %v4599 = vpop.f32.mrf.mxu0
      %v4600 = vadd.f32 %v3189, %v4599
      %v4601 = vpop.f32.mrf.mxu0
      %v4602 = vadd.f32 %v3191, %v4601
      %4603 = vmatmul.bf16.gmra.mxu0 %v4071
      %v4604 = vpop.f32.mrf.mxu0
      %v4605 = vadd.f32 %v3194, %v4604
      %v4606 = vpop.f32.mrf.mxu0
      %v4607 = vadd.f32 %v3196, %v4606
      %4608 = vmatmul.bf16.gmra.mxu0 %v4074
      %v4609 = vpop.f32.mrf.mxu0
      %v4610 = vadd.f32 %v3199, %v4609
      %v4611 = vpop.f32.mrf.mxu0
      %v4612 = vadd.f32 %v3201, %v4611
      %4613 = vmatmul.bf16.gmra.mxu0 %v4077
      %v4614 = vpop.f32.mrf.mxu0
      %v4615 = vpop.f32.mrf.mxu0
      %4616 = vmatmul.bf16.gmra.mxu0 %v4080
      %v4617 = vpop.f32.mrf.mxu0
      %v4618 = vadd.f32 %v3207, %v4617
      %v4619 = vpop.f32.mrf.mxu0
      %v4620 = vadd.f32 %v3209, %v4619
      %4621 = vmatmul.bf16.gmra.mxu0 %v4083
      %v4622 = vpop.f32.mrf.mxu0
      %v4623 = vadd.f32 %v3212, %v4622
      %v4624 = vpop.f32.mrf.mxu0
      %v4625 = vadd.f32 %v3214, %v4624
      %4626 = vmatmul.bf16.gmra.mxu0 %v4086
      %v4627 = vpop.f32.mrf.mxu0
      %v4628 = vadd.f32 %v3217, %v4627
      %v4629 = vpop.f32.mrf.mxu0
      %v4630 = vadd.f32 %v3219, %v4629
      %4631 = vmatmul.bf16.gmra.mxu0 %v4089
      %v4632 = vpop.f32.mrf.mxu0
      %v4633 = vadd.f32 %v3222, %v4632
      %v4634 = vpop.f32.mrf.mxu0
      %v4635 = vadd.f32 %v3224, %v4634
      %4636 = vmatmul.bf16.gmra.mxu0 %v4092
      %v4637 = vpop.f32.mrf.mxu0
      %v4638 = vpop.f32.mrf.mxu0
      %4639 = vdwg.mxu0
      %4640 = vmatpush.bf16.msra.mxu0 %v4440
      %4641 = vmatpush.bf16.msra.mxu0 %v4437
      %4642 = vmatpush.bf16.msra.mxu0 %v4434
      %4643 = vmatpush.bf16.msra.mxu0 %v4431
      %4644 = vmatpush.bf16.msra.mxu0 %v4428
      %4645 = vmatpush.bf16.msra.mxu0 %v4425
      %4646 = vmatpush.bf16.msra.mxu0 %v4422
      %4647 = vmatpush.bf16.msra.mxu0 %v4419
      %4648 = vmatmul.bf16.gmra.mxu0 %v4036
      %v4649 = vpop.f32.mrf.mxu0
      %v4650 = vadd.f32 %v4549, %v4649
      %v4651 = vpop.f32.mrf.mxu0
      %v4652 = vadd.f32 %v4551, %v4651
      %4653 = vmatmul.bf16.gmra.mxu0 %v4039
      %v4654 = vpop.f32.mrf.mxu0
      %v4655 = vadd.f32 %v4554, %v4654
      %v4656 = vpop.f32.mrf.mxu0
      %v4657 = vadd.f32 %v4556, %v4656
      %4658 = vmatmul.bf16.gmra.mxu0 %v4042
      %v4659 = vpop.f32.mrf.mxu0
      %v4660 = vadd.f32 %v4559, %v4659
      %v4661 = vpop.f32.mrf.mxu0
      %v4662 = vadd.f32 %v4561, %v4661
      %4663 = vmatmul.bf16.gmra.mxu0 %v4045
      %v4664 = vpop.f32.mrf.mxu0
      %v4665 = vadd.f32 %v4564, %v4664
      %v4666 = vpop.f32.mrf.mxu0
      %v4667 = vadd.f32 %v4566, %v4666
      %4668 = vmatmul.bf16.gmra.mxu0 %v4048
      %v4669 = vpop.f32.mrf.mxu0
      %v4670 = vpop.f32.mrf.mxu0
      %4671 = vmatmul.bf16.gmra.mxu0 %v4051
      %v4672 = vpop.f32.mrf.mxu0
      %v4673 = vadd.f32 %v4572, %v4672
      %v4674 = vpop.f32.mrf.mxu0
      %v4675 = vadd.f32 %v4574, %v4674
      %4676 = vmatmul.bf16.gmra.mxu0 %v4054
      %v4677 = vpop.f32.mrf.mxu0
      %v4678 = vadd.f32 %v4577, %v4677
      %v4679 = vpop.f32.mrf.mxu0
      %v4680 = vadd.f32 %v4579, %v4679
      %4681 = vmatmul.bf16.gmra.mxu0 %v4057
      %v4682 = vpop.f32.mrf.mxu0
      %v4683 = vadd.f32 %v4582, %v4682
      %v4684 = vpop.f32.mrf.mxu0
      %v4685 = vadd.f32 %v4584, %v4684
      %4686 = vmatmul.bf16.gmra.mxu0 %v4060
      %v4687 = vpop.f32.mrf.mxu0
      %v4688 = vadd.f32 %v4587, %v4687
      %v4689 = vpop.f32.mrf.mxu0
      %v4690 = vadd.f32 %v4589, %v4689
      %4691 = vmatmul.bf16.gmra.mxu0 %v4063
      %v4692 = vpop.f32.mrf.mxu0
      %v4693 = vpop.f32.mrf.mxu0
      %4694 = vmatmul.bf16.gmra.mxu0 %v4066
      %v4695 = vpop.f32.mrf.mxu0
      %v4696 = vadd.f32 %v4595, %v4695
      %v4697 = vpop.f32.mrf.mxu0
      %v4698 = vadd.f32 %v4597, %v4697
      %4699 = vmatmul.bf16.gmra.mxu0 %v4069
      %v4700 = vpop.f32.mrf.mxu0
      %v4701 = vadd.f32 %v4600, %v4700
      %v4702 = vpop.f32.mrf.mxu0
      %v4703 = vadd.f32 %v4602, %v4702
      %4704 = vmatmul.bf16.gmra.mxu0 %v4072
      %v4705 = vpop.f32.mrf.mxu0
      %v4706 = vadd.f32 %v4605, %v4705
      %v4707 = vpop.f32.mrf.mxu0
      %v4708 = vadd.f32 %v4607, %v4707
      %4709 = vmatmul.bf16.gmra.mxu0 %v4075
      %v4710 = vpop.f32.mrf.mxu0
      %v4711 = vadd.f32 %v4610, %v4710
      %v4712 = vpop.f32.mrf.mxu0
      %v4713 = vadd.f32 %v4612, %v4712
      %4714 = vmatmul.bf16.gmra.mxu0 %v4078
      %v4715 = vpop.f32.mrf.mxu0
      %v4716 = vpop.f32.mrf.mxu0
      %4717 = vmatmul.bf16.gmra.mxu0 %v4081
      %v4718 = vpop.f32.mrf.mxu0
      %v4719 = vadd.f32 %v4618, %v4718
      %v4720 = vpop.f32.mrf.mxu0
      %v4721 = vadd.f32 %v4620, %v4720
      %4722 = vmatmul.bf16.gmra.mxu0 %v4084
      %v4723 = vpop.f32.mrf.mxu0
      %v4724 = vadd.f32 %v4623, %v4723
      %v4725 = vpop.f32.mrf.mxu0
      %v4726 = vadd.f32 %v4625, %v4725
      %4727 = vmatmul.bf16.gmra.mxu0 %v4087
      %v4728 = vpop.f32.mrf.mxu0
      %v4729 = vadd.f32 %v4628, %v4728
      %v4730 = vpop.f32.mrf.mxu0
      %v4731 = vadd.f32 %v4630, %v4730
      %4732 = vmatmul.bf16.gmra.mxu0 %v4090
      %v4733 = vpop.f32.mrf.mxu0
      %v4734 = vadd.f32 %v4633, %v4733
      %v4735 = vpop.f32.mrf.mxu0
      %v4736 = vadd.f32 %v4635, %v4735
      %4737 = vmatmul.bf16.gmra.mxu0 %v4093
      %v4738 = vpop.f32.mrf.mxu0
      %v4739 = vpop.f32.mrf.mxu0
      %4740 = vdwg.mxu0
      %4741 = vmatpush.bf16.msra.mxu0 %v4464
      %4742 = vmatpush.bf16.msra.mxu0 %v4461
      %4743 = vmatpush.bf16.msra.mxu0 %v4458
      %4744 = vmatpush.bf16.msra.mxu0 %v4455
      %4745 = vmatpush.bf16.msra.mxu0 %v4452
      %4746 = vmatpush.bf16.msra.mxu0 %v4449
      %4747 = vmatpush.bf16.msra.mxu0 %v4446
      %4748 = vmatpush.bf16.msra.mxu0 %v4443
      %4749 = vmatmul.bf16.gmra.mxu0 %v4037
      %v4750 = vpop.f32.mrf.mxu0
      %v4751 = vadd.f32 %v4650, %v4750
      %v4752 = vpop.f32.mrf.mxu0
      %v4753 = vadd.f32 %v4652, %v4752
      %4754 = vmatmul.bf16.gmra.mxu0 %v4040
      %v4755 = vpop.f32.mrf.mxu0
      %v4756 = vadd.f32 %v4655, %v4755
      %v4757 = vpop.f32.mrf.mxu0
      %v4758 = vadd.f32 %v4657, %v4757
      %4759 = vmatmul.bf16.gmra.mxu0 %v4043
      %v4760 = vpop.f32.mrf.mxu0
      %v4761 = vadd.f32 %v4660, %v4760
      %v4762 = vpop.f32.mrf.mxu0
      %v4763 = vadd.f32 %v4662, %v4762
      %4764 = vmatmul.bf16.gmra.mxu0 %v4046
      %v4765 = vpop.f32.mrf.mxu0
      %v4766 = vadd.f32 %v4665, %v4765
      %v4767 = vpop.f32.mrf.mxu0
      %v4768 = vadd.f32 %v4667, %v4767
      %4769 = vmatmul.bf16.gmra.mxu0 %v4049
      %v4770 = vpop.f32.mrf.mxu0
      %v4771 = vpop.f32.mrf.mxu0
      %4772 = vmatmul.bf16.gmra.mxu0 %v4052
      %v4773 = vpop.f32.mrf.mxu0
      %v4774 = vadd.f32 %v4673, %v4773
      %v4775 = vpop.f32.mrf.mxu0
      %v4776 = vadd.f32 %v4675, %v4775
      %4777 = vmatmul.bf16.gmra.mxu0 %v4055
      %v4778 = vpop.f32.mrf.mxu0
      %v4779 = vadd.f32 %v4678, %v4778
      %v4780 = vpop.f32.mrf.mxu0
      %v4781 = vadd.f32 %v4680, %v4780
      %4782 = vmatmul.bf16.gmra.mxu0 %v4058
      %v4783 = vpop.f32.mrf.mxu0
      %v4784 = vadd.f32 %v4683, %v4783
      %v4785 = vpop.f32.mrf.mxu0
      %v4786 = vadd.f32 %v4685, %v4785
      %4787 = vmatmul.bf16.gmra.mxu0 %v4061
      %v4788 = vpop.f32.mrf.mxu0
      %v4789 = vadd.f32 %v4688, %v4788
      %v4790 = vpop.f32.mrf.mxu0
      %v4791 = vadd.f32 %v4690, %v4790
      %4792 = vmatmul.bf16.gmra.mxu0 %v4064
      %v4793 = vpop.f32.mrf.mxu0
      %v4794 = vpop.f32.mrf.mxu0
      %4795 = vmatmul.bf16.gmra.mxu0 %v4067
      %v4796 = vpop.f32.mrf.mxu0
      %v4797 = vadd.f32 %v4696, %v4796
      %v4798 = vpop.f32.mrf.mxu0
      %v4799 = vadd.f32 %v4698, %v4798
      %4800 = vmatmul.bf16.gmra.mxu0 %v4070
      %v4801 = vpop.f32.mrf.mxu0
      %v4802 = vadd.f32 %v4701, %v4801
      %v4803 = vpop.f32.mrf.mxu0
      %v4804 = vadd.f32 %v4703, %v4803
      %4805 = vmatmul.bf16.gmra.mxu0 %v4073
      %v4806 = vpop.f32.mrf.mxu0
      %v4807 = vadd.f32 %v4706, %v4806
      %v4808 = vpop.f32.mrf.mxu0
      %v4809 = vadd.f32 %v4708, %v4808
      %4810 = vmatmul.bf16.gmra.mxu0 %v4076
      %v4811 = vpop.f32.mrf.mxu0
      %v4812 = vadd.f32 %v4711, %v4811
      %v4813 = vpop.f32.mrf.mxu0
      %v4814 = vadd.f32 %v4713, %v4813
      %4815 = vmatmul.bf16.gmra.mxu0 %v4079
      %v4816 = vpop.f32.mrf.mxu0
      %v4817 = vpop.f32.mrf.mxu0
      %4818 = vmatmul.bf16.gmra.mxu0 %v4082
      %v4819 = vpop.f32.mrf.mxu0
      %v4820 = vadd.f32 %v4719, %v4819
      %v4821 = vpop.f32.mrf.mxu0
      %v4822 = vadd.f32 %v4721, %v4821
      %4823 = vmatmul.bf16.gmra.mxu0 %v4085
      %v4824 = vpop.f32.mrf.mxu0
      %v4825 = vadd.f32 %v4724, %v4824
      %v4826 = vpop.f32.mrf.mxu0
      %v4827 = vadd.f32 %v4726, %v4826
      %4828 = vmatmul.bf16.gmra.mxu0 %v4088
      %v4829 = vpop.f32.mrf.mxu0
      %v4830 = vadd.f32 %v4729, %v4829
      %v4831 = vpop.f32.mrf.mxu0
      %v4832 = vadd.f32 %v4731, %v4831
      %4833 = vmatmul.bf16.gmra.mxu0 %v4091
      %v4834 = vpop.f32.mrf.mxu0
      %v4835 = vadd.f32 %v4734, %v4834
      %v4836 = vpop.f32.mrf.mxu0
      %v4837 = vadd.f32 %v4736, %v4836
      %4838 = vmatmul.bf16.gmra.mxu0 %v4094
      %v4839 = vpop.f32.mrf.mxu0
      %v4840 = vpop.f32.mrf.mxu0
      %4841 = vdwg.mxu0
      %4842 = vmatpush.bf16.msra.mxu0 %v4417
      %4843 = vmatpush.bf16.msra.mxu0 %v4414
      %4844 = vmatpush.bf16.msra.mxu0 %v4411
      %4845 = vmatpush.bf16.msra.mxu0 %v4408
      %4846 = vmatpush.bf16.msra.mxu0 %v4405
      %4847 = vmatpush.bf16.msra.mxu0 %v4402
      %4848 = vmatpush.bf16.msra.mxu0 %v4399
      %4849 = vmatpush.bf16.msra.mxu0 %v4396
      %4850 = vmatmul.bf16.gmra.mxu0 %v4035
      %v4851 = vpop.f32.mrf.mxu0
      %v4852 = vpop.f32.mrf.mxu0
      %v4853 = vadd.f32 %v3442, %v4852
      %4854 = vmatmul.bf16.gmra.mxu0 %v4038
      %v4855 = vpop.f32.mrf.mxu0
      %v4856 = vadd.f32 %v3445, %v4855
      %v4857 = vpop.f32.mrf.mxu0
      %v4858 = vadd.f32 %v3447, %v4857
      %4859 = vmatmul.bf16.gmra.mxu0 %v4041
      %v4860 = vpop.f32.mrf.mxu0
      %v4861 = vadd.f32 %v3450, %v4860
      %v4862 = vpop.f32.mrf.mxu0
      %v4863 = vadd.f32 %v3452, %v4862
      %4864 = vmatmul.bf16.gmra.mxu0 %v4044
      %v4865 = vpop.f32.mrf.mxu0
      %v4866 = vadd.f32 %v3455, %v4865
      %v4867 = vpop.f32.mrf.mxu0
      %v4868 = vadd.f32 %v3457, %v4867
      %4869 = vmatmul.bf16.gmra.mxu0 %v4047
      %v4870 = vpop.f32.mrf.mxu0
      %v4871 = vadd.f32 %v3460, %v4870
      %v4872 = vpop.f32.mrf.mxu0
      %4873 = vmatmul.bf16.gmra.mxu0 %v4050
      %v4874 = vpop.f32.mrf.mxu0
      %v4875 = vpop.f32.mrf.mxu0
      %v4876 = vadd.f32 %v3465, %v4875
      %4877 = vmatmul.bf16.gmra.mxu0 %v4053
      %v4878 = vpop.f32.mrf.mxu0
      %v4879 = vadd.f32 %v3468, %v4878
      %v4880 = vpop.f32.mrf.mxu0
      %v4881 = vadd.f32 %v3470, %v4880
      %4882 = vmatmul.bf16.gmra.mxu0 %v4056
      %v4883 = vpop.f32.mrf.mxu0
      %v4884 = vadd.f32 %v3473, %v4883
      %v4885 = vpop.f32.mrf.mxu0
      %v4886 = vadd.f32 %v3475, %v4885
      %4887 = vmatmul.bf16.gmra.mxu0 %v4059
      %v4888 = vpop.f32.mrf.mxu0
      %v4889 = vadd.f32 %v3478, %v4888
      %v4890 = vpop.f32.mrf.mxu0
      %v4891 = vadd.f32 %v3480, %v4890
      %4892 = vmatmul.bf16.gmra.mxu0 %v4062
      %v4893 = vpop.f32.mrf.mxu0
      %v4894 = vadd.f32 %v3483, %v4893
      %v4895 = vpop.f32.mrf.mxu0
      %4896 = vmatmul.bf16.gmra.mxu0 %v4065
      %v4897 = vpop.f32.mrf.mxu0
      %v4898 = vpop.f32.mrf.mxu0
      %v4899 = vadd.f32 %v3488, %v4898
      %4900 = vmatmul.bf16.gmra.mxu0 %v4068
      %v4901 = vpop.f32.mrf.mxu0
      %v4902 = vadd.f32 %v3491, %v4901
      %v4903 = vpop.f32.mrf.mxu0
      %v4904 = vadd.f32 %v3493, %v4903
      %4905 = vmatmul.bf16.gmra.mxu0 %v4071
      %v4906 = vpop.f32.mrf.mxu0
      %v4907 = vadd.f32 %v3496, %v4906
      %v4908 = vpop.f32.mrf.mxu0
      %v4909 = vadd.f32 %v3498, %v4908
      %4910 = vmatmul.bf16.gmra.mxu0 %v4074
      %v4911 = vpop.f32.mrf.mxu0
      %v4912 = vadd.f32 %v3501, %v4911
      %v4913 = vpop.f32.mrf.mxu0
      %v4914 = vadd.f32 %v3503, %v4913
      %4915 = vmatmul.bf16.gmra.mxu0 %v4077
      %v4916 = vpop.f32.mrf.mxu0
      %v4917 = vadd.f32 %v3506, %v4916
      %v4918 = vpop.f32.mrf.mxu0
      %4919 = vmatmul.bf16.gmra.mxu0 %v4080
      %v4920 = vpop.f32.mrf.mxu0
      %v4921 = vpop.f32.mrf.mxu0
      %v4922 = vadd.f32 %v3511, %v4921
      %4923 = vmatmul.bf16.gmra.mxu0 %v4083
      %v4924 = vpop.f32.mrf.mxu0
      %v4925 = vadd.f32 %v3514, %v4924
      %v4926 = vpop.f32.mrf.mxu0
      %v4927 = vadd.f32 %v3516, %v4926
      %4928 = vmatmul.bf16.gmra.mxu0 %v4086
      %v4929 = vpop.f32.mrf.mxu0
      %v4930 = vadd.f32 %v3519, %v4929
      %v4931 = vpop.f32.mrf.mxu0
      %v4932 = vadd.f32 %v3521, %v4931
      %4933 = vmatmul.bf16.gmra.mxu0 %v4089
      %v4934 = vpop.f32.mrf.mxu0
      %v4935 = vadd.f32 %v3524, %v4934
      %v4936 = vpop.f32.mrf.mxu0
      %v4937 = vadd.f32 %v3526, %v4936
      %4938 = vmatmul.bf16.gmra.mxu0 %v4092
      %v4939 = vpop.f32.mrf.mxu0
      %v4940 = vadd.f32 %v3529, %v4939
      %v4941 = vpop.f32.mrf.mxu0
      %4942 = vdwg.mxu0
      %4943 = vmatpush.bf16.msra.mxu0 %v4441
      %4944 = vmatpush.bf16.msra.mxu0 %v4438
      %4945 = vmatpush.bf16.msra.mxu0 %v4435
      %4946 = vmatpush.bf16.msra.mxu0 %v4432
      %4947 = vmatpush.bf16.msra.mxu0 %v4429
      %4948 = vmatpush.bf16.msra.mxu0 %v4426
      %4949 = vmatpush.bf16.msra.mxu0 %v4423
      %4950 = vmatpush.bf16.msra.mxu0 %v4420
      %4951 = vmatmul.bf16.gmra.mxu0 %v4036
      %v4952 = vpop.f32.mrf.mxu0
      %v4953 = vpop.f32.mrf.mxu0
      %v4954 = vadd.f32 %v4853, %v4953
      %4955 = vmatmul.bf16.gmra.mxu0 %v4039
      %v4956 = vpop.f32.mrf.mxu0
      %v4957 = vadd.f32 %v4856, %v4956
      %v4958 = vpop.f32.mrf.mxu0
      %v4959 = vadd.f32 %v4858, %v4958
      %4960 = vmatmul.bf16.gmra.mxu0 %v4042
      %v4961 = vpop.f32.mrf.mxu0
      %v4962 = vadd.f32 %v4861, %v4961
      %v4963 = vpop.f32.mrf.mxu0
      %v4964 = vadd.f32 %v4863, %v4963
      %4965 = vmatmul.bf16.gmra.mxu0 %v4045
      %v4966 = vpop.f32.mrf.mxu0
      %v4967 = vadd.f32 %v4866, %v4966
      %v4968 = vpop.f32.mrf.mxu0
      %v4969 = vadd.f32 %v4868, %v4968
      %4970 = vmatmul.bf16.gmra.mxu0 %v4048
      %v4971 = vpop.f32.mrf.mxu0
      %v4972 = vadd.f32 %v4871, %v4971
      %v4973 = vpop.f32.mrf.mxu0
      %4974 = vmatmul.bf16.gmra.mxu0 %v4051
      %v4975 = vpop.f32.mrf.mxu0
      %v4976 = vpop.f32.mrf.mxu0
      %v4977 = vadd.f32 %v4876, %v4976
      %4978 = vmatmul.bf16.gmra.mxu0 %v4054
      %v4979 = vpop.f32.mrf.mxu0
      %v4980 = vadd.f32 %v4879, %v4979
      %v4981 = vpop.f32.mrf.mxu0
      %v4982 = vadd.f32 %v4881, %v4981
      %4983 = vmatmul.bf16.gmra.mxu0 %v4057
      %v4984 = vpop.f32.mrf.mxu0
      %v4985 = vadd.f32 %v4884, %v4984
      %v4986 = vpop.f32.mrf.mxu0
      %v4987 = vadd.f32 %v4886, %v4986
      %4988 = vmatmul.bf16.gmra.mxu0 %v4060
      %v4989 = vpop.f32.mrf.mxu0
      %v4990 = vadd.f32 %v4889, %v4989
      %v4991 = vpop.f32.mrf.mxu0
      %v4992 = vadd.f32 %v4891, %v4991
      %4993 = vmatmul.bf16.gmra.mxu0 %v4063
      %v4994 = vpop.f32.mrf.mxu0
      %v4995 = vadd.f32 %v4894, %v4994
      %v4996 = vpop.f32.mrf.mxu0
      %4997 = vmatmul.bf16.gmra.mxu0 %v4066
      %v4998 = vpop.f32.mrf.mxu0
      %v4999 = vpop.f32.mrf.mxu0
      %v5000 = vadd.f32 %v4899, %v4999
      %5001 = vmatmul.bf16.gmra.mxu0 %v4069
      %v5002 = vpop.f32.mrf.mxu0
      %v5003 = vadd.f32 %v4902, %v5002
      %v5004 = vpop.f32.mrf.mxu0
      %v5005 = vadd.f32 %v4904, %v5004
      %5006 = vmatmul.bf16.gmra.mxu0 %v4072
      %v5007 = vpop.f32.mrf.mxu0
      %v5008 = vadd.f32 %v4907, %v5007
      %v5009 = vpop.f32.mrf.mxu0
      %v5010 = vadd.f32 %v4909, %v5009
      %5011 = vmatmul.bf16.gmra.mxu0 %v4075
      %v5012 = vpop.f32.mrf.mxu0
      %v5013 = vadd.f32 %v4912, %v5012
      %v5014 = vpop.f32.mrf.mxu0
      %v5015 = vadd.f32 %v4914, %v5014
      %5016 = vmatmul.bf16.gmra.mxu0 %v4078
      %v5017 = vpop.f32.mrf.mxu0
      %v5018 = vadd.f32 %v4917, %v5017
      %v5019 = vpop.f32.mrf.mxu0
      %5020 = vmatmul.bf16.gmra.mxu0 %v4081
      %v5021 = vpop.f32.mrf.mxu0
      %v5022 = vpop.f32.mrf.mxu0
      %v5023 = vadd.f32 %v4922, %v5022
      %5024 = vmatmul.bf16.gmra.mxu0 %v4084
      %v5025 = vpop.f32.mrf.mxu0
      %v5026 = vadd.f32 %v4925, %v5025
      %v5027 = vpop.f32.mrf.mxu0
      %v5028 = vadd.f32 %v4927, %v5027
      %5029 = vmatmul.bf16.gmra.mxu0 %v4087
      %v5030 = vpop.f32.mrf.mxu0
      %v5031 = vadd.f32 %v4930, %v5030
      %v5032 = vpop.f32.mrf.mxu0
      %v5033 = vadd.f32 %v4932, %v5032
      %5034 = vmatmul.bf16.gmra.mxu0 %v4090
      %v5035 = vpop.f32.mrf.mxu0
      %v5036 = vadd.f32 %v4935, %v5035
      %v5037 = vpop.f32.mrf.mxu0
      %v5038 = vadd.f32 %v4937, %v5037
      %5039 = vmatmul.bf16.gmra.mxu0 %v4093
      %v5040 = vpop.f32.mrf.mxu0
      %v5041 = vadd.f32 %v4940, %v5040
      %v5042 = vpop.f32.mrf.mxu0
      %5043 = vdwg.mxu0
      %5044 = vmatpush.bf16.msra.mxu0 %v4465
      %5045 = vmatpush.bf16.msra.mxu0 %v4462
      %5046 = vmatpush.bf16.msra.mxu0 %v4459
      %5047 = vmatpush.bf16.msra.mxu0 %v4456
      %5048 = vmatpush.bf16.msra.mxu0 %v4453
      %5049 = vmatpush.bf16.msra.mxu0 %v4450
      %5050 = vmatpush.bf16.msra.mxu0 %v4447
      %5051 = vmatpush.bf16.msra.mxu0 %v4444
      %5052 = vmatmul.bf16.gmra.mxu0 %v4037
      %v5053 = vpop.f32.mrf.mxu0
      %v5054 = vpop.f32.mrf.mxu0
      %v5055 = vadd.f32 %v4954, %v5054
      %5056 = vmatmul.bf16.gmra.mxu0 %v4040
      %v5057 = vpop.f32.mrf.mxu0
      %v5058 = vadd.f32 %v4957, %v5057
      %v5059 = vpop.f32.mrf.mxu0
      %v5060 = vadd.f32 %v4959, %v5059
      %5061 = vmatmul.bf16.gmra.mxu0 %v4043
      %v5062 = vpop.f32.mrf.mxu0
      %v5063 = vadd.f32 %v4962, %v5062
      %v5064 = vpop.f32.mrf.mxu0
      %v5065 = vadd.f32 %v4964, %v5064
      %5066 = vmatmul.bf16.gmra.mxu0 %v4046
      %v5067 = vpop.f32.mrf.mxu0
      %v5068 = vadd.f32 %v4967, %v5067
      %v5069 = vpop.f32.mrf.mxu0
      %v5070 = vadd.f32 %v4969, %v5069
      %5071 = vmatmul.bf16.gmra.mxu0 %v4049
      %v5072 = vpop.f32.mrf.mxu0
      %v5073 = vadd.f32 %v4972, %v5072
      %v5074 = vpop.f32.mrf.mxu0
      %5075 = vmatmul.bf16.gmra.mxu0 %v4052
      %v5076 = vpop.f32.mrf.mxu0
      %v5077 = vpop.f32.mrf.mxu0
      %v5078 = vadd.f32 %v4977, %v5077
      %5079 = vmatmul.bf16.gmra.mxu0 %v4055
      %v5080 = vpop.f32.mrf.mxu0
      %v5081 = vadd.f32 %v4980, %v5080
      %v5082 = vpop.f32.mrf.mxu0
      %v5083 = vadd.f32 %v4982, %v5082
      %5084 = vmatmul.bf16.gmra.mxu0 %v4058
      %v5085 = vpop.f32.mrf.mxu0
      %v5086 = vadd.f32 %v4985, %v5085
      %v5087 = vpop.f32.mrf.mxu0
      %v5088 = vadd.f32 %v4987, %v5087
      %5089 = vmatmul.bf16.gmra.mxu0 %v4061
      %v5090 = vpop.f32.mrf.mxu0
      %v5091 = vadd.f32 %v4990, %v5090
      %v5092 = vpop.f32.mrf.mxu0
      %v5093 = vadd.f32 %v4992, %v5092
      %5094 = vmatmul.bf16.gmra.mxu0 %v4064
      %v5095 = vpop.f32.mrf.mxu0
      %v5096 = vadd.f32 %v4995, %v5095
      %v5097 = vpop.f32.mrf.mxu0
      %5098 = vmatmul.bf16.gmra.mxu0 %v4067
      %v5099 = vpop.f32.mrf.mxu0
      %v5100 = vpop.f32.mrf.mxu0
      %v5101 = vadd.f32 %v5000, %v5100
      %5102 = vmatmul.bf16.gmra.mxu0 %v4070
      %v5103 = vpop.f32.mrf.mxu0
      %v5104 = vadd.f32 %v5003, %v5103
      %v5105 = vpop.f32.mrf.mxu0
      %v5106 = vadd.f32 %v5005, %v5105
      %5107 = vmatmul.bf16.gmra.mxu0 %v4073
      %v5108 = vpop.f32.mrf.mxu0
      %v5109 = vadd.f32 %v5008, %v5108
      %v5110 = vpop.f32.mrf.mxu0
      %v5111 = vadd.f32 %v5010, %v5110
      %5112 = vmatmul.bf16.gmra.mxu0 %v4076
      %v5113 = vpop.f32.mrf.mxu0
      %v5114 = vadd.f32 %v5013, %v5113
      %v5115 = vpop.f32.mrf.mxu0
      %v5116 = vadd.f32 %v5015, %v5115
      %5117 = vmatmul.bf16.gmra.mxu0 %v4079
      %v5118 = vpop.f32.mrf.mxu0
      %v5119 = vadd.f32 %v5018, %v5118
      %v5120 = vpop.f32.mrf.mxu0
      %5121 = vmatmul.bf16.gmra.mxu0 %v4082
      %v5122 = vpop.f32.mrf.mxu0
      %v5123 = vpop.f32.mrf.mxu0
      %v5124 = vadd.f32 %v5023, %v5123
      %5125 = vmatmul.bf16.gmra.mxu0 %v4085
      %v5126 = vpop.f32.mrf.mxu0
      %v5127 = vadd.f32 %v5026, %v5126
      %v5128 = vpop.f32.mrf.mxu0
      %v5129 = vadd.f32 %v5028, %v5128
      %5130 = vmatmul.bf16.gmra.mxu0 %v4088
      %v5131 = vpop.f32.mrf.mxu0
      %v5132 = vadd.f32 %v5031, %v5131
      %v5133 = vpop.f32.mrf.mxu0
      %v5134 = vadd.f32 %v5033, %v5133
      %5135 = vmatmul.bf16.gmra.mxu0 %v4091
      %v5136 = vpop.f32.mrf.mxu0
      %v5137 = vadd.f32 %v5036, %v5136
      %v5138 = vpop.f32.mrf.mxu0
      %v5139 = vadd.f32 %v5038, %v5138
      %5140 = vmatmul.bf16.gmra.mxu0 %v4094
      %v5141 = vpop.f32.mrf.mxu0
      %v5142 = vadd.f32 %v5041, %v5141
      %v5143 = vpop.f32.mrf.mxu0
      %5144 = vdwg.mxu0
      %5145 = vmatpush.bf16.msra.mxu0 %v4418
      %5146 = vmatpush.bf16.msra.mxu0 %v4415
      %5147 = vmatpush.bf16.msra.mxu0 %v4412
      %5148 = vmatpush.bf16.msra.mxu0 %v4409
      %5149 = vmatpush.bf16.msra.mxu0 %v4406
      %5150 = vmatpush.bf16.msra.mxu0 %v4403
      %5151 = vmatpush.bf16.msra.mxu0 %v4400
      %5152 = vmatpush.bf16.msra.mxu0 %v4397
      %5153 = vmatmul.bf16.gmra.mxu0 %v4035
      %v5154 = vpop.f32.mrf.mxu0
      %v5155 = vpop.f32.mrf.mxu0
      %5156 = vmatmul.bf16.gmra.mxu0 %v4038
      %v5157 = vpop.f32.mrf.mxu0
      %v5158 = vadd.f32 %v3747, %v5157
      %v5159 = vpop.f32.mrf.mxu0
      %v5160 = vadd.f32 %v3749, %v5159
      %5161 = vmatmul.bf16.gmra.mxu0 %v4041
      %v5162 = vpop.f32.mrf.mxu0
      %v5163 = vadd.f32 %v3752, %v5162
      %v5164 = vpop.f32.mrf.mxu0
      %v5165 = vadd.f32 %v3754, %v5164
      %5166 = vmatmul.bf16.gmra.mxu0 %v4044
      %v5167 = vpop.f32.mrf.mxu0
      %v5168 = vadd.f32 %v3757, %v5167
      %v5169 = vpop.f32.mrf.mxu0
      %v5170 = vadd.f32 %v3759, %v5169
      %5171 = vmatmul.bf16.gmra.mxu0 %v4047
      %v5172 = vpop.f32.mrf.mxu0
      %v5173 = vadd.f32 %v3762, %v5172
      %v5174 = vpop.f32.mrf.mxu0
      %v5175 = vadd.f32 %v3764, %v5174
      %5176 = vmatmul.bf16.gmra.mxu0 %v4050
      %v5177 = vpop.f32.mrf.mxu0
      %v5178 = vpop.f32.mrf.mxu0
      %5179 = vmatmul.bf16.gmra.mxu0 %v4053
      %v5180 = vpop.f32.mrf.mxu0
      %v5181 = vadd.f32 %v3770, %v5180
      %v5182 = vpop.f32.mrf.mxu0
      %v5183 = vadd.f32 %v3772, %v5182
      %5184 = vmatmul.bf16.gmra.mxu0 %v4056
      %v5185 = vpop.f32.mrf.mxu0
      %v5186 = vadd.f32 %v3775, %v5185
      %v5187 = vpop.f32.mrf.mxu0
      %v5188 = vadd.f32 %v3777, %v5187
      %5189 = vmatmul.bf16.gmra.mxu0 %v4059
      %v5190 = vpop.f32.mrf.mxu0
      %v5191 = vadd.f32 %v3780, %v5190
      %v5192 = vpop.f32.mrf.mxu0
      %v5193 = vadd.f32 %v3782, %v5192
      %5194 = vmatmul.bf16.gmra.mxu0 %v4062
      %v5195 = vpop.f32.mrf.mxu0
      %v5196 = vadd.f32 %v3785, %v5195
      %v5197 = vpop.f32.mrf.mxu0
      %v5198 = vadd.f32 %v3787, %v5197
      %5199 = vmatmul.bf16.gmra.mxu0 %v4065
      %v5200 = vpop.f32.mrf.mxu0
      %v5201 = vpop.f32.mrf.mxu0
      %5202 = vmatmul.bf16.gmra.mxu0 %v4068
      %v5203 = vpop.f32.mrf.mxu0
      %v5204 = vadd.f32 %v3793, %v5203
      %v5205 = vpop.f32.mrf.mxu0
      %v5206 = vadd.f32 %v3795, %v5205
      %5207 = vmatmul.bf16.gmra.mxu0 %v4071
      %v5208 = vpop.f32.mrf.mxu0
      %v5209 = vadd.f32 %v3798, %v5208
      %v5210 = vpop.f32.mrf.mxu0
      %v5211 = vadd.f32 %v3800, %v5210
      %5212 = vmatmul.bf16.gmra.mxu0 %v4074
      %v5213 = vpop.f32.mrf.mxu0
      %v5214 = vadd.f32 %v3803, %v5213
      %v5215 = vpop.f32.mrf.mxu0
      %v5216 = vadd.f32 %v3805, %v5215
      %5217 = vmatmul.bf16.gmra.mxu0 %v4077
      %v5218 = vpop.f32.mrf.mxu0
      %v5219 = vadd.f32 %v3808, %v5218
      %v5220 = vpop.f32.mrf.mxu0
      %v5221 = vadd.f32 %v3810, %v5220
      %5222 = vmatmul.bf16.gmra.mxu0 %v4080
      %v5223 = vpop.f32.mrf.mxu0
      %v5224 = vpop.f32.mrf.mxu0
      %5225 = vmatmul.bf16.gmra.mxu0 %v4083
      %v5226 = vpop.f32.mrf.mxu0
      %v5227 = vadd.f32 %v3816, %v5226
      %v5228 = vpop.f32.mrf.mxu0
      %v5229 = vadd.f32 %v3818, %v5228
      %5230 = vmatmul.bf16.gmra.mxu0 %v4086
      %v5231 = vpop.f32.mrf.mxu0
      %v5232 = vadd.f32 %v3821, %v5231
      %v5233 = vpop.f32.mrf.mxu0
      %v5234 = vadd.f32 %v3823, %v5233
      %5235 = vmatmul.bf16.gmra.mxu0 %v4089
      %v5236 = vpop.f32.mrf.mxu0
      %v5237 = vadd.f32 %v3826, %v5236
      %v5238 = vpop.f32.mrf.mxu0
      %v5239 = vadd.f32 %v3828, %v5238
      %5240 = vmatmul.bf16.gmra.mxu0 %v4092
      %v5241 = vpop.f32.mrf.mxu0
      %v5242 = vadd.f32 %v3831, %v5241
      %v5243 = vpop.f32.mrf.mxu0
      %v5244 = vadd.f32 %v3833, %v5243
      %5245 = vdwg.mxu0
      %5246 = vmatpush.bf16.msra.mxu0 %v4442
      %5247 = vmatpush.bf16.msra.mxu0 %v4439
      %5248 = vmatpush.bf16.msra.mxu0 %v4436
      %5249 = vmatpush.bf16.msra.mxu0 %v4433
      %5250 = vmatpush.bf16.msra.mxu0 %v4430
      %5251 = vmatpush.bf16.msra.mxu0 %v4427
      %5252 = vmatpush.bf16.msra.mxu0 %v4424
      %5253 = vmatpush.bf16.msra.mxu0 %v4421
      %5254 = vmatmul.bf16.gmra.mxu0 %v4036
      %v5255 = vpop.f32.mrf.mxu0
      %v5256 = vpop.f32.mrf.mxu0
      %5257 = vmatmul.bf16.gmra.mxu0 %v4039
      %v5258 = vpop.f32.mrf.mxu0
      %v5259 = vadd.f32 %v5158, %v5258
      %v5260 = vpop.f32.mrf.mxu0
      %v5261 = vadd.f32 %v5160, %v5260
      %5262 = vmatmul.bf16.gmra.mxu0 %v4042
      %v5263 = vpop.f32.mrf.mxu0
      %v5264 = vadd.f32 %v5163, %v5263
      %v5265 = vpop.f32.mrf.mxu0
      %v5266 = vadd.f32 %v5165, %v5265
      %5267 = vmatmul.bf16.gmra.mxu0 %v4045
      %v5268 = vpop.f32.mrf.mxu0
      %v5269 = vadd.f32 %v5168, %v5268
      %v5270 = vpop.f32.mrf.mxu0
      %v5271 = vadd.f32 %v5170, %v5270
      %5272 = vmatmul.bf16.gmra.mxu0 %v4048
      %v5273 = vpop.f32.mrf.mxu0
      %v5274 = vadd.f32 %v5173, %v5273
      %v5275 = vpop.f32.mrf.mxu0
      %v5276 = vadd.f32 %v5175, %v5275
      %5277 = vmatmul.bf16.gmra.mxu0 %v4051
      %v5278 = vpop.f32.mrf.mxu0
      %v5279 = vpop.f32.mrf.mxu0
      %5280 = vmatmul.bf16.gmra.mxu0 %v4054
      %v5281 = vpop.f32.mrf.mxu0
      %v5282 = vadd.f32 %v5181, %v5281
      %v5283 = vpop.f32.mrf.mxu0
      %v5284 = vadd.f32 %v5183, %v5283
      %5285 = vmatmul.bf16.gmra.mxu0 %v4057
      %v5286 = vpop.f32.mrf.mxu0
      %v5287 = vadd.f32 %v5186, %v5286
      %v5288 = vpop.f32.mrf.mxu0
      %v5289 = vadd.f32 %v5188, %v5288
      %5290 = vmatmul.bf16.gmra.mxu0 %v4060
      %v5291 = vpop.f32.mrf.mxu0
      %v5292 = vadd.f32 %v5191, %v5291
      %v5293 = vpop.f32.mrf.mxu0
      %v5294 = vadd.f32 %v5193, %v5293
      %5295 = vmatmul.bf16.gmra.mxu0 %v4063
      %v5296 = vpop.f32.mrf.mxu0
      %v5297 = vadd.f32 %v5196, %v5296
      %v5298 = vpop.f32.mrf.mxu0
      %v5299 = vadd.f32 %v5198, %v5298
      %5300 = vmatmul.bf16.gmra.mxu0 %v4066
      %v5301 = vpop.f32.mrf.mxu0
      %v5302 = vpop.f32.mrf.mxu0
      %5303 = vmatmul.bf16.gmra.mxu0 %v4069
      %v5304 = vpop.f32.mrf.mxu0
      %v5305 = vadd.f32 %v5204, %v5304
      %v5306 = vpop.f32.mrf.mxu0
      %v5307 = vadd.f32 %v5206, %v5306
      %5308 = vmatmul.bf16.gmra.mxu0 %v4072
      %v5309 = vpop.f32.mrf.mxu0
      %v5310 = vadd.f32 %v5209, %v5309
      %v5311 = vpop.f32.mrf.mxu0
      %v5312 = vadd.f32 %v5211, %v5311
      %5313 = vmatmul.bf16.gmra.mxu0 %v4075
      %v5314 = vpop.f32.mrf.mxu0
      %v5315 = vadd.f32 %v5214, %v5314
      %v5316 = vpop.f32.mrf.mxu0
      %v5317 = vadd.f32 %v5216, %v5316
      %5318 = vmatmul.bf16.gmra.mxu0 %v4078
      %v5319 = vpop.f32.mrf.mxu0
      %v5320 = vadd.f32 %v5219, %v5319
      %v5321 = vpop.f32.mrf.mxu0
      %v5322 = vadd.f32 %v5221, %v5321
      %5323 = vmatmul.bf16.gmra.mxu0 %v4081
      %v5324 = vpop.f32.mrf.mxu0
      %v5325 = vpop.f32.mrf.mxu0
      %5326 = vmatmul.bf16.gmra.mxu0 %v4084
      %v5327 = vpop.f32.mrf.mxu0
      %v5328 = vadd.f32 %v5227, %v5327
      %v5329 = vpop.f32.mrf.mxu0
      %v5330 = vadd.f32 %v5229, %v5329
      %5331 = vmatmul.bf16.gmra.mxu0 %v4087
      %v5332 = vpop.f32.mrf.mxu0
      %v5333 = vadd.f32 %v5232, %v5332
      %v5334 = vpop.f32.mrf.mxu0
      %v5335 = vadd.f32 %v5234, %v5334
      %5336 = vmatmul.bf16.gmra.mxu0 %v4090
      %v5337 = vpop.f32.mrf.mxu0
      %v5338 = vadd.f32 %v5237, %v5337
      %v5339 = vpop.f32.mrf.mxu0
      %v5340 = vadd.f32 %v5239, %v5339
      %5341 = vmatmul.bf16.gmra.mxu0 %v4093
      %v5342 = vpop.f32.mrf.mxu0
      %v5343 = vadd.f32 %v5242, %v5342
      %v5344 = vpop.f32.mrf.mxu0
      %v5345 = vadd.f32 %v5244, %v5344
      %5346 = vdwg.mxu0
      %5347 = vmatpush.bf16.msra.mxu0 %v4466
      %5348 = vmatpush.bf16.msra.mxu0 %v4463
      %5349 = vmatpush.bf16.msra.mxu0 %v4460
      %5350 = vmatpush.bf16.msra.mxu0 %v4457
      %5351 = vmatpush.bf16.msra.mxu0 %v4454
      %5352 = vmatpush.bf16.msra.mxu0 %v4451
      %5353 = vmatpush.bf16.msra.mxu0 %v4448
      %5354 = vmatpush.bf16.msra.mxu0 %v4445
      %5355 = vmatmul.bf16.gmra.mxu0 %v4037
      %v5356 = vpop.f32.mrf.mxu0
      %v5357 = vpop.f32.mrf.mxu0
      %5358 = vmatmul.bf16.gmra.mxu0 %v4040
      %v5359 = vpop.f32.mrf.mxu0
      %v5360 = vadd.f32 %v5259, %v5359
      %v5361 = vpop.f32.mrf.mxu0
      %v5362 = vadd.f32 %v5261, %v5361
      %5363 = vmatmul.bf16.gmra.mxu0 %v4043
      %v5364 = vpop.f32.mrf.mxu0
      %v5365 = vadd.f32 %v5264, %v5364
      %v5366 = vpop.f32.mrf.mxu0
      %v5367 = vadd.f32 %v5266, %v5366
      %5368 = vmatmul.bf16.gmra.mxu0 %v4046
      %v5369 = vpop.f32.mrf.mxu0
      %v5370 = vadd.f32 %v5269, %v5369
      %v5371 = vpop.f32.mrf.mxu0
      %v5372 = vadd.f32 %v5271, %v5371
      %5373 = vmatmul.bf16.gmra.mxu0 %v4049
      %v5374 = vpop.f32.mrf.mxu0
      %v5375 = vadd.f32 %v5274, %v5374
      %v5376 = vpop.f32.mrf.mxu0
      %v5377 = vadd.f32 %v5276, %v5376
      %5378 = vmatmul.bf16.gmra.mxu0 %v4052
      %v5379 = vpop.f32.mrf.mxu0
      %v5380 = vpop.f32.mrf.mxu0
      %5381 = vmatmul.bf16.gmra.mxu0 %v4055
      %v5382 = vpop.f32.mrf.mxu0
      %v5383 = vadd.f32 %v5282, %v5382
      %v5384 = vpop.f32.mrf.mxu0
      %v5385 = vadd.f32 %v5284, %v5384
      %5386 = vmatmul.bf16.gmra.mxu0 %v4058
      %v5387 = vpop.f32.mrf.mxu0
      %v5388 = vadd.f32 %v5287, %v5387
      %v5389 = vpop.f32.mrf.mxu0
      %v5390 = vadd.f32 %v5289, %v5389
      %5391 = vmatmul.bf16.gmra.mxu0 %v4061
      %v5392 = vpop.f32.mrf.mxu0
      %v5393 = vadd.f32 %v5292, %v5392
      %v5394 = vpop.f32.mrf.mxu0
      %v5395 = vadd.f32 %v5294, %v5394
      %5396 = vmatmul.bf16.gmra.mxu0 %v4064
      %v5397 = vpop.f32.mrf.mxu0
      %v5398 = vadd.f32 %v5297, %v5397
      %v5399 = vpop.f32.mrf.mxu0
      %v5400 = vadd.f32 %v5299, %v5399
      %5401 = vmatmul.bf16.gmra.mxu0 %v4067
      %v5402 = vpop.f32.mrf.mxu0
      %v5403 = vpop.f32.mrf.mxu0
      %5404 = vmatmul.bf16.gmra.mxu0 %v4070
      %v5405 = vpop.f32.mrf.mxu0
      %v5406 = vadd.f32 %v5305, %v5405
      %v5407 = vpop.f32.mrf.mxu0
      %v5408 = vadd.f32 %v5307, %v5407
      %5409 = vmatmul.bf16.gmra.mxu0 %v4073
      %v5410 = vpop.f32.mrf.mxu0
      %v5411 = vadd.f32 %v5310, %v5410
      %v5412 = vpop.f32.mrf.mxu0
      %v5413 = vadd.f32 %v5312, %v5412
      %5414 = vmatmul.bf16.gmra.mxu0 %v4076
      %v5415 = vpop.f32.mrf.mxu0
      %v5416 = vadd.f32 %v5315, %v5415
      %v5417 = vpop.f32.mrf.mxu0
      %v5418 = vadd.f32 %v5317, %v5417
      %5419 = vmatmul.bf16.gmra.mxu0 %v4079
      %v5420 = vpop.f32.mrf.mxu0
      %v5421 = vadd.f32 %v5320, %v5420
      %v5422 = vpop.f32.mrf.mxu0
      %v5423 = vadd.f32 %v5322, %v5422
      %5424 = vmatmul.bf16.gmra.mxu0 %v4082
      %v5425 = vpop.f32.mrf.mxu0
      %v5426 = vpop.f32.mrf.mxu0
      %5427 = vmatmul.bf16.gmra.mxu0 %v4085
      %v5428 = vpop.f32.mrf.mxu0
      %v5429 = vadd.f32 %v5328, %v5428
      %v5430 = vpop.f32.mrf.mxu0
      %v5431 = vadd.f32 %v5330, %v5430
      %5432 = vmatmul.bf16.gmra.mxu0 %v4088
      %v5433 = vpop.f32.mrf.mxu0
      %v5434 = vadd.f32 %v5333, %v5433
      %v5435 = vpop.f32.mrf.mxu0
      %v5436 = vadd.f32 %v5335, %v5435
      %5437 = vmatmul.bf16.gmra.mxu0 %v4091
      %v5438 = vpop.f32.mrf.mxu0
      %v5439 = vadd.f32 %v5338, %v5438
      %v5440 = vpop.f32.mrf.mxu0
      %v5441 = vadd.f32 %v5340, %v5440
      %5442 = vmatmul.bf16.gmra.mxu0 %v4094
      %v5443 = vpop.f32.mrf.mxu0
      %v5444 = vadd.f32 %v5343, %v5443
      %v5445 = vpop.f32.mrf.mxu0
      %v5446 = vadd.f32 %v5345, %v5445
      %5447 = vdwg.mxu0
      %s5448 = sadd.s32 %s386, 2
      %s5449 = smul.u32 %s5448, 30
      %s5450 = smul.addr %s5449, 4
      %s5451 = scalar_lea.vmem [#allocation2], %s5450
      %v5452 = vld [vmem:[%s5451] sm:$0xff]
      %v5453 = vld [vmem:[%s5451 + $0x8] sm:$0xf]
      %v5454 = vld [vmem:[%s5451 + $0xc] sm:$0xff]
      %v5455 = vld [vmem:[%s5451 + $0x14] sm:$0xf]
      %v5456 = vld [vmem:[%s5451 + $0x18] sm:$0xff]
      %v5457 = vld [vmem:[%s5451 + $0x20] sm:$0xf]
      %v5458 = vld [vmem:[%s5451 + $0x24] sm:$0xff]
      %v5459 = vld [vmem:[%s5451 + $0x2c] sm:$0xf]
      %v5460 = vld [vmem:[%s5451 + $0x30] sm:$0xff]
      %v5461 = vld [vmem:[%s5451 + $0x38] sm:$0xf]
      %v5462 = vld [vmem:[%s5451 + $0x3c] sm:$0xff]
      %v5463 = vld [vmem:[%s5451 + $0x44] sm:$0xf]
      %v5464 = vld [vmem:[%s5451 + $0x48] sm:$0xff]
      %v5465 = vld [vmem:[%s5451 + $0x50] sm:$0xf]
      %v5466 = vld [vmem:[%s5451 + $0x54] sm:$0xff]
      %v5467 = vld [vmem:[%s5451 + $0x5c] sm:$0xf]
      %v5468 = vld [vmem:[%s5451 + $0x60] sm:$0xff]
      %v5469 = vld [vmem:[%s5451 + $0x68] sm:$0xf]
      %v5470 = vld [vmem:[%s5451 + $0x6c] sm:$0xff]
      %v5471 = vld [vmem:[%s5451 + $0x74] sm:$0xf]
      %v5472 = vld [vmem:[%s5451 + $0x78] sm:$0xff]
      %v5473 = vld [vmem:[%s5451 + $0x80] sm:$0xf]
      %v5474 = vld [vmem:[%s5451 + $0x84] sm:$0xff]
      %v5475 = vld [vmem:[%s5451 + $0x8c] sm:$0xf]
      %v5476 = vld [vmem:[%s5451 + $0x90] sm:$0xff]
      %v5477 = vld [vmem:[%s5451 + $0x98] sm:$0xf]
      %v5478 = vld [vmem:[%s5451 + $0x9c] sm:$0xff]
      %v5479 = vld [vmem:[%s5451 + $0xa4] sm:$0xf]
      %v5480 = vld [vmem:[%s5451 + $0xa8] sm:$0xff]
      %v5481 = vld [vmem:[%s5451 + $0xb0] sm:$0xf]
      %v5482 = vld [vmem:[%s5451 + $0xb4] sm:$0xff]
      %v5483 = vld [vmem:[%s5451 + $0xbc] sm:$0xf]
      %v5484 = vld [vmem:[%s5451 + $0xc0] sm:$0xff]
      %v5485 = vld [vmem:[%s5451 + $0xc8] sm:$0xf]
      %v5486 = vld [vmem:[%s5451 + $0xcc] sm:$0xff]
      %v5487 = vld [vmem:[%s5451 + $0xd4] sm:$0xf]
      %v5488 = vld [vmem:[%s5451 + $0xd8] sm:$0xff]
      %v5489 = vld [vmem:[%s5451 + $0xe0] sm:$0xf]
      %v5490 = vld [vmem:[%s5451 + $0xe4] sm:$0xff]
      %v5491 = vld [vmem:[%s5451 + $0xec] sm:$0xf]
      %v5492 = vld [vmem:[%s5451 + $0xf0] sm:$0xff]
      %v5493 = vld [vmem:[%s5451 + $0xf8] sm:$0xf]
      %v5494 = vld [vmem:[%s5451 + $0xfc] sm:$0xff]
      %v5495 = vld [vmem:[%s5451 + $0x104] sm:$0xf]
      %v5496 = vld [vmem:[%s5451 + $0x108] sm:$0xff]
      %v5497 = vld [vmem:[%s5451 + $0x110] sm:$0xf]
      %v5498 = vld [vmem:[%s5451 + $0x114] sm:$0xff]
      %v5499 = vld [vmem:[%s5451 + $0x11c] sm:$0xf]
      %v5500 = vld [vmem:[%s5451 + $0x120] sm:$0xff]
      %v5501 = vld [vmem:[%s5451 + $0x128] sm:$0xf]
      %v5502 = vld [vmem:[%s5451 + $0x12c] sm:$0xff]
      %v5503 = vld [vmem:[%s5451 + $0x134] sm:$0xf]
      %v5504 = vld [vmem:[%s5451 + $0x138] sm:$0xff]
      %v5505 = vld [vmem:[%s5451 + $0x140] sm:$0xf]
      %v5506 = vld [vmem:[%s5451 + $0x144] sm:$0xff]
      %v5507 = vld [vmem:[%s5451 + $0x14c] sm:$0xf]
      %v5508 = vld [vmem:[%s5451 + $0x150] sm:$0xff]
      %v5509 = vld [vmem:[%s5451 + $0x158] sm:$0xf]
      %v5510 = vld [vmem:[%s5451 + $0x15c] sm:$0xff]
      %v5511 = vld [vmem:[%s5451 + $0x164] sm:$0xf]
      %v5512 = vld [vmem:[%s5451 + $0x168] sm:$0xff]
      %v5513 = vld [vmem:[%s5451 + $0x170] sm:$0xf]
      %v5514 = vld [vmem:[%s5451 + $0x174] sm:$0xff]
      %v5515 = vld [vmem:[%s5451 + $0x17c] sm:$0xf]
      %v5516 = vld [vmem:[%s5451 + $0x180] sm:$0xff]
      %v5517 = vld [vmem:[%s5451 + $0x188] sm:$0xf]
      %v5518 = vld [vmem:[%s5451 + $0x18c] sm:$0xff]
      %v5519 = vld [vmem:[%s5451 + $0x194] sm:$0xf]
      %v5520 = vld [vmem:[%s5451 + $0x198] sm:$0xff]
      %v5521 = vld [vmem:[%s5451 + $0x1a0] sm:$0xf]
      %v5522 = vld [vmem:[%s5451 + $0x1a4] sm:$0xff]
      %v5523 = vld [vmem:[%s5451 + $0x1ac] sm:$0xf]
      %v5524 = vld [vmem:[%s5451 + $0x1b0] sm:$0xff]
      %v5525 = vld [vmem:[%s5451 + $0x1b8] sm:$0xf]
      %v5526 = vld [vmem:[%s5451 + $0x1bc] sm:$0xff]
      %v5527 = vld [vmem:[%s5451 + $0x1c4] sm:$0xf]
      %v5528 = vld [vmem:[%s5451 + $0x1c8] sm:$0xff]
      %v5529 = vld [vmem:[%s5451 + $0x1d0] sm:$0xf]
      %v5530 = vld [vmem:[%s5451 + $0x1d4] sm:$0xff]
      %v5531 = vld [vmem:[%s5451 + $0x1dc] sm:$0xf]
      %s5532 = scalar_lea.vmem %s2, 1152
      %v5533 = vld [vmem:[%s5532] sm:$0xff]
      %v5534 = vld [vmem:[%s5532 + $0x8] sm:$0xf]
      %v5535 = vld [vmem:[%s5532 + $0xc] sm:$0xff]
      %v5536 = vld [vmem:[%s5532 + $0x14] sm:$0xf]
      %v5537 = vld [vmem:[%s5532 + $0x18] sm:$0xff]
      %v5538 = vld [vmem:[%s5532 + $0x20] sm:$0xf]
      %v5539 = vld [vmem:[%s5532 + $0x24] sm:$0xff]
      %v5540 = vld [vmem:[%s5532 + $0x2c] sm:$0xf]
      %v5541 = vld [vmem:[%s5532 + $0x30] sm:$0xff]
      %v5542 = vld [vmem:[%s5532 + $0x38] sm:$0xf]
      %v5543 = vld [vmem:[%s5532 + $0x3c] sm:$0xff]
      %v5544 = vld [vmem:[%s5532 + $0x44] sm:$0xf]
      %v5545 = vld [vmem:[%s5532 + $0x48] sm:$0xff]
      %v5546 = vld [vmem:[%s5532 + $0x50] sm:$0xf]
      %v5547 = vld [vmem:[%s5532 + $0x54] sm:$0xff]
      %v5548 = vld [vmem:[%s5532 + $0x5c] sm:$0xf]
      %v5549 = vld [vmem:[%s5532 + $0x60] sm:$0xff]
      %v5550 = vld [vmem:[%s5532 + $0x68] sm:$0xf]
      %v5551 = vld [vmem:[%s5532 + $0x6c] sm:$0xff]
      %v5552 = vld [vmem:[%s5532 + $0x74] sm:$0xf]
      %v5553 = vld [vmem:[%s5532 + $0x78] sm:$0xff]
      %v5554 = vld [vmem:[%s5532 + $0x80] sm:$0xf]
      %v5555 = vld [vmem:[%s5532 + $0x84] sm:$0xff]
      %v5556 = vld [vmem:[%s5532 + $0x8c] sm:$0xf]
      %v5557 = vld [vmem:[%s5532 + $0x90] sm:$0xff]
      %v5558 = vld [vmem:[%s5532 + $0x98] sm:$0xf]
      %v5559 = vld [vmem:[%s5532 + $0x9c] sm:$0xff]
      %v5560 = vld [vmem:[%s5532 + $0xa4] sm:$0xf]
      %v5561 = vld [vmem:[%s5532 + $0xa8] sm:$0xff]
      %v5562 = vld [vmem:[%s5532 + $0xb0] sm:$0xf]
      %v5563 = vld [vmem:[%s5532 + $0xb4] sm:$0xff]
      %v5564 = vld [vmem:[%s5532 + $0xbc] sm:$0xf]
      %v5565 = vld [vmem:[%s5532 + $0xc0] sm:$0xff]
      %v5566 = vld [vmem:[%s5532 + $0xc8] sm:$0xf]
      %v5567 = vld [vmem:[%s5532 + $0xcc] sm:$0xff]
      %v5568 = vld [vmem:[%s5532 + $0xd4] sm:$0xf]
      %v5569 = vld [vmem:[%s5532 + $0xd8] sm:$0xff]
      %v5570 = vld [vmem:[%s5532 + $0xe0] sm:$0xf]
      %v5571 = vld [vmem:[%s5532 + $0xe4] sm:$0xff]
      %v5572 = vld [vmem:[%s5532 + $0xec] sm:$0xf]
      %v5573 = vld [vmem:[%s5532 + $0xf0] sm:$0xff]
      %v5574 = vld [vmem:[%s5532 + $0xf8] sm:$0xf]
      %v5575 = vld [vmem:[%s5532 + $0xfc] sm:$0xff]
      %v5576 = vld [vmem:[%s5532 + $0x104] sm:$0xf]
      %v5577 = vld [vmem:[%s5532 + $0x108] sm:$0xff]
      %v5578 = vld [vmem:[%s5532 + $0x110] sm:$0xf]
      %v5579 = vld [vmem:[%s5532 + $0x114] sm:$0xff]
      %v5580 = vld [vmem:[%s5532 + $0x11c] sm:$0xf]
      %v5581 = vld [vmem:[%s5532 + $0x120] sm:$0xff]
      %v5582 = vld [vmem:[%s5532 + $0x128] sm:$0xf]
      %v5583 = vld [vmem:[%s5532 + $0x12c] sm:$0xff]
      %v5584 = vld [vmem:[%s5532 + $0x134] sm:$0xf]
      %v5585 = vld [vmem:[%s5532 + $0x138] sm:$0xff]
      %v5586 = vld [vmem:[%s5532 + $0x140] sm:$0xf]
      %v5587 = vld [vmem:[%s5532 + $0x144] sm:$0xff]
      %v5588 = vld [vmem:[%s5532 + $0x14c] sm:$0xf]
      %v5589 = vld [vmem:[%s5532 + $0x150] sm:$0xff]
      %v5590 = vld [vmem:[%s5532 + $0x158] sm:$0xf]
      %v5591 = vld [vmem:[%s5532 + $0x15c] sm:$0xff]
      %v5592 = vld [vmem:[%s5532 + $0x164] sm:$0xf]
      %v5593 = vld [vmem:[%s5532 + $0x168] sm:$0xff]
      %v5594 = vld [vmem:[%s5532 + $0x170] sm:$0xf]
      %v5595 = vld [vmem:[%s5532 + $0x174] sm:$0xff]
      %v5596 = vld [vmem:[%s5532 + $0x17c] sm:$0xf]
      %v5597 = vld [vmem:[%s5532 + $0x180] sm:$0xff]
      %v5598 = vld [vmem:[%s5532 + $0x188] sm:$0xf]
      %v5599 = vld [vmem:[%s5532 + $0x18c] sm:$0xff]
      %v5600 = vld [vmem:[%s5532 + $0x194] sm:$0xf]
      %v5601 = vld [vmem:[%s5532 + $0x198] sm:$0xff]
      %v5602 = vld [vmem:[%s5532 + $0x1a0] sm:$0xf]
      %v5603 = vld [vmem:[%s5532 + $0x1a4] sm:$0xff]
      %v5604 = vld [vmem:[%s5532 + $0x1ac] sm:$0xf]
      %v5605 = vld [vmem:[%s5532 + $0x1b0] sm:$0xff]
      %v5606 = vld [vmem:[%s5532 + $0x1b8] sm:$0xf]
      %v5607 = vld [vmem:[%s5532 + $0x1bc] sm:$0xff]
      %v5608 = vld [vmem:[%s5532 + $0x1c4] sm:$0xf]
      %v5609 = vld [vmem:[%s5532 + $0x1c8] sm:$0xff]
      %v5610 = vld [vmem:[%s5532 + $0x1d0] sm:$0xf]
      %v5611 = vld [vmem:[%s5532 + $0x1d4] sm:$0xff]
      %v5612 = vld [vmem:[%s5532 + $0x1dc] sm:$0xf]
      %v5613 = vld [vmem:[%s5532 + $0x1e0] sm:$0xff]
      %v5614 = vld [vmem:[%s5532 + $0x1e8] sm:$0xf]
      %v5615 = vld [vmem:[%s5532 + $0x1ec] sm:$0xff]
      %v5616 = vld [vmem:[%s5532 + $0x1f4] sm:$0xf]
      %v5617 = vld [vmem:[%s5532 + $0x1f8] sm:$0xff]
      %v5618 = vld [vmem:[%s5532 + $0x200] sm:$0xf]
      %v5619 = vld [vmem:[%s5532 + $0x204] sm:$0xff]
      %v5620 = vld [vmem:[%s5532 + $0x20c] sm:$0xf]
      %v5621 = vld [vmem:[%s5532 + $0x210] sm:$0xff]
      %v5622 = vld [vmem:[%s5532 + $0x218] sm:$0xf]
      %v5623 = vld [vmem:[%s5532 + $0x21c] sm:$0xff]
      %v5624 = vld [vmem:[%s5532 + $0x224] sm:$0xf]
      %v5625 = vld [vmem:[%s5532 + $0x228] sm:$0xff]
      %v5626 = vld [vmem:[%s5532 + $0x230] sm:$0xf]
      %v5627 = vld [vmem:[%s5532 + $0x234] sm:$0xff]
      %v5628 = vld [vmem:[%s5532 + $0x23c] sm:$0xf]
      %v5709 = vunpack.c.l.b16 %v5452
      %v5710 = vunpack.c.h.b16 %v5452
      %v5711 = vunpack.c.l.b16 %v5453
      %v5712 = vunpack.c.l.b16 %v5454
      %v5713 = vunpack.c.h.b16 %v5454
      %v5714 = vunpack.c.l.b16 %v5455
      %v5715 = vunpack.c.l.b16 %v5456
      %v5716 = vunpack.c.h.b16 %v5456
      %v5717 = vunpack.c.l.b16 %v5457
      %v5718 = vunpack.c.l.b16 %v5458
      %v5719 = vunpack.c.h.b16 %v5458
      %v5720 = vunpack.c.l.b16 %v5459
      %v5721 = vunpack.c.l.b16 %v5460
      %v5722 = vunpack.c.h.b16 %v5460
      %v5723 = vunpack.c.l.b16 %v5461
      %v5724 = vunpack.c.l.b16 %v5462
      %v5725 = vunpack.c.h.b16 %v5462
      %v5726 = vunpack.c.l.b16 %v5463
      %v5727 = vunpack.c.l.b16 %v5464
      %v5728 = vunpack.c.h.b16 %v5464
      %v5729 = vunpack.c.l.b16 %v5465
      %v5730 = vunpack.c.l.b16 %v5466
      %v5731 = vunpack.c.h.b16 %v5466
      %v5732 = vunpack.c.l.b16 %v5467
      %v5733 = vunpack.c.l.b16 %v5468
      %v5734 = vunpack.c.h.b16 %v5468
      %v5735 = vunpack.c.l.b16 %v5469
      %v5736 = vunpack.c.l.b16 %v5470
      %v5737 = vunpack.c.h.b16 %v5470
      %v5738 = vunpack.c.l.b16 %v5471
      %v5739 = vunpack.c.l.b16 %v5472
      %v5740 = vunpack.c.h.b16 %v5472
      %v5741 = vunpack.c.l.b16 %v5473
      %v5742 = vunpack.c.l.b16 %v5474
      %v5743 = vunpack.c.h.b16 %v5474
      %v5744 = vunpack.c.l.b16 %v5475
      %v5745 = vunpack.c.l.b16 %v5476
      %v5746 = vunpack.c.h.b16 %v5476
      %v5747 = vunpack.c.l.b16 %v5477
      %v5748 = vunpack.c.l.b16 %v5478
      %v5749 = vunpack.c.h.b16 %v5478
      %v5750 = vunpack.c.l.b16 %v5479
      %v5751 = vunpack.c.l.b16 %v5480
      %v5752 = vunpack.c.h.b16 %v5480
      %v5753 = vunpack.c.l.b16 %v5481
      %v5754 = vunpack.c.l.b16 %v5482
      %v5755 = vunpack.c.h.b16 %v5482
      %v5756 = vunpack.c.l.b16 %v5483
      %v5757 = vunpack.c.l.b16 %v5484
      %v5758 = vunpack.c.h.b16 %v5484
      %v5759 = vunpack.c.l.b16 %v5485
      %v5760 = vunpack.c.l.b16 %v5486
      %v5761 = vunpack.c.h.b16 %v5486
      %v5762 = vunpack.c.l.b16 %v5487
      %v5763 = vunpack.c.l.b16 %v5488
      %v5764 = vunpack.c.h.b16 %v5488
      %v5765 = vunpack.c.l.b16 %v5489
      %v5766 = vunpack.c.l.b16 %v5490
      %v5767 = vunpack.c.h.b16 %v5490
      %v5768 = vunpack.c.l.b16 %v5491
      %v5769 = vunpack.c.l.b16 %v5492
      %v5770 = vunpack.c.h.b16 %v5492
      %v5771 = vunpack.c.l.b16 %v5493
      %v5772 = vunpack.c.l.b16 %v5494
      %v5773 = vunpack.c.h.b16 %v5494
      %v5774 = vunpack.c.l.b16 %v5495
      %v5775 = vunpack.c.l.b16 %v5496
      %v5776 = vunpack.c.h.b16 %v5496
      %v5777 = vunpack.c.l.b16 %v5497
      %v5778 = vunpack.c.l.b16 %v5498
      %v5779 = vunpack.c.h.b16 %v5498
      %v5780 = vunpack.c.l.b16 %v5499
      %v5781 = vunpack.c.l.b16 %v5500
      %v5782 = vunpack.c.h.b16 %v5500
      %v5783 = vunpack.c.l.b16 %v5501
      %v5784 = vunpack.c.l.b16 %v5502
      %v5785 = vunpack.c.h.b16 %v5502
      %v5786 = vunpack.c.l.b16 %v5503
      %v5787 = vunpack.c.l.b16 %v5504
      %v5788 = vunpack.c.h.b16 %v5504
      %v5789 = vunpack.c.l.b16 %v5505
      %v5790 = vunpack.c.l.b16 %v5506
      %v5791 = vunpack.c.h.b16 %v5506
      %v5792 = vunpack.c.l.b16 %v5507
      %v5793 = vunpack.c.l.b16 %v5508
      %v5794 = vunpack.c.h.b16 %v5508
      %v5795 = vunpack.c.l.b16 %v5509
      %v5796 = vunpack.c.l.b16 %v5510
      %v5797 = vunpack.c.h.b16 %v5510
      %v5798 = vunpack.c.l.b16 %v5511
      %v5799 = vunpack.c.l.b16 %v5512
      %v5800 = vunpack.c.h.b16 %v5512
      %v5801 = vunpack.c.l.b16 %v5513
      %v5802 = vunpack.c.l.b16 %v5514
      %v5803 = vunpack.c.h.b16 %v5514
      %v5804 = vunpack.c.l.b16 %v5515
      %v5805 = vunpack.c.l.b16 %v5516
      %v5806 = vunpack.c.h.b16 %v5516
      %v5807 = vunpack.c.l.b16 %v5517
      %v5808 = vunpack.c.l.b16 %v5518
      %v5809 = vunpack.c.h.b16 %v5518
      %v5810 = vunpack.c.l.b16 %v5519
      %v5811 = vunpack.c.l.b16 %v5520
      %v5812 = vunpack.c.h.b16 %v5520
      %v5813 = vunpack.c.l.b16 %v5521
      %v5814 = vunpack.c.l.b16 %v5522
      %v5815 = vunpack.c.h.b16 %v5522
      %v5816 = vunpack.c.l.b16 %v5523
      %v5817 = vunpack.c.l.b16 %v5524
      %v5818 = vunpack.c.h.b16 %v5524
      %v5819 = vunpack.c.l.b16 %v5525
      %v5820 = vunpack.c.l.b16 %v5526
      %v5821 = vunpack.c.h.b16 %v5526
      %v5822 = vunpack.c.l.b16 %v5527
      %v5823 = vunpack.c.l.b16 %v5528
      %v5824 = vunpack.c.h.b16 %v5528
      %v5825 = vunpack.c.l.b16 %v5529
      %v5826 = vunpack.c.l.b16 %v5530
      %v5827 = vunpack.c.h.b16 %v5530
      %v5828 = vunpack.c.l.b16 %v5531
      %v5829 = vpack.c.b16 %v5712, %v5709
      %v5830 = vpack.c.b16 %v5713, %v5710
      %v5831 = vpack.c.b16 %v5714, %v5711
      %v5832 = vpack.c.b16 %v5718, %v5715
      %v5833 = vpack.c.b16 %v5719, %v5716
      %v5834 = vpack.c.b16 %v5720, %v5717
      %v5835 = vpack.c.b16 %v5724, %v5721
      %v5836 = vpack.c.b16 %v5725, %v5722
      %v5837 = vpack.c.b16 %v5726, %v5723
      %v5838 = vpack.c.b16 %v5730, %v5727
      %v5839 = vpack.c.b16 %v5731, %v5728
      %v5840 = vpack.c.b16 %v5732, %v5729
      %v5841 = vpack.c.b16 %v5736, %v5733
      %v5842 = vpack.c.b16 %v5737, %v5734
      %v5843 = vpack.c.b16 %v5738, %v5735
      %v5844 = vpack.c.b16 %v5742, %v5739
      %v5845 = vpack.c.b16 %v5743, %v5740
      %v5846 = vpack.c.b16 %v5744, %v5741
      %v5847 = vpack.c.b16 %v5748, %v5745
      %v5848 = vpack.c.b16 %v5749, %v5746
      %v5849 = vpack.c.b16 %v5750, %v5747
      %v5850 = vpack.c.b16 %v5754, %v5751
      %v5851 = vpack.c.b16 %v5755, %v5752
      %v5852 = vpack.c.b16 %v5756, %v5753
      %v5853 = vpack.c.b16 %v5760, %v5757
      %v5854 = vpack.c.b16 %v5761, %v5758
      %v5855 = vpack.c.b16 %v5762, %v5759
      %v5856 = vpack.c.b16 %v5766, %v5763
      %v5857 = vpack.c.b16 %v5767, %v5764
      %v5858 = vpack.c.b16 %v5768, %v5765
      %v5859 = vpack.c.b16 %v5772, %v5769
      %v5860 = vpack.c.b16 %v5773, %v5770
      %v5861 = vpack.c.b16 %v5774, %v5771
      %v5862 = vpack.c.b16 %v5778, %v5775
      %v5863 = vpack.c.b16 %v5779, %v5776
      %v5864 = vpack.c.b16 %v5780, %v5777
      %v5865 = vpack.c.b16 %v5784, %v5781
      %v5866 = vpack.c.b16 %v5785, %v5782
      %v5867 = vpack.c.b16 %v5786, %v5783
      %v5868 = vpack.c.b16 %v5790, %v5787
      %v5869 = vpack.c.b16 %v5791, %v5788
      %v5870 = vpack.c.b16 %v5792, %v5789
      %v5871 = vpack.c.b16 %v5796, %v5793
      %v5872 = vpack.c.b16 %v5797, %v5794
      %v5873 = vpack.c.b16 %v5798, %v5795
      %v5874 = vpack.c.b16 %v5802, %v5799
      %v5875 = vpack.c.b16 %v5803, %v5800
      %v5876 = vpack.c.b16 %v5804, %v5801
      %v5877 = vpack.c.b16 %v5808, %v5805
      %v5878 = vpack.c.b16 %v5809, %v5806
      %v5879 = vpack.c.b16 %v5810, %v5807
      %v5880 = vpack.c.b16 %v5814, %v5811
      %v5881 = vpack.c.b16 %v5815, %v5812
      %v5882 = vpack.c.b16 %v5816, %v5813
      %v5883 = vpack.c.b16 %v5820, %v5817
      %v5884 = vpack.c.b16 %v5821, %v5818
      %v5885 = vpack.c.b16 %v5822, %v5819
      %v5886 = vpack.c.b16 %v5826, %v5823
      %v5887 = vpack.c.b16 %v5827, %v5824
      %v5888 = vpack.c.b16 %v5828, %v5825
      %v6045 = vunpack.c.l.b16 %v5533
      %v6046 = vunpack.c.h.b16 %v5533
      %v6047 = vunpack.c.l.b16 %v5534
      %v6048 = vunpack.c.l.b16 %v5535
      %v6049 = vunpack.c.h.b16 %v5535
      %v6050 = vunpack.c.l.b16 %v5536
      %v6051 = vunpack.c.l.b16 %v5537
      %v6052 = vunpack.c.h.b16 %v5537
      %v6053 = vunpack.c.l.b16 %v5538
      %v6054 = vunpack.c.l.b16 %v5539
      %v6055 = vunpack.c.h.b16 %v5539
      %v6056 = vunpack.c.l.b16 %v5540
      %v6057 = vunpack.c.l.b16 %v5541
      %v6058 = vunpack.c.h.b16 %v5541
      %v6059 = vunpack.c.l.b16 %v5542
      %v6060 = vunpack.c.l.b16 %v5543
      %v6061 = vunpack.c.h.b16 %v5543
      %v6062 = vunpack.c.l.b16 %v5544
      %v6063 = vunpack.c.l.b16 %v5545
      %v6064 = vunpack.c.h.b16 %v5545
      %v6065 = vunpack.c.l.b16 %v5546
      %v6066 = vunpack.c.l.b16 %v5547
      %v6067 = vunpack.c.h.b16 %v5547
      %v6068 = vunpack.c.l.b16 %v5548
      %v6069 = vunpack.c.l.b16 %v5549
      %v6070 = vunpack.c.h.b16 %v5549
      %v6071 = vunpack.c.l.b16 %v5550
      %v6072 = vunpack.c.l.b16 %v5551
      %v6073 = vunpack.c.h.b16 %v5551
      %v6074 = vunpack.c.l.b16 %v5552
      %v6075 = vunpack.c.l.b16 %v5553
      %v6076 = vunpack.c.h.b16 %v5553
      %v6077 = vunpack.c.l.b16 %v5554
      %v6078 = vunpack.c.l.b16 %v5555
      %v6079 = vunpack.c.h.b16 %v5555
      %v6080 = vunpack.c.l.b16 %v5556
      %v6081 = vunpack.c.l.b16 %v5557
      %v6082 = vunpack.c.h.b16 %v5557
      %v6083 = vunpack.c.l.b16 %v5558
      %v6084 = vunpack.c.l.b16 %v5559
      %v6085 = vunpack.c.h.b16 %v5559
      %v6086 = vunpack.c.l.b16 %v5560
      %v6087 = vunpack.c.l.b16 %v5561
      %v6088 = vunpack.c.h.b16 %v5561
      %v6089 = vunpack.c.l.b16 %v5562
      %v6090 = vunpack.c.l.b16 %v5563
      %v6091 = vunpack.c.h.b16 %v5563
      %v6092 = vunpack.c.l.b16 %v5564
      %v6093 = vunpack.c.l.b16 %v5565
      %v6094 = vunpack.c.h.b16 %v5565
      %v6095 = vunpack.c.l.b16 %v5566
      %v6096 = vunpack.c.l.b16 %v5567
      %v6097 = vunpack.c.h.b16 %v5567
      %v6098 = vunpack.c.l.b16 %v5568
      %v6099 = vunpack.c.l.b16 %v5569
      %v6100 = vunpack.c.h.b16 %v5569
      %v6101 = vunpack.c.l.b16 %v5570
      %v6102 = vunpack.c.l.b16 %v5571
      %v6103 = vunpack.c.h.b16 %v5571
      %v6104 = vunpack.c.l.b16 %v5572
      %v6105 = vunpack.c.l.b16 %v5573
      %v6106 = vunpack.c.h.b16 %v5573
      %v6107 = vunpack.c.l.b16 %v5574
      %v6108 = vunpack.c.l.b16 %v5575
      %v6109 = vunpack.c.h.b16 %v5575
      %v6110 = vunpack.c.l.b16 %v5576
      %v6111 = vunpack.c.l.b16 %v5577
      %v6112 = vunpack.c.h.b16 %v5577
      %v6113 = vunpack.c.l.b16 %v5578
      %v6114 = vunpack.c.l.b16 %v5579
      %v6115 = vunpack.c.h.b16 %v5579
      %v6116 = vunpack.c.l.b16 %v5580
      %v6117 = vunpack.c.l.b16 %v5581
      %v6118 = vunpack.c.h.b16 %v5581
      %v6119 = vunpack.c.l.b16 %v5582
      %v6120 = vunpack.c.l.b16 %v5583
      %v6121 = vunpack.c.h.b16 %v5583
      %v6122 = vunpack.c.l.b16 %v5584
      %v6123 = vunpack.c.l.b16 %v5585
      %v6124 = vunpack.c.h.b16 %v5585
      %v6125 = vunpack.c.l.b16 %v5586
      %v6126 = vunpack.c.l.b16 %v5587
      %v6127 = vunpack.c.h.b16 %v5587
      %v6128 = vunpack.c.l.b16 %v5588
      %v6129 = vunpack.c.l.b16 %v5589
      %v6130 = vunpack.c.h.b16 %v5589
      %v6131 = vunpack.c.l.b16 %v5590
      %v6132 = vunpack.c.l.b16 %v5591
      %v6133 = vunpack.c.h.b16 %v5591
      %v6134 = vunpack.c.l.b16 %v5592
      %v6135 = vunpack.c.l.b16 %v5593
      %v6136 = vunpack.c.h.b16 %v5593
      %v6137 = vunpack.c.l.b16 %v5594
      %v6138 = vunpack.c.l.b16 %v5595
      %v6139 = vunpack.c.h.b16 %v5595
      %v6140 = vunpack.c.l.b16 %v5596
      %v6141 = vunpack.c.l.b16 %v5597
      %v6142 = vunpack.c.h.b16 %v5597
      %v6143 = vunpack.c.l.b16 %v5598
      %v6144 = vunpack.c.l.b16 %v5599
      %v6145 = vunpack.c.h.b16 %v5599
      %v6146 = vunpack.c.l.b16 %v5600
      %v6147 = vunpack.c.l.b16 %v5601
      %v6148 = vunpack.c.h.b16 %v5601
      %v6149 = vunpack.c.l.b16 %v5602
      %v6150 = vunpack.c.l.b16 %v5603
      %v6151 = vunpack.c.h.b16 %v5603
      %v6152 = vunpack.c.l.b16 %v5604
      %v6153 = vunpack.c.l.b16 %v5605
      %v6154 = vunpack.c.h.b16 %v5605
      %v6155 = vunpack.c.l.b16 %v5606
      %v6156 = vunpack.c.l.b16 %v5607
      %v6157 = vunpack.c.h.b16 %v5607
      %v6158 = vunpack.c.l.b16 %v5608
      %v6159 = vunpack.c.l.b16 %v5609
      %v6160 = vunpack.c.h.b16 %v5609
      %v6161 = vunpack.c.l.b16 %v5610
      %v6162 = vunpack.c.l.b16 %v5611
      %v6163 = vunpack.c.h.b16 %v5611
      %v6164 = vunpack.c.l.b16 %v5612
      %v6165 = vunpack.c.l.b16 %v5613
      %v6166 = vunpack.c.h.b16 %v5613
      %v6167 = vunpack.c.l.b16 %v5614
      %v6168 = vunpack.c.l.b16 %v5615
      %v6169 = vunpack.c.h.b16 %v5615
      %v6170 = vunpack.c.l.b16 %v5616
      %v6171 = vunpack.c.l.b16 %v5617
      %v6172 = vunpack.c.h.b16 %v5617
      %v6173 = vunpack.c.l.b16 %v5618
      %v6174 = vunpack.c.l.b16 %v5619
      %v6175 = vunpack.c.h.b16 %v5619
      %v6176 = vunpack.c.l.b16 %v5620
      %v6177 = vunpack.c.l.b16 %v5621
      %v6178 = vunpack.c.h.b16 %v5621
      %v6179 = vunpack.c.l.b16 %v5622
      %v6180 = vunpack.c.l.b16 %v5623
      %v6181 = vunpack.c.h.b16 %v5623
      %v6182 = vunpack.c.l.b16 %v5624
      %v6183 = vunpack.c.l.b16 %v5625
      %v6184 = vunpack.c.h.b16 %v5625
      %v6185 = vunpack.c.l.b16 %v5626
      %v6186 = vunpack.c.l.b16 %v5627
      %v6187 = vunpack.c.h.b16 %v5627
      %v6188 = vunpack.c.l.b16 %v5628
      %v6189 = vpack.c.b16 %v6048, %v6045
      %v6190 = vpack.c.b16 %v6049, %v6046
      %v6191 = vpack.c.b16 %v6050, %v6047
      %v6192 = vpack.c.b16 %v6054, %v6051
      %v6193 = vpack.c.b16 %v6055, %v6052
      %v6194 = vpack.c.b16 %v6056, %v6053
      %v6195 = vpack.c.b16 %v6060, %v6057
      %v6196 = vpack.c.b16 %v6061, %v6058
      %v6197 = vpack.c.b16 %v6062, %v6059
      %v6198 = vpack.c.b16 %v6066, %v6063
      %v6199 = vpack.c.b16 %v6067, %v6064
      %v6200 = vpack.c.b16 %v6068, %v6065
      %v6201 = vpack.c.b16 %v6072, %v6069
      %v6202 = vpack.c.b16 %v6073, %v6070
      %v6203 = vpack.c.b16 %v6074, %v6071
      %v6204 = vpack.c.b16 %v6078, %v6075
      %v6205 = vpack.c.b16 %v6079, %v6076
      %v6206 = vpack.c.b16 %v6080, %v6077
      %v6207 = vpack.c.b16 %v6084, %v6081
      %v6208 = vpack.c.b16 %v6085, %v6082
      %v6209 = vpack.c.b16 %v6086, %v6083
      %v6210 = vpack.c.b16 %v6090, %v6087
      %v6211 = vpack.c.b16 %v6091, %v6088
      %v6212 = vpack.c.b16 %v6092, %v6089
      %v6213 = vpack.c.b16 %v6096, %v6093
      %v6214 = vpack.c.b16 %v6097, %v6094
      %v6215 = vpack.c.b16 %v6098, %v6095
      %v6216 = vpack.c.b16 %v6102, %v6099
      %v6217 = vpack.c.b16 %v6103, %v6100
      %v6218 = vpack.c.b16 %v6104, %v6101
      %v6219 = vpack.c.b16 %v6108, %v6105
      %v6220 = vpack.c.b16 %v6109, %v6106
      %v6221 = vpack.c.b16 %v6110, %v6107
      %v6222 = vpack.c.b16 %v6114, %v6111
      %v6223 = vpack.c.b16 %v6115, %v6112
      %v6224 = vpack.c.b16 %v6116, %v6113
      %v6225 = vpack.c.b16 %v6120, %v6117
      %v6226 = vpack.c.b16 %v6121, %v6118
      %v6227 = vpack.c.b16 %v6122, %v6119
      %v6228 = vpack.c.b16 %v6126, %v6123
      %v6229 = vpack.c.b16 %v6127, %v6124
      %v6230 = vpack.c.b16 %v6128, %v6125
      %v6231 = vpack.c.b16 %v6132, %v6129
      %v6232 = vpack.c.b16 %v6133, %v6130
      %v6233 = vpack.c.b16 %v6134, %v6131
      %v6234 = vpack.c.b16 %v6138, %v6135
      %v6235 = vpack.c.b16 %v6139, %v6136
      %v6236 = vpack.c.b16 %v6140, %v6137
      %v6237 = vpack.c.b16 %v6144, %v6141
      %v6238 = vpack.c.b16 %v6145, %v6142
      %v6239 = vpack.c.b16 %v6146, %v6143
      %v6240 = vpack.c.b16 %v6150, %v6147
      %v6241 = vpack.c.b16 %v6151, %v6148
      %v6242 = vpack.c.b16 %v6152, %v6149
      %v6243 = vpack.c.b16 %v6156, %v6153
      %v6244 = vpack.c.b16 %v6157, %v6154
      %v6245 = vpack.c.b16 %v6158, %v6155
      %v6246 = vpack.c.b16 %v6162, %v6159
      %v6247 = vpack.c.b16 %v6163, %v6160
      %v6248 = vpack.c.b16 %v6164, %v6161
      %v6249 = vpack.c.b16 %v6168, %v6165
      %v6250 = vpack.c.b16 %v6169, %v6166
      %v6251 = vpack.c.b16 %v6170, %v6167
      %v6252 = vpack.c.b16 %v6174, %v6171
      %v6253 = vpack.c.b16 %v6175, %v6172
      %v6254 = vpack.c.b16 %v6176, %v6173
      %v6255 = vpack.c.b16 %v6180, %v6177
      %v6256 = vpack.c.b16 %v6181, %v6178
      %v6257 = vpack.c.b16 %v6182, %v6179
      %v6258 = vpack.c.b16 %v6186, %v6183
      %v6259 = vpack.c.b16 %v6187, %v6184
      %v6260 = vpack.c.b16 %v6188, %v6185
      %6333 = vmatpush.bf16.msra.mxu0 %v6210
      %6334 = vmatpush.bf16.msra.mxu0 %v6207
      %6335 = vmatpush.bf16.msra.mxu0 %v6204
      %6336 = vmatpush.bf16.msra.mxu0 %v6201
      %6337 = vmatpush.bf16.msra.mxu0 %v6198
      %6338 = vmatpush.bf16.msra.mxu0 %v6195
      %6339 = vmatpush.bf16.msra.mxu0 %v6192
      %6340 = vmatpush.bf16.msra.mxu0 %v6189
      %6341 = vmatmul.bf16.gmra.mxu0 %v5829
      %v6342 = vpop.f32.mrf.mxu0
      %v6343 = vadd.f32 0.0, %v6342
      %v6344 = vpop.f32.mrf.mxu0
      %v6345 = vadd.f32 0.0, %v6344
      %6346 = vmatmul.bf16.gmra.mxu0 %v5832
      %v6347 = vpop.f32.mrf.mxu0
      %v6348 = vadd.f32 0.0, %v6347
      %v6349 = vpop.f32.mrf.mxu0
      %v6350 = vadd.f32 0.0, %v6349
      %6351 = vmatmul.bf16.gmra.mxu0 %v5835
      %v6352 = vpop.f32.mrf.mxu0
      %v6353 = vadd.f32 0.0, %v6352
      %v6354 = vpop.f32.mrf.mxu0
      %v6355 = vadd.f32 0.0, %v6354
      %6356 = vmatmul.bf16.gmra.mxu0 %v5838
      %v6357 = vpop.f32.mrf.mxu0
      %v6358 = vadd.f32 0.0, %v6357
      %v6359 = vpop.f32.mrf.mxu0
      %v6360 = vadd.f32 0.0, %v6359
      %6361 = vmatmul.bf16.gmra.mxu0 %v5841
      %v6362 = vpop.f32.mrf.mxu0
      %v6363 = vpop.f32.mrf.mxu0
      %6364 = vmatmul.bf16.gmra.mxu0 %v5844
      %v6365 = vpop.f32.mrf.mxu0
      %v6366 = vadd.f32 0.0, %v6365
      %v6367 = vpop.f32.mrf.mxu0
      %v6368 = vadd.f32 0.0, %v6367
      %6369 = vmatmul.bf16.gmra.mxu0 %v5847
      %v6370 = vpop.f32.mrf.mxu0
      %v6371 = vadd.f32 0.0, %v6370
      %v6372 = vpop.f32.mrf.mxu0
      %v6373 = vadd.f32 0.0, %v6372
      %6374 = vmatmul.bf16.gmra.mxu0 %v5850
      %v6375 = vpop.f32.mrf.mxu0
      %v6376 = vadd.f32 0.0, %v6375
      %v6377 = vpop.f32.mrf.mxu0
      %v6378 = vadd.f32 0.0, %v6377
      %6379 = vmatmul.bf16.gmra.mxu0 %v5853
      %v6380 = vpop.f32.mrf.mxu0
      %v6381 = vadd.f32 0.0, %v6380
      %v6382 = vpop.f32.mrf.mxu0
      %v6383 = vadd.f32 0.0, %v6382
      %6384 = vmatmul.bf16.gmra.mxu0 %v5856
      %v6385 = vpop.f32.mrf.mxu0
      %v6386 = vpop.f32.mrf.mxu0
      %6387 = vmatmul.bf16.gmra.mxu0 %v5859
      %v6388 = vpop.f32.mrf.mxu0
      %v6389 = vadd.f32 0.0, %v6388
      %v6390 = vpop.f32.mrf.mxu0
      %v6391 = vadd.f32 0.0, %v6390
      %6392 = vmatmul.bf16.gmra.mxu0 %v5862
      %v6393 = vpop.f32.mrf.mxu0
      %v6394 = vadd.f32 0.0, %v6393
      %v6395 = vpop.f32.mrf.mxu0
      %v6396 = vadd.f32 0.0, %v6395
      %6397 = vmatmul.bf16.gmra.mxu0 %v5865
      %v6398 = vpop.f32.mrf.mxu0
      %v6399 = vadd.f32 0.0, %v6398
      %v6400 = vpop.f32.mrf.mxu0
      %v6401 = vadd.f32 0.0, %v6400
      %6402 = vmatmul.bf16.gmra.mxu0 %v5868
      %v6403 = vpop.f32.mrf.mxu0
      %v6404 = vadd.f32 0.0, %v6403
      %v6405 = vpop.f32.mrf.mxu0
      %v6406 = vadd.f32 0.0, %v6405
      %6407 = vmatmul.bf16.gmra.mxu0 %v5871
      %v6408 = vpop.f32.mrf.mxu0
      %v6409 = vpop.f32.mrf.mxu0
      %6410 = vmatmul.bf16.gmra.mxu0 %v5874
      %v6411 = vpop.f32.mrf.mxu0
      %v6412 = vadd.f32 0.0, %v6411
      %v6413 = vpop.f32.mrf.mxu0
      %v6414 = vadd.f32 0.0, %v6413
      %6415 = vmatmul.bf16.gmra.mxu0 %v5877
      %v6416 = vpop.f32.mrf.mxu0
      %v6417 = vadd.f32 0.0, %v6416
      %v6418 = vpop.f32.mrf.mxu0
      %v6419 = vadd.f32 0.0, %v6418
      %6420 = vmatmul.bf16.gmra.mxu0 %v5880
      %v6421 = vpop.f32.mrf.mxu0
      %v6422 = vadd.f32 0.0, %v6421
      %v6423 = vpop.f32.mrf.mxu0
      %v6424 = vadd.f32 0.0, %v6423
      %6425 = vmatmul.bf16.gmra.mxu0 %v5883
      %v6426 = vpop.f32.mrf.mxu0
      %v6427 = vadd.f32 0.0, %v6426
      %v6428 = vpop.f32.mrf.mxu0
      %v6429 = vadd.f32 0.0, %v6428
      %6430 = vmatmul.bf16.gmra.mxu0 %v5886
      %v6431 = vpop.f32.mrf.mxu0
      %v6432 = vpop.f32.mrf.mxu0
      %6433 = vdwg.mxu0
      %6434 = vmatpush.bf16.msra.mxu0 %v6234
      %6435 = vmatpush.bf16.msra.mxu0 %v6231
      %6436 = vmatpush.bf16.msra.mxu0 %v6228
      %6437 = vmatpush.bf16.msra.mxu0 %v6225
      %6438 = vmatpush.bf16.msra.mxu0 %v6222
      %6439 = vmatpush.bf16.msra.mxu0 %v6219
      %6440 = vmatpush.bf16.msra.mxu0 %v6216
      %6441 = vmatpush.bf16.msra.mxu0 %v6213
      %6442 = vmatmul.bf16.gmra.mxu0 %v5830
      %v6443 = vpop.f32.mrf.mxu0
      %v6444 = vadd.f32 %v6343, %v6443
      %v6445 = vpop.f32.mrf.mxu0
      %v6446 = vadd.f32 %v6345, %v6445
      %6447 = vmatmul.bf16.gmra.mxu0 %v5833
      %v6448 = vpop.f32.mrf.mxu0
      %v6449 = vadd.f32 %v6348, %v6448
      %v6450 = vpop.f32.mrf.mxu0
      %v6451 = vadd.f32 %v6350, %v6450
      %6452 = vmatmul.bf16.gmra.mxu0 %v5836
      %v6453 = vpop.f32.mrf.mxu0
      %v6454 = vadd.f32 %v6353, %v6453
      %v6455 = vpop.f32.mrf.mxu0
      %v6456 = vadd.f32 %v6355, %v6455
      %6457 = vmatmul.bf16.gmra.mxu0 %v5839
      %v6458 = vpop.f32.mrf.mxu0
      %v6459 = vadd.f32 %v6358, %v6458
      %v6460 = vpop.f32.mrf.mxu0
      %v6461 = vadd.f32 %v6360, %v6460
      %6462 = vmatmul.bf16.gmra.mxu0 %v5842
      %v6463 = vpop.f32.mrf.mxu0
      %v6464 = vpop.f32.mrf.mxu0
      %6465 = vmatmul.bf16.gmra.mxu0 %v5845
      %v6466 = vpop.f32.mrf.mxu0
      %v6467 = vadd.f32 %v6366, %v6466
      %v6468 = vpop.f32.mrf.mxu0
      %v6469 = vadd.f32 %v6368, %v6468
      %6470 = vmatmul.bf16.gmra.mxu0 %v5848
      %v6471 = vpop.f32.mrf.mxu0
      %v6472 = vadd.f32 %v6371, %v6471
      %v6473 = vpop.f32.mrf.mxu0
      %v6474 = vadd.f32 %v6373, %v6473
      %6475 = vmatmul.bf16.gmra.mxu0 %v5851
      %v6476 = vpop.f32.mrf.mxu0
      %v6477 = vadd.f32 %v6376, %v6476
      %v6478 = vpop.f32.mrf.mxu0
      %v6479 = vadd.f32 %v6378, %v6478
      %6480 = vmatmul.bf16.gmra.mxu0 %v5854
      %v6481 = vpop.f32.mrf.mxu0
      %v6482 = vadd.f32 %v6381, %v6481
      %v6483 = vpop.f32.mrf.mxu0
      %v6484 = vadd.f32 %v6383, %v6483
      %6485 = vmatmul.bf16.gmra.mxu0 %v5857
      %v6486 = vpop.f32.mrf.mxu0
      %v6487 = vpop.f32.mrf.mxu0
      %6488 = vmatmul.bf16.gmra.mxu0 %v5860
      %v6489 = vpop.f32.mrf.mxu0
      %v6490 = vadd.f32 %v6389, %v6489
      %v6491 = vpop.f32.mrf.mxu0
      %v6492 = vadd.f32 %v6391, %v6491
      %6493 = vmatmul.bf16.gmra.mxu0 %v5863
      %v6494 = vpop.f32.mrf.mxu0
      %v6495 = vadd.f32 %v6394, %v6494
      %v6496 = vpop.f32.mrf.mxu0
      %v6497 = vadd.f32 %v6396, %v6496
      %6498 = vmatmul.bf16.gmra.mxu0 %v5866
      %v6499 = vpop.f32.mrf.mxu0
      %v6500 = vadd.f32 %v6399, %v6499
      %v6501 = vpop.f32.mrf.mxu0
      %v6502 = vadd.f32 %v6401, %v6501
      %6503 = vmatmul.bf16.gmra.mxu0 %v5869
      %v6504 = vpop.f32.mrf.mxu0
      %v6505 = vadd.f32 %v6404, %v6504
      %v6506 = vpop.f32.mrf.mxu0
      %v6507 = vadd.f32 %v6406, %v6506
      %6508 = vmatmul.bf16.gmra.mxu0 %v5872
      %v6509 = vpop.f32.mrf.mxu0
      %v6510 = vpop.f32.mrf.mxu0
      %6511 = vmatmul.bf16.gmra.mxu0 %v5875
      %v6512 = vpop.f32.mrf.mxu0
      %v6513 = vadd.f32 %v6412, %v6512
      %v6514 = vpop.f32.mrf.mxu0
      %v6515 = vadd.f32 %v6414, %v6514
      %6516 = vmatmul.bf16.gmra.mxu0 %v5878
      %v6517 = vpop.f32.mrf.mxu0
      %v6518 = vadd.f32 %v6417, %v6517
      %v6519 = vpop.f32.mrf.mxu0
      %v6520 = vadd.f32 %v6419, %v6519
      %6521 = vmatmul.bf16.gmra.mxu0 %v5881
      %v6522 = vpop.f32.mrf.mxu0
      %v6523 = vadd.f32 %v6422, %v6522
      %v6524 = vpop.f32.mrf.mxu0
      %v6525 = vadd.f32 %v6424, %v6524
      %6526 = vmatmul.bf16.gmra.mxu0 %v5884
      %v6527 = vpop.f32.mrf.mxu0
      %v6528 = vadd.f32 %v6427, %v6527
      %v6529 = vpop.f32.mrf.mxu0
      %v6530 = vadd.f32 %v6429, %v6529
      %6531 = vmatmul.bf16.gmra.mxu0 %v5887
      %v6532 = vpop.f32.mrf.mxu0
      %v6533 = vpop.f32.mrf.mxu0
      %6534 = vdwg.mxu0
      %6535 = vmatpush.bf16.msra.mxu0 %v6258
      %6536 = vmatpush.bf16.msra.mxu0 %v6255
      %6537 = vmatpush.bf16.msra.mxu0 %v6252
      %6538 = vmatpush.bf16.msra.mxu0 %v6249
      %6539 = vmatpush.bf16.msra.mxu0 %v6246
      %6540 = vmatpush.bf16.msra.mxu0 %v6243
      %6541 = vmatpush.bf16.msra.mxu0 %v6240
      %6542 = vmatpush.bf16.msra.mxu0 %v6237
      %6543 = vmatmul.bf16.gmra.mxu0 %v5831
      %v6544 = vpop.f32.mrf.mxu0
      %v6545 = vadd.f32 %v6444, %v6544
      %v6546 = vpop.f32.mrf.mxu0
      %v6547 = vadd.f32 %v6446, %v6546
      %6548 = vmatmul.bf16.gmra.mxu0 %v5834
      %v6549 = vpop.f32.mrf.mxu0
      %v6550 = vadd.f32 %v6449, %v6549
      %v6551 = vpop.f32.mrf.mxu0
      %v6552 = vadd.f32 %v6451, %v6551
      %6553 = vmatmul.bf16.gmra.mxu0 %v5837
      %v6554 = vpop.f32.mrf.mxu0
      %v6555 = vadd.f32 %v6454, %v6554
      %v6556 = vpop.f32.mrf.mxu0
      %v6557 = vadd.f32 %v6456, %v6556
      %6558 = vmatmul.bf16.gmra.mxu0 %v5840
      %v6559 = vpop.f32.mrf.mxu0
      %v6560 = vadd.f32 %v6459, %v6559
      %v6561 = vpop.f32.mrf.mxu0
      %v6562 = vadd.f32 %v6461, %v6561
      %6563 = vmatmul.bf16.gmra.mxu0 %v5843
      %v6564 = vpop.f32.mrf.mxu0
      %v6565 = vpop.f32.mrf.mxu0
      %6566 = vmatmul.bf16.gmra.mxu0 %v5846
      %v6567 = vpop.f32.mrf.mxu0
      %v6568 = vadd.f32 %v6467, %v6567
      %v6569 = vpop.f32.mrf.mxu0
      %v6570 = vadd.f32 %v6469, %v6569
      %6571 = vmatmul.bf16.gmra.mxu0 %v5849
      %v6572 = vpop.f32.mrf.mxu0
      %v6573 = vadd.f32 %v6472, %v6572
      %v6574 = vpop.f32.mrf.mxu0
      %v6575 = vadd.f32 %v6474, %v6574
      %6576 = vmatmul.bf16.gmra.mxu0 %v5852
      %v6577 = vpop.f32.mrf.mxu0
      %v6578 = vadd.f32 %v6477, %v6577
      %v6579 = vpop.f32.mrf.mxu0
      %v6580 = vadd.f32 %v6479, %v6579
      %6581 = vmatmul.bf16.gmra.mxu0 %v5855
      %v6582 = vpop.f32.mrf.mxu0
      %v6583 = vadd.f32 %v6482, %v6582
      %v6584 = vpop.f32.mrf.mxu0
      %v6585 = vadd.f32 %v6484, %v6584
      %6586 = vmatmul.bf16.gmra.mxu0 %v5858
      %v6587 = vpop.f32.mrf.mxu0
      %v6588 = vpop.f32.mrf.mxu0
      %6589 = vmatmul.bf16.gmra.mxu0 %v5861
      %v6590 = vpop.f32.mrf.mxu0
      %v6591 = vadd.f32 %v6490, %v6590
      %v6592 = vpop.f32.mrf.mxu0
      %v6593 = vadd.f32 %v6492, %v6592
      %6594 = vmatmul.bf16.gmra.mxu0 %v5864
      %v6595 = vpop.f32.mrf.mxu0
      %v6596 = vadd.f32 %v6495, %v6595
      %v6597 = vpop.f32.mrf.mxu0
      %v6598 = vadd.f32 %v6497, %v6597
      %6599 = vmatmul.bf16.gmra.mxu0 %v5867
      %v6600 = vpop.f32.mrf.mxu0
      %v6601 = vadd.f32 %v6500, %v6600
      %v6602 = vpop.f32.mrf.mxu0
      %v6603 = vadd.f32 %v6502, %v6602
      %6604 = vmatmul.bf16.gmra.mxu0 %v5870
      %v6605 = vpop.f32.mrf.mxu0
      %v6606 = vadd.f32 %v6505, %v6605
      %v6607 = vpop.f32.mrf.mxu0
      %v6608 = vadd.f32 %v6507, %v6607
      %6609 = vmatmul.bf16.gmra.mxu0 %v5873
      %v6610 = vpop.f32.mrf.mxu0
      %v6611 = vpop.f32.mrf.mxu0
      %6612 = vmatmul.bf16.gmra.mxu0 %v5876
      %v6613 = vpop.f32.mrf.mxu0
      %v6614 = vadd.f32 %v6513, %v6613
      %v6615 = vpop.f32.mrf.mxu0
      %v6616 = vadd.f32 %v6515, %v6615
      %6617 = vmatmul.bf16.gmra.mxu0 %v5879
      %v6618 = vpop.f32.mrf.mxu0
      %v6619 = vadd.f32 %v6518, %v6618
      %v6620 = vpop.f32.mrf.mxu0
      %v6621 = vadd.f32 %v6520, %v6620
      %6622 = vmatmul.bf16.gmra.mxu0 %v5882
      %v6623 = vpop.f32.mrf.mxu0
      %v6624 = vadd.f32 %v6523, %v6623
      %v6625 = vpop.f32.mrf.mxu0
      %v6626 = vadd.f32 %v6525, %v6625
      %6627 = vmatmul.bf16.gmra.mxu0 %v5885
      %v6628 = vpop.f32.mrf.mxu0
      %v6629 = vadd.f32 %v6528, %v6628
      %v6630 = vpop.f32.mrf.mxu0
      %v6631 = vadd.f32 %v6530, %v6630
      %6632 = vmatmul.bf16.gmra.mxu0 %v5888
      %v6633 = vpop.f32.mrf.mxu0
      %v6634 = vpop.f32.mrf.mxu0
      %6635 = vdwg.mxu0
      %6636 = vmatpush.bf16.msra.mxu0 %v6211
      %6637 = vmatpush.bf16.msra.mxu0 %v6208
      %6638 = vmatpush.bf16.msra.mxu0 %v6205
      %6639 = vmatpush.bf16.msra.mxu0 %v6202
      %6640 = vmatpush.bf16.msra.mxu0 %v6199
      %6641 = vmatpush.bf16.msra.mxu0 %v6196
      %6642 = vmatpush.bf16.msra.mxu0 %v6193
      %6643 = vmatpush.bf16.msra.mxu0 %v6190
      %6644 = vmatmul.bf16.gmra.mxu0 %v5829
      %v6645 = vpop.f32.mrf.mxu0
      %v6646 = vpop.f32.mrf.mxu0
      %v6647 = vadd.f32 0.0, %v6646
      %6648 = vmatmul.bf16.gmra.mxu0 %v5832
      %v6649 = vpop.f32.mrf.mxu0
      %v6650 = vadd.f32 0.0, %v6649
      %v6651 = vpop.f32.mrf.mxu0
      %v6652 = vadd.f32 0.0, %v6651
      %6653 = vmatmul.bf16.gmra.mxu0 %v5835
      %v6654 = vpop.f32.mrf.mxu0
      %v6655 = vadd.f32 0.0, %v6654
      %v6656 = vpop.f32.mrf.mxu0
      %v6657 = vadd.f32 0.0, %v6656
      %6658 = vmatmul.bf16.gmra.mxu0 %v5838
      %v6659 = vpop.f32.mrf.mxu0
      %v6660 = vadd.f32 0.0, %v6659
      %v6661 = vpop.f32.mrf.mxu0
      %v6662 = vadd.f32 0.0, %v6661
      %6663 = vmatmul.bf16.gmra.mxu0 %v5841
      %v6664 = vpop.f32.mrf.mxu0
      %v6665 = vadd.f32 0.0, %v6664
      %v6666 = vpop.f32.mrf.mxu0
      %6667 = vmatmul.bf16.gmra.mxu0 %v5844
      %v6668 = vpop.f32.mrf.mxu0
      %v6669 = vpop.f32.mrf.mxu0
      %v6670 = vadd.f32 0.0, %v6669
      %6671 = vmatmul.bf16.gmra.mxu0 %v5847
      %v6672 = vpop.f32.mrf.mxu0
      %v6673 = vadd.f32 0.0, %v6672
      %v6674 = vpop.f32.mrf.mxu0
      %v6675 = vadd.f32 0.0, %v6674
      %6676 = vmatmul.bf16.gmra.mxu0 %v5850
      %v6677 = vpop.f32.mrf.mxu0
      %v6678 = vadd.f32 0.0, %v6677
      %v6679 = vpop.f32.mrf.mxu0
      %v6680 = vadd.f32 0.0, %v6679
      %6681 = vmatmul.bf16.gmra.mxu0 %v5853
      %v6682 = vpop.f32.mrf.mxu0
      %v6683 = vadd.f32 0.0, %v6682
      %v6684 = vpop.f32.mrf.mxu0
      %v6685 = vadd.f32 0.0, %v6684
      %6686 = vmatmul.bf16.gmra.mxu0 %v5856
      %v6687 = vpop.f32.mrf.mxu0
      %v6688 = vadd.f32 0.0, %v6687
      %v6689 = vpop.f32.mrf.mxu0
      %6690 = vmatmul.bf16.gmra.mxu0 %v5859
      %v6691 = vpop.f32.mrf.mxu0
      %v6692 = vpop.f32.mrf.mxu0
      %v6693 = vadd.f32 0.0, %v6692
      %6694 = vmatmul.bf16.gmra.mxu0 %v5862
      %v6695 = vpop.f32.mrf.mxu0
      %v6696 = vadd.f32 0.0, %v6695
      %v6697 = vpop.f32.mrf.mxu0
      %v6698 = vadd.f32 0.0, %v6697
      %6699 = vmatmul.bf16.gmra.mxu0 %v5865
      %v6700 = vpop.f32.mrf.mxu0
      %v6701 = vadd.f32 0.0, %v6700
      %v6702 = vpop.f32.mrf.mxu0
      %v6703 = vadd.f32 0.0, %v6702
      %6704 = vmatmul.bf16.gmra.mxu0 %v5868
      %v6705 = vpop.f32.mrf.mxu0
      %v6706 = vadd.f32 0.0, %v6705
      %v6707 = vpop.f32.mrf.mxu0
      %v6708 = vadd.f32 0.0, %v6707
      %6709 = vmatmul.bf16.gmra.mxu0 %v5871
      %v6710 = vpop.f32.mrf.mxu0
      %v6711 = vadd.f32 0.0, %v6710
      %v6712 = vpop.f32.mrf.mxu0
      %6713 = vmatmul.bf16.gmra.mxu0 %v5874
      %v6714 = vpop.f32.mrf.mxu0
      %v6715 = vpop.f32.mrf.mxu0
      %v6716 = vadd.f32 0.0, %v6715
      %6717 = vmatmul.bf16.gmra.mxu0 %v5877
      %v6718 = vpop.f32.mrf.mxu0
      %v6719 = vadd.f32 0.0, %v6718
      %v6720 = vpop.f32.mrf.mxu0
      %v6721 = vadd.f32 0.0, %v6720
      %6722 = vmatmul.bf16.gmra.mxu0 %v5880
      %v6723 = vpop.f32.mrf.mxu0
      %v6724 = vadd.f32 0.0, %v6723
      %v6725 = vpop.f32.mrf.mxu0
      %v6726 = vadd.f32 0.0, %v6725
      %6727 = vmatmul.bf16.gmra.mxu0 %v5883
      %v6728 = vpop.f32.mrf.mxu0
      %v6729 = vadd.f32 0.0, %v6728
      %v6730 = vpop.f32.mrf.mxu0
      %v6731 = vadd.f32 0.0, %v6730
      %6732 = vmatmul.bf16.gmra.mxu0 %v5886
      %v6733 = vpop.f32.mrf.mxu0
      %v6734 = vadd.f32 0.0, %v6733
      %v6735 = vpop.f32.mrf.mxu0
      %6736 = vdwg.mxu0
      %6737 = vmatpush.bf16.msra.mxu0 %v6235
      %6738 = vmatpush.bf16.msra.mxu0 %v6232
      %6739 = vmatpush.bf16.msra.mxu0 %v6229
      %6740 = vmatpush.bf16.msra.mxu0 %v6226
      %6741 = vmatpush.bf16.msra.mxu0 %v6223
      %6742 = vmatpush.bf16.msra.mxu0 %v6220
      %6743 = vmatpush.bf16.msra.mxu0 %v6217
      %6744 = vmatpush.bf16.msra.mxu0 %v6214
      %6745 = vmatmul.bf16.gmra.mxu0 %v5830
      %v6746 = vpop.f32.mrf.mxu0
      %v6747 = vpop.f32.mrf.mxu0
      %v6748 = vadd.f32 %v6647, %v6747
      %6749 = vmatmul.bf16.gmra.mxu0 %v5833
      %v6750 = vpop.f32.mrf.mxu0
      %v6751 = vadd.f32 %v6650, %v6750
      %v6752 = vpop.f32.mrf.mxu0
      %v6753 = vadd.f32 %v6652, %v6752
      %6754 = vmatmul.bf16.gmra.mxu0 %v5836
      %v6755 = vpop.f32.mrf.mxu0
      %v6756 = vadd.f32 %v6655, %v6755
      %v6757 = vpop.f32.mrf.mxu0
      %v6758 = vadd.f32 %v6657, %v6757
      %6759 = vmatmul.bf16.gmra.mxu0 %v5839
      %v6760 = vpop.f32.mrf.mxu0
      %v6761 = vadd.f32 %v6660, %v6760
      %v6762 = vpop.f32.mrf.mxu0
      %v6763 = vadd.f32 %v6662, %v6762
      %6764 = vmatmul.bf16.gmra.mxu0 %v5842
      %v6765 = vpop.f32.mrf.mxu0
      %v6766 = vadd.f32 %v6665, %v6765
      %v6767 = vpop.f32.mrf.mxu0
      %6768 = vmatmul.bf16.gmra.mxu0 %v5845
      %v6769 = vpop.f32.mrf.mxu0
      %v6770 = vpop.f32.mrf.mxu0
      %v6771 = vadd.f32 %v6670, %v6770
      %6772 = vmatmul.bf16.gmra.mxu0 %v5848
      %v6773 = vpop.f32.mrf.mxu0
      %v6774 = vadd.f32 %v6673, %v6773
      %v6775 = vpop.f32.mrf.mxu0
      %v6776 = vadd.f32 %v6675, %v6775
      %6777 = vmatmul.bf16.gmra.mxu0 %v5851
      %v6778 = vpop.f32.mrf.mxu0
      %v6779 = vadd.f32 %v6678, %v6778
      %v6780 = vpop.f32.mrf.mxu0
      %v6781 = vadd.f32 %v6680, %v6780
      %6782 = vmatmul.bf16.gmra.mxu0 %v5854
      %v6783 = vpop.f32.mrf.mxu0
      %v6784 = vadd.f32 %v6683, %v6783
      %v6785 = vpop.f32.mrf.mxu0
      %v6786 = vadd.f32 %v6685, %v6785
      %6787 = vmatmul.bf16.gmra.mxu0 %v5857
      %v6788 = vpop.f32.mrf.mxu0
      %v6789 = vadd.f32 %v6688, %v6788
      %v6790 = vpop.f32.mrf.mxu0
      %6791 = vmatmul.bf16.gmra.mxu0 %v5860
      %v6792 = vpop.f32.mrf.mxu0
      %v6793 = vpop.f32.mrf.mxu0
      %v6794 = vadd.f32 %v6693, %v6793
      %6795 = vmatmul.bf16.gmra.mxu0 %v5863
      %v6796 = vpop.f32.mrf.mxu0
      %v6797 = vadd.f32 %v6696, %v6796
      %v6798 = vpop.f32.mrf.mxu0
      %v6799 = vadd.f32 %v6698, %v6798
      %6800 = vmatmul.bf16.gmra.mxu0 %v5866
      %v6801 = vpop.f32.mrf.mxu0
      %v6802 = vadd.f32 %v6701, %v6801
      %v6803 = vpop.f32.mrf.mxu0
      %v6804 = vadd.f32 %v6703, %v6803
      %6805 = vmatmul.bf16.gmra.mxu0 %v5869
      %v6806 = vpop.f32.mrf.mxu0
      %v6807 = vadd.f32 %v6706, %v6806
      %v6808 = vpop.f32.mrf.mxu0
      %v6809 = vadd.f32 %v6708, %v6808
      %6810 = vmatmul.bf16.gmra.mxu0 %v5872
      %v6811 = vpop.f32.mrf.mxu0
      %v6812 = vadd.f32 %v6711, %v6811
      %v6813 = vpop.f32.mrf.mxu0
      %6814 = vmatmul.bf16.gmra.mxu0 %v5875
      %v6815 = vpop.f32.mrf.mxu0
      %v6816 = vpop.f32.mrf.mxu0
      %v6817 = vadd.f32 %v6716, %v6816
      %6818 = vmatmul.bf16.gmra.mxu0 %v5878
      %v6819 = vpop.f32.mrf.mxu0
      %v6820 = vadd.f32 %v6719, %v6819
      %v6821 = vpop.f32.mrf.mxu0
      %v6822 = vadd.f32 %v6721, %v6821
      %6823 = vmatmul.bf16.gmra.mxu0 %v5881
      %v6824 = vpop.f32.mrf.mxu0
      %v6825 = vadd.f32 %v6724, %v6824
      %v6826 = vpop.f32.mrf.mxu0
      %v6827 = vadd.f32 %v6726, %v6826
      %6828 = vmatmul.bf16.gmra.mxu0 %v5884
      %v6829 = vpop.f32.mrf.mxu0
      %v6830 = vadd.f32 %v6729, %v6829
      %v6831 = vpop.f32.mrf.mxu0
      %v6832 = vadd.f32 %v6731, %v6831
      %6833 = vmatmul.bf16.gmra.mxu0 %v5887
      %v6834 = vpop.f32.mrf.mxu0
      %v6835 = vadd.f32 %v6734, %v6834
      %v6836 = vpop.f32.mrf.mxu0
      %6837 = vdwg.mxu0
      %6838 = vmatpush.bf16.msra.mxu0 %v6259
      %6839 = vmatpush.bf16.msra.mxu0 %v6256
      %6840 = vmatpush.bf16.msra.mxu0 %v6253
      %6841 = vmatpush.bf16.msra.mxu0 %v6250
      %6842 = vmatpush.bf16.msra.mxu0 %v6247
      %6843 = vmatpush.bf16.msra.mxu0 %v6244
      %6844 = vmatpush.bf16.msra.mxu0 %v6241
      %6845 = vmatpush.bf16.msra.mxu0 %v6238
      %6846 = vmatmul.bf16.gmra.mxu0 %v5831
      %v6847 = vpop.f32.mrf.mxu0
      %v6848 = vpop.f32.mrf.mxu0
      %v6849 = vadd.f32 %v6748, %v6848
      %6850 = vmatmul.bf16.gmra.mxu0 %v5834
      %v6851 = vpop.f32.mrf.mxu0
      %v6852 = vadd.f32 %v6751, %v6851
      %v6853 = vpop.f32.mrf.mxu0
      %v6854 = vadd.f32 %v6753, %v6853
      %6855 = vmatmul.bf16.gmra.mxu0 %v5837
      %v6856 = vpop.f32.mrf.mxu0
      %v6857 = vadd.f32 %v6756, %v6856
      %v6858 = vpop.f32.mrf.mxu0
      %v6859 = vadd.f32 %v6758, %v6858
      %6860 = vmatmul.bf16.gmra.mxu0 %v5840
      %v6861 = vpop.f32.mrf.mxu0
      %v6862 = vadd.f32 %v6761, %v6861
      %v6863 = vpop.f32.mrf.mxu0
      %v6864 = vadd.f32 %v6763, %v6863
      %6865 = vmatmul.bf16.gmra.mxu0 %v5843
      %v6866 = vpop.f32.mrf.mxu0
      %v6867 = vadd.f32 %v6766, %v6866
      %v6868 = vpop.f32.mrf.mxu0
      %6869 = vmatmul.bf16.gmra.mxu0 %v5846
      %v6870 = vpop.f32.mrf.mxu0
      %v6871 = vpop.f32.mrf.mxu0
      %v6872 = vadd.f32 %v6771, %v6871
      %6873 = vmatmul.bf16.gmra.mxu0 %v5849
      %v6874 = vpop.f32.mrf.mxu0
      %v6875 = vadd.f32 %v6774, %v6874
      %v6876 = vpop.f32.mrf.mxu0
      %v6877 = vadd.f32 %v6776, %v6876
      %6878 = vmatmul.bf16.gmra.mxu0 %v5852
      %v6879 = vpop.f32.mrf.mxu0
      %v6880 = vadd.f32 %v6779, %v6879
      %v6881 = vpop.f32.mrf.mxu0
      %v6882 = vadd.f32 %v6781, %v6881
      %6883 = vmatmul.bf16.gmra.mxu0 %v5855
      %v6884 = vpop.f32.mrf.mxu0
      %v6885 = vadd.f32 %v6784, %v6884
      %v6886 = vpop.f32.mrf.mxu0
      %v6887 = vadd.f32 %v6786, %v6886
      %6888 = vmatmul.bf16.gmra.mxu0 %v5858
      %v6889 = vpop.f32.mrf.mxu0
      %v6890 = vadd.f32 %v6789, %v6889
      %v6891 = vpop.f32.mrf.mxu0
      %6892 = vmatmul.bf16.gmra.mxu0 %v5861
      %v6893 = vpop.f32.mrf.mxu0
      %v6894 = vpop.f32.mrf.mxu0
      %v6895 = vadd.f32 %v6794, %v6894
      %6896 = vmatmul.bf16.gmra.mxu0 %v5864
      %v6897 = vpop.f32.mrf.mxu0
      %v6898 = vadd.f32 %v6797, %v6897
      %v6899 = vpop.f32.mrf.mxu0
      %v6900 = vadd.f32 %v6799, %v6899
      %6901 = vmatmul.bf16.gmra.mxu0 %v5867
      %v6902 = vpop.f32.mrf.mxu0
      %v6903 = vadd.f32 %v6802, %v6902
      %v6904 = vpop.f32.mrf.mxu0
      %v6905 = vadd.f32 %v6804, %v6904
      %6906 = vmatmul.bf16.gmra.mxu0 %v5870
      %v6907 = vpop.f32.mrf.mxu0
      %v6908 = vadd.f32 %v6807, %v6907
      %v6909 = vpop.f32.mrf.mxu0
      %v6910 = vadd.f32 %v6809, %v6909
      %6911 = vmatmul.bf16.gmra.mxu0 %v5873
      %v6912 = vpop.f32.mrf.mxu0
      %v6913 = vadd.f32 %v6812, %v6912
      %v6914 = vpop.f32.mrf.mxu0
      %6915 = vmatmul.bf16.gmra.mxu0 %v5876
      %v6916 = vpop.f32.mrf.mxu0
      %v6917 = vpop.f32.mrf.mxu0
      %v6918 = vadd.f32 %v6817, %v6917
      %6919 = vmatmul.bf16.gmra.mxu0 %v5879
      %v6920 = vpop.f32.mrf.mxu0
      %v6921 = vadd.f32 %v6820, %v6920
      %v6922 = vpop.f32.mrf.mxu0
      %v6923 = vadd.f32 %v6822, %v6922
      %6924 = vmatmul.bf16.gmra.mxu0 %v5882
      %v6925 = vpop.f32.mrf.mxu0
      %v6926 = vadd.f32 %v6825, %v6925
      %v6927 = vpop.f32.mrf.mxu0
      %v6928 = vadd.f32 %v6827, %v6927
      %6929 = vmatmul.bf16.gmra.mxu0 %v5885
      %v6930 = vpop.f32.mrf.mxu0
      %v6931 = vadd.f32 %v6830, %v6930
      %v6932 = vpop.f32.mrf.mxu0
      %v6933 = vadd.f32 %v6832, %v6932
      %6934 = vmatmul.bf16.gmra.mxu0 %v5888
      %v6935 = vpop.f32.mrf.mxu0
      %v6936 = vadd.f32 %v6835, %v6935
      %v6937 = vpop.f32.mrf.mxu0
      %6938 = vdwg.mxu0
      %6939 = vmatpush.bf16.msra.mxu0 %v6212
      %6940 = vmatpush.bf16.msra.mxu0 %v6209
      %6941 = vmatpush.bf16.msra.mxu0 %v6206
      %6942 = vmatpush.bf16.msra.mxu0 %v6203
      %6943 = vmatpush.bf16.msra.mxu0 %v6200
      %6944 = vmatpush.bf16.msra.mxu0 %v6197
      %6945 = vmatpush.bf16.msra.mxu0 %v6194
      %6946 = vmatpush.bf16.msra.mxu0 %v6191
      %6947 = vmatmul.bf16.gmra.mxu0 %v5829
      %v6948 = vpop.f32.mrf.mxu0
      %v6949 = vpop.f32.mrf.mxu0
      %6950 = vmatmul.bf16.gmra.mxu0 %v5832
      %v6951 = vpop.f32.mrf.mxu0
      %v6952 = vadd.f32 0.0, %v6951
      %v6953 = vpop.f32.mrf.mxu0
      %v6954 = vadd.f32 0.0, %v6953
      %6955 = vmatmul.bf16.gmra.mxu0 %v5835
      %v6956 = vpop.f32.mrf.mxu0
      %v6957 = vadd.f32 0.0, %v6956
      %v6958 = vpop.f32.mrf.mxu0
      %v6959 = vadd.f32 0.0, %v6958
      %6960 = vmatmul.bf16.gmra.mxu0 %v5838
      %v6961 = vpop.f32.mrf.mxu0
      %v6962 = vadd.f32 0.0, %v6961
      %v6963 = vpop.f32.mrf.mxu0
      %v6964 = vadd.f32 0.0, %v6963
      %6965 = vmatmul.bf16.gmra.mxu0 %v5841
      %v6966 = vpop.f32.mrf.mxu0
      %v6967 = vadd.f32 0.0, %v6966
      %v6968 = vpop.f32.mrf.mxu0
      %v6969 = vadd.f32 0.0, %v6968
      %6970 = vmatmul.bf16.gmra.mxu0 %v5844
      %v6971 = vpop.f32.mrf.mxu0
      %v6972 = vpop.f32.mrf.mxu0
      %6973 = vmatmul.bf16.gmra.mxu0 %v5847
      %v6974 = vpop.f32.mrf.mxu0
      %v6975 = vadd.f32 0.0, %v6974
      %v6976 = vpop.f32.mrf.mxu0
      %v6977 = vadd.f32 0.0, %v6976
      %6978 = vmatmul.bf16.gmra.mxu0 %v5850
      %v6979 = vpop.f32.mrf.mxu0
      %v6980 = vadd.f32 0.0, %v6979
      %v6981 = vpop.f32.mrf.mxu0
      %v6982 = vadd.f32 0.0, %v6981
      %6983 = vmatmul.bf16.gmra.mxu0 %v5853
      %v6984 = vpop.f32.mrf.mxu0
      %v6985 = vadd.f32 0.0, %v6984
      %v6986 = vpop.f32.mrf.mxu0
      %v6987 = vadd.f32 0.0, %v6986
      %6988 = vmatmul.bf16.gmra.mxu0 %v5856
      %v6989 = vpop.f32.mrf.mxu0
      %v6990 = vadd.f32 0.0, %v6989
      %v6991 = vpop.f32.mrf.mxu0
      %v6992 = vadd.f32 0.0, %v6991
      %6993 = vmatmul.bf16.gmra.mxu0 %v5859
      %v6994 = vpop.f32.mrf.mxu0
      %v6995 = vpop.f32.mrf.mxu0
      %6996 = vmatmul.bf16.gmra.mxu0 %v5862
      %v6997 = vpop.f32.mrf.mxu0
      %v6998 = vadd.f32 0.0, %v6997
      %v6999 = vpop.f32.mrf.mxu0
      %v7000 = vadd.f32 0.0, %v6999
      %7001 = vmatmul.bf16.gmra.mxu0 %v5865
      %v7002 = vpop.f32.mrf.mxu0
      %v7003 = vadd.f32 0.0, %v7002
      %v7004 = vpop.f32.mrf.mxu0
      %v7005 = vadd.f32 0.0, %v7004
      %7006 = vmatmul.bf16.gmra.mxu0 %v5868
      %v7007 = vpop.f32.mrf.mxu0
      %v7008 = vadd.f32 0.0, %v7007
      %v7009 = vpop.f32.mrf.mxu0
      %v7010 = vadd.f32 0.0, %v7009
      %7011 = vmatmul.bf16.gmra.mxu0 %v5871
      %v7012 = vpop.f32.mrf.mxu0
      %v7013 = vadd.f32 0.0, %v7012
      %v7014 = vpop.f32.mrf.mxu0
      %v7015 = vadd.f32 0.0, %v7014
      %7016 = vmatmul.bf16.gmra.mxu0 %v5874
      %v7017 = vpop.f32.mrf.mxu0
      %v7018 = vpop.f32.mrf.mxu0
      %7019 = vmatmul.bf16.gmra.mxu0 %v5877
      %v7020 = vpop.f32.mrf.mxu0
      %v7021 = vadd.f32 0.0, %v7020
      %v7022 = vpop.f32.mrf.mxu0
      %v7023 = vadd.f32 0.0, %v7022
      %7024 = vmatmul.bf16.gmra.mxu0 %v5880
      %v7025 = vpop.f32.mrf.mxu0
      %v7026 = vadd.f32 0.0, %v7025
      %v7027 = vpop.f32.mrf.mxu0
      %v7028 = vadd.f32 0.0, %v7027
      %7029 = vmatmul.bf16.gmra.mxu0 %v5883
      %v7030 = vpop.f32.mrf.mxu0
      %v7031 = vadd.f32 0.0, %v7030
      %v7032 = vpop.f32.mrf.mxu0
      %v7033 = vadd.f32 0.0, %v7032
      %7034 = vmatmul.bf16.gmra.mxu0 %v5886
      %v7035 = vpop.f32.mrf.mxu0
      %v7036 = vadd.f32 0.0, %v7035
      %v7037 = vpop.f32.mrf.mxu0
      %v7038 = vadd.f32 0.0, %v7037
      %7039 = vdwg.mxu0
      %7040 = vmatpush.bf16.msra.mxu0 %v6236
      %7041 = vmatpush.bf16.msra.mxu0 %v6233
      %7042 = vmatpush.bf16.msra.mxu0 %v6230
      %7043 = vmatpush.bf16.msra.mxu0 %v6227
      %7044 = vmatpush.bf16.msra.mxu0 %v6224
      %7045 = vmatpush.bf16.msra.mxu0 %v6221
      %7046 = vmatpush.bf16.msra.mxu0 %v6218
      %7047 = vmatpush.bf16.msra.mxu0 %v6215
      %7048 = vmatmul.bf16.gmra.mxu0 %v5830
      %v7049 = vpop.f32.mrf.mxu0
      %v7050 = vpop.f32.mrf.mxu0
      %7051 = vmatmul.bf16.gmra.mxu0 %v5833
      %v7052 = vpop.f32.mrf.mxu0
      %v7053 = vadd.f32 %v6952, %v7052
      %v7054 = vpop.f32.mrf.mxu0
      %v7055 = vadd.f32 %v6954, %v7054
      %7056 = vmatmul.bf16.gmra.mxu0 %v5836
      %v7057 = vpop.f32.mrf.mxu0
      %v7058 = vadd.f32 %v6957, %v7057
      %v7059 = vpop.f32.mrf.mxu0
      %v7060 = vadd.f32 %v6959, %v7059
      %7061 = vmatmul.bf16.gmra.mxu0 %v5839
      %v7062 = vpop.f32.mrf.mxu0
      %v7063 = vadd.f32 %v6962, %v7062
      %v7064 = vpop.f32.mrf.mxu0
      %v7065 = vadd.f32 %v6964, %v7064
      %7066 = vmatmul.bf16.gmra.mxu0 %v5842
      %v7067 = vpop.f32.mrf.mxu0
      %v7068 = vadd.f32 %v6967, %v7067
      %v7069 = vpop.f32.mrf.mxu0
      %v7070 = vadd.f32 %v6969, %v7069
      %7071 = vmatmul.bf16.gmra.mxu0 %v5845
      %v7072 = vpop.f32.mrf.mxu0
      %v7073 = vpop.f32.mrf.mxu0
      %7074 = vmatmul.bf16.gmra.mxu0 %v5848
      %v7075 = vpop.f32.mrf.mxu0
      %v7076 = vadd.f32 %v6975, %v7075
      %v7077 = vpop.f32.mrf.mxu0
      %v7078 = vadd.f32 %v6977, %v7077
      %7079 = vmatmul.bf16.gmra.mxu0 %v5851
      %v7080 = vpop.f32.mrf.mxu0
      %v7081 = vadd.f32 %v6980, %v7080
      %v7082 = vpop.f32.mrf.mxu0
      %v7083 = vadd.f32 %v6982, %v7082
      %7084 = vmatmul.bf16.gmra.mxu0 %v5854
      %v7085 = vpop.f32.mrf.mxu0
      %v7086 = vadd.f32 %v6985, %v7085
      %v7087 = vpop.f32.mrf.mxu0
      %v7088 = vadd.f32 %v6987, %v7087
      %7089 = vmatmul.bf16.gmra.mxu0 %v5857
      %v7090 = vpop.f32.mrf.mxu0
      %v7091 = vadd.f32 %v6990, %v7090
      %v7092 = vpop.f32.mrf.mxu0
      %v7093 = vadd.f32 %v6992, %v7092
      %7094 = vmatmul.bf16.gmra.mxu0 %v5860
      %v7095 = vpop.f32.mrf.mxu0
      %v7096 = vpop.f32.mrf.mxu0
      %7097 = vmatmul.bf16.gmra.mxu0 %v5863
      %v7098 = vpop.f32.mrf.mxu0
      %v7099 = vadd.f32 %v6998, %v7098
      %v7100 = vpop.f32.mrf.mxu0
      %v7101 = vadd.f32 %v7000, %v7100
      %7102 = vmatmul.bf16.gmra.mxu0 %v5866
      %v7103 = vpop.f32.mrf.mxu0
      %v7104 = vadd.f32 %v7003, %v7103
      %v7105 = vpop.f32.mrf.mxu0
      %v7106 = vadd.f32 %v7005, %v7105
      %7107 = vmatmul.bf16.gmra.mxu0 %v5869
      %v7108 = vpop.f32.mrf.mxu0
      %v7109 = vadd.f32 %v7008, %v7108
      %v7110 = vpop.f32.mrf.mxu0
      %v7111 = vadd.f32 %v7010, %v7110
      %7112 = vmatmul.bf16.gmra.mxu0 %v5872
      %v7113 = vpop.f32.mrf.mxu0
      %v7114 = vadd.f32 %v7013, %v7113
      %v7115 = vpop.f32.mrf.mxu0
      %v7116 = vadd.f32 %v7015, %v7115
      %7117 = vmatmul.bf16.gmra.mxu0 %v5875
      %v7118 = vpop.f32.mrf.mxu0
      %v7119 = vpop.f32.mrf.mxu0
      %7120 = vmatmul.bf16.gmra.mxu0 %v5878
      %v7121 = vpop.f32.mrf.mxu0
      %v7122 = vadd.f32 %v7021, %v7121
      %v7123 = vpop.f32.mrf.mxu0
      %v7124 = vadd.f32 %v7023, %v7123
      %7125 = vmatmul.bf16.gmra.mxu0 %v5881
      %v7126 = vpop.f32.mrf.mxu0
      %v7127 = vadd.f32 %v7026, %v7126
      %v7128 = vpop.f32.mrf.mxu0
      %v7129 = vadd.f32 %v7028, %v7128
      %7130 = vmatmul.bf16.gmra.mxu0 %v5884
      %v7131 = vpop.f32.mrf.mxu0
      %v7132 = vadd.f32 %v7031, %v7131
      %v7133 = vpop.f32.mrf.mxu0
      %v7134 = vadd.f32 %v7033, %v7133
      %7135 = vmatmul.bf16.gmra.mxu0 %v5887
      %v7136 = vpop.f32.mrf.mxu0
      %v7137 = vadd.f32 %v7036, %v7136
      %v7138 = vpop.f32.mrf.mxu0
      %v7139 = vadd.f32 %v7038, %v7138
      %7140 = vdwg.mxu0
      %7141 = vmatpush.bf16.msra.mxu0 %v6260
      %7142 = vmatpush.bf16.msra.mxu0 %v6257
      %7143 = vmatpush.bf16.msra.mxu0 %v6254
      %7144 = vmatpush.bf16.msra.mxu0 %v6251
      %7145 = vmatpush.bf16.msra.mxu0 %v6248
      %7146 = vmatpush.bf16.msra.mxu0 %v6245
      %7147 = vmatpush.bf16.msra.mxu0 %v6242
      %7148 = vmatpush.bf16.msra.mxu0 %v6239
      %7149 = vmatmul.bf16.gmra.mxu0 %v5831
      %v7150 = vpop.f32.mrf.mxu0
      %v7151 = vpop.f32.mrf.mxu0
      %7152 = vmatmul.bf16.gmra.mxu0 %v5834
      %v7153 = vpop.f32.mrf.mxu0
      %v7154 = vadd.f32 %v7053, %v7153
      %v7155 = vpop.f32.mrf.mxu0
      %v7156 = vadd.f32 %v7055, %v7155
      %7157 = vmatmul.bf16.gmra.mxu0 %v5837
      %v7158 = vpop.f32.mrf.mxu0
      %v7159 = vadd.f32 %v7058, %v7158
      %v7160 = vpop.f32.mrf.mxu0
      %v7161 = vadd.f32 %v7060, %v7160
      %7162 = vmatmul.bf16.gmra.mxu0 %v5840
      %v7163 = vpop.f32.mrf.mxu0
      %v7164 = vadd.f32 %v7063, %v7163
      %v7165 = vpop.f32.mrf.mxu0
      %v7166 = vadd.f32 %v7065, %v7165
      %7167 = vmatmul.bf16.gmra.mxu0 %v5843
      %v7168 = vpop.f32.mrf.mxu0
      %v7169 = vadd.f32 %v7068, %v7168
      %v7170 = vpop.f32.mrf.mxu0
      %v7171 = vadd.f32 %v7070, %v7170
      %7172 = vmatmul.bf16.gmra.mxu0 %v5846
      %v7173 = vpop.f32.mrf.mxu0
      %v7174 = vpop.f32.mrf.mxu0
      %7175 = vmatmul.bf16.gmra.mxu0 %v5849
      %v7176 = vpop.f32.mrf.mxu0
      %v7177 = vadd.f32 %v7076, %v7176
      %v7178 = vpop.f32.mrf.mxu0
      %v7179 = vadd.f32 %v7078, %v7178
      %7180 = vmatmul.bf16.gmra.mxu0 %v5852
      %v7181 = vpop.f32.mrf.mxu0
      %v7182 = vadd.f32 %v7081, %v7181
      %v7183 = vpop.f32.mrf.mxu0
      %v7184 = vadd.f32 %v7083, %v7183
      %7185 = vmatmul.bf16.gmra.mxu0 %v5855
      %v7186 = vpop.f32.mrf.mxu0
      %v7187 = vadd.f32 %v7086, %v7186
      %v7188 = vpop.f32.mrf.mxu0
      %v7189 = vadd.f32 %v7088, %v7188
      %7190 = vmatmul.bf16.gmra.mxu0 %v5858
      %v7191 = vpop.f32.mrf.mxu0
      %v7192 = vadd.f32 %v7091, %v7191
      %v7193 = vpop.f32.mrf.mxu0
      %v7194 = vadd.f32 %v7093, %v7193
      %7195 = vmatmul.bf16.gmra.mxu0 %v5861
      %v7196 = vpop.f32.mrf.mxu0
      %v7197 = vpop.f32.mrf.mxu0
      %7198 = vmatmul.bf16.gmra.mxu0 %v5864
      %v7199 = vpop.f32.mrf.mxu0
      %v7200 = vadd.f32 %v7099, %v7199
      %v7201 = vpop.f32.mrf.mxu0
      %v7202 = vadd.f32 %v7101, %v7201
      %7203 = vmatmul.bf16.gmra.mxu0 %v5867
      %v7204 = vpop.f32.mrf.mxu0
      %v7205 = vadd.f32 %v7104, %v7204
      %v7206 = vpop.f32.mrf.mxu0
      %v7207 = vadd.f32 %v7106, %v7206
      %7208 = vmatmul.bf16.gmra.mxu0 %v5870
      %v7209 = vpop.f32.mrf.mxu0
      %v7210 = vadd.f32 %v7109, %v7209
      %v7211 = vpop.f32.mrf.mxu0
      %v7212 = vadd.f32 %v7111, %v7211
      %7213 = vmatmul.bf16.gmra.mxu0 %v5873
      %v7214 = vpop.f32.mrf.mxu0
      %v7215 = vadd.f32 %v7114, %v7214
      %v7216 = vpop.f32.mrf.mxu0
      %v7217 = vadd.f32 %v7116, %v7216
      %7218 = vmatmul.bf16.gmra.mxu0 %v5876
      %v7219 = vpop.f32.mrf.mxu0
      %v7220 = vpop.f32.mrf.mxu0
      %7221 = vmatmul.bf16.gmra.mxu0 %v5879
      %v7222 = vpop.f32.mrf.mxu0
      %v7223 = vadd.f32 %v7122, %v7222
      %v7224 = vpop.f32.mrf.mxu0
      %v7225 = vadd.f32 %v7124, %v7224
      %7226 = vmatmul.bf16.gmra.mxu0 %v5882
      %v7227 = vpop.f32.mrf.mxu0
      %v7228 = vadd.f32 %v7127, %v7227
      %v7229 = vpop.f32.mrf.mxu0
      %v7230 = vadd.f32 %v7129, %v7229
      %7231 = vmatmul.bf16.gmra.mxu0 %v5885
      %v7232 = vpop.f32.mrf.mxu0
      %v7233 = vadd.f32 %v7132, %v7232
      %v7234 = vpop.f32.mrf.mxu0
      %v7235 = vadd.f32 %v7134, %v7234
      %7236 = vmatmul.bf16.gmra.mxu0 %v5888
      %v7237 = vpop.f32.mrf.mxu0
      %v7238 = vadd.f32 %v7137, %v7237
      %v7239 = vpop.f32.mrf.mxu0
      %v7240 = vadd.f32 %v7139, %v7239
      %7241 = vdwg.mxu0
      %v7242 = vadd.f32 %v4751, %v6545
      %v7243 = vadd.f32 %v4753, %v6547
      %v7244 = vadd.f32 %v5055, %v6849
      %v7245 = vadd.f32 %v4756, %v6550
      %v7246 = vadd.f32 %v5058, %v6852
      %v7247 = vadd.f32 %v5360, %v7154
      %v7248 = vadd.f32 %v4758, %v6552
      %v7249 = vadd.f32 %v5060, %v6854
      %v7250 = vadd.f32 %v5362, %v7156
      %v7251 = vadd.f32 %v4761, %v6555
      %v7252 = vadd.f32 %v5063, %v6857
      %v7253 = vadd.f32 %v5365, %v7159
      %v7254 = vadd.f32 %v4763, %v6557
      %v7255 = vadd.f32 %v5065, %v6859
      %v7256 = vadd.f32 %v5367, %v7161
      %v7257 = vadd.f32 %v4766, %v6560
      %v7258 = vadd.f32 %v5068, %v6862
      %v7259 = vadd.f32 %v5370, %v7164
      %v7260 = vadd.f32 %v4768, %v6562
      %v7261 = vadd.f32 %v5070, %v6864
      %v7262 = vadd.f32 %v5372, %v7166
      %v7263 = vadd.f32 %v5073, %v6867
      %v7264 = vadd.f32 %v5375, %v7169
      %v7265 = vadd.f32 %v5377, %v7171
      %v7266 = vadd.f32 %v4774, %v6568
      %v7267 = vadd.f32 %v4776, %v6570
      %v7268 = vadd.f32 %v5078, %v6872
      %v7269 = vadd.f32 %v4779, %v6573
      %v7270 = vadd.f32 %v5081, %v6875
      %v7271 = vadd.f32 %v5383, %v7177
      %v7272 = vadd.f32 %v4781, %v6575
      %v7273 = vadd.f32 %v5083, %v6877
      %v7274 = vadd.f32 %v5385, %v7179
      %v7275 = vadd.f32 %v4784, %v6578
      %v7276 = vadd.f32 %v5086, %v6880
      %v7277 = vadd.f32 %v5388, %v7182
      %v7278 = vadd.f32 %v4786, %v6580
      %v7279 = vadd.f32 %v5088, %v6882
      %v7280 = vadd.f32 %v5390, %v7184
      %v7281 = vadd.f32 %v4789, %v6583
      %v7282 = vadd.f32 %v5091, %v6885
      %v7283 = vadd.f32 %v5393, %v7187
      %v7284 = vadd.f32 %v4791, %v6585
      %v7285 = vadd.f32 %v5093, %v6887
      %v7286 = vadd.f32 %v5395, %v7189
      %v7287 = vadd.f32 %v5096, %v6890
      %v7288 = vadd.f32 %v5398, %v7192
      %v7289 = vadd.f32 %v5400, %v7194
      %v7290 = vadd.f32 %v4797, %v6591
      %v7291 = vadd.f32 %v4799, %v6593
      %v7292 = vadd.f32 %v5101, %v6895
      %v7293 = vadd.f32 %v4802, %v6596
      %v7294 = vadd.f32 %v5104, %v6898
      %v7295 = vadd.f32 %v5406, %v7200
      %v7296 = vadd.f32 %v4804, %v6598
      %v7297 = vadd.f32 %v5106, %v6900
      %v7298 = vadd.f32 %v5408, %v7202
      %v7299 = vadd.f32 %v4807, %v6601
      %v7300 = vadd.f32 %v5109, %v6903
      %v7301 = vadd.f32 %v5411, %v7205
      %v7302 = vadd.f32 %v4809, %v6603
      %v7303 = vadd.f32 %v5111, %v6905
      %v7304 = vadd.f32 %v5413, %v7207
      %v7305 = vadd.f32 %v4812, %v6606
      %v7306 = vadd.f32 %v5114, %v6908
      %v7307 = vadd.f32 %v5416, %v7210
      %v7308 = vadd.f32 %v4814, %v6608
      %v7309 = vadd.f32 %v5116, %v6910
      %v7310 = vadd.f32 %v5418, %v7212
      %v7311 = vadd.f32 %v5119, %v6913
      %v7312 = vadd.f32 %v5421, %v7215
      %v7313 = vadd.f32 %v5423, %v7217
      %v7314 = vadd.f32 %v4820, %v6614
      %v7315 = vadd.f32 %v4822, %v6616
      %v7316 = vadd.f32 %v5124, %v6918
      %v7317 = vadd.f32 %v4825, %v6619
      %v7318 = vadd.f32 %v5127, %v6921
      %v7319 = vadd.f32 %v5429, %v7223
      %v7320 = vadd.f32 %v4827, %v6621
      %v7321 = vadd.f32 %v5129, %v6923
      %v7322 = vadd.f32 %v5431, %v7225
      %v7323 = vadd.f32 %v4830, %v6624
      %v7324 = vadd.f32 %v5132, %v6926
      %v7325 = vadd.f32 %v5434, %v7228
      %v7326 = vadd.f32 %v4832, %v6626
      %v7327 = vadd.f32 %v5134, %v6928
      %v7328 = vadd.f32 %v5436, %v7230
      %v7329 = vadd.f32 %v4835, %v6629
      %v7330 = vadd.f32 %v5137, %v6931
      %v7331 = vadd.f32 %v5439, %v7233
      %v7332 = vadd.f32 %v4837, %v6631
      %v7333 = vadd.f32 %v5139, %v6933
      %v7334 = vadd.f32 %v5441, %v7235
      %v7335 = vadd.f32 %v5142, %v6936
      %v7336 = vadd.f32 %v5444, %v7238
      %v7337 = vadd.f32 %v5446, %v7240
      %v7338 = vadd.f32 %v7242, %v7244
      %v7339 = vadd.f32 %v7243, %v7246
      %v7340 = vadd.f32 %v7245, %v7249
      %v7341 = vadd.f32 %v7248, %v7252
      %v7342 = vadd.f32 %v7251, %v7255
      %v7343 = vadd.f32 %v7254, %v7258
      %v7344 = vadd.f32 %v7257, %v7261
      %v7345 = vadd.f32 %v7260, %v7263
      %v7346 = vadd.f32 %v7266, %v7268
      %v7347 = vadd.f32 %v7267, %v7270
      %v7348 = vadd.f32 %v7269, %v7273
      %v7349 = vadd.f32 %v7272, %v7276
      %v7350 = vadd.f32 %v7275, %v7279
      %v7351 = vadd.f32 %v7278, %v7282
      %v7352 = vadd.f32 %v7281, %v7285
      %v7353 = vadd.f32 %v7284, %v7287
      %v7354 = vadd.f32 %v7290, %v7292
      %v7355 = vadd.f32 %v7291, %v7294
      %v7356 = vadd.f32 %v7293, %v7297
      %v7357 = vadd.f32 %v7296, %v7300
      %v7358 = vadd.f32 %v7299, %v7303
      %v7359 = vadd.f32 %v7302, %v7306
      %v7360 = vadd.f32 %v7305, %v7309
      %v7361 = vadd.f32 %v7308, %v7311
      %v7362 = vadd.f32 %v7314, %v7316
      %v7363 = vadd.f32 %v7315, %v7318
      %v7364 = vadd.f32 %v7317, %v7321
      %v7365 = vadd.f32 %v7320, %v7324
      %v7366 = vadd.f32 %v7323, %v7327
      %v7367 = vadd.f32 %v7326, %v7330
      %v7368 = vadd.f32 %v7329, %v7333
      %v7369 = vadd.f32 %v7332, %v7335
      %v7370 = vadd.f32 %v7338, %v7247
      %v7371 = vadd.f32 %v7339, %v7250
      %v7372 = vadd.f32 %v7340, %v7253
      %v7373 = vadd.f32 %v7341, %v7256
      %v7374 = vadd.f32 %v7342, %v7259
      %v7375 = vadd.f32 %v7343, %v7262
      %v7376 = vadd.f32 %v7344, %v7264
      %v7377 = vadd.f32 %v7345, %v7265
      %v7378 = vadd.f32 %v7346, %v7271
      %v7379 = vadd.f32 %v7347, %v7274
      %v7380 = vadd.f32 %v7348, %v7277
      %v7381 = vadd.f32 %v7349, %v7280
      %v7382 = vadd.f32 %v7350, %v7283
      %v7383 = vadd.f32 %v7351, %v7286
      %v7384 = vadd.f32 %v7352, %v7288
      %v7385 = vadd.f32 %v7353, %v7289
      %v7386 = vadd.f32 %v7354, %v7295
      %v7387 = vadd.f32 %v7355, %v7298
      %v7388 = vadd.f32 %v7356, %v7301
      %v7389 = vadd.f32 %v7357, %v7304
      %v7390 = vadd.f32 %v7358, %v7307
      %v7391 = vadd.f32 %v7359, %v7310
      %v7392 = vadd.f32 %v7360, %v7312
      %v7393 = vadd.f32 %v7361, %v7313
      %v7394 = vadd.f32 %v7362, %v7319
      %v7395 = vadd.f32 %v7363, %v7322
      %v7396 = vadd.f32 %v7364, %v7325
      %v7397 = vadd.f32 %v7365, %v7328
      %v7398 = vadd.f32 %v7366, %v7331
      %v7399 = vadd.f32 %v7367, %v7334
      %v7400 = vadd.f32 %v7368, %v7336
      %v7401 = vadd.f32 %v7369, %v7337
      %v7402 = vld [vmem:[%s6] sm:$0x1]
      %v7404 = vperm.slane %v7402, 0
      %v7406 = vmul.f32 %v7370, %v7404
      %v7407 = vmul.f32 %v7371, %v7404
      %v7408 = vmul.f32 %v7372, %v7404
      %v7409 = vmul.f32 %v7373, %v7404
      %v7410 = vmul.f32 %v7374, %v7404
      %v7411 = vmul.f32 %v7375, %v7404
      %v7412 = vmul.f32 %v7376, %v7404
      %v7413 = vmul.f32 %v7377, %v7404
      %v7414 = vmul.f32 %v7378, %v7404
      %v7415 = vmul.f32 %v7379, %v7404
      %v7416 = vmul.f32 %v7380, %v7404
      %v7417 = vmul.f32 %v7381, %v7404
      %v7418 = vmul.f32 %v7382, %v7404
      %v7419 = vmul.f32 %v7383, %v7404
      %v7420 = vmul.f32 %v7384, %v7404
      %v7421 = vmul.f32 %v7385, %v7404
      %v7422 = vmul.f32 %v7386, %v7404
      %v7423 = vmul.f32 %v7387, %v7404
      %v7424 = vmul.f32 %v7388, %v7404
      %v7425 = vmul.f32 %v7389, %v7404
      %v7426 = vmul.f32 %v7390, %v7404
      %v7427 = vmul.f32 %v7391, %v7404
      %v7428 = vmul.f32 %v7392, %v7404
      %v7429 = vmul.f32 %v7393, %v7404
      %v7430 = vmul.f32 %v7394, %v7404
      %v7431 = vmul.f32 %v7395, %v7404
      %v7432 = vmul.f32 %v7396, %v7404
      %v7433 = vmul.f32 %v7397, %v7404
      %v7434 = vmul.f32 %v7398, %v7404
      %v7435 = vmul.f32 %v7399, %v7404
      %v7436 = vmul.f32 %v7400, %v7404
      %v7437 = vmul.f32 %v7401, %v7404
      %v7438 = vld [vmem:[%s7] sm:$0x1]
      %v7440 = vperm.slane %v7438, 0
      %v7442 = vadd.f32 %v7406, %v7440
      %v7443 = vadd.f32 %v7407, %v7440
      %v7444 = vadd.f32 %v7408, %v7440
      %v7445 = vadd.f32 %v7409, %v7440
      %v7446 = vadd.f32 %v7410, %v7440
      %v7447 = vadd.f32 %v7411, %v7440
      %v7448 = vadd.f32 %v7412, %v7440
      %v7449 = vadd.f32 %v7413, %v7440
      %v7450 = vadd.f32 %v7414, %v7440
      %v7451 = vadd.f32 %v7415, %v7440
      %v7452 = vadd.f32 %v7416, %v7440
      %v7453 = vadd.f32 %v7417, %v7440
      %v7454 = vadd.f32 %v7418, %v7440
      %v7455 = vadd.f32 %v7419, %v7440
      %v7456 = vadd.f32 %v7420, %v7440
      %v7457 = vadd.f32 %v7421, %v7440
      %v7458 = vadd.f32 %v7422, %v7440
      %v7459 = vadd.f32 %v7423, %v7440
      %v7460 = vadd.f32 %v7424, %v7440
      %v7461 = vadd.f32 %v7425, %v7440
      %v7462 = vadd.f32 %v7426, %v7440
      %v7463 = vadd.f32 %v7427, %v7440
      %v7464 = vadd.f32 %v7428, %v7440
      %v7465 = vadd.f32 %v7429, %v7440
      %v7466 = vadd.f32 %v7430, %v7440
      %v7467 = vadd.f32 %v7431, %v7440
      %v7468 = vadd.f32 %v7432, %v7440
      %v7469 = vadd.f32 %v7433, %v7440
      %v7470 = vadd.f32 %v7434, %v7440
      %v7471 = vadd.f32 %v7435, %v7440
      %v7472 = vadd.f32 %v7436, %v7440
      %v7473 = vadd.f32 %v7437, %v7440
      %v7474 = vmax.f32 %v7442, 0.0
      %v7475 = vmax.f32 %v7443, 0.0
      %v7476 = vmax.f32 %v7444, 0.0
      %v7477 = vmax.f32 %v7445, 0.0
      %v7478 = vmax.f32 %v7446, 0.0
      %v7479 = vmax.f32 %v7447, 0.0
      %v7480 = vmax.f32 %v7448, 0.0
      %v7481 = vmax.f32 %v7449, 0.0
      %v7482 = vmax.f32 %v7450, 0.0
      %v7483 = vmax.f32 %v7451, 0.0
      %v7484 = vmax.f32 %v7452, 0.0
      %v7485 = vmax.f32 %v7453, 0.0
      %v7486 = vmax.f32 %v7454, 0.0
      %v7487 = vmax.f32 %v7455, 0.0
      %v7488 = vmax.f32 %v7456, 0.0
      %v7489 = vmax.f32 %v7457, 0.0
      %v7490 = vmax.f32 %v7458, 0.0
      %v7491 = vmax.f32 %v7459, 0.0
      %v7492 = vmax.f32 %v7460, 0.0
      %v7493 = vmax.f32 %v7461, 0.0
      %v7494 = vmax.f32 %v7462, 0.0
      %v7495 = vmax.f32 %v7463, 0.0
      %v7496 = vmax.f32 %v7464, 0.0
      %v7497 = vmax.f32 %v7465, 0.0
      %v7498 = vmax.f32 %v7466, 0.0
      %v7499 = vmax.f32 %v7467, 0.0
      %v7500 = vmax.f32 %v7468, 0.0
      %v7501 = vmax.f32 %v7469, 0.0
      %v7502 = vmax.f32 %v7470, 0.0
      %v7503 = vmax.f32 %v7471, 0.0
      %v7504 = vmax.f32 %v7472, 0.0
      %v7505 = vmax.f32 %v7473, 0.0
      %v7506 = vpack.c.bf16 %v7474, %v7474
      %v7507 = vpack.c.bf16 %v7475, %v7475
      %v7508 = vpack.c.bf16 %v7476, %v7476
      %v7509 = vpack.c.bf16 %v7477, %v7477
      %v7510 = vpack.c.bf16 %v7478, %v7478
      %v7511 = vpack.c.bf16 %v7479, %v7479
      %v7512 = vpack.c.bf16 %v7480, %v7480
      %v7513 = vpack.c.bf16 %v7481, %v7481
      %v7514 = vpack.c.bf16 %v7482, %v7482
      %v7515 = vpack.c.bf16 %v7483, %v7483
      %v7516 = vpack.c.bf16 %v7484, %v7484
      %v7517 = vpack.c.bf16 %v7485, %v7485
      %v7518 = vpack.c.bf16 %v7486, %v7486
      %v7519 = vpack.c.bf16 %v7487, %v7487
      %v7520 = vpack.c.bf16 %v7488, %v7488
      %v7521 = vpack.c.bf16 %v7489, %v7489
      %v7522 = vpack.c.bf16 %v7490, %v7490
      %v7523 = vpack.c.bf16 %v7491, %v7491
      %v7524 = vpack.c.bf16 %v7492, %v7492
      %v7525 = vpack.c.bf16 %v7493, %v7493
      %v7526 = vpack.c.bf16 %v7494, %v7494
      %v7527 = vpack.c.bf16 %v7495, %v7495
      %v7528 = vpack.c.bf16 %v7496, %v7496
      %v7529 = vpack.c.bf16 %v7497, %v7497
      %v7530 = vpack.c.bf16 %v7498, %v7498
      %v7531 = vpack.c.bf16 %v7499, %v7499
      %v7532 = vpack.c.bf16 %v7500, %v7500
      %v7533 = vpack.c.bf16 %v7501, %v7501
      %v7534 = vpack.c.bf16 %v7502, %v7502
      %v7535 = vpack.c.bf16 %v7503, %v7503
      %v7536 = vpack.c.bf16 %v7504, %v7504
      %v7537 = vpack.c.bf16 %v7505, %v7505
      %v7538 = vld [vmem:[%s3] sm:$0xf]
      %v7539 = vld [vmem:[%s3 + $0x4] sm:$0xf]
      %v7540 = vld [vmem:[%s3 + $0x8] sm:$0xf]
      %v7541 = vld [vmem:[%s3 + $0xc] sm:$0xf]
      %v7542 = vld [vmem:[%s3 + $0x10] sm:$0xf]
      %v7543 = vld [vmem:[%s3 + $0x14] sm:$0xf]
      %v7544 = vld [vmem:[%s3 + $0x18] sm:$0xf]
      %v7545 = vld [vmem:[%s3 + $0x1c] sm:$0xf]
      %v7546 = vld [vmem:[%s3 + $0x20] sm:$0xf]
      %v7547 = vld [vmem:[%s3 + $0x24] sm:$0xf]
      %v7548 = vld [vmem:[%s3 + $0x28] sm:$0xf]
      %v7549 = vld [vmem:[%s3 + $0x2c] sm:$0xf]
      %v7550 = vld [vmem:[%s3 + $0x30] sm:$0xf]
      %v7551 = vld [vmem:[%s3 + $0x34] sm:$0xf]
      %v7552 = vld [vmem:[%s3 + $0x38] sm:$0xf]
      %v7553 = vld [vmem:[%s3 + $0x3c] sm:$0xf]
      %v7586 = vunpack.c.l.b16 %v7506
      %v7587 = vunpack.c.l.b16 %v7507
      %v7588 = vunpack.c.l.b16 %v7508
      %v7589 = vunpack.c.l.b16 %v7509
      %v7590 = vunpack.c.l.b16 %v7510
      %v7591 = vunpack.c.l.b16 %v7511
      %v7592 = vunpack.c.l.b16 %v7512
      %v7593 = vunpack.c.l.b16 %v7513
      %v7594 = vunpack.c.l.b16 %v7514
      %v7595 = vunpack.c.l.b16 %v7515
      %v7596 = vunpack.c.l.b16 %v7516
      %v7597 = vunpack.c.l.b16 %v7517
      %v7598 = vunpack.c.l.b16 %v7518
      %v7599 = vunpack.c.l.b16 %v7519
      %v7600 = vunpack.c.l.b16 %v7520
      %v7601 = vunpack.c.l.b16 %v7521
      %v7602 = vunpack.c.l.b16 %v7522
      %v7603 = vunpack.c.l.b16 %v7523
      %v7604 = vunpack.c.l.b16 %v7524
      %v7605 = vunpack.c.l.b16 %v7525
      %v7606 = vunpack.c.l.b16 %v7526
      %v7607 = vunpack.c.l.b16 %v7527
      %v7608 = vunpack.c.l.b16 %v7528
      %v7609 = vunpack.c.l.b16 %v7529
      %v7610 = vunpack.c.l.b16 %v7530
      %v7611 = vunpack.c.l.b16 %v7531
      %v7612 = vunpack.c.l.b16 %v7532
      %v7613 = vunpack.c.l.b16 %v7533
      %v7614 = vunpack.c.l.b16 %v7534
      %v7615 = vunpack.c.l.b16 %v7535
      %v7616 = vunpack.c.l.b16 %v7536
      %v7617 = vunpack.c.l.b16 %v7537
      %v7618 = vpack.c.b16 %v7587, %v7586
      %v7619 = vpack.c.b16 %v7589, %v7588
      %v7620 = vpack.c.b16 %v7591, %v7590
      %v7621 = vpack.c.b16 %v7593, %v7592
      %v7622 = vpack.c.b16 %v7595, %v7594
      %v7623 = vpack.c.b16 %v7597, %v7596
      %v7624 = vpack.c.b16 %v7599, %v7598
      %v7625 = vpack.c.b16 %v7601, %v7600
      %v7626 = vpack.c.b16 %v7603, %v7602
      %v7627 = vpack.c.b16 %v7605, %v7604
      %v7628 = vpack.c.b16 %v7607, %v7606
      %v7629 = vpack.c.b16 %v7609, %v7608
      %v7630 = vpack.c.b16 %v7611, %v7610
      %v7631 = vpack.c.b16 %v7613, %v7612
      %v7632 = vpack.c.b16 %v7615, %v7614
      %v7633 = vpack.c.b16 %v7617, %v7616
      %v7666 = vunpack.c.l.b16 %v7538
      %v7667 = vunpack.c.l.b16 %v7539
      %v7668 = vunpack.c.l.b16 %v7540
      %v7669 = vunpack.c.l.b16 %v7541
      %v7670 = vunpack.c.l.b16 %v7542
      %v7671 = vunpack.c.l.b16 %v7543
      %v7672 = vunpack.c.l.b16 %v7544
      %v7673 = vunpack.c.l.b16 %v7545
      %v7674 = vunpack.c.l.b16 %v7546
      %v7675 = vunpack.c.l.b16 %v7547
      %v7676 = vunpack.c.l.b16 %v7548
      %v7677 = vunpack.c.l.b16 %v7549
      %v7678 = vunpack.c.l.b16 %v7550
      %v7679 = vunpack.c.l.b16 %v7551
      %v7680 = vunpack.c.l.b16 %v7552
      %v7681 = vunpack.c.l.b16 %v7553
      %v7682 = vpack.c.b16 %v7667, %v7666
      %v7683 = vpack.c.b16 %v7669, %v7668
      %v7684 = vpack.c.b16 %v7671, %v7670
      %v7685 = vpack.c.b16 %v7673, %v7672
      %v7686 = vpack.c.b16 %v7675, %v7674
      %v7687 = vpack.c.b16 %v7677, %v7676
      %v7688 = vpack.c.b16 %v7679, %v7678
      %v7689 = vpack.c.b16 %v7681, %v7680
      %7698 = vmatpush.bf16.msra.mxu0 %v7689
      %7699 = vmatpush.bf16.msra.mxu0 %v7688
      %7700 = vmatpush.bf16.msra.mxu0 %v7687
      %7701 = vmatpush.bf16.msra.mxu0 %v7686
      %7702 = vmatpush.bf16.msra.mxu0 %v7685
      %7703 = vmatpush.bf16.msra.mxu0 %v7684
      %7704 = vmatpush.bf16.msra.mxu0 %v7683
      %7705 = vmatpush.bf16.msra.mxu0 %v7682
      %7706 = vmatmul.bf16.gmra.mxu0 %v7618
      %v7707 = vpop.f32.mrf.mxu0
      %v7708 = vadd.f32 0.0, %v7707
      %v7709 = vpop.f32.mrf.mxu0
      %v7710 = vadd.f32 0.0, %v7709
      %7711 = vmatmul.bf16.gmra.mxu0 %v7619
      %v7712 = vpop.f32.mrf.mxu0
      %v7713 = vadd.f32 0.0, %v7712
      %v7714 = vpop.f32.mrf.mxu0
      %v7715 = vadd.f32 0.0, %v7714
      %7716 = vmatmul.bf16.gmra.mxu0 %v7620
      %v7717 = vpop.f32.mrf.mxu0
      %v7718 = vadd.f32 0.0, %v7717
      %v7719 = vpop.f32.mrf.mxu0
      %v7720 = vadd.f32 0.0, %v7719
      %7721 = vmatmul.bf16.gmra.mxu0 %v7621
      %v7722 = vpop.f32.mrf.mxu0
      %v7723 = vadd.f32 0.0, %v7722
      %v7724 = vpop.f32.mrf.mxu0
      %v7725 = vadd.f32 0.0, %v7724
      %7726 = vmatmul.bf16.gmra.mxu0 %v7622
      %v7727 = vpop.f32.mrf.mxu0
      %v7728 = vadd.f32 0.0, %v7727
      %v7729 = vpop.f32.mrf.mxu0
      %v7730 = vadd.f32 0.0, %v7729
      %7731 = vmatmul.bf16.gmra.mxu0 %v7623
      %v7732 = vpop.f32.mrf.mxu0
      %v7733 = vadd.f32 0.0, %v7732
      %v7734 = vpop.f32.mrf.mxu0
      %v7735 = vadd.f32 0.0, %v7734
      %7736 = vmatmul.bf16.gmra.mxu0 %v7624
      %v7737 = vpop.f32.mrf.mxu0
      %v7738 = vadd.f32 0.0, %v7737
      %v7739 = vpop.f32.mrf.mxu0
      %v7740 = vadd.f32 0.0, %v7739
      %7741 = vmatmul.bf16.gmra.mxu0 %v7625
      %v7742 = vpop.f32.mrf.mxu0
      %v7743 = vadd.f32 0.0, %v7742
      %v7744 = vpop.f32.mrf.mxu0
      %v7745 = vadd.f32 0.0, %v7744
      %7746 = vmatmul.bf16.gmra.mxu0 %v7626
      %v7747 = vpop.f32.mrf.mxu0
      %v7748 = vadd.f32 0.0, %v7747
      %v7749 = vpop.f32.mrf.mxu0
      %v7750 = vadd.f32 0.0, %v7749
      %7751 = vmatmul.bf16.gmra.mxu0 %v7627
      %v7752 = vpop.f32.mrf.mxu0
      %v7753 = vadd.f32 0.0, %v7752
      %v7754 = vpop.f32.mrf.mxu0
      %v7755 = vadd.f32 0.0, %v7754
      %7756 = vmatmul.bf16.gmra.mxu0 %v7628
      %v7757 = vpop.f32.mrf.mxu0
      %v7758 = vadd.f32 0.0, %v7757
      %v7759 = vpop.f32.mrf.mxu0
      %v7760 = vadd.f32 0.0, %v7759
      %7761 = vmatmul.bf16.gmra.mxu0 %v7629
      %v7762 = vpop.f32.mrf.mxu0
      %v7763 = vadd.f32 0.0, %v7762
      %v7764 = vpop.f32.mrf.mxu0
      %v7765 = vadd.f32 0.0, %v7764
      %7766 = vmatmul.bf16.gmra.mxu0 %v7630
      %v7767 = vpop.f32.mrf.mxu0
      %v7768 = vadd.f32 0.0, %v7767
      %v7769 = vpop.f32.mrf.mxu0
      %v7770 = vadd.f32 0.0, %v7769
      %7771 = vmatmul.bf16.gmra.mxu0 %v7631
      %v7772 = vpop.f32.mrf.mxu0
      %v7773 = vadd.f32 0.0, %v7772
      %v7774 = vpop.f32.mrf.mxu0
      %v7775 = vadd.f32 0.0, %v7774
      %7776 = vmatmul.bf16.gmra.mxu0 %v7632
      %v7777 = vpop.f32.mrf.mxu0
      %v7778 = vadd.f32 0.0, %v7777
      %v7779 = vpop.f32.mrf.mxu0
      %v7780 = vadd.f32 0.0, %v7779
      %7781 = vmatmul.bf16.gmra.mxu0 %v7633
      %v7782 = vpop.f32.mrf.mxu0
      %v7783 = vadd.f32 0.0, %v7782
      %v7784 = vpop.f32.mrf.mxu0
      %v7785 = vadd.f32 0.0, %v7784
      %7786 = vdwg.mxu0
      %v7787 = vld [vmem:[%s8] sm:$0x1]
      %v7789 = vperm.slane %v7787, 0
      %v7791 = vmul.f32 %v7708, %v7789
      %v7792 = vmul.f32 %v7710, %v7789
      %v7793 = vmul.f32 %v7713, %v7789
      %v7794 = vmul.f32 %v7715, %v7789
      %v7795 = vmul.f32 %v7718, %v7789
      %v7796 = vmul.f32 %v7720, %v7789
      %v7797 = vmul.f32 %v7723, %v7789
      %v7798 = vmul.f32 %v7725, %v7789
      %v7799 = vmul.f32 %v7728, %v7789
      %v7800 = vmul.f32 %v7730, %v7789
      %v7801 = vmul.f32 %v7733, %v7789
      %v7802 = vmul.f32 %v7735, %v7789
      %v7803 = vmul.f32 %v7738, %v7789
      %v7804 = vmul.f32 %v7740, %v7789
      %v7805 = vmul.f32 %v7743, %v7789
      %v7806 = vmul.f32 %v7745, %v7789
      %v7807 = vmul.f32 %v7748, %v7789
      %v7808 = vmul.f32 %v7750, %v7789
      %v7809 = vmul.f32 %v7753, %v7789
      %v7810 = vmul.f32 %v7755, %v7789
      %v7811 = vmul.f32 %v7758, %v7789
      %v7812 = vmul.f32 %v7760, %v7789
      %v7813 = vmul.f32 %v7763, %v7789
      %v7814 = vmul.f32 %v7765, %v7789
      %v7815 = vmul.f32 %v7768, %v7789
      %v7816 = vmul.f32 %v7770, %v7789
      %v7817 = vmul.f32 %v7773, %v7789
      %v7818 = vmul.f32 %v7775, %v7789
      %v7819 = vmul.f32 %v7778, %v7789
      %v7820 = vmul.f32 %v7780, %v7789
      %v7821 = vmul.f32 %v7783, %v7789
      %v7822 = vmul.f32 %v7785, %v7789
      %v7823 = vld [vmem:[%s9] sm:$0x1]
      %v7825 = vperm.slane %v7823, 0
      %v7827 = vadd.f32 %v7791, %v7825
      %v7828 = vadd.f32 %v7792, %v7825
      %v7829 = vadd.f32 %v7793, %v7825
      %v7830 = vadd.f32 %v7794, %v7825
      %v7831 = vadd.f32 %v7795, %v7825
      %v7832 = vadd.f32 %v7796, %v7825
      %v7833 = vadd.f32 %v7797, %v7825
      %v7834 = vadd.f32 %v7798, %v7825
      %v7835 = vadd.f32 %v7799, %v7825
      %v7836 = vadd.f32 %v7800, %v7825
      %v7837 = vadd.f32 %v7801, %v7825
      %v7838 = vadd.f32 %v7802, %v7825
      %v7839 = vadd.f32 %v7803, %v7825
      %v7840 = vadd.f32 %v7804, %v7825
      %v7841 = vadd.f32 %v7805, %v7825
      %v7842 = vadd.f32 %v7806, %v7825
      %v7843 = vadd.f32 %v7807, %v7825
      %v7844 = vadd.f32 %v7808, %v7825
      %v7845 = vadd.f32 %v7809, %v7825
      %v7846 = vadd.f32 %v7810, %v7825
      %v7847 = vadd.f32 %v7811, %v7825
      %v7848 = vadd.f32 %v7812, %v7825
      %v7849 = vadd.f32 %v7813, %v7825
      %v7850 = vadd.f32 %v7814, %v7825
      %v7851 = vadd.f32 %v7815, %v7825
      %v7852 = vadd.f32 %v7816, %v7825
      %v7853 = vadd.f32 %v7817, %v7825
      %v7854 = vadd.f32 %v7818, %v7825
      %v7855 = vadd.f32 %v7819, %v7825
      %v7856 = vadd.f32 %v7820, %v7825
      %v7857 = vadd.f32 %v7821, %v7825
      %v7858 = vadd.f32 %v7822, %v7825
      %s7859 = smul.u32 %s386, 8
      %s7860 = smul.addr %s7859, 4
      %s7861 = scalar_lea.vmem %s373, %s7860
      %v7862 = vld [vmem:[%s7861] sm:$0xf]
      %v7863 = vld [vmem:[%s7861 + $0x4] sm:$0xf]
      %v7864 = vld [vmem:[%s7861 + $0x8] sm:$0xf]
      %v7865 = vld [vmem:[%s7861 + $0xc] sm:$0xf]
      %v7866 = vld [vmem:[%s7861 + $0x10] sm:$0xf]
      %v7867 = vld [vmem:[%s7861 + $0x14] sm:$0xf]
      %v7868 = vld [vmem:[%s7861 + $0x18] sm:$0xf]
      %v7869 = vld [vmem:[%s7861 + $0x1c] sm:$0xf]
      %v7870 = vld [vmem:[%s7861 + $0x20] sm:$0xf]
      %v7871 = vld [vmem:[%s7861 + $0x24] sm:$0xf]
      %v7872 = vld [vmem:[%s7861 + $0x28] sm:$0xf]
      %v7873 = vld [vmem:[%s7861 + $0x2c] sm:$0xf]
      %v7874 = vld [vmem:[%s7861 + $0x30] sm:$0xf]
      %v7875 = vld [vmem:[%s7861 + $0x34] sm:$0xf]
      %v7876 = vld [vmem:[%s7861 + $0x38] sm:$0xf]
      %v7877 = vld [vmem:[%s7861 + $0x3c] sm:$0xf]
      %v7878 = vld [vmem:[%s7861 + $0x40] sm:$0xf]
      %v7879 = vld [vmem:[%s7861 + $0x44] sm:$0xf]
      %v7880 = vld [vmem:[%s7861 + $0x48] sm:$0xf]
      %v7881 = vld [vmem:[%s7861 + $0x4c] sm:$0xf]
      %v7882 = vld [vmem:[%s7861 + $0x50] sm:$0xf]
      %v7883 = vld [vmem:[%s7861 + $0x54] sm:$0xf]
      %v7884 = vld [vmem:[%s7861 + $0x58] sm:$0xf]
      %v7885 = vld [vmem:[%s7861 + $0x5c] sm:$0xf]
      %v7886 = vld [vmem:[%s7861 + $0x60] sm:$0xf]
      %v7887 = vld [vmem:[%s7861 + $0x64] sm:$0xf]
      %v7888 = vld [vmem:[%s7861 + $0x68] sm:$0xf]
      %v7889 = vld [vmem:[%s7861 + $0x6c] sm:$0xf]
      %v7890 = vld [vmem:[%s7861 + $0x70] sm:$0xf]
      %v7891 = vld [vmem:[%s7861 + $0x74] sm:$0xf]
      %v7892 = vld [vmem:[%s7861 + $0x78] sm:$0xf]
      %v7893 = vld [vmem:[%s7861 + $0x7c] sm:$0xf]
      %v7894 = vunpack.c.l.bf16 %v7862
      %v7895 = vunpack.c.l.bf16 %v7863
      %v7896 = vunpack.c.l.bf16 %v7864
      %v7897 = vunpack.c.l.bf16 %v7865
      %v7898 = vunpack.c.l.bf16 %v7866
      %v7899 = vunpack.c.l.bf16 %v7867
      %v7900 = vunpack.c.l.bf16 %v7868
      %v7901 = vunpack.c.l.bf16 %v7869
      %v7902 = vunpack.c.l.bf16 %v7870
      %v7903 = vunpack.c.l.bf16 %v7871
      %v7904 = vunpack.c.l.bf16 %v7872
      %v7905 = vunpack.c.l.bf16 %v7873
      %v7906 = vunpack.c.l.bf16 %v7874
      %v7907 = vunpack.c.l.bf16 %v7875
      %v7908 = vunpack.c.l.bf16 %v7876
      %v7909 = vunpack.c.l.bf16 %v7877
      %v7910 = vunpack.c.l.bf16 %v7878
      %v7911 = vunpack.c.l.bf16 %v7879
      %v7912 = vunpack.c.l.bf16 %v7880
      %v7913 = vunpack.c.l.bf16 %v7881
      %v7914 = vunpack.c.l.bf16 %v7882
      %v7915 = vunpack.c.l.bf16 %v7883
      %v7916 = vunpack.c.l.bf16 %v7884
      %v7917 = vunpack.c.l.bf16 %v7885
      %v7918 = vunpack.c.l.bf16 %v7886
      %v7919 = vunpack.c.l.bf16 %v7887
      %v7920 = vunpack.c.l.bf16 %v7888
      %v7921 = vunpack.c.l.bf16 %v7889
      %v7922 = vunpack.c.l.bf16 %v7890
      %v7923 = vunpack.c.l.bf16 %v7891
      %v7924 = vunpack.c.l.bf16 %v7892
      %v7925 = vunpack.c.l.bf16 %v7893
      %v7926 = vadd.f32 %v7827, %v7894
      %v7927 = vadd.f32 %v7828, %v7895
      %v7928 = vadd.f32 %v7829, %v7896
      %v7929 = vadd.f32 %v7830, %v7897
      %v7930 = vadd.f32 %v7831, %v7898
      %v7931 = vadd.f32 %v7832, %v7899
      %v7932 = vadd.f32 %v7833, %v7900
      %v7933 = vadd.f32 %v7834, %v7901
      %v7934 = vadd.f32 %v7835, %v7902
      %v7935 = vadd.f32 %v7836, %v7903
      %v7936 = vadd.f32 %v7837, %v7904
      %v7937 = vadd.f32 %v7838, %v7905
      %v7938 = vadd.f32 %v7839, %v7906
      %v7939 = vadd.f32 %v7840, %v7907
      %v7940 = vadd.f32 %v7841, %v7908
      %v7941 = vadd.f32 %v7842, %v7909
      %v7942 = vadd.f32 %v7843, %v7910
      %v7943 = vadd.f32 %v7844, %v7911
      %v7944 = vadd.f32 %v7845, %v7912
      %v7945 = vadd.f32 %v7846, %v7913
      %v7946 = vadd.f32 %v7847, %v7914
      %v7947 = vadd.f32 %v7848, %v7915
      %v7948 = vadd.f32 %v7849, %v7916
      %v7949 = vadd.f32 %v7850, %v7917
      %v7950 = vadd.f32 %v7851, %v7918
      %v7951 = vadd.f32 %v7852, %v7919
      %v7952 = vadd.f32 %v7853, %v7920
      %v7953 = vadd.f32 %v7854, %v7921
      %v7954 = vadd.f32 %v7855, %v7922
      %v7955 = vadd.f32 %v7856, %v7923
      %v7956 = vadd.f32 %v7857, %v7924
      %v7957 = vadd.f32 %v7858, %v7925
      %v7958 = vmax.f32 %v7926, 0.0
      %v7959 = vmax.f32 %v7927, 0.0
      %v7960 = vmax.f32 %v7928, 0.0
      %v7961 = vmax.f32 %v7929, 0.0
      %v7962 = vmax.f32 %v7930, 0.0
      %v7963 = vmax.f32 %v7931, 0.0
      %v7964 = vmax.f32 %v7932, 0.0
      %v7965 = vmax.f32 %v7933, 0.0
      %v7966 = vmax.f32 %v7934, 0.0
      %v7967 = vmax.f32 %v7935, 0.0
      %v7968 = vmax.f32 %v7936, 0.0
      %v7969 = vmax.f32 %v7937, 0.0
      %v7970 = vmax.f32 %v7938, 0.0
      %v7971 = vmax.f32 %v7939, 0.0
      %v7972 = vmax.f32 %v7940, 0.0
      %v7973 = vmax.f32 %v7941, 0.0
      %v7974 = vmax.f32 %v7942, 0.0
      %v7975 = vmax.f32 %v7943, 0.0
      %v7976 = vmax.f32 %v7944, 0.0
      %v7977 = vmax.f32 %v7945, 0.0
      %v7978 = vmax.f32 %v7946, 0.0
      %v7979 = vmax.f32 %v7947, 0.0
      %v7980 = vmax.f32 %v7948, 0.0
      %v7981 = vmax.f32 %v7949, 0.0
      %v7982 = vmax.f32 %v7950, 0.0
      %v7983 = vmax.f32 %v7951, 0.0
      %v7984 = vmax.f32 %v7952, 0.0
      %v7985 = vmax.f32 %v7953, 0.0
      %v7986 = vmax.f32 %v7954, 0.0
      %v7987 = vmax.f32 %v7955, 0.0
      %v7988 = vmax.f32 %v7956, 0.0
      %v7989 = vmax.f32 %v7957, 0.0
      %v7990 = vpack.c.bf16 %v7958, %v7958
      %v7991 = vpack.c.bf16 %v7959, %v7959
      %v7992 = vpack.c.bf16 %v7960, %v7960
      %v7993 = vpack.c.bf16 %v7961, %v7961
      %v7994 = vpack.c.bf16 %v7962, %v7962
      %v7995 = vpack.c.bf16 %v7963, %v7963
      %v7996 = vpack.c.bf16 %v7964, %v7964
      %v7997 = vpack.c.bf16 %v7965, %v7965
      %v7998 = vpack.c.bf16 %v7966, %v7966
      %v7999 = vpack.c.bf16 %v7967, %v7967
      %v8000 = vpack.c.bf16 %v7968, %v7968
      %v8001 = vpack.c.bf16 %v7969, %v7969
      %v8002 = vpack.c.bf16 %v7970, %v7970
      %v8003 = vpack.c.bf16 %v7971, %v7971
      %v8004 = vpack.c.bf16 %v7972, %v7972
      %v8005 = vpack.c.bf16 %v7973, %v7973
      %v8006 = vpack.c.bf16 %v7974, %v7974
      %v8007 = vpack.c.bf16 %v7975, %v7975
      %v8008 = vpack.c.bf16 %v7976, %v7976
      %v8009 = vpack.c.bf16 %v7977, %v7977
      %v8010 = vpack.c.bf16 %v7978, %v7978
      %v8011 = vpack.c.bf16 %v7979, %v7979
      %v8012 = vpack.c.bf16 %v7980, %v7980
      %v8013 = vpack.c.bf16 %v7981, %v7981
      %v8014 = vpack.c.bf16 %v7982, %v7982
      %v8015 = vpack.c.bf16 %v7983, %v7983
      %v8016 = vpack.c.bf16 %v7984, %v7984
      %v8017 = vpack.c.bf16 %v7985, %v7985
      %v8018 = vpack.c.bf16 %v7986, %v7986
      %v8019 = vpack.c.bf16 %v7987, %v7987
      %v8020 = vpack.c.bf16 %v7988, %v7988
      %v8021 = vpack.c.bf16 %v7989, %v7989
      %8022 = vst [vmem:[%s383] sm:$0xf] %v7990
      %8023 = vst [vmem:[%s383 + $0x4] sm:$0xf] %v7991
      %8024 = vst [vmem:[%s383 + $0x8] sm:$0xf] %v7992
      %8025 = vst [vmem:[%s383 + $0xc] sm:$0xf] %v7993
      %8026 = vst [vmem:[%s383 + $0x10] sm:$0xf] %v7994
      %8027 = vst [vmem:[%s383 + $0x14] sm:$0xf] %v7995
      %8028 = vst [vmem:[%s383 + $0x18] sm:$0xf] %v7996
      %8029 = vst [vmem:[%s383 + $0x1c] sm:$0xf] %v7997
      %8030 = vst [vmem:[%s383 + $0x20] sm:$0xf] %v7998
      %8031 = vst [vmem:[%s383 + $0x24] sm:$0xf] %v7999
      %8032 = vst [vmem:[%s383 + $0x28] sm:$0xf] %v8000
      %8033 = vst [vmem:[%s383 + $0x2c] sm:$0xf] %v8001
      %8034 = vst [vmem:[%s383 + $0x30] sm:$0xf] %v8002
      %8035 = vst [vmem:[%s383 + $0x34] sm:$0xf] %v8003
      %8036 = vst [vmem:[%s383 + $0x38] sm:$0xf] %v8004
      %8037 = vst [vmem:[%s383 + $0x3c] sm:$0xf] %v8005
      %8038 = vst [vmem:[%s383 + $0x40] sm:$0xf] %v8006
      %8039 = vst [vmem:[%s383 + $0x44] sm:$0xf] %v8007
      %8040 = vst [vmem:[%s383 + $0x48] sm:$0xf] %v8008
      %8041 = vst [vmem:[%s383 + $0x4c] sm:$0xf] %v8009
      %8042 = vst [vmem:[%s383 + $0x50] sm:$0xf] %v8010
      %8043 = vst [vmem:[%s383 + $0x54] sm:$0xf] %v8011
      %8044 = vst [vmem:[%s383 + $0x58] sm:$0xf] %v8012
      %8045 = vst [vmem:[%s383 + $0x5c] sm:$0xf] %v8013
      %8046 = vst [vmem:[%s383 + $0x60] sm:$0xf] %v8014
      %8047 = vst [vmem:[%s383 + $0x64] sm:$0xf] %v8015
      %8048 = vst [vmem:[%s383 + $0x68] sm:$0xf] %v8016
      %8049 = vst [vmem:[%s383 + $0x6c] sm:$0xf] %v8017
      %8050 = vst [vmem:[%s383 + $0x70] sm:$0xf] %v8018
      %8051 = vst [vmem:[%s383 + $0x74] sm:$0xf] %v8019
      %8052 = vst [vmem:[%s383 + $0x78] sm:$0xf] %v8020
      %8053 = vst [vmem:[%s383 + $0x7c] sm:$0xf] %v8021
      %s8054 = smul.u32 4, %s26
      %p8055 = scmp.lt.s32.totalorder %s25, 1
      %s8056 = scalar_select %p8055, %s25, 1
      %p8057 = scmp.lt.s32.totalorder %s8054, 7
      %s8058 = scalar_select %p8057, %s8054, 7
      %s8059 = smul.addr %s8058, 8
      %s8060 = smul.addr %s8056, 64
      %s8061 = sadd.s32 %s8059, %s8060
      %s8062 = smul.addr %s8061, 4
      %s8063 = scalar_lea.vmem %s10, %s8062
      // Predicated region
      $region65: #{bottleneck_forward.1} parent=59 // pred_check
        %p8064 = pneg %p268
      $region66: #{bottleneck_forward.1} parent=59 // pred_check_branch
        %8066 = sbr.rel (%p8064) target = $region68
      $region67: #{bottleneck_forward.1} parent=59 // pred_region
        %s8067 = smul.u32 4, %s26
      $region68: #{bottleneck_forward.1} parent=59 // pred_fallthru
        _
    $region60: #{bottleneck_forward.1} parent=5 // pred_fallthru
      _
    %p8068 = scmp.le.s32.totalorder 2, %s16
    // Predicated region
    $region69: #{bottleneck_forward.1} parent=5 // pred_check
      %p8069 = pneg %p8068
    $region70: #{bottleneck_forward.1} parent=5 // pred_check_branch
      %8071 = sbr.rel (%p8069) target = $region72
    $region71: #{bottleneck_forward.1} parent=5 // pred_region
      %s8072 = ssub.s32 %s16, 2
      // Predicated region
      $region73: #{bottleneck_forward.1} parent=71 // pred_check
        %p8073 = pneg %p274
      $region74: #{bottleneck_forward.1} parent=71 // pred_check_branch
        %8075 = sbr.rel (%p8073) target = $region76
      $region75: #{bottleneck_forward.1} parent=71 // pred_region
        %s8076 = smul.u32 4, %s28
        %p8077 = scmp.lt.s32.totalorder %s27, 1
        %s8078 = scalar_select %p8077, %s27, 1
        %p8079 = scmp.lt.s32.totalorder %s8076, 7
        %s8080 = scalar_select %p8079, %s8076, 7
        %s8081 = smul.addr %s8080, 8
        %s8082 = smul.addr %s8078, 64
        %s8083 = sadd.s32 %s8081, %s8082
        %s8084 = smul.addr %s8083, 4
        %s8085 = scalar_lea.vmem %s10, %s8084
      $region76: #{bottleneck_forward.1} parent=71 // pred_fallthru
        _
    $region72: #{bottleneck_forward.1} parent=5 // pred_fallthru
      _
  $region6: #{bottleneck_forward.1} parent=0 // loop_footer
    %s20 = sadd.s32 1, %s16
  $region7: #{bottleneck_forward.1} parent=0 // loop_footer_branch
    %15 = sbr.rel target = $region3
  $region8: #{bottleneck_forward.1} parent=0 // loop_exit
    _

</llo_original>
